<compile_context>
chip_gen: v7x
topology: tpu7x:2x2x1
jax: 0.10.0
libtpu: 0.0.40
codegen_flags: <defaults>
</compile_context>

<pallas_src>
import re

import jax
import jax.numpy as jnp
from jax.experimental import pallas as pl
from jax.experimental.pallas import tpu as pltpu


H1, H2, H3, HO = 256, 128, 64, 1
_MIB = 1024 * 1024


def _hidden_layers(x_ref, w1_ref, t1_ref, w2_ref, t2_ref, w3_ref, t3_ref):
    """relu(bn(fc(.))) x3 with the BN scale pre-folded into the weights."""
    cdt = w1_ref.dtype                       # MXU operand dtype (bf16 fast path)
    edt = t1_ref.dtype                       # epilogue dtype (bf16 on v6e/v7x)
    prec = jax.lax.Precision.HIGHEST if cdt == jnp.float32 else None

    h = jnp.dot(x_ref[...].astype(cdt), w1_ref[...],
                precision=prec, preferred_element_type=jnp.float32)
    h = jnp.maximum(h.astype(edt) + t1_ref[...], 0).astype(cdt)      # bn1 + relu

    h = jnp.dot(h, w2_ref[...], precision=prec,
                preferred_element_type=jnp.float32)
    h = jnp.maximum(h.astype(edt) + t2_ref[...], 0).astype(cdt)      # bn2 + relu

    h = jnp.dot(h, w3_ref[...], precision=prec,
                preferred_element_type=jnp.float32)
    h = jnp.maximum(h.astype(edt) + t3_ref[...], 0)                  # bn3 + relu
    return h.astype(jnp.float32)             # (tile, 64) f32 for the head


def _mlp_kernel_lane_dense(x_ref, w1_ref, t1_ref, w2_ref, t2_ref, w3_ref, t3_ref,
                           w4_ref, b4_ref, o_ref):
    """Fused MLP; output tile laid out lane-dense as (tile//128, 128)."""
    h = _hidden_layers(x_ref, w1_ref, t1_ref, w2_ref, t2_ref, w3_ref, t3_ref)
    g, lanes = o_ref.shape                   # (tile//128, 128)
    # Leading-dim split (minor dim unchanged, split point multiple of 8):
    # a layout no-op view, so the lane-reduce lands the result in lanes.
    h3d = h.reshape(g, lanes, h.shape[-1])
    o_ref[...] = jnp.sum(h3d * w4_ref[...], axis=-1) + b4_ref[...]


def _mlp_kernel_narrow(x_ref, w1_ref, t1_ref, w2_ref, t2_ref, w3_ref, t3_ref,
                       w4_ref, b4_ref, o_ref):
    """Fallback kernel with the original lane-sparse (tile, 1) output layout."""
    h = _hidden_layers(x_ref, w1_ref, t1_ref, w2_ref, t2_ref, w3_ref, t3_ref)
    o_ref[...] = (jnp.sum(h * w4_ref[...], axis=-1, keepdims=True)
                  + b4_ref[...])


def _round_up(n, m):
    return ((n + m - 1) // m) * m


def _tpu_config():
    """Best-effort (vmem_limit_bytes, epilogue_dtype, max_batch_tile)."""
    phys = None
    try:
        phys = getattr(pltpu.get_tpu_info(), "vmem_capacity_bytes", None)
    except Exception:
        phys = None
    gen = None
    try:
        kind = jax.devices()[0].device_kind.lower()
        m = re.search(r"(\d+)", kind)
        gen = int(m.group(1)) if m else None
    except Exception:
        gen = None
    if phys is None:
        # Conservative default (v7x has 64 MiB / TC); v4/v5/v6 have 128 MiB.
        phys = 64 * _MIB if (gen is None or gen >= 7) else 128 * _MIB
    vmem_limit = int(min(max(phys - 16 * _MIB, 32 * _MIB), 112 * _MIB))
    # bf16 VPU exists on v6e/v7x; keep the f32 epilogue on v5e/older/unknown.
    epilogue_dtype = jnp.bfloat16 if (gen is not None and gen >= 6) else jnp.float32
    max_tile = 4096 if phys < 96 * _MIB else 8192
    return vmem_limit, epilogue_dtype, max_tile


def interaction_predictor_forward(x, params, *, batch_tile=2048,
                                  matmul_dtype=jnp.bfloat16):
    """x: [B, input_size] (f32 or bf16).  Returns [B, 1] float32 (eval forward)."""
    B, D = x.shape
    (w1, b1, bn1), (w2, b2, bn2), (w3, b3, bn3), (w4, b4) = params

    vmem_limit, edt, max_tile = _tpu_config()
    if matmul_dtype == jnp.float32:
        edt = jnp.float32                     # exact-verification path

    def fold(w, b, bn):
        gamma, beta, mean, var, eps = bn
        scale = gamma / jnp.sqrt(var + eps)
        w_folded = (w * scale[None, :]).astype(matmul_dtype)   # scale into weights
        shift = ((b - mean) * scale + beta).astype(edt).reshape(1, -1)
        return w_folded, shift

    w1f, t1 = fold(w1, b1, bn1)
    w2f, t2 = fold(w2, b2, bn2)
    w3f, t3 = fold(w3, b3, bn3)
    w4r = w4.reshape(1, H3).astype(jnp.float32)   # head kept f32 (VPU/XLU path)
    b4r = b4.reshape(1, 1).astype(jnp.float32)

    # Batch tiling: tile is a multiple of 1024 rows when the grid has more than
    # one step (keeps the lane-dense (tile//128, 128) output block (8,128)
    # aligned); a single full block covers small batches (padded to 128 rows).
    b128 = _round_up(B, 128)
    tile = _round_up(min(batch_tile, max_tile), 1024)
    if b128 <= tile:
        tile = b128
    Bp = _round_up(B, tile)
    xp = x if Bp == B else jnp.pad(x, ((0, Bp - B), (0, 0)))
    grid = Bp // tile

    full = lambda *shape: pl.BlockSpec(shape, lambda i: (0,) * len(shape))
    in_specs = [
        pl.BlockSpec((tile, D), lambda i: (i, 0)),   # x tile
        full(D, H1), full(1, H1),                    # layer 1 (w', shift)
        full(H1, H2), full(1, H2),                   # layer 2
        full(H2, H3), full(1, H3),                   # layer 3
        full(1, H3), full(1, 1),                     # output head (w4 row, b4)
    ]
    operands = (xp, w1f, t1, w2f, t2, w3f, t3, w4r, b4r)

    x_bytes = int(xp.size) * xp.dtype.itemsize
    w_bytes = sum(int(a.size) * a.dtype.itemsize
                  for a in (w1f, t1, w2f, t2, w3f, t3, w4r, b4r))
    cost = pl.CostEstimate(
        flops=2 * Bp * (D * H1 + H1 * H2 + H2 * H3 + H3 * HO),
        transcendentals=0,
        bytes_accessed=int(x_bytes + w_bytes + Bp * 4))

    def call(lane_dense):
        if lane_dense:
            kernel = _mlp_kernel_lane_dense
            out_shape = jax.ShapeDtypeStruct((Bp // 128, 128), jnp.float32)
            out_spec = pl.BlockSpec((tile // 128, 128), lambda i: (i, 0))
        else:
            kernel = _mlp_kernel_narrow
            out_shape = jax.ShapeDtypeStruct((Bp, HO), jnp.float32)
            out_spec = pl.BlockSpec((tile, HO), lambda i: (i, 0))
        grid_spec = pltpu.PrefetchScalarGridSpec(
            num_scalar_prefetch=0,
            grid=(grid,),
            in_specs=in_specs,
            out_specs=out_spec)
        return pl.pallas_call(
            kernel,
            out_shape=out_shape,
            grid_spec=grid_spec,
            compiler_params=pltpu.CompilerParams(
                dimension_semantics=("parallel",),     # batch tiles shard across TCs
                vmem_limit_bytes=vmem_limit),
            cost_estimate=cost,
        )(*operands)

    try:
        out = call(lane_dense=True).reshape(Bp, HO)
    except Exception:
        # Fallback to the known-good lane-sparse output layout if this
        # toolchain rejects the in-kernel lane-dense relayout.
        out = call(lane_dense=False)
    return out[:B]


def init_params(key, input_size):
    """Deterministic init mirroring the PyTorch module's __init__.

    Linear weights: kaiming_normal(mode='fan_out', nonlinearity='relu')
      -> std = sqrt(2 / fan_out); biases = 0.
    BatchNorm params get small deterministic random values so the affine fold
    is non-trivial.  Weights are stored [in, out] (transposed vs torch).
    """
    dims = [input_size, 256, 128, 64, 1]
    keys = jax.random.split(key, 16)
    eps = 1e-5

    def linear(k, d_in, d_out):
        std = (2.0 / d_out) ** 0.5            # fan_out mode, relu gain
        w = jax.random.normal(k, (d_in, d_out), jnp.float32) * std
        b = jnp.zeros((d_out,), jnp.float32)
        return w, b

    def bn(k, d):
        k1, k2, k3, k4 = jax.random.split(k, 4)
        gamma = 1.0 + 0.1 * jax.random.normal(k1, (d,), jnp.float32)
        beta = 0.1 * jax.random.normal(k2, (d,), jnp.float32)
        mean = 0.1 * jax.random.normal(k3, (d,), jnp.float32)
        var = 1.0 + 0.1 * jax.random.uniform(k4, (d,), jnp.float32)
        return gamma, beta, mean, var, eps

    w1, b1 = linear(keys[0], dims[0], dims[1])
    w2, b2 = linear(keys[1], dims[1], dims[2])
    w3, b3 = linear(keys[2], dims[2], dims[3])
    w4, b4 = linear(keys[3], dims[3], dims[4])
    return ((w1, b1, bn(keys[4], dims[1])),
            (w2, b2, bn(keys[5], dims[2])),
            (w3, b3, bn(keys[6], dims[3])),
            (w4, b4))


def reference_forward(x, params):
    """Pure-JAX reference (eval-mode PyTorch semantics) in full f32 precision."""
    (w1, b1, bn1), (w2, b2, bn2), (w3, b3, bn3), (w4, b4) = params
    hp = jax.lax.Precision.HIGHEST

    def layer(h, w, b, bn):
        gamma, beta, mean, var, eps = bn
        z = jnp.dot(h, w, precision=hp) + b
        z = (z - mean) / jnp.sqrt(var + eps) * gamma + beta
        return jnp.maximum(z, 0.0)

    h = layer(x, w1, b1, bn1)
    h = layer(h, w2, b2, bn2)
    h = layer(h, w3, b3, bn3)
    return jnp.dot(h, w4, precision=hp) + b4


if __name__ == "__main__":
    key = jax.random.PRNGKey(0)
    k_param, k_x1, k_x2 = jax.random.split(key, 3)

    input_size = 32
    params = init_params(k_param, input_size)

    # Small odd batch: exercises 128-row tail padding + single-step grid.
    x_small = jax.random.normal(k_x1, (13, input_size), jnp.float32)
    ref_small = reference_forward(x_small, params)

    out_f32 = jax.block_until_ready(
        interaction_predictor_forward(x_small, params, matmul_dtype=jnp.float32))
    assert out_f32.shape == (13, 1)
    assert jnp.allclose(out_f32, ref_small, atol=1e-3, rtol=1e-3), "f32 kernel mismatch"

    out_bf16 = jax.block_until_ready(interaction_predictor_forward(x_small, params))
    assert out_bf16.shape == (13, 1)
    assert jnp.allclose(out_bf16, ref_small, atol=2.5e-1, rtol=1e-1), \
        "bf16 kernel mismatch (small batch)"

    # Larger batch with an explicit smaller tile: exercises the multi-step grid
    # and per-step lane-dense output blocks.
    x_big = jax.random.normal(k_x2, (2500, input_size), jnp.float32)
    ref_big = reference_forward(x_big, params)
    out_big = jax.block_until_ready(
        interaction_predictor_forward(x_big, params, batch_tile=1024))
    assert out_big.shape == (2500, 1)
    assert jnp.allclose(out_big, ref_big, atol=2.5e-1, rtol=1e-1), \
        "bf16 kernel mismatch (large batch)"

    print("KERNEL_OK")
</pallas_src>

<mosaic_0001>
module attributes {stable_mosaic.version = 11 : i64} {
  func.func @_mlp_kernel_lane_dense(%arg0: i32, %arg1: memref<128x32xf32, #tpu.memory_space<vmem>>, %arg2: memref<32x256xf32, #tpu.memory_space<vmem>>, %arg3: memref<1x256xf32, #tpu.memory_space<vmem>>, %arg4: memref<256x128xf32, #tpu.memory_space<vmem>>, %arg5: memref<1x128xf32, #tpu.memory_space<vmem>>, %arg6: memref<128x64xf32, #tpu.memory_space<vmem>>, %arg7: memref<1x64xf32, #tpu.memory_space<vmem>>, %arg8: memref<1x64xf32, #tpu.memory_space<vmem>>, %arg9: memref<1x1xf32, #tpu.memory_space<vmem>>, %arg10: memref<1x128xf32, #tpu.memory_space<vmem>>) attributes {dimension_semantics = [#tpu.dimension_semantics<parallel>], iteration_bounds = array<i64: 1>, scalar_prefetch = 0 : i64, scratch_operands = 0 : i64, tpu.core_type = #tpu.core_type<tc>, window_params = [{transform_indices = @transform_0, window_bounds = array<i64: 128, 32>}, {pipeline_mode = #tpu.pipeline_mode<synchronous>, transform_indices = @transform_1, window_bounds = array<i64: 32, 256>}, {pipeline_mode = #tpu.pipeline_mode<synchronous>, transform_indices = @transform_2, window_bounds = array<i64: 1, 256>}, {pipeline_mode = #tpu.pipeline_mode<synchronous>, transform_indices = @transform_3, window_bounds = array<i64: 256, 128>}, {pipeline_mode = #tpu.pipeline_mode<synchronous>, transform_indices = @transform_4, window_bounds = array<i64: 1, 128>}, {pipeline_mode = #tpu.pipeline_mode<synchronous>, transform_indices = @transform_5, window_bounds = array<i64: 128, 64>}, {pipeline_mode = #tpu.pipeline_mode<synchronous>, transform_indices = @transform_6, window_bounds = array<i64: 1, 64>}, {pipeline_mode = #tpu.pipeline_mode<synchronous>, transform_indices = @transform_7, window_bounds = array<i64: 1, 64>}, {pipeline_mode = #tpu.pipeline_mode<synchronous>, transform_indices = @transform_8, window_bounds = array<i64: 1, 1>}, {transform_indices = @transform_9, window_bounds = array<i64: 1, 128>}]} {
    %c0 = arith.constant 0 : index
    %c0_0 = arith.constant 0 : index
    %0 = vector.load %arg1[%c0, %c0_0] : memref<128x32xf32, #tpu.memory_space<vmem>>, vector<128x32xf32>
    %c0_1 = arith.constant 0 : index
    %c0_2 = arith.constant 0 : index
    %1 = vector.load %arg2[%c0_1, %c0_2] : memref<32x256xf32, #tpu.memory_space<vmem>>, vector<32x256xf32>
    %cst = arith.constant dense<0.000000e+00> : vector<128x256xf32>
    %2 = tpu.matmul %0, %1, %cst {dimension_numbers = #tpu.dot_dimension_numbers<[1], [0], [0], [1], [0, 0, 1, 1], [], []>, precision = #tpu.contract_precision<fp32>} : vector<128x32xf32>, vector<32x256xf32>, vector<128x256xf32> -> vector<128x256xf32>
    %c0_3 = arith.constant 0 : index
    %c0_4 = arith.constant 0 : index
    %3 = vector.load %arg3[%c0_3, %c0_4] : memref<1x256xf32, #tpu.memory_space<vmem>>, vector<1x256xf32>
    %4 = vector.broadcast %3 : vector<1x256xf32> to vector<128x256xf32>
    %5 = arith.addf %2, %4 : vector<128x256xf32>
    %cst_5 = arith.constant 0.000000e+00 : f32
    %6 = vector.broadcast %cst_5 : f32 to vector<128x256xf32>
    %7 = arith.maximumf %5, %6 : vector<128x256xf32>
    %c0_6 = arith.constant 0 : index
    %c0_7 = arith.constant 0 : index
    %8 = vector.load %arg4[%c0_6, %c0_7] : memref<256x128xf32, #tpu.memory_space<vmem>>, vector<256x128xf32>
    %cst_8 = arith.constant dense<0.000000e+00> : vector<128x128xf32>
    %9 = tpu.matmul %7, %8, %cst_8 {dimension_numbers = #tpu.dot_dimension_numbers<[1], [0], [0], [1], [0, 0, 1, 1], [], []>, precision = #tpu.contract_precision<fp32>} : vector<128x256xf32>, vector<256x128xf32>, vector<128x128xf32> -> vector<128x128xf32>
    %c0_9 = arith.constant 0 : index
    %c0_10 = arith.constant 0 : index
    %10 = vector.load %arg5[%c0_9, %c0_10] : memref<1x128xf32, #tpu.memory_space<vmem>>, vector<1x128xf32>
    %11 = vector.broadcast %10 : vector<1x128xf32> to vector<128x128xf32>
    %12 = arith.addf %9, %11 : vector<128x128xf32>
    %cst_11 = arith.constant 0.000000e+00 : f32
    %13 = vector.broadcast %cst_11 : f32 to vector<128x128xf32>
    %14 = arith.maximumf %12, %13 : vector<128x128xf32>
    %c0_12 = arith.constant 0 : index
    %c0_13 = arith.constant 0 : index
    %15 = vector.load %arg6[%c0_12, %c0_13] : memref<128x64xf32, #tpu.memory_space<vmem>>, vector<128x64xf32>
    %cst_14 = arith.constant dense<0.000000e+00> : vector<128x64xf32>
    %16 = tpu.matmul %14, %15, %cst_14 {dimension_numbers = #tpu.dot_dimension_numbers<[1], [0], [0], [1], [0, 0, 1, 1], [], []>, precision = #tpu.contract_precision<fp32>} : vector<128x128xf32>, vector<128x64xf32>, vector<128x64xf32> -> vector<128x64xf32>
    %c0_15 = arith.constant 0 : index
    %c0_16 = arith.constant 0 : index
    %17 = vector.load %arg7[%c0_15, %c0_16] : memref<1x64xf32, #tpu.memory_space<vmem>>, vector<1x64xf32>
    %18 = vector.broadcast %17 : vector<1x64xf32> to vector<128x64xf32>
    %19 = arith.addf %16, %18 : vector<128x64xf32>
    %cst_17 = arith.constant 0.000000e+00 : f32
    %20 = vector.broadcast %cst_17 : f32 to vector<128x64xf32>
    %21 = arith.maximumf %19, %20 : vector<128x64xf32>
    %22 = vector.shape_cast %21 : vector<128x64xf32> to vector<1x128x64xf32>
    %c0_18 = arith.constant 0 : index
    %c0_19 = arith.constant 0 : index
    %23 = vector.load %arg8[%c0_18, %c0_19] : memref<1x64xf32, #tpu.memory_space<vmem>>, vector<1x64xf32>
    %24 = vector.shape_cast %23 : vector<1x64xf32> to vector<1x1x64xf32>
    %25 = vector.broadcast %24 : vector<1x1x64xf32> to vector<1x128x64xf32>
    %26 = arith.mulf %22, %25 : vector<1x128x64xf32>
    %cst_20 = arith.constant dense<0.000000e+00> : vector<1x128xf32>
    %27 = vector.multi_reduction <add>, %26, %cst_20 [2] : vector<1x128x64xf32> to vector<1x128xf32>
    %c0_21 = arith.constant 0 : index
    %c0_22 = arith.constant 0 : index
    %28 = vector.load %arg9[%c0_21, %c0_22] : memref<1x1xf32, #tpu.memory_space<vmem>>, vector<1x1xf32>
    %29 = vector.broadcast %28 : vector<1x1xf32> to vector<1x128xf32>
    %30 = arith.addf %27, %29 : vector<1x128xf32>
    %c0_23 = arith.constant 0 : index
    %c0_24 = arith.constant 0 : index
    %31 = vector.load %arg10[%c0_23, %c0_24] : memref<1x128xf32, #tpu.memory_space<vmem>>, vector<1x128xf32>
    tpu.vector_store %arg10[%c0_23, %c0_24], %30 {strides = array<i32>} : memref<1x128xf32, #tpu.memory_space<vmem>>, vector<1x128xf32>,
    return
  }
  func.func @transform_0(%arg0: i32) -> (i32, i32) {
    %c0_i32 = arith.constant 0 : i32
    %c0_i32_0 = arith.constant 0 : i32
    return %arg0, %c0_i32 : i32, i32
  }
  func.func @transform_1(%arg0: i32) -> (i32, i32) {
    %c0_i32 = arith.constant 0 : i32
    %c0_i32_0 = arith.constant 0 : i32
    %c0_i32_1 = arith.constant 0 : i32
    return %c0_i32, %c0_i32_0 : i32, i32
  }
  func.func @transform_2(%arg0: i32) -> (i32, i32) {
    %c0_i32 = arith.constant 0 : i32
    %c0_i32_0 = arith.constant 0 : i32
    %c0_i32_1 = arith.constant 0 : i32
    return %c0_i32, %c0_i32_0 : i32, i32
  }
  func.func @transform_3(%arg0: i32) -> (i32, i32) {
    %c0_i32 = arith.constant 0 : i32
    %c0_i32_0 = arith.constant 0 : i32
    %c0_i32_1 = arith.constant 0 : i32
    return %c0_i32, %c0_i32_0 : i32, i32
  }
  func.func @transform_4(%arg0: i32) -> (i32, i32) {
    %c0_i32 = arith.constant 0 : i32
    %c0_i32_0 = arith.constant 0 : i32
    %c0_i32_1 = arith.constant 0 : i32
    return %c0_i32, %c0_i32_0 : i32, i32
  }
  func.func @transform_5(%arg0: i32) -> (i32, i32) {
    %c0_i32 = arith.constant 0 : i32
    %c0_i32_0 = arith.constant 0 : i32
    %c0_i32_1 = arith.constant 0 : i32
    return %c0_i32, %c0_i32_0 : i32, i32
  }
  func.func @transform_6(%arg0: i32) -> (i32, i32) {
    %c0_i32 = arith.constant 0 : i32
    %c0_i32_0 = arith.constant 0 : i32
    %c0_i32_1 = arith.constant 0 : i32
    return %c0_i32, %c0_i32_0 : i32, i32
  }
  func.func @transform_7(%arg0: i32) -> (i32, i32) {
    %c0_i32 = arith.constant 0 : i32
    %c0_i32_0 = arith.constant 0 : i32
    %c0_i32_1 = arith.constant 0 : i32
    return %c0_i32, %c0_i32_0 : i32, i32
  }
  func.func @transform_8(%arg0: i32) -> (i32, i32) {
    %c0_i32 = arith.constant 0 : i32
    %c0_i32_0 = arith.constant 0 : i32
    %c0_i32_1 = arith.constant 0 : i32
    return %c0_i32, %c0_i32_0 : i32, i32
  }
  func.func @transform_9(%arg0: i32) -> (i32, i32) {
    %c0_i32 = arith.constant 0 : i32
    %c0_i32_0 = arith.constant 0 : i32
    return %arg0, %c0_i32 : i32, i32
  }
}

module attributes {stable_mosaic.version = 11 : i64} {
  func.func @_mlp_kernel_narrow(%arg0: i32, %arg1: memref<128x32xf32, #tpu.memory_space<vmem>>, %arg2: memref<32x256xf32, #tpu.memory_space<vmem>>, %arg3: memref<1x256xf32, #tpu.memory_space<vmem>>, %arg4: memref<256x128xf32, #tpu.memory_space<vmem>>, %arg5: memref<1x128xf32, #tpu.memory_space<vmem>>, %arg6: memref<128x64xf32, #tpu.memory_space<vmem>>, %arg7: memref<1x64xf32, #tpu.memory_space<vmem>>, %arg8: memref<1x64xf32, #tpu.memory_space<vmem>>, %arg9: memref<1x1xf32, #tpu.memory_space<vmem>>, %arg10: memref<128x1xf32, #tpu.memory_space<vmem>>) attributes {dimension_semantics = [#tpu.dimension_semantics<parallel>], iteration_bounds = array<i64: 1>, scalar_prefetch = 0 : i64, scratch_operands = 0 : i64, tpu.core_type = #tpu.core_type<tc>, window_params = [{transform_indices = @transform_0, window_bounds = array<i64: 128, 32>}, {pipeline_mode = #tpu.pipeline_mode<synchronous>, transform_indices = @transform_1, window_bounds = array<i64: 32, 256>}, {pipeline_mode = #tpu.pipeline_mode<synchronous>, transform_indices = @transform_2, window_bounds = array<i64: 1, 256>}, {pipeline_mode = #tpu.pipeline_mode<synchronous>, transform_indices = @transform_3, window_bounds = array<i64: 256, 128>}, {pipeline_mode = #tpu.pipeline_mode<synchronous>, transform_indices = @transform_4, window_bounds = array<i64: 1, 128>}, {pipeline_mode = #tpu.pipeline_mode<synchronous>, transform_indices = @transform_5, window_bounds = array<i64: 128, 64>}, {pipeline_mode = #tpu.pipeline_mode<synchronous>, transform_indices = @transform_6, window_bounds = array<i64: 1, 64>}, {pipeline_mode = #tpu.pipeline_mode<synchronous>, transform_indices = @transform_7, window_bounds = array<i64: 1, 64>}, {pipeline_mode = #tpu.pipeline_mode<synchronous>, transform_indices = @transform_8, window_bounds = array<i64: 1, 1>}, {transform_indices = @transform_9, window_bounds = array<i64: 128, 1>}]} {
    %c0 = arith.constant 0 : index
    %c0_0 = arith.constant 0 : index
    %0 = vector.load %arg1[%c0, %c0_0] : memref<128x32xf32, #tpu.memory_space<vmem>>, vector<128x32xf32>
    %c0_1 = arith.constant 0 : index
    %c0_2 = arith.constant 0 : index
    %1 = vector.load %arg2[%c0_1, %c0_2] : memref<32x256xf32, #tpu.memory_space<vmem>>, vector<32x256xf32>
    %cst = arith.constant dense<0.000000e+00> : vector<128x256xf32>
    %2 = tpu.matmul %0, %1, %cst {dimension_numbers = #tpu.dot_dimension_numbers<[1], [0], [0], [1], [0, 0, 1, 1], [], []>, precision = #tpu.contract_precision<fp32>} : vector<128x32xf32>, vector<32x256xf32>, vector<128x256xf32> -> vector<128x256xf32>
    %c0_3 = arith.constant 0 : index
    %c0_4 = arith.constant 0 : index
    %3 = vector.load %arg3[%c0_3, %c0_4] : memref<1x256xf32, #tpu.memory_space<vmem>>, vector<1x256xf32>
    %4 = vector.broadcast %3 : vector<1x256xf32> to vector<128x256xf32>
    %5 = arith.addf %2, %4 : vector<128x256xf32>
    %cst_5 = arith.constant 0.000000e+00 : f32
    %6 = vector.broadcast %cst_5 : f32 to vector<128x256xf32>
    %7 = arith.maximumf %5, %6 : vector<128x256xf32>
    %c0_6 = arith.constant 0 : index
    %c0_7 = arith.constant 0 : index
    %8 = vector.load %arg4[%c0_6, %c0_7] : memref<256x128xf32, #tpu.memory_space<vmem>>, vector<256x128xf32>
    %cst_8 = arith.constant dense<0.000000e+00> : vector<128x128xf32>
    %9 = tpu.matmul %7, %8, %cst_8 {dimension_numbers = #tpu.dot_dimension_numbers<[1], [0], [0], [1], [0, 0, 1, 1], [], []>, precision = #tpu.contract_precision<fp32>} : vector<128x256xf32>, vector<256x128xf32>, vector<128x128xf32> -> vector<128x128xf32>
    %c0_9 = arith.constant 0 : index
    %c0_10 = arith.constant 0 : index
    %10 = vector.load %arg5[%c0_9, %c0_10] : memref<1x128xf32, #tpu.memory_space<vmem>>, vector<1x128xf32>
    %11 = vector.broadcast %10 : vector<1x128xf32> to vector<128x128xf32>
    %12 = arith.addf %9, %11 : vector<128x128xf32>
    %cst_11 = arith.constant 0.000000e+00 : f32
    %13 = vector.broadcast %cst_11 : f32 to vector<128x128xf32>
    %14 = arith.maximumf %12, %13 : vector<128x128xf32>
    %c0_12 = arith.constant 0 : index
    %c0_13 = arith.constant 0 : index
    %15 = vector.load %arg6[%c0_12, %c0_13] : memref<128x64xf32, #tpu.memory_space<vmem>>, vector<128x64xf32>
    %cst_14 = arith.constant dense<0.000000e+00> : vector<128x64xf32>
    %16 = tpu.matmul %14, %15, %cst_14 {dimension_numbers = #tpu.dot_dimension_numbers<[1], [0], [0], [1], [0, 0, 1, 1], [], []>, precision = #tpu.contract_precision<fp32>} : vector<128x128xf32>, vector<128x64xf32>, vector<128x64xf32> -> vector<128x64xf32>
    %c0_15 = arith.constant 0 : index
    %c0_16 = arith.constant 0 : index
    %17 = vector.load %arg7[%c0_15, %c0_16] : memref<1x64xf32, #tpu.memory_space<vmem>>, vector<1x64xf32>
    %18 = vector.broadcast %17 : vector<1x64xf32> to vector<128x64xf32>
    %19 = arith.addf %16, %18 : vector<128x64xf32>
    %cst_17 = arith.constant 0.000000e+00 : f32
    %20 = vector.broadcast %cst_17 : f32 to vector<128x64xf32>
    %21 = arith.maximumf %19, %20 : vector<128x64xf32>
    %c0_18 = arith.constant 0 : index
    %c0_19 = arith.constant 0 : index
    %22 = vector.load %arg8[%c0_18, %c0_19] : memref<1x64xf32, #tpu.memory_space<vmem>>, vector<1x64xf32>
    %23 = vector.broadcast %22 : vector<1x64xf32> to vector<128x64xf32>
    %24 = arith.mulf %21, %23 : vector<128x64xf32>
    %cst_20 = arith.constant dense<0.000000e+00> : vector<128xf32>
    %25 = vector.multi_reduction <add>, %24, %cst_20 [1] : vector<128x64xf32> to vector<128xf32>
    %26 = vector.shape_cast %25 : vector<128xf32> to vector<128x1xf32>
    %c0_21 = arith.constant 0 : index
    %c0_22 = arith.constant 0 : index
    %27 = vector.load %arg9[%c0_21, %c0_22] : memref<1x1xf32, #tpu.memory_space<vmem>>, vector<1x1xf32>
    %28 = vector.broadcast %27 : vector<1x1xf32> to vector<128x1xf32>
    %29 = arith.addf %26, %28 : vector<128x1xf32>
    %c0_23 = arith.constant 0 : index
    %c0_24 = arith.constant 0 : index
    %30 = vector.load %arg10[%c0_23, %c0_24] : memref<128x1xf32, #tpu.memory_space<vmem>>, vector<128x1xf32>
    tpu.vector_store %arg10[%c0_23, %c0_24], %29 {strides = array<i32>} : memref<128x1xf32, #tpu.memory_space<vmem>>, vector<128x1xf32>,
    return
  }
  func.func @transform_0(%arg0: i32) -> (i32, i32) {
    %c0_i32 = arith.constant 0 : i32
    %c0_i32_0 = arith.constant 0 : i32
    return %arg0, %c0_i32 : i32, i32
  }
  func.func @transform_1(%arg0: i32) -> (i32, i32) {
    %c0_i32 = arith.constant 0 : i32
    %c0_i32_0 = arith.constant 0 : i32
    %c0_i32_1 = arith.constant 0 : i32
    return %c0_i32, %c0_i32_0 : i32, i32
  }
  func.func @transform_2(%arg0: i32) -> (i32, i32) {
    %c0_i32 = arith.constant 0 : i32
    %c0_i32_0 = arith.constant 0 : i32
    %c0_i32_1 = arith.constant 0 : i32
    return %c0_i32, %c0_i32_0 : i32, i32
  }
  func.func @transform_3(%arg0: i32) -> (i32, i32) {
    %c0_i32 = arith.constant 0 : i32
    %c0_i32_0 = arith.constant 0 : i32
    %c0_i32_1 = arith.constant 0 : i32
    return %c0_i32, %c0_i32_0 : i32, i32
  }
  func.func @transform_4(%arg0: i32) -> (i32, i32) {
    %c0_i32 = arith.constant 0 : i32
    %c0_i32_0 = arith.constant 0 : i32
    %c0_i32_1 = arith.constant 0 : i32
    return %c0_i32, %c0_i32_0 : i32, i32
  }
  func.func @transform_5(%arg0: i32) -> (i32, i32) {
    %c0_i32 = arith.constant 0 : i32
    %c0_i32_0 = arith.constant 0 : i32
    %c0_i32_1 = arith.constant 0 : i32
    return %c0_i32, %c0_i32_0 : i32, i32
  }
  func.func @transform_6(%arg0: i32) -> (i32, i32) {
    %c0_i32 = arith.constant 0 : i32
    %c0_i32_0 = arith.constant 0 : i32
    %c0_i32_1 = arith.constant 0 : i32
    return %c0_i32, %c0_i32_0 : i32, i32
  }
  func.func @transform_7(%arg0: i32) -> (i32, i32) {
    %c0_i32 = arith.constant 0 : i32
    %c0_i32_0 = arith.constant 0 : i32
    %c0_i32_1 = arith.constant 0 : i32
    return %c0_i32, %c0_i32_0 : i32, i32
  }
  func.func @transform_8(%arg0: i32) -> (i32, i32) {
    %c0_i32 = arith.constant 0 : i32
    %c0_i32_0 = arith.constant 0 : i32
    %c0_i32_1 = arith.constant 0 : i32
    return %c0_i32, %c0_i32_0 : i32, i32
  }
  func.func @transform_9(%arg0: i32) -> (i32, i32) {
    %c0_i32 = arith.constant 0 : i32
    %c0_i32_0 = arith.constant 0 : i32
    return %arg0, %c0_i32 : i32, i32
  }
}

</mosaic_0001>

<llo_original>
// kernel: tpu_custom_call.1
$region0: #{tpu_custom_call.1}
  #allocation0 [shape = 'u32[]', space=smem, size = 0x4, offset = 0x4, fixed_abs, tag = 'smem constant byte address 0x4 - core index']
  #allocation1 [shape = 'u32[144,128]{1,0:T(1,128)}', space=vmem, size = 0x12000, scoped, tag = 'internal scratch']
  #allocation2 [shape = 'f32[1,1]{1,0:T(1,128)S(1)}', space=vmem, size = 0x200, scoped, tag = 'scoped memory for tpu_custom_call.1']
  %s0 = inlined_call_operand.vmem [shape: f32[128,32], index: 0, kind: input, shape index: {}]
  %s1 = inlined_call_operand.hbm [shape: f32[32,256], index: 1, kind: input, shape index: {}]
  %s2 = inlined_call_operand.vmem [shape: f32[1,256], index: 2, kind: input, shape index: {}]
  %s3 = inlined_call_operand.vmem [shape: f32[256,128], index: 3, kind: input, shape index: {}]
  %s4 = inlined_call_operand.vmem [shape: f32[1,128], index: 4, kind: input, shape index: {}]
  %s5 = inlined_call_operand.vmem [shape: f32[128,64], index: 5, kind: input, shape index: {}]
  %s6 = inlined_call_operand.vmem [shape: f32[1,64], index: 6, kind: input, shape index: {}]
  %s7 = inlined_call_operand.vmem [shape: f32[1,64], index: 7, kind: input, shape index: {}]
  %s8 = inlined_call_operand.<no memory space> [shape: f32[1,1], index: 8, kind: input, shape index: {}]
  %s9 = inlined_call_operand.hbm [shape: f32[1,128], index: 9, kind: output, shape index: {}]
  %s10 = sld [smem:[#allocation0]]
  $region50: #{tpu_custom_call.1} parent=0
    _
  %s12 = ssub.s32 1, %s10
  %s13 = scalar_select 0, %s12, %s10
  %v14 = vstv %s8
  %15 = vst [vmem:[#allocation2] sm:$0x1] %v14
  $region1: #{tpu_custom_call.1} parent=0
    #allocation3 [shape = 'u8[32768]{0}', space=vmem, size = 0x8000, scoped, tag = 'input window, operand 1, single buffered']
    #allocation4 [shape = 's32[1]{0}', space=sflag, size = 0x4, scoped, tag = 'scoped memory for tpu_custom_call.1']
    #allocation5 [shape = 's32[1]{0}', space=sflag, size = 0x4, scoped, tag = 'scoped memory for tpu_custom_call.1']
    #allocation6 [shape = 'u8[512]{0}', space=vmem, size = 0x400, scoped, tag = 'output window, operand 0, single buffered']
    %16 = vsyncpa [#allocation4], 0
    %17 = vsyncpa [#allocation5], 0
    // Predicated region
    $region2: #{tpu_custom_call.1} parent=1 // pred_check
      _
    $region3: #{tpu_custom_call.1} parent=1 // pred_check_branch
      %19 = sbr.rel (0) target = $region5
    $region4: #{tpu_custom_call.1} parent=1 // pred_region
      _
    $region5: #{tpu_custom_call.1} parent=1 // pred_fallthru
      _
    // Predicated region
    $region6: #{tpu_custom_call.1} parent=1 // pred_check
      _
    $region7: #{tpu_custom_call.1} parent=1 // pred_check_branch
      %21 = sbr.rel (0) target = $region9
    $region8: #{tpu_custom_call.1} parent=1 // pred_region
      %s23 = ssub.s32 1024, 1024
      %24 = vsyncadd [#allocation4], %s23
      %s25 = sshll.u32 [#allocation3], 4
      %s26 = int_to_ptr.vmem [resolvable:$true] %s25
      %31 = dma.hbm_to_vmem [thread:$0]  %s1, 1024, %s26, [#allocation4], 256, 256, 16
    $region9: #{tpu_custom_call.1} parent=1 // pred_fallthru
      _
    // Predicated region
    $region10: #{tpu_custom_call.1} parent=1 // pred_check
      _
    $region11: #{tpu_custom_call.1} parent=1 // pred_check_branch
      %33 = sbr.rel (0) target = $region13
    $region12: #{tpu_custom_call.1} parent=1 // pred_region
      _
    $region13: #{tpu_custom_call.1} parent=1 // pred_fallthru
      _
    // Predicated region
    $region14: #{tpu_custom_call.1} parent=1 // pred_check
      _
    $region15: #{tpu_custom_call.1} parent=1 // pred_check_branch
      %35 = sbr.rel (0) target = $region17
    $region16: #{tpu_custom_call.1} parent=1 // pred_region
      _
    $region17: #{tpu_custom_call.1} parent=1 // pred_fallthru
      _
    // Predicated region
    $region18: #{tpu_custom_call.1} parent=1 // pred_check
      _
    $region19: #{tpu_custom_call.1} parent=1 // pred_check_branch
      %37 = sbr.rel (0) target = $region21
    $region20: #{tpu_custom_call.1} parent=1 // pred_region
      _
    $region21: #{tpu_custom_call.1} parent=1 // pred_fallthru
      _
    // Predicated region
    $region22: #{tpu_custom_call.1} parent=1 // pred_check
      _
    $region23: #{tpu_custom_call.1} parent=1 // pred_check_branch
      %39 = sbr.rel (0) target = $region25
    $region24: #{tpu_custom_call.1} parent=1 // pred_region
      _
    $region25: #{tpu_custom_call.1} parent=1 // pred_fallthru
      _
    // Predicated region
    $region26: #{tpu_custom_call.1} parent=1 // pred_check
      _
    $region27: #{tpu_custom_call.1} parent=1 // pred_check_branch
      %41 = sbr.rel (0) target = $region29
    $region28: #{tpu_custom_call.1} parent=1 // pred_region
      _
    $region29: #{tpu_custom_call.1} parent=1 // pred_fallthru
      _
    // Predicated region
    $region30: #{tpu_custom_call.1} parent=1 // pred_check
      _
    $region31: #{tpu_custom_call.1} parent=1 // pred_check_branch
      %43 = sbr.rel (0) target = $region33
    $region32: #{tpu_custom_call.1} parent=1 // pred_region
      _
    $region33: #{tpu_custom_call.1} parent=1 // pred_fallthru
      _
    // Predicated region
    $region34: #{tpu_custom_call.1} parent=1 // pred_check
      _
    $region35: #{tpu_custom_call.1} parent=1 // pred_check_branch
      %45 = sbr.rel (0) target = $region37
    $region36: #{tpu_custom_call.1} parent=1 // pred_region
      _
    $region37: #{tpu_custom_call.1} parent=1 // pred_fallthru
      _
    // Predicated region
    $region38: #{tpu_custom_call.1} parent=1 // pred_check
      _
    $region39: #{tpu_custom_call.1} parent=1 // pred_check_branch
      %47 = sbr.rel (0) target = $region41
    $region40: #{tpu_custom_call.1} parent=1 // pred_region
      %48 = dma.done [#allocation4], 1024
    $region41: #{tpu_custom_call.1} parent=1 // pred_fallthru
      _
    %v49 = vld [vmem:[%s0] sm:$0xff]
    %v50 = vld [vmem:[%s0 + $0x8] sm:$0xff]
    %v51 = vld [vmem:[%s0 + $0x10] sm:$0xff]
    %v52 = vld [vmem:[%s0 + $0x18] sm:$0xff]
    %v53 = vld [vmem:[%s0 + $0x20] sm:$0xff]
    %v54 = vld [vmem:[%s0 + $0x28] sm:$0xff]
    %v55 = vld [vmem:[%s0 + $0x30] sm:$0xff]
    %v56 = vld [vmem:[%s0 + $0x38] sm:$0xff]
    %v57 = vld [vmem:[%s0 + $0x40] sm:$0xff]
    %v58 = vld [vmem:[%s0 + $0x48] sm:$0xff]
    %v59 = vld [vmem:[%s0 + $0x50] sm:$0xff]
    %v60 = vld [vmem:[%s0 + $0x58] sm:$0xff]
    %v61 = vld [vmem:[%s0 + $0x60] sm:$0xff]
    %v62 = vld [vmem:[%s0 + $0x68] sm:$0xff]
    %v63 = vld [vmem:[%s0 + $0x70] sm:$0xff]
    %v64 = vld [vmem:[%s0 + $0x78] sm:$0xff]
    %v65 = vld [vmem:[#allocation3] sm:$0xff]
    %v66 = vld [vmem:[#allocation3 + $0x8] sm:$0xff]
    %v67 = vld [vmem:[#allocation3 + $0x10] sm:$0xff]
    %v68 = vld [vmem:[#allocation3 + $0x18] sm:$0xff]
    %v69 = vld [vmem:[#allocation3 + $0x20] sm:$0xff]
    %v70 = vld [vmem:[#allocation3 + $0x28] sm:$0xff]
    %v71 = vld [vmem:[#allocation3 + $0x30] sm:$0xff]
    %v72 = vld [vmem:[#allocation3 + $0x38] sm:$0xff]
    %v73 = vld [vmem:[%s2] sm:$0x3]
    %v75 = vlaneseq
    %v76 = vshrl.u32 %v75, 7
    %v77 = vsub.s32 0, %v76
    %v78 = vrot.slane %v73, %v77
    %v79 = vlaneseq
    %v80 = vshrl.u32 %v79, 7
    %v81 = vsub.s32 1, %v80
    %v82 = vrot.slane %v73, %v81
    %vm85 = vcmask 261120
    %v87 = vsel %vm85, %v49, 0
    %v90 = vsel %vm85, %v50, 0
    %v93 = vsel %vm85, %v51, 0
    %v96 = vsel %vm85, %v52, 0
    %v99 = vsel %vm85, %v53, 0
    %v102 = vsel %vm85, %v54, 0
    %v105 = vsel %vm85, %v55, 0
    %v108 = vsel %vm85, %v56, 0
    %v111 = vsel %vm85, %v57, 0
    %v114 = vsel %vm85, %v58, 0
    %v117 = vsel %vm85, %v59, 0
    %v120 = vsel %vm85, %v60, 0
    %v123 = vsel %vm85, %v61, 0
    %v126 = vsel %vm85, %v62, 0
    %v129 = vsel %vm85, %v63, 0
    %v132 = vsel %vm85, %v64, 0
    %v134 = vand.u32 %v66, 4294901760
    %135 = vmatprep.subr.mxu0 %v134
    %v136 = vand.u32 %v65, 4294901760
    %137 = vmatpush1.msra.mxu0 %v136
    %v138 = vand.u32 %v68, 4294901760
    %139 = vmatprep.subr.mxu0 %v138
    %v140 = vand.u32 %v67, 4294901760
    %141 = vmatpush1.msra.mxu0 %v140
    %v142 = vand.u32 %v70, 4294901760
    %143 = vmatprep.subr.mxu0 %v142
    %v144 = vand.u32 %v69, 4294901760
    %145 = vmatpush1.msra.mxu0 %v144
    %v146 = vand.u32 %v72, 4294901760
    %147 = vmatprep.subr.mxu0 %v146
    %v148 = vand.u32 %v71, 4294901760
    %149 = vmatpush1.msra.mxu0 %v148
    %150 = vmatprep.subr.mxu0 0.0
    %151 = vmatpush1.msra.mxu0 0.0
    %152 = vmatprep.subr.mxu0 0.0
    %153 = vmatpush1.msra.mxu0 0.0
    %154 = vmatprep.subr.mxu0 0.0
    %155 = vmatpush1.msra.mxu0 0.0
    %156 = vmatprep.subr.mxu0 0.0
    %157 = vmatpush1.msra.mxu0 0.0
    %158 = vmatprep.subr.mxu0 0.0
    %159 = vmatpush1.msra.mxu0 0.0
    %160 = vmatprep.subr.mxu0 0.0
    %161 = vmatpush1.msra.mxu0 0.0
    %162 = vmatprep.subr.mxu0 0.0
    %163 = vmatpush1.msra.mxu0 0.0
    %164 = vmatprep.subr.mxu0 0.0
    %165 = vmatpush1.msra.mxu0 0.0
    %166 = vmatprep.subr.mxu0 0.0
    %167 = vmatpush1.msra.mxu0 0.0
    %168 = vmatprep.subr.mxu0 0.0
    %169 = vmatpush1.msra.mxu0 0.0
    %170 = vmatprep.subr.mxu0 0.0
    %171 = vmatpush1.msra.mxu0 0.0
    %172 = vmatprep.subr.mxu0 0.0
    %173 = vmatpush1.msra.mxu0 0.0
    %174 = vmatprep.subr.mxu0 0.0
    %175 = vmatpush1.msra.mxu0 0.0
    %176 = vmatprep.subr.mxu0 0.0
    %177 = vmatpush1.msra.mxu0 0.0
    %178 = vmatprep.subr.mxu0 0.0
    %179 = vmatpush1.msra.mxu0 0.0
    %180 = vmatprep.subr.mxu0 0.0
    %181 = vmatpush1.msra.mxu0 0.0
    %182 = vmatprep.subr.mxu0 0.0
    %183 = vmatpush1.msra.mxu0 0.0
    %184 = vmatprep.subr.mxu0 0.0
    %185 = vmatpush1.msra.mxu0 0.0
    %186 = vmatprep.subr.mxu0 0.0
    %187 = vmatpush1.msra.mxu0 0.0
    %188 = vmatprep.subr.mxu0 0.0
    %189 = vmatpush1.msra.mxu0 0.0
    %190 = vmatprep.subr.mxu0 0.0
    %191 = vmatpush1.msra.mxu0 0.0
    %192 = vmatprep.subr.mxu0 0.0
    %193 = vmatpush1.msra.mxu0 0.0
    %194 = vmatprep.subr.mxu0 0.0
    %195 = vmatpush1.msra.mxu0 0.0
    %196 = vmatprep.subr.mxu0 0.0
    %197 = vmatpush1.msra.mxu0 0.0
    %198 = vmatprep.subr.mxu0 0.0
    %199 = vmatpush1.msra.mxu0 0.0
    %200 = vmatprep.subr.mxu0 0.0
    %201 = vmatpush1.msra.mxu0 0.0
    %202 = vmatprep.subr.mxu0 0.0
    %203 = vmatpush1.msra.mxu0 0.0
    %204 = vmatprep.subr.mxu0 0.0
    %205 = vmatpush1.msra.mxu0 0.0
    %206 = vmatprep.mubr.f32.mxu0 0.0
    %v207 = vand.u32 %v87, 4294901760
    %v208 = vsub.f32 %v87, %v207
    %v209 = vand.u32 %v208, 4294901760
    %v210 = vsub.f32 %v208, %v209
    %v211 = vand.u32 %v210, 4294901760
    %212 = vmatmul.mubr.f32.gmra.mrb[0].mxu0 %v211
    %v213 = vpop.f32.mrb[0].mxu0
    %v214 = vadd.f32 %v78, %v213
    %v215 = vpop.f32.mrb[0].mxu0
    %v216 = vadd.f32 %v82, %v215
    %217 = vmatprep.mubr.f32.mxu0 0.0
    %v218 = vand.u32 %v90, 4294901760
    %v219 = vsub.f32 %v90, %v218
    %v220 = vand.u32 %v219, 4294901760
    %v221 = vsub.f32 %v219, %v220
    %v222 = vand.u32 %v221, 4294901760
    %223 = vmatmul.mubr.f32.gmra.mrb[0].mxu0 %v222
    %v224 = vpop.f32.mrb[0].mxu0
    %v225 = vadd.f32 %v78, %v224
    %v226 = vpop.f32.mrb[0].mxu0
    %v227 = vadd.f32 %v82, %v226
    %228 = vmatprep.mubr.f32.mxu0 0.0
    %v229 = vand.u32 %v93, 4294901760
    %v230 = vsub.f32 %v93, %v229
    %v231 = vand.u32 %v230, 4294901760
    %v232 = vsub.f32 %v230, %v231
    %v233 = vand.u32 %v232, 4294901760
    %234 = vmatmul.mubr.f32.gmra.mrb[0].mxu0 %v233
    %v235 = vpop.f32.mrb[0].mxu0
    %v236 = vadd.f32 %v78, %v235
    %v237 = vpop.f32.mrb[0].mxu0
    %v238 = vadd.f32 %v82, %v237
    %239 = vmatprep.mubr.f32.mxu0 0.0
    %v240 = vand.u32 %v96, 4294901760
    %v241 = vsub.f32 %v96, %v240
    %v242 = vand.u32 %v241, 4294901760
    %v243 = vsub.f32 %v241, %v242
    %v244 = vand.u32 %v243, 4294901760
    %245 = vmatmul.mubr.f32.gmra.mrb[0].mxu0 %v244
    %v246 = vpop.f32.mrb[0].mxu0
    %v247 = vadd.f32 %v78, %v246
    %v248 = vpop.f32.mrb[0].mxu0
    %v249 = vadd.f32 %v82, %v248
    %250 = vmatprep.mubr.f32.mxu0 0.0
    %v251 = vand.u32 %v99, 4294901760
    %v252 = vsub.f32 %v99, %v251
    %v253 = vand.u32 %v252, 4294901760
    %v254 = vsub.f32 %v252, %v253
    %v255 = vand.u32 %v254, 4294901760
    %256 = vmatmul.mubr.f32.gmra.mrb[0].mxu0 %v255
    %v257 = vpop.f32.mrb[0].mxu0
    %v258 = vadd.f32 %v78, %v257
    %v259 = vpop.f32.mrb[0].mxu0
    %v260 = vadd.f32 %v82, %v259
    %261 = vmatprep.mubr.f32.mxu0 0.0
    %v262 = vand.u32 %v102, 4294901760
    %v263 = vsub.f32 %v102, %v262
    %v264 = vand.u32 %v263, 4294901760
    %v265 = vsub.f32 %v263, %v264
    %v266 = vand.u32 %v265, 4294901760
    %267 = vmatmul.mubr.f32.gmra.mrb[0].mxu0 %v266
    %v268 = vpop.f32.mrb[0].mxu0
    %v269 = vadd.f32 %v78, %v268
    %v270 = vpop.f32.mrb[0].mxu0
    %v271 = vadd.f32 %v82, %v270
    %272 = vmatprep.mubr.f32.mxu0 0.0
    %v273 = vand.u32 %v105, 4294901760
    %v274 = vsub.f32 %v105, %v273
    %v275 = vand.u32 %v274, 4294901760
    %v276 = vsub.f32 %v274, %v275
    %v277 = vand.u32 %v276, 4294901760
    %278 = vmatmul.mubr.f32.gmra.mrb[0].mxu0 %v277
    %v279 = vpop.f32.mrb[0].mxu0
    %v280 = vadd.f32 %v78, %v279
    %v281 = vpop.f32.mrb[0].mxu0
    %v282 = vadd.f32 %v82, %v281
    %283 = vmatprep.mubr.f32.mxu0 0.0
    %v284 = vand.u32 %v108, 4294901760
    %v285 = vsub.f32 %v108, %v284
    %v286 = vand.u32 %v285, 4294901760
    %v287 = vsub.f32 %v285, %v286
    %v288 = vand.u32 %v287, 4294901760
    %289 = vmatmul.mubr.f32.gmra.mrb[0].mxu0 %v288
    %v290 = vpop.f32.mrb[0].mxu0
    %v291 = vadd.f32 %v78, %v290
    %v292 = vpop.f32.mrb[0].mxu0
    %v293 = vadd.f32 %v82, %v292
    %294 = vmatprep.mubr.f32.mxu0 0.0
    %v295 = vand.u32 %v111, 4294901760
    %v296 = vsub.f32 %v111, %v295
    %v297 = vand.u32 %v296, 4294901760
    %v298 = vsub.f32 %v296, %v297
    %v299 = vand.u32 %v298, 4294901760
    %300 = vmatmul.mubr.f32.gmra.mrb[0].mxu0 %v299
    %v301 = vpop.f32.mrb[0].mxu0
    %v302 = vadd.f32 %v78, %v301
    %v303 = vpop.f32.mrb[0].mxu0
    %v304 = vadd.f32 %v82, %v303
    %305 = vmatprep.mubr.f32.mxu0 0.0
    %v306 = vand.u32 %v114, 4294901760
    %v307 = vsub.f32 %v114, %v306
    %v308 = vand.u32 %v307, 4294901760
    %v309 = vsub.f32 %v307, %v308
    %v310 = vand.u32 %v309, 4294901760
    %311 = vmatmul.mubr.f32.gmra.mrb[0].mxu0 %v310
    %v312 = vpop.f32.mrb[0].mxu0
    %v313 = vadd.f32 %v78, %v312
    %v314 = vpop.f32.mrb[0].mxu0
    %v315 = vadd.f32 %v82, %v314
    %316 = vmatprep.mubr.f32.mxu0 0.0
    %v317 = vand.u32 %v117, 4294901760
    %v318 = vsub.f32 %v117, %v317
    %v319 = vand.u32 %v318, 4294901760
    %v320 = vsub.f32 %v318, %v319
    %v321 = vand.u32 %v320, 4294901760
    %322 = vmatmul.mubr.f32.gmra.mrb[0].mxu0 %v321
    %v323 = vpop.f32.mrb[0].mxu0
    %v324 = vadd.f32 %v78, %v323
    %v325 = vpop.f32.mrb[0].mxu0
    %v326 = vadd.f32 %v82, %v325
    %327 = vmatprep.mubr.f32.mxu0 0.0
    %v328 = vand.u32 %v120, 4294901760
    %v329 = vsub.f32 %v120, %v328
    %v330 = vand.u32 %v329, 4294901760
    %v331 = vsub.f32 %v329, %v330
    %v332 = vand.u32 %v331, 4294901760
    %333 = vmatmul.mubr.f32.gmra.mrb[0].mxu0 %v332
    %v334 = vpop.f32.mrb[0].mxu0
    %v335 = vadd.f32 %v78, %v334
    %v336 = vpop.f32.mrb[0].mxu0
    %v337 = vadd.f32 %v82, %v336
    %338 = vmatprep.mubr.f32.mxu0 0.0
    %v339 = vand.u32 %v123, 4294901760
    %v340 = vsub.f32 %v123, %v339
    %v341 = vand.u32 %v340, 4294901760
    %v342 = vsub.f32 %v340, %v341
    %v343 = vand.u32 %v342, 4294901760
    %344 = vmatmul.mubr.f32.gmra.mrb[0].mxu0 %v343
    %v345 = vpop.f32.mrb[0].mxu0
    %v346 = vadd.f32 %v78, %v345
    %v347 = vpop.f32.mrb[0].mxu0
    %v348 = vadd.f32 %v82, %v347
    %349 = vmatprep.mubr.f32.mxu0 0.0
    %v350 = vand.u32 %v126, 4294901760
    %v351 = vsub.f32 %v126, %v350
    %v352 = vand.u32 %v351, 4294901760
    %v353 = vsub.f32 %v351, %v352
    %v354 = vand.u32 %v353, 4294901760
    %355 = vmatmul.mubr.f32.gmra.mrb[0].mxu0 %v354
    %v356 = vpop.f32.mrb[0].mxu0
    %v357 = vadd.f32 %v78, %v356
    %v358 = vpop.f32.mrb[0].mxu0
    %v359 = vadd.f32 %v82, %v358
    %360 = vmatprep.mubr.f32.mxu0 0.0
    %v361 = vand.u32 %v129, 4294901760
    %v362 = vsub.f32 %v129, %v361
    %v363 = vand.u32 %v362, 4294901760
    %v364 = vsub.f32 %v362, %v363
    %v365 = vand.u32 %v364, 4294901760
    %366 = vmatmul.mubr.f32.gmra.mrb[0].mxu0 %v365
    %v367 = vpop.f32.mrb[0].mxu0
    %v368 = vadd.f32 %v78, %v367
    %v369 = vpop.f32.mrb[0].mxu0
    %v370 = vadd.f32 %v82, %v369
    %371 = vmatprep.mubr.f32.mxu0 0.0
    %v372 = vand.u32 %v132, 4294901760
    %v373 = vsub.f32 %v132, %v372
    %v374 = vand.u32 %v373, 4294901760
    %v375 = vsub.f32 %v373, %v374
    %v376 = vand.u32 %v375, 4294901760
    %377 = vmatmul.mubr.f32.gmra.mrb[0].mxu0 %v376
    %v378 = vpop.f32.mrb[0].mxu0
    %v379 = vadd.f32 %v78, %v378
    %v380 = vpop.f32.mrb[0].mxu0
    %v381 = vadd.f32 %v82, %v380
    %382 = vdwg.mxu0
    %v383 = vand.u32 %v66, 4294901760
    %v384 = vsub.f32 %v66, %v383
    %v385 = vand.u32 %v384, 4294901760
    %v386 = vsub.f32 %v384, %v385
    %v387 = vand.u32 %v386, 4294901760
    %388 = vmatprep.subr.mxu0 %v387
    %v389 = vand.u32 %v65, 4294901760
    %v390 = vsub.f32 %v65, %v389
    %v391 = vand.u32 %v390, 4294901760
    %v392 = vsub.f32 %v390, %v391
    %v393 = vand.u32 %v392, 4294901760
    %394 = vmatpush1.msra.mxu0 %v393
    %v395 = vand.u32 %v68, 4294901760
    %v396 = vsub.f32 %v68, %v395
    %v397 = vand.u32 %v396, 4294901760
    %v398 = vsub.f32 %v396, %v397
    %v399 = vand.u32 %v398, 4294901760
    %400 = vmatprep.subr.mxu0 %v399
    %v401 = vand.u32 %v67, 4294901760
    %v402 = vsub.f32 %v67, %v401
    %v403 = vand.u32 %v402, 4294901760
    %v404 = vsub.f32 %v402, %v403
    %v405 = vand.u32 %v404, 4294901760
    %406 = vmatpush1.msra.mxu0 %v405
    %v407 = vand.u32 %v70, 4294901760
    %v408 = vsub.f32 %v70, %v407
    %v409 = vand.u32 %v408, 4294901760
    %v410 = vsub.f32 %v408, %v409
    %v411 = vand.u32 %v410, 4294901760
    %412 = vmatprep.subr.mxu0 %v411
    %v413 = vand.u32 %v69, 4294901760
    %v414 = vsub.f32 %v69, %v413
    %v415 = vand.u32 %v414, 4294901760
    %v416 = vsub.f32 %v414, %v415
    %v417 = vand.u32 %v416, 4294901760
    %418 = vmatpush1.msra.mxu0 %v417
    %v419 = vand.u32 %v72, 4294901760
    %v420 = vsub.f32 %v72, %v419
    %v421 = vand.u32 %v420, 4294901760
    %v422 = vsub.f32 %v420, %v421
    %v423 = vand.u32 %v422, 4294901760
    %424 = vmatprep.subr.mxu0 %v423
    %v425 = vand.u32 %v71, 4294901760
    %v426 = vsub.f32 %v71, %v425
    %v427 = vand.u32 %v426, 4294901760
    %v428 = vsub.f32 %v426, %v427
    %v429 = vand.u32 %v428, 4294901760
    %430 = vmatpush1.msra.mxu0 %v429
    %431 = vmatprep.subr.mxu0 0.0
    %432 = vmatpush1.msra.mxu0 0.0
    %433 = vmatprep.subr.mxu0 0.0
    %434 = vmatpush1.msra.mxu0 0.0
    %435 = vmatprep.subr.mxu0 0.0
    %436 = vmatpush1.msra.mxu0 0.0
    %437 = vmatprep.subr.mxu0 0.0
    %438 = vmatpush1.msra.mxu0 0.0
    %439 = vmatprep.subr.mxu0 0.0
    %440 = vmatpush1.msra.mxu0 0.0
    %441 = vmatprep.subr.mxu0 0.0
    %442 = vmatpush1.msra.mxu0 0.0
    %443 = vmatprep.subr.mxu0 0.0
    %444 = vmatpush1.msra.mxu0 0.0
    %445 = vmatprep.subr.mxu0 0.0
    %446 = vmatpush1.msra.mxu0 0.0
    %447 = vmatprep.subr.mxu0 0.0
    %448 = vmatpush1.msra.mxu0 0.0
    %449 = vmatprep.subr.mxu0 0.0
    %450 = vmatpush1.msra.mxu0 0.0
    %451 = vmatprep.subr.mxu0 0.0
    %452 = vmatpush1.msra.mxu0 0.0
    %453 = vmatprep.subr.mxu0 0.0
    %454 = vmatpush1.msra.mxu0 0.0
    %455 = vmatprep.subr.mxu0 0.0
    %456 = vmatpush1.msra.mxu0 0.0
    %457 = vmatprep.subr.mxu0 0.0
    %458 = vmatpush1.msra.mxu0 0.0
    %459 = vmatprep.subr.mxu0 0.0
    %460 = vmatpush1.msra.mxu0 0.0
    %461 = vmatprep.subr.mxu0 0.0
    %462 = vmatpush1.msra.mxu0 0.0
    %463 = vmatprep.subr.mxu0 0.0
    %464 = vmatpush1.msra.mxu0 0.0
    %465 = vmatprep.subr.mxu0 0.0
    %466 = vmatpush1.msra.mxu0 0.0
    %467 = vmatprep.subr.mxu0 0.0
    %468 = vmatpush1.msra.mxu0 0.0
    %469 = vmatprep.subr.mxu0 0.0
    %470 = vmatpush1.msra.mxu0 0.0
    %471 = vmatprep.subr.mxu0 0.0
    %472 = vmatpush1.msra.mxu0 0.0
    %473 = vmatprep.subr.mxu0 0.0
    %474 = vmatpush1.msra.mxu0 0.0
    %475 = vmatprep.subr.mxu0 0.0
    %476 = vmatpush1.msra.mxu0 0.0
    %477 = vmatprep.subr.mxu0 0.0
    %478 = vmatpush1.msra.mxu0 0.0
    %479 = vmatprep.subr.mxu0 0.0
    %480 = vmatpush1.msra.mxu0 0.0
    %481 = vmatprep.subr.mxu0 0.0
    %482 = vmatpush1.msra.mxu0 0.0
    %483 = vmatprep.subr.mxu0 0.0
    %484 = vmatpush1.msra.mxu0 0.0
    %485 = vmatprep.subr.mxu0 0.0
    %486 = vmatpush1.msra.mxu0 0.0
    %487 = vmatprep.mubr.f32.mxu0 0.0
    %v488 = vand.u32 %v87, 4294901760
    %489 = vmatmul.mubr.f32.gmra.mrb[0].mxu0 %v488
    %v490 = vpop.f32.mrb[0].mxu0
    %v491 = vadd.f32 %v214, %v490
    %v492 = vpop.f32.mrb[0].mxu0
    %v493 = vadd.f32 %v216, %v492
    %494 = vmatprep.mubr.f32.mxu0 0.0
    %v495 = vand.u32 %v90, 4294901760
    %496 = vmatmul.mubr.f32.gmra.mrb[0].mxu0 %v495
    %v497 = vpop.f32.mrb[0].mxu0
    %v498 = vadd.f32 %v225, %v497
    %v499 = vpop.f32.mrb[0].mxu0
    %v500 = vadd.f32 %v227, %v499
    %501 = vmatprep.mubr.f32.mxu0 0.0
    %v502 = vand.u32 %v93, 4294901760
    %503 = vmatmul.mubr.f32.gmra.mrb[0].mxu0 %v502
    %v504 = vpop.f32.mrb[0].mxu0
    %v505 = vadd.f32 %v236, %v504
    %v506 = vpop.f32.mrb[0].mxu0
    %v507 = vadd.f32 %v238, %v506
    %508 = vmatprep.mubr.f32.mxu0 0.0
    %v509 = vand.u32 %v96, 4294901760
    %510 = vmatmul.mubr.f32.gmra.mrb[0].mxu0 %v509
    %v511 = vpop.f32.mrb[0].mxu0
    %v512 = vadd.f32 %v247, %v511
    %v513 = vpop.f32.mrb[0].mxu0
    %v514 = vadd.f32 %v249, %v513
    %515 = vmatprep.mubr.f32.mxu0 0.0
    %v516 = vand.u32 %v99, 4294901760
    %517 = vmatmul.mubr.f32.gmra.mrb[0].mxu0 %v516
    %v518 = vpop.f32.mrb[0].mxu0
    %v519 = vadd.f32 %v258, %v518
    %v520 = vpop.f32.mrb[0].mxu0
    %v521 = vadd.f32 %v260, %v520
    %522 = vmatprep.mubr.f32.mxu0 0.0
    %v523 = vand.u32 %v102, 4294901760
    %524 = vmatmul.mubr.f32.gmra.mrb[0].mxu0 %v523
    %v525 = vpop.f32.mrb[0].mxu0
    %v526 = vadd.f32 %v269, %v525
    %v527 = vpop.f32.mrb[0].mxu0
    %v528 = vadd.f32 %v271, %v527
    %529 = vmatprep.mubr.f32.mxu0 0.0
    %v530 = vand.u32 %v105, 4294901760
    %531 = vmatmul.mubr.f32.gmra.mrb[0].mxu0 %v530
    %v532 = vpop.f32.mrb[0].mxu0
    %v533 = vadd.f32 %v280, %v532
    %v534 = vpop.f32.mrb[0].mxu0
    %v535 = vadd.f32 %v282, %v534
    %536 = vmatprep.mubr.f32.mxu0 0.0
    %v537 = vand.u32 %v108, 4294901760
    %538 = vmatmul.mubr.f32.gmra.mrb[0].mxu0 %v537
    %v539 = vpop.f32.mrb[0].mxu0
    %v540 = vadd.f32 %v291, %v539
    %v541 = vpop.f32.mrb[0].mxu0
    %v542 = vadd.f32 %v293, %v541
    %543 = vmatprep.mubr.f32.mxu0 0.0
    %v544 = vand.u32 %v111, 4294901760
    %545 = vmatmul.mubr.f32.gmra.mrb[0].mxu0 %v544
    %v546 = vpop.f32.mrb[0].mxu0
    %v547 = vadd.f32 %v302, %v546
    %v548 = vpop.f32.mrb[0].mxu0
    %v549 = vadd.f32 %v304, %v548
    %550 = vmatprep.mubr.f32.mxu0 0.0
    %v551 = vand.u32 %v114, 4294901760
    %552 = vmatmul.mubr.f32.gmra.mrb[0].mxu0 %v551
    %v553 = vpop.f32.mrb[0].mxu0
    %v554 = vadd.f32 %v313, %v553
    %v555 = vpop.f32.mrb[0].mxu0
    %v556 = vadd.f32 %v315, %v555
    %557 = vmatprep.mubr.f32.mxu0 0.0
    %v558 = vand.u32 %v117, 4294901760
    %559 = vmatmul.mubr.f32.gmra.mrb[0].mxu0 %v558
    %v560 = vpop.f32.mrb[0].mxu0
    %v561 = vadd.f32 %v324, %v560
    %v562 = vpop.f32.mrb[0].mxu0
    %v563 = vadd.f32 %v326, %v562
    %564 = vmatprep.mubr.f32.mxu0 0.0
    %v565 = vand.u32 %v120, 4294901760
    %566 = vmatmul.mubr.f32.gmra.mrb[0].mxu0 %v565
    %v567 = vpop.f32.mrb[0].mxu0
    %v568 = vadd.f32 %v335, %v567
    %v569 = vpop.f32.mrb[0].mxu0
    %v570 = vadd.f32 %v337, %v569
    %571 = vmatprep.mubr.f32.mxu0 0.0
    %v572 = vand.u32 %v123, 4294901760
    %573 = vmatmul.mubr.f32.gmra.mrb[0].mxu0 %v572
    %v574 = vpop.f32.mrb[0].mxu0
    %v575 = vadd.f32 %v346, %v574
    %v576 = vpop.f32.mrb[0].mxu0
    %v577 = vadd.f32 %v348, %v576
    %578 = vmatprep.mubr.f32.mxu0 0.0
    %v579 = vand.u32 %v126, 4294901760
    %580 = vmatmul.mubr.f32.gmra.mrb[0].mxu0 %v579
    %v581 = vpop.f32.mrb[0].mxu0
    %v582 = vadd.f32 %v357, %v581
    %v583 = vpop.f32.mrb[0].mxu0
    %v584 = vadd.f32 %v359, %v583
    %585 = vmatprep.mubr.f32.mxu0 0.0
    %v586 = vand.u32 %v129, 4294901760
    %587 = vmatmul.mubr.f32.gmra.mrb[0].mxu0 %v586
    %v588 = vpop.f32.mrb[0].mxu0
    %v589 = vadd.f32 %v368, %v588
    %v590 = vpop.f32.mrb[0].mxu0
    %v591 = vadd.f32 %v370, %v590
    %592 = vmatprep.mubr.f32.mxu0 0.0
    %v593 = vand.u32 %v132, 4294901760
    %594 = vmatmul.mubr.f32.gmra.mrb[0].mxu0 %v593
    %v595 = vpop.f32.mrb[0].mxu0
    %v596 = vadd.f32 %v379, %v595
    %v597 = vpop.f32.mrb[0].mxu0
    %v598 = vadd.f32 %v381, %v597
    %599 = vdwg.mxu0
    %v600 = vand.u32 %v66, 4294901760
    %v601 = vsub.f32 %v66, %v600
    %602 = vmatprep.subr.mxu0 %v601
    %v603 = vand.u32 %v65, 4294901760
    %v604 = vsub.f32 %v65, %v603
    %605 = vmatpush1.msra.mxu0 %v604
    %v606 = vand.u32 %v68, 4294901760
    %v607 = vsub.f32 %v68, %v606
    %608 = vmatprep.subr.mxu0 %v607
    %v609 = vand.u32 %v67, 4294901760
    %v610 = vsub.f32 %v67, %v609
    %611 = vmatpush1.msra.mxu0 %v610
    %v612 = vand.u32 %v70, 4294901760
    %v613 = vsub.f32 %v70, %v612
    %614 = vmatprep.subr.mxu0 %v613
    %v615 = vand.u32 %v69, 4294901760
    %v616 = vsub.f32 %v69, %v615
    %617 = vmatpush1.msra.mxu0 %v616
    %v618 = vand.u32 %v72, 4294901760
    %v619 = vsub.f32 %v72, %v618
    %620 = vmatprep.subr.mxu0 %v619
    %v621 = vand.u32 %v71, 4294901760
    %v622 = vsub.f32 %v71, %v621
    %623 = vmatpush1.msra.mxu0 %v622
    %624 = vmatprep.subr.mxu0 0.0
    %625 = vmatpush1.msra.mxu0 0.0
    %626 = vmatprep.subr.mxu0 0.0
    %627 = vmatpush1.msra.mxu0 0.0
    %628 = vmatprep.subr.mxu0 0.0
    %629 = vmatpush1.msra.mxu0 0.0
    %630 = vmatprep.subr.mxu0 0.0
    %631 = vmatpush1.msra.mxu0 0.0
    %632 = vmatprep.subr.mxu0 0.0
    %633 = vmatpush1.msra.mxu0 0.0
    %634 = vmatprep.subr.mxu0 0.0
    %635 = vmatpush1.msra.mxu0 0.0
    %636 = vmatprep.subr.mxu0 0.0
    %637 = vmatpush1.msra.mxu0 0.0
    %638 = vmatprep.subr.mxu0 0.0
    %639 = vmatpush1.msra.mxu0 0.0
    %640 = vmatprep.subr.mxu0 0.0
    %641 = vmatpush1.msra.mxu0 0.0
    %642 = vmatprep.subr.mxu0 0.0
    %643 = vmatpush1.msra.mxu0 0.0
    %644 = vmatprep.subr.mxu0 0.0
    %645 = vmatpush1.msra.mxu0 0.0
    %646 = vmatprep.subr.mxu0 0.0
    %647 = vmatpush1.msra.mxu0 0.0
    %648 = vmatprep.subr.mxu0 0.0
    %649 = vmatpush1.msra.mxu0 0.0
    %650 = vmatprep.subr.mxu0 0.0
    %651 = vmatpush1.msra.mxu0 0.0
    %652 = vmatprep.subr.mxu0 0.0
    %653 = vmatpush1.msra.mxu0 0.0
    %654 = vmatprep.subr.mxu0 0.0
    %655 = vmatpush1.msra.mxu0 0.0
    %656 = vmatprep.subr.mxu0 0.0
    %657 = vmatpush1.msra.mxu0 0.0
    %658 = vmatprep.subr.mxu0 0.0
    %659 = vmatpush1.msra.mxu0 0.0
    %660 = vmatprep.subr.mxu0 0.0
    %661 = vmatpush1.msra.mxu0 0.0
    %662 = vmatprep.subr.mxu0 0.0
    %663 = vmatpush1.msra.mxu0 0.0
    %664 = vmatprep.subr.mxu0 0.0
    %665 = vmatpush1.msra.mxu0 0.0
    %666 = vmatprep.subr.mxu0 0.0
    %667 = vmatpush1.msra.mxu0 0.0
    %668 = vmatprep.subr.mxu0 0.0
    %669 = vmatpush1.msra.mxu0 0.0
    %670 = vmatprep.subr.mxu0 0.0
    %671 = vmatpush1.msra.mxu0 0.0
    %672 = vmatprep.subr.mxu0 0.0
    %673 = vmatpush1.msra.mxu0 0.0
    %674 = vmatprep.subr.mxu0 0.0
    %675 = vmatpush1.msra.mxu0 0.0
    %676 = vmatprep.subr.mxu0 0.0
    %677 = vmatpush1.msra.mxu0 0.0
    %678 = vmatprep.subr.mxu0 0.0
    %679 = vmatpush1.msra.mxu0 0.0
    %680 = vmatprep.mubr.f32.mxu0 0.0
    %v681 = vand.u32 %v87, 4294901760
    %v682 = vsub.f32 %v87, %v681
    %683 = vmatmul.mubr.f32.gmra.mrb[0].mxu0 %v682
    %v684 = vpop.f32.mrb[0].mxu0
    %v685 = vadd.f32 %v491, %v684
    %v686 = vpop.f32.mrb[0].mxu0
    %v687 = vadd.f32 %v493, %v686
    %688 = vmatprep.mubr.f32.mxu0 0.0
    %v689 = vand.u32 %v90, 4294901760
    %v690 = vsub.f32 %v90, %v689
    %691 = vmatmul.mubr.f32.gmra.mrb[0].mxu0 %v690
    %v692 = vpop.f32.mrb[0].mxu0
    %v693 = vadd.f32 %v498, %v692
    %v694 = vpop.f32.mrb[0].mxu0
    %v695 = vadd.f32 %v500, %v694
    %696 = vmatprep.mubr.f32.mxu0 0.0
    %v697 = vand.u32 %v93, 4294901760
    %v698 = vsub.f32 %v93, %v697
    %699 = vmatmul.mubr.f32.gmra.mrb[0].mxu0 %v698
    %v700 = vpop.f32.mrb[0].mxu0
    %v701 = vadd.f32 %v505, %v700
    %v702 = vpop.f32.mrb[0].mxu0
    %v703 = vadd.f32 %v507, %v702
    %704 = vmatprep.mubr.f32.mxu0 0.0
    %v705 = vand.u32 %v96, 4294901760
    %v706 = vsub.f32 %v96, %v705
    %707 = vmatmul.mubr.f32.gmra.mrb[0].mxu0 %v706
    %v708 = vpop.f32.mrb[0].mxu0
    %v709 = vadd.f32 %v512, %v708
    %v710 = vpop.f32.mrb[0].mxu0
    %v711 = vadd.f32 %v514, %v710
    %712 = vmatprep.mubr.f32.mxu0 0.0
    %v713 = vand.u32 %v99, 4294901760
    %v714 = vsub.f32 %v99, %v713
    %715 = vmatmul.mubr.f32.gmra.mrb[0].mxu0 %v714
    %v716 = vpop.f32.mrb[0].mxu0
    %v717 = vadd.f32 %v519, %v716
    %v718 = vpop.f32.mrb[0].mxu0
    %v719 = vadd.f32 %v521, %v718
    %720 = vmatprep.mubr.f32.mxu0 0.0
    %v721 = vand.u32 %v102, 4294901760
    %v722 = vsub.f32 %v102, %v721
    %723 = vmatmul.mubr.f32.gmra.mrb[0].mxu0 %v722
    %v724 = vpop.f32.mrb[0].mxu0
    %v725 = vadd.f32 %v526, %v724
    %v726 = vpop.f32.mrb[0].mxu0
    %v727 = vadd.f32 %v528, %v726
    %728 = vmatprep.mubr.f32.mxu0 0.0
    %v729 = vand.u32 %v105, 4294901760
    %v730 = vsub.f32 %v105, %v729
    %731 = vmatmul.mubr.f32.gmra.mrb[0].mxu0 %v730
    %v732 = vpop.f32.mrb[0].mxu0
    %v733 = vadd.f32 %v533, %v732
    %v734 = vpop.f32.mrb[0].mxu0
    %v735 = vadd.f32 %v535, %v734
    %736 = vmatprep.mubr.f32.mxu0 0.0
    %v737 = vand.u32 %v108, 4294901760
    %v738 = vsub.f32 %v108, %v737
    %739 = vmatmul.mubr.f32.gmra.mrb[0].mxu0 %v738
    %v740 = vpop.f32.mrb[0].mxu0
    %v741 = vadd.f32 %v540, %v740
    %v742 = vpop.f32.mrb[0].mxu0
    %v743 = vadd.f32 %v542, %v742
    %744 = vmatprep.mubr.f32.mxu0 0.0
    %v745 = vand.u32 %v111, 4294901760
    %v746 = vsub.f32 %v111, %v745
    %747 = vmatmul.mubr.f32.gmra.mrb[0].mxu0 %v746
    %v748 = vpop.f32.mrb[0].mxu0
    %v749 = vadd.f32 %v547, %v748
    %v750 = vpop.f32.mrb[0].mxu0
    %v751 = vadd.f32 %v549, %v750
    %752 = vmatprep.mubr.f32.mxu0 0.0
    %v753 = vand.u32 %v114, 4294901760
    %v754 = vsub.f32 %v114, %v753
    %755 = vmatmul.mubr.f32.gmra.mrb[0].mxu0 %v754
    %v756 = vpop.f32.mrb[0].mxu0
    %v757 = vadd.f32 %v554, %v756
    %v758 = vpop.f32.mrb[0].mxu0
    %v759 = vadd.f32 %v556, %v758
    %760 = vmatprep.mubr.f32.mxu0 0.0
    %v761 = vand.u32 %v117, 4294901760
    %v762 = vsub.f32 %v117, %v761
    %763 = vmatmul.mubr.f32.gmra.mrb[0].mxu0 %v762
    %v764 = vpop.f32.mrb[0].mxu0
    %v765 = vadd.f32 %v561, %v764
    %v766 = vpop.f32.mrb[0].mxu0
    %v767 = vadd.f32 %v563, %v766
    %768 = vmatprep.mubr.f32.mxu0 0.0
    %v769 = vand.u32 %v120, 4294901760
    %v770 = vsub.f32 %v120, %v769
    %771 = vmatmul.mubr.f32.gmra.mrb[0].mxu0 %v770
    %v772 = vpop.f32.mrb[0].mxu0
    %v773 = vadd.f32 %v568, %v772
    %v774 = vpop.f32.mrb[0].mxu0
    %v775 = vadd.f32 %v570, %v774
    %776 = vmatprep.mubr.f32.mxu0 0.0
    %v777 = vand.u32 %v123, 4294901760
    %v778 = vsub.f32 %v123, %v777
    %779 = vmatmul.mubr.f32.gmra.mrb[0].mxu0 %v778
    %v780 = vpop.f32.mrb[0].mxu0
    %v781 = vadd.f32 %v575, %v780
    %v782 = vpop.f32.mrb[0].mxu0
    %v783 = vadd.f32 %v577, %v782
    %784 = vmatprep.mubr.f32.mxu0 0.0
    %v785 = vand.u32 %v126, 4294901760
    %v786 = vsub.f32 %v126, %v785
    %787 = vmatmul.mubr.f32.gmra.mrb[0].mxu0 %v786
    %v788 = vpop.f32.mrb[0].mxu0
    %v789 = vadd.f32 %v582, %v788
    %v790 = vpop.f32.mrb[0].mxu0
    %v791 = vadd.f32 %v584, %v790
    %792 = vmatprep.mubr.f32.mxu0 0.0
    %v793 = vand.u32 %v129, 4294901760
    %v794 = vsub.f32 %v129, %v793
    %795 = vmatmul.mubr.f32.gmra.mrb[0].mxu0 %v794
    %v796 = vpop.f32.mrb[0].mxu0
    %v797 = vadd.f32 %v589, %v796
    %v798 = vpop.f32.mrb[0].mxu0
    %v799 = vadd.f32 %v591, %v798
    %800 = vmatprep.mubr.f32.mxu0 0.0
    %v801 = vand.u32 %v132, 4294901760
    %v802 = vsub.f32 %v132, %v801
    %803 = vmatmul.mubr.f32.gmra.mrb[0].mxu0 %v802
    %v804 = vpop.f32.mrb[0].mxu0
    %v805 = vadd.f32 %v596, %v804
    %v806 = vpop.f32.mrb[0].mxu0
    %v807 = vadd.f32 %v598, %v806
    %808 = vdwg.mxu0
    %v809 = vand.u32 %v66, 4294901760
    %810 = vmatprep.subr.mxu0 %v809
    %v811 = vand.u32 %v65, 4294901760
    %812 = vmatpush1.msra.mxu0 %v811
    %v813 = vand.u32 %v68, 4294901760
    %814 = vmatprep.subr.mxu0 %v813
    %v815 = vand.u32 %v67, 4294901760
    %816 = vmatpush1.msra.mxu0 %v815
    %v817 = vand.u32 %v70, 4294901760
    %818 = vmatprep.subr.mxu0 %v817
    %v819 = vand.u32 %v69, 4294901760
    %820 = vmatpush1.msra.mxu0 %v819
    %v821 = vand.u32 %v72, 4294901760
    %822 = vmatprep.subr.mxu0 %v821
    %v823 = vand.u32 %v71, 4294901760
    %824 = vmatpush1.msra.mxu0 %v823
    %825 = vmatprep.subr.mxu0 0.0
    %826 = vmatpush1.msra.mxu0 0.0
    %827 = vmatprep.subr.mxu0 0.0
    %828 = vmatpush1.msra.mxu0 0.0
    %829 = vmatprep.subr.mxu0 0.0
    %830 = vmatpush1.msra.mxu0 0.0
    %831 = vmatprep.subr.mxu0 0.0
    %832 = vmatpush1.msra.mxu0 0.0
    %833 = vmatprep.subr.mxu0 0.0
    %834 = vmatpush1.msra.mxu0 0.0
    %835 = vmatprep.subr.mxu0 0.0
    %836 = vmatpush1.msra.mxu0 0.0
    %837 = vmatprep.subr.mxu0 0.0
    %838 = vmatpush1.msra.mxu0 0.0
    %839 = vmatprep.subr.mxu0 0.0
    %840 = vmatpush1.msra.mxu0 0.0
    %841 = vmatprep.subr.mxu0 0.0
    %842 = vmatpush1.msra.mxu0 0.0
    %843 = vmatprep.subr.mxu0 0.0
    %844 = vmatpush1.msra.mxu0 0.0
    %845 = vmatprep.subr.mxu0 0.0
    %846 = vmatpush1.msra.mxu0 0.0
    %847 = vmatprep.subr.mxu0 0.0
    %848 = vmatpush1.msra.mxu0 0.0
    %849 = vmatprep.subr.mxu0 0.0
    %850 = vmatpush1.msra.mxu0 0.0
    %851 = vmatprep.subr.mxu0 0.0
    %852 = vmatpush1.msra.mxu0 0.0
    %853 = vmatprep.subr.mxu0 0.0
    %854 = vmatpush1.msra.mxu0 0.0
    %855 = vmatprep.subr.mxu0 0.0
    %856 = vmatpush1.msra.mxu0 0.0
    %857 = vmatprep.subr.mxu0 0.0
    %858 = vmatpush1.msra.mxu0 0.0
    %859 = vmatprep.subr.mxu0 0.0
    %860 = vmatpush1.msra.mxu0 0.0
    %861 = vmatprep.subr.mxu0 0.0
    %862 = vmatpush1.msra.mxu0 0.0
    %863 = vmatprep.subr.mxu0 0.0
    %864 = vmatpush1.msra.mxu0 0.0
    %865 = vmatprep.subr.mxu0 0.0
    %866 = vmatpush1.msra.mxu0 0.0
    %867 = vmatprep.subr.mxu0 0.0
    %868 = vmatpush1.msra.mxu0 0.0
    %869 = vmatprep.subr.mxu0 0.0
    %870 = vmatpush1.msra.mxu0 0.0
    %871 = vmatprep.subr.mxu0 0.0
    %872 = vmatpush1.msra.mxu0 0.0
    %873 = vmatprep.subr.mxu0 0.0
    %874 = vmatpush1.msra.mxu0 0.0
    %875 = vmatprep.subr.mxu0 0.0
    %876 = vmatpush1.msra.mxu0 0.0
    %877 = vmatprep.subr.mxu0 0.0
    %878 = vmatpush1.msra.mxu0 0.0
    %879 = vmatprep.subr.mxu0 0.0
    %880 = vmatpush1.msra.mxu0 0.0
    %881 = vmatprep.mubr.f32.mxu0 0.0
    %v882 = vand.u32 %v87, 4294901760
    %v883 = vsub.f32 %v87, %v882
    %v884 = vand.u32 %v883, 4294901760
    %885 = vmatmul.mubr.f32.gmra.mrb[0].mxu0 %v884
    %v886 = vpop.f32.mrb[0].mxu0
    %v887 = vadd.f32 %v685, %v886
    %v888 = vpop.f32.mrb[0].mxu0
    %v889 = vadd.f32 %v687, %v888
    %890 = vmatprep.mubr.f32.mxu0 0.0
    %v891 = vand.u32 %v90, 4294901760
    %v892 = vsub.f32 %v90, %v891
    %v893 = vand.u32 %v892, 4294901760
    %894 = vmatmul.mubr.f32.gmra.mrb[0].mxu0 %v893
    %v895 = vpop.f32.mrb[0].mxu0
    %v896 = vadd.f32 %v693, %v895
    %v897 = vpop.f32.mrb[0].mxu0
    %v898 = vadd.f32 %v695, %v897
    %899 = vmatprep.mubr.f32.mxu0 0.0
    %v900 = vand.u32 %v93, 4294901760
    %v901 = vsub.f32 %v93, %v900
    %v902 = vand.u32 %v901, 4294901760
    %903 = vmatmul.mubr.f32.gmra.mrb[0].mxu0 %v902
    %v904 = vpop.f32.mrb[0].mxu0
    %v905 = vadd.f32 %v701, %v904
    %v906 = vpop.f32.mrb[0].mxu0
    %v907 = vadd.f32 %v703, %v906
    %908 = vmatprep.mubr.f32.mxu0 0.0
    %v909 = vand.u32 %v96, 4294901760
    %v910 = vsub.f32 %v96, %v909
    %v911 = vand.u32 %v910, 4294901760
    %912 = vmatmul.mubr.f32.gmra.mrb[0].mxu0 %v911
    %v913 = vpop.f32.mrb[0].mxu0
    %v914 = vadd.f32 %v709, %v913
    %v915 = vpop.f32.mrb[0].mxu0
    %v916 = vadd.f32 %v711, %v915
    %917 = vmatprep.mubr.f32.mxu0 0.0
    %v918 = vand.u32 %v99, 4294901760
    %v919 = vsub.f32 %v99, %v918
    %v920 = vand.u32 %v919, 4294901760
    %921 = vmatmul.mubr.f32.gmra.mrb[0].mxu0 %v920
    %v922 = vpop.f32.mrb[0].mxu0
    %v923 = vadd.f32 %v717, %v922
    %v924 = vpop.f32.mrb[0].mxu0
    %v925 = vadd.f32 %v719, %v924
    %926 = vmatprep.mubr.f32.mxu0 0.0
    %v927 = vand.u32 %v102, 4294901760
    %v928 = vsub.f32 %v102, %v927
    %v929 = vand.u32 %v928, 4294901760
    %930 = vmatmul.mubr.f32.gmra.mrb[0].mxu0 %v929
    %v931 = vpop.f32.mrb[0].mxu0
    %v932 = vadd.f32 %v725, %v931
    %v933 = vpop.f32.mrb[0].mxu0
    %v934 = vadd.f32 %v727, %v933
    %935 = vmatprep.mubr.f32.mxu0 0.0
    %v936 = vand.u32 %v105, 4294901760
    %v937 = vsub.f32 %v105, %v936
    %v938 = vand.u32 %v937, 4294901760
    %939 = vmatmul.mubr.f32.gmra.mrb[0].mxu0 %v938
    %v940 = vpop.f32.mrb[0].mxu0
    %v941 = vadd.f32 %v733, %v940
    %v942 = vpop.f32.mrb[0].mxu0
    %v943 = vadd.f32 %v735, %v942
    %944 = vmatprep.mubr.f32.mxu0 0.0
    %v945 = vand.u32 %v108, 4294901760
    %v946 = vsub.f32 %v108, %v945
    %v947 = vand.u32 %v946, 4294901760
    %948 = vmatmul.mubr.f32.gmra.mrb[0].mxu0 %v947
    %v949 = vpop.f32.mrb[0].mxu0
    %v950 = vadd.f32 %v741, %v949
    %v951 = vpop.f32.mrb[0].mxu0
    %v952 = vadd.f32 %v743, %v951
    %953 = vmatprep.mubr.f32.mxu0 0.0
    %v954 = vand.u32 %v111, 4294901760
    %v955 = vsub.f32 %v111, %v954
    %v956 = vand.u32 %v955, 4294901760
    %957 = vmatmul.mubr.f32.gmra.mrb[0].mxu0 %v956
    %v958 = vpop.f32.mrb[0].mxu0
    %v959 = vadd.f32 %v749, %v958
    %v960 = vpop.f32.mrb[0].mxu0
    %v961 = vadd.f32 %v751, %v960
    %962 = vmatprep.mubr.f32.mxu0 0.0
    %v963 = vand.u32 %v114, 4294901760
    %v964 = vsub.f32 %v114, %v963
    %v965 = vand.u32 %v964, 4294901760
    %966 = vmatmul.mubr.f32.gmra.mrb[0].mxu0 %v965
    %v967 = vpop.f32.mrb[0].mxu0
    %v968 = vadd.f32 %v757, %v967
    %v969 = vpop.f32.mrb[0].mxu0
    %v970 = vadd.f32 %v759, %v969
    %971 = vmatprep.mubr.f32.mxu0 0.0
    %v972 = vand.u32 %v117, 4294901760
    %v973 = vsub.f32 %v117, %v972
    %v974 = vand.u32 %v973, 4294901760
    %975 = vmatmul.mubr.f32.gmra.mrb[0].mxu0 %v974
    %v976 = vpop.f32.mrb[0].mxu0
    %v977 = vadd.f32 %v765, %v976
    %v978 = vpop.f32.mrb[0].mxu0
    %v979 = vadd.f32 %v767, %v978
    %980 = vmatprep.mubr.f32.mxu0 0.0
    %v981 = vand.u32 %v120, 4294901760
    %v982 = vsub.f32 %v120, %v981
    %v983 = vand.u32 %v982, 4294901760
    %984 = vmatmul.mubr.f32.gmra.mrb[0].mxu0 %v983
    %v985 = vpop.f32.mrb[0].mxu0
    %v986 = vadd.f32 %v773, %v985
    %v987 = vpop.f32.mrb[0].mxu0
    %v988 = vadd.f32 %v775, %v987
    %989 = vmatprep.mubr.f32.mxu0 0.0
    %v990 = vand.u32 %v123, 4294901760
    %v991 = vsub.f32 %v123, %v990
    %v992 = vand.u32 %v991, 4294901760
    %993 = vmatmul.mubr.f32.gmra.mrb[0].mxu0 %v992
    %v994 = vpop.f32.mrb[0].mxu0
    %v995 = vadd.f32 %v781, %v994
    %v996 = vpop.f32.mrb[0].mxu0
    %v997 = vadd.f32 %v783, %v996
    %998 = vmatprep.mubr.f32.mxu0 0.0
    %v999 = vand.u32 %v126, 4294901760
    %v1000 = vsub.f32 %v126, %v999
    %v1001 = vand.u32 %v1000, 4294901760
    %1002 = vmatmul.mubr.f32.gmra.mrb[0].mxu0 %v1001
    %v1003 = vpop.f32.mrb[0].mxu0
    %v1004 = vadd.f32 %v789, %v1003
    %v1005 = vpop.f32.mrb[0].mxu0
    %v1006 = vadd.f32 %v791, %v1005
    %1007 = vmatprep.mubr.f32.mxu0 0.0
    %v1008 = vand.u32 %v129, 4294901760
    %v1009 = vsub.f32 %v129, %v1008
    %v1010 = vand.u32 %v1009, 4294901760
    %1011 = vmatmul.mubr.f32.gmra.mrb[0].mxu0 %v1010
    %v1012 = vpop.f32.mrb[0].mxu0
    %v1013 = vadd.f32 %v797, %v1012
    %v1014 = vpop.f32.mrb[0].mxu0
    %v1015 = vadd.f32 %v799, %v1014
    %1016 = vmatprep.mubr.f32.mxu0 0.0
    %v1017 = vand.u32 %v132, 4294901760
    %v1018 = vsub.f32 %v132, %v1017
    %v1019 = vand.u32 %v1018, 4294901760
    %1020 = vmatmul.mubr.f32.gmra.mrb[0].mxu0 %v1019
    %v1021 = vpop.f32.mrb[0].mxu0
    %v1022 = vadd.f32 %v805, %v1021
    %v1023 = vpop.f32.mrb[0].mxu0
    %v1024 = vadd.f32 %v807, %v1023
    %1025 = vdwg.mxu0
    %v1026 = vand.u32 %v66, 4294901760
    %v1027 = vsub.f32 %v66, %v1026
    %v1028 = vand.u32 %v1027, 4294901760
    %1029 = vmatprep.subr.mxu0 %v1028
    %v1030 = vand.u32 %v65, 4294901760
    %v1031 = vsub.f32 %v65, %v1030
    %v1032 = vand.u32 %v1031, 4294901760
    %1033 = vmatpush1.msra.mxu0 %v1032
    %v1034 = vand.u32 %v68, 4294901760
    %v1035 = vsub.f32 %v68, %v1034
    %v1036 = vand.u32 %v1035, 4294901760
    %1037 = vmatprep.subr.mxu0 %v1036
    %v1038 = vand.u32 %v67, 4294901760
    %v1039 = vsub.f32 %v67, %v1038
    %v1040 = vand.u32 %v1039, 4294901760
    %1041 = vmatpush1.msra.mxu0 %v1040
    %v1042 = vand.u32 %v70, 4294901760
    %v1043 = vsub.f32 %v70, %v1042
    %v1044 = vand.u32 %v1043, 4294901760
    %1045 = vmatprep.subr.mxu0 %v1044
    %v1046 = vand.u32 %v69, 4294901760
    %v1047 = vsub.f32 %v69, %v1046
    %v1048 = vand.u32 %v1047, 4294901760
    %1049 = vmatpush1.msra.mxu0 %v1048
    %v1050 = vand.u32 %v72, 4294901760
    %v1051 = vsub.f32 %v72, %v1050
    %v1052 = vand.u32 %v1051, 4294901760
    %1053 = vmatprep.subr.mxu0 %v1052
    %v1054 = vand.u32 %v71, 4294901760
    %v1055 = vsub.f32 %v71, %v1054
    %v1056 = vand.u32 %v1055, 4294901760
    %1057 = vmatpush1.msra.mxu0 %v1056
    %1058 = vmatprep.subr.mxu0 0.0
    %1059 = vmatpush1.msra.mxu0 0.0
    %1060 = vmatprep.subr.mxu0 0.0
    %1061 = vmatpush1.msra.mxu0 0.0
    %1062 = vmatprep.subr.mxu0 0.0
    %1063 = vmatpush1.msra.mxu0 0.0
    %1064 = vmatprep.subr.mxu0 0.0
    %1065 = vmatpush1.msra.mxu0 0.0
    %1066 = vmatprep.subr.mxu0 0.0
    %1067 = vmatpush1.msra.mxu0 0.0
    %1068 = vmatprep.subr.mxu0 0.0
    %1069 = vmatpush1.msra.mxu0 0.0
    %1070 = vmatprep.subr.mxu0 0.0
    %1071 = vmatpush1.msra.mxu0 0.0
    %1072 = vmatprep.subr.mxu0 0.0
    %1073 = vmatpush1.msra.mxu0 0.0
    %1074 = vmatprep.subr.mxu0 0.0
    %1075 = vmatpush1.msra.mxu0 0.0
    %1076 = vmatprep.subr.mxu0 0.0
    %1077 = vmatpush1.msra.mxu0 0.0
    %1078 = vmatprep.subr.mxu0 0.0
    %1079 = vmatpush1.msra.mxu0 0.0
    %1080 = vmatprep.subr.mxu0 0.0
    %1081 = vmatpush1.msra.mxu0 0.0
    %1082 = vmatprep.subr.mxu0 0.0
    %1083 = vmatpush1.msra.mxu0 0.0
    %1084 = vmatprep.subr.mxu0 0.0
    %1085 = vmatpush1.msra.mxu0 0.0
    %1086 = vmatprep.subr.mxu0 0.0
    %1087 = vmatpush1.msra.mxu0 0.0
    %1088 = vmatprep.subr.mxu0 0.0
    %1089 = vmatpush1.msra.mxu0 0.0
    %1090 = vmatprep.subr.mxu0 0.0
    %1091 = vmatpush1.msra.mxu0 0.0
    %1092 = vmatprep.subr.mxu0 0.0
    %1093 = vmatpush1.msra.mxu0 0.0
    %1094 = vmatprep.subr.mxu0 0.0
    %1095 = vmatpush1.msra.mxu0 0.0
    %1096 = vmatprep.subr.mxu0 0.0
    %1097 = vmatpush1.msra.mxu0 0.0
    %1098 = vmatprep.subr.mxu0 0.0
    %1099 = vmatpush1.msra.mxu0 0.0
    %1100 = vmatprep.subr.mxu0 0.0
    %1101 = vmatpush1.msra.mxu0 0.0
    %1102 = vmatprep.subr.mxu0 0.0
    %1103 = vmatpush1.msra.mxu0 0.0
    %1104 = vmatprep.subr.mxu0 0.0
    %1105 = vmatpush1.msra.mxu0 0.0
    %1106 = vmatprep.subr.mxu0 0.0
    %1107 = vmatpush1.msra.mxu0 0.0
    %1108 = vmatprep.subr.mxu0 0.0
    %1109 = vmatpush1.msra.mxu0 0.0
    %1110 = vmatprep.subr.mxu0 0.0
    %1111 = vmatpush1.msra.mxu0 0.0
    %1112 = vmatprep.subr.mxu0 0.0
    %1113 = vmatpush1.msra.mxu0 0.0
    %1114 = vmatprep.mubr.f32.mxu0 0.0
    %v1115 = vand.u32 %v87, 4294901760
    %1116 = vmatmul.mubr.f32.gmra.mrb[0].mxu0 %v1115
    %v1117 = vpop.f32.mrb[0].mxu0
    %v1118 = vadd.f32 %v887, %v1117
    %v1119 = vpop.f32.mrb[0].mxu0
    %v1120 = vadd.f32 %v889, %v1119
    %1121 = vmatprep.mubr.f32.mxu0 0.0
    %v1122 = vand.u32 %v90, 4294901760
    %1123 = vmatmul.mubr.f32.gmra.mrb[0].mxu0 %v1122
    %v1124 = vpop.f32.mrb[0].mxu0
    %v1125 = vadd.f32 %v896, %v1124
    %v1126 = vpop.f32.mrb[0].mxu0
    %v1127 = vadd.f32 %v898, %v1126
    %1128 = vmatprep.mubr.f32.mxu0 0.0
    %v1129 = vand.u32 %v93, 4294901760
    %1130 = vmatmul.mubr.f32.gmra.mrb[0].mxu0 %v1129
    %v1131 = vpop.f32.mrb[0].mxu0
    %v1132 = vadd.f32 %v905, %v1131
    %v1133 = vpop.f32.mrb[0].mxu0
    %v1134 = vadd.f32 %v907, %v1133
    %1135 = vmatprep.mubr.f32.mxu0 0.0
    %v1136 = vand.u32 %v96, 4294901760
    %1137 = vmatmul.mubr.f32.gmra.mrb[0].mxu0 %v1136
    %v1138 = vpop.f32.mrb[0].mxu0
    %v1139 = vadd.f32 %v914, %v1138
    %v1140 = vpop.f32.mrb[0].mxu0
    %v1141 = vadd.f32 %v916, %v1140
    %1142 = vmatprep.mubr.f32.mxu0 0.0
    %v1143 = vand.u32 %v99, 4294901760
    %1144 = vmatmul.mubr.f32.gmra.mrb[0].mxu0 %v1143
    %v1145 = vpop.f32.mrb[0].mxu0
    %v1146 = vadd.f32 %v923, %v1145
    %v1147 = vpop.f32.mrb[0].mxu0
    %v1148 = vadd.f32 %v925, %v1147
    %1149 = vmatprep.mubr.f32.mxu0 0.0
    %v1150 = vand.u32 %v102, 4294901760
    %1151 = vmatmul.mubr.f32.gmra.mrb[0].mxu0 %v1150
    %v1152 = vpop.f32.mrb[0].mxu0
    %v1153 = vadd.f32 %v932, %v1152
    %v1154 = vpop.f32.mrb[0].mxu0
    %v1155 = vadd.f32 %v934, %v1154
    %1156 = vmatprep.mubr.f32.mxu0 0.0
    %v1157 = vand.u32 %v105, 4294901760
    %1158 = vmatmul.mubr.f32.gmra.mrb[0].mxu0 %v1157
    %v1159 = vpop.f32.mrb[0].mxu0
    %v1160 = vadd.f32 %v941, %v1159
    %v1161 = vpop.f32.mrb[0].mxu0
    %v1162 = vadd.f32 %v943, %v1161
    %1163 = vmatprep.mubr.f32.mxu0 0.0
    %v1164 = vand.u32 %v108, 4294901760
    %1165 = vmatmul.mubr.f32.gmra.mrb[0].mxu0 %v1164
    %v1166 = vpop.f32.mrb[0].mxu0
    %v1167 = vadd.f32 %v950, %v1166
    %v1168 = vpop.f32.mrb[0].mxu0
    %v1169 = vadd.f32 %v952, %v1168
    %1170 = vmatprep.mubr.f32.mxu0 0.0
    %v1171 = vand.u32 %v111, 4294901760
    %1172 = vmatmul.mubr.f32.gmra.mrb[0].mxu0 %v1171
    %v1173 = vpop.f32.mrb[0].mxu0
    %v1174 = vadd.f32 %v959, %v1173
    %v1175 = vpop.f32.mrb[0].mxu0
    %v1176 = vadd.f32 %v961, %v1175
    %1177 = vmatprep.mubr.f32.mxu0 0.0
    %v1178 = vand.u32 %v114, 4294901760
    %1179 = vmatmul.mubr.f32.gmra.mrb[0].mxu0 %v1178
    %v1180 = vpop.f32.mrb[0].mxu0
    %v1181 = vadd.f32 %v968, %v1180
    %v1182 = vpop.f32.mrb[0].mxu0
    %v1183 = vadd.f32 %v970, %v1182
    %1184 = vmatprep.mubr.f32.mxu0 0.0
    %v1185 = vand.u32 %v117, 4294901760
    %1186 = vmatmul.mubr.f32.gmra.mrb[0].mxu0 %v1185
    %v1187 = vpop.f32.mrb[0].mxu0
    %v1188 = vadd.f32 %v977, %v1187
    %v1189 = vpop.f32.mrb[0].mxu0
    %v1190 = vadd.f32 %v979, %v1189
    %1191 = vmatprep.mubr.f32.mxu0 0.0
    %v1192 = vand.u32 %v120, 4294901760
    %1193 = vmatmul.mubr.f32.gmra.mrb[0].mxu0 %v1192
    %v1194 = vpop.f32.mrb[0].mxu0
    %v1195 = vadd.f32 %v986, %v1194
    %v1196 = vpop.f32.mrb[0].mxu0
    %v1197 = vadd.f32 %v988, %v1196
    %1198 = vmatprep.mubr.f32.mxu0 0.0
    %v1199 = vand.u32 %v123, 4294901760
    %1200 = vmatmul.mubr.f32.gmra.mrb[0].mxu0 %v1199
    %v1201 = vpop.f32.mrb[0].mxu0
    %v1202 = vadd.f32 %v995, %v1201
    %v1203 = vpop.f32.mrb[0].mxu0
    %v1204 = vadd.f32 %v997, %v1203
    %1205 = vmatprep.mubr.f32.mxu0 0.0
    %v1206 = vand.u32 %v126, 4294901760
    %1207 = vmatmul.mubr.f32.gmra.mrb[0].mxu0 %v1206
    %v1208 = vpop.f32.mrb[0].mxu0
    %v1209 = vadd.f32 %v1004, %v1208
    %v1210 = vpop.f32.mrb[0].mxu0
    %v1211 = vadd.f32 %v1006, %v1210
    %1212 = vmatprep.mubr.f32.mxu0 0.0
    %v1213 = vand.u32 %v129, 4294901760
    %1214 = vmatmul.mubr.f32.gmra.mrb[0].mxu0 %v1213
    %v1215 = vpop.f32.mrb[0].mxu0
    %v1216 = vadd.f32 %v1013, %v1215
    %v1217 = vpop.f32.mrb[0].mxu0
    %v1218 = vadd.f32 %v1015, %v1217
    %1219 = vmatprep.mubr.f32.mxu0 0.0
    %v1220 = vand.u32 %v132, 4294901760
    %1221 = vmatmul.mubr.f32.gmra.mrb[0].mxu0 %v1220
    %v1222 = vpop.f32.mrb[0].mxu0
    %v1223 = vadd.f32 %v1022, %v1222
    %v1224 = vpop.f32.mrb[0].mxu0
    %v1225 = vadd.f32 %v1024, %v1224
    %1226 = vdwg.mxu0
    %v1227 = vand.u32 %v66, 4294901760
    %1228 = vmatprep.subr.mxu0 %v1227
    %v1229 = vand.u32 %v65, 4294901760
    %1230 = vmatpush1.msra.mxu0 %v1229
    %v1231 = vand.u32 %v68, 4294901760
    %1232 = vmatprep.subr.mxu0 %v1231
    %v1233 = vand.u32 %v67, 4294901760
    %1234 = vmatpush1.msra.mxu0 %v1233
    %v1235 = vand.u32 %v70, 4294901760
    %1236 = vmatprep.subr.mxu0 %v1235
    %v1237 = vand.u32 %v69, 4294901760
    %1238 = vmatpush1.msra.mxu0 %v1237
    %v1239 = vand.u32 %v72, 4294901760
    %1240 = vmatprep.subr.mxu0 %v1239
    %v1241 = vand.u32 %v71, 4294901760
    %1242 = vmatpush1.msra.mxu0 %v1241
    %1243 = vmatprep.subr.mxu0 0.0
    %1244 = vmatpush1.msra.mxu0 0.0
    %1245 = vmatprep.subr.mxu0 0.0
    %1246 = vmatpush1.msra.mxu0 0.0
    %1247 = vmatprep.subr.mxu0 0.0
    %1248 = vmatpush1.msra.mxu0 0.0
    %1249 = vmatprep.subr.mxu0 0.0
    %1250 = vmatpush1.msra.mxu0 0.0
    %1251 = vmatprep.subr.mxu0 0.0
    %1252 = vmatpush1.msra.mxu0 0.0
    %1253 = vmatprep.subr.mxu0 0.0
    %1254 = vmatpush1.msra.mxu0 0.0
    %1255 = vmatprep.subr.mxu0 0.0
    %1256 = vmatpush1.msra.mxu0 0.0
    %1257 = vmatprep.subr.mxu0 0.0
    %1258 = vmatpush1.msra.mxu0 0.0
    %1259 = vmatprep.subr.mxu0 0.0
    %1260 = vmatpush1.msra.mxu0 0.0
    %1261 = vmatprep.subr.mxu0 0.0
    %1262 = vmatpush1.msra.mxu0 0.0
    %1263 = vmatprep.subr.mxu0 0.0
    %1264 = vmatpush1.msra.mxu0 0.0
    %1265 = vmatprep.subr.mxu0 0.0
    %1266 = vmatpush1.msra.mxu0 0.0
    %1267 = vmatprep.subr.mxu0 0.0
    %1268 = vmatpush1.msra.mxu0 0.0
    %1269 = vmatprep.subr.mxu0 0.0
    %1270 = vmatpush1.msra.mxu0 0.0
    %1271 = vmatprep.subr.mxu0 0.0
    %1272 = vmatpush1.msra.mxu0 0.0
    %1273 = vmatprep.subr.mxu0 0.0
    %1274 = vmatpush1.msra.mxu0 0.0
    %1275 = vmatprep.subr.mxu0 0.0
    %1276 = vmatpush1.msra.mxu0 0.0
    %1277 = vmatprep.subr.mxu0 0.0
    %1278 = vmatpush1.msra.mxu0 0.0
    %1279 = vmatprep.subr.mxu0 0.0
    %1280 = vmatpush1.msra.mxu0 0.0
    %1281 = vmatprep.subr.mxu0 0.0
    %1282 = vmatpush1.msra.mxu0 0.0
    %1283 = vmatprep.subr.mxu0 0.0
    %1284 = vmatpush1.msra.mxu0 0.0
    %1285 = vmatprep.subr.mxu0 0.0
    %1286 = vmatpush1.msra.mxu0 0.0
    %1287 = vmatprep.subr.mxu0 0.0
    %1288 = vmatpush1.msra.mxu0 0.0
    %1289 = vmatprep.subr.mxu0 0.0
    %1290 = vmatpush1.msra.mxu0 0.0
    %1291 = vmatprep.subr.mxu0 0.0
    %1292 = vmatpush1.msra.mxu0 0.0
    %1293 = vmatprep.subr.mxu0 0.0
    %1294 = vmatpush1.msra.mxu0 0.0
    %1295 = vmatprep.subr.mxu0 0.0
    %1296 = vmatpush1.msra.mxu0 0.0
    %1297 = vmatprep.subr.mxu0 0.0
    %1298 = vmatpush1.msra.mxu0 0.0
    %1299 = vmatprep.mubr.f32.mxu0 0.0
    %v1300 = vand.u32 %v87, 4294901760
    %1301 = vmatmul.mubr.f32.gmra.mrb[0].mxu0 %v1300
    %v1302 = vpop.f32.mrb[0].mxu0
    %v1303 = vadd.f32 %v1118, %v1302
    %v1304 = vpop.f32.mrb[0].mxu0
    %v1305 = vadd.f32 %v1120, %v1304
    %1306 = vmatprep.mubr.f32.mxu0 0.0
    %v1307 = vand.u32 %v90, 4294901760
    %1308 = vmatmul.mubr.f32.gmra.mrb[0].mxu0 %v1307
    %v1309 = vpop.f32.mrb[0].mxu0
    %v1310 = vadd.f32 %v1125, %v1309
    %v1311 = vpop.f32.mrb[0].mxu0
    %v1312 = vadd.f32 %v1127, %v1311
    %1313 = vmatprep.mubr.f32.mxu0 0.0
    %v1314 = vand.u32 %v93, 4294901760
    %1315 = vmatmul.mubr.f32.gmra.mrb[0].mxu0 %v1314
    %v1316 = vpop.f32.mrb[0].mxu0
    %v1317 = vadd.f32 %v1132, %v1316
    %v1318 = vpop.f32.mrb[0].mxu0
    %v1319 = vadd.f32 %v1134, %v1318
    %1320 = vmatprep.mubr.f32.mxu0 0.0
    %v1321 = vand.u32 %v96, 4294901760
    %1322 = vmatmul.mubr.f32.gmra.mrb[0].mxu0 %v1321
    %v1323 = vpop.f32.mrb[0].mxu0
    %v1324 = vadd.f32 %v1139, %v1323
    %v1325 = vpop.f32.mrb[0].mxu0
    %v1326 = vadd.f32 %v1141, %v1325
    %1327 = vmatprep.mubr.f32.mxu0 0.0
    %v1328 = vand.u32 %v99, 4294901760
    %1329 = vmatmul.mubr.f32.gmra.mrb[0].mxu0 %v1328
    %v1330 = vpop.f32.mrb[0].mxu0
    %v1331 = vadd.f32 %v1146, %v1330
    %v1332 = vpop.f32.mrb[0].mxu0
    %v1333 = vadd.f32 %v1148, %v1332
    %1334 = vmatprep.mubr.f32.mxu0 0.0
    %v1335 = vand.u32 %v102, 4294901760
    %1336 = vmatmul.mubr.f32.gmra.mrb[0].mxu0 %v1335
    %v1337 = vpop.f32.mrb[0].mxu0
    %v1338 = vadd.f32 %v1153, %v1337
    %v1339 = vpop.f32.mrb[0].mxu0
    %v1340 = vadd.f32 %v1155, %v1339
    %1341 = vmatprep.mubr.f32.mxu0 0.0
    %v1342 = vand.u32 %v105, 4294901760
    %1343 = vmatmul.mubr.f32.gmra.mrb[0].mxu0 %v1342
    %v1344 = vpop.f32.mrb[0].mxu0
    %v1345 = vadd.f32 %v1160, %v1344
    %v1346 = vpop.f32.mrb[0].mxu0
    %v1347 = vadd.f32 %v1162, %v1346
    %1348 = vmatprep.mubr.f32.mxu0 0.0
    %v1349 = vand.u32 %v108, 4294901760
    %1350 = vmatmul.mubr.f32.gmra.mrb[0].mxu0 %v1349
    %v1351 = vpop.f32.mrb[0].mxu0
    %v1352 = vadd.f32 %v1167, %v1351
    %v1353 = vpop.f32.mrb[0].mxu0
    %v1354 = vadd.f32 %v1169, %v1353
    %1355 = vmatprep.mubr.f32.mxu0 0.0
    %v1356 = vand.u32 %v111, 4294901760
    %1357 = vmatmul.mubr.f32.gmra.mrb[0].mxu0 %v1356
    %v1358 = vpop.f32.mrb[0].mxu0
    %v1359 = vadd.f32 %v1174, %v1358
    %v1360 = vpop.f32.mrb[0].mxu0
    %v1361 = vadd.f32 %v1176, %v1360
    %1362 = vmatprep.mubr.f32.mxu0 0.0
    %v1363 = vand.u32 %v114, 4294901760
    %1364 = vmatmul.mubr.f32.gmra.mrb[0].mxu0 %v1363
    %v1365 = vpop.f32.mrb[0].mxu0
    %v1366 = vadd.f32 %v1181, %v1365
    %v1367 = vpop.f32.mrb[0].mxu0
    %v1368 = vadd.f32 %v1183, %v1367
    %1369 = vmatprep.mubr.f32.mxu0 0.0
    %v1370 = vand.u32 %v117, 4294901760
    %1371 = vmatmul.mubr.f32.gmra.mrb[0].mxu0 %v1370
    %v1372 = vpop.f32.mrb[0].mxu0
    %v1373 = vadd.f32 %v1188, %v1372
    %v1374 = vpop.f32.mrb[0].mxu0
    %v1375 = vadd.f32 %v1190, %v1374
    %1376 = vmatprep.mubr.f32.mxu0 0.0
    %v1377 = vand.u32 %v120, 4294901760
    %1378 = vmatmul.mubr.f32.gmra.mrb[0].mxu0 %v1377
    %v1379 = vpop.f32.mrb[0].mxu0
    %v1380 = vadd.f32 %v1195, %v1379
    %v1381 = vpop.f32.mrb[0].mxu0
    %v1382 = vadd.f32 %v1197, %v1381
    %1383 = vmatprep.mubr.f32.mxu0 0.0
    %v1384 = vand.u32 %v123, 4294901760
    %1385 = vmatmul.mubr.f32.gmra.mrb[0].mxu0 %v1384
    %v1386 = vpop.f32.mrb[0].mxu0
    %v1387 = vadd.f32 %v1202, %v1386
    %v1388 = vpop.f32.mrb[0].mxu0
    %v1389 = vadd.f32 %v1204, %v1388
    %1390 = vmatprep.mubr.f32.mxu0 0.0
    %v1391 = vand.u32 %v126, 4294901760
    %1392 = vmatmul.mubr.f32.gmra.mrb[0].mxu0 %v1391
    %v1393 = vpop.f32.mrb[0].mxu0
    %v1394 = vadd.f32 %v1209, %v1393
    %v1395 = vpop.f32.mrb[0].mxu0
    %v1396 = vadd.f32 %v1211, %v1395
    %1397 = vmatprep.mubr.f32.mxu0 0.0
    %v1398 = vand.u32 %v129, 4294901760
    %1399 = vmatmul.mubr.f32.gmra.mrb[0].mxu0 %v1398
    %v1400 = vpop.f32.mrb[0].mxu0
    %v1401 = vadd.f32 %v1216, %v1400
    %v1402 = vpop.f32.mrb[0].mxu0
    %v1403 = vadd.f32 %v1218, %v1402
    %1404 = vmatprep.mubr.f32.mxu0 0.0
    %v1405 = vand.u32 %v132, 4294901760
    %1406 = vmatmul.mubr.f32.gmra.mrb[0].mxu0 %v1405
    %v1407 = vpop.f32.mrb[0].mxu0
    %v1408 = vadd.f32 %v1223, %v1407
    %v1409 = vpop.f32.mrb[0].mxu0
    %v1410 = vadd.f32 %v1225, %v1409
    %1411 = vdwg.mxu0
    %v1412 = vmax.f32 %v1303, 0.0
    %v1413 = vmax.f32 %v1305, 0.0
    %v1414 = vmax.f32 %v1310, 0.0
    %v1415 = vmax.f32 %v1312, 0.0
    %v1416 = vmax.f32 %v1317, 0.0
    %v1417 = vmax.f32 %v1319, 0.0
    %v1418 = vmax.f32 %v1324, 0.0
    %v1419 = vmax.f32 %v1326, 0.0
    %v1420 = vmax.f32 %v1331, 0.0
    %v1421 = vmax.f32 %v1333, 0.0
    %v1422 = vmax.f32 %v1338, 0.0
    %v1423 = vmax.f32 %v1340, 0.0
    %v1424 = vmax.f32 %v1345, 0.0
    %v1425 = vmax.f32 %v1347, 0.0
    %v1426 = vmax.f32 %v1352, 0.0
    %v1427 = vmax.f32 %v1354, 0.0
    %v1428 = vmax.f32 %v1359, 0.0
    %v1429 = vmax.f32 %v1361, 0.0
    %v1430 = vmax.f32 %v1366, 0.0
    %v1431 = vmax.f32 %v1368, 0.0
    %v1432 = vmax.f32 %v1373, 0.0
    %v1433 = vmax.f32 %v1375, 0.0
    %v1434 = vmax.f32 %v1380, 0.0
    %v1435 = vmax.f32 %v1382, 0.0
    %v1436 = vmax.f32 %v1387, 0.0
    %v1437 = vmax.f32 %v1389, 0.0
    %v1438 = vmax.f32 %v1394, 0.0
    %v1439 = vmax.f32 %v1396, 0.0
    %v1440 = vmax.f32 %v1401, 0.0
    %v1441 = vmax.f32 %v1403, 0.0
    %v1442 = vmax.f32 %v1408, 0.0
    %v1443 = vmax.f32 %v1410, 0.0
    %v1444 = vld [vmem:[%s3] sm:$0xff]
    %v1445 = vld [vmem:[%s3 + $0x8] sm:$0xff]
    %v1446 = vld [vmem:[%s3 + $0x10] sm:$0xff]
    %v1447 = vld [vmem:[%s3 + $0x18] sm:$0xff]
    %v1448 = vld [vmem:[%s3 + $0x20] sm:$0xff]
    %v1449 = vld [vmem:[%s3 + $0x28] sm:$0xff]
    %v1450 = vld [vmem:[%s3 + $0x30] sm:$0xff]
    %v1451 = vld [vmem:[%s3 + $0x38] sm:$0xff]
    %v1452 = vld [vmem:[%s3 + $0x40] sm:$0xff]
    %v1453 = vld [vmem:[%s3 + $0x48] sm:$0xff]
    %v1454 = vld [vmem:[%s3 + $0x50] sm:$0xff]
    %v1455 = vld [vmem:[%s3 + $0x58] sm:$0xff]
    %v1456 = vld [vmem:[%s3 + $0x60] sm:$0xff]
    %v1457 = vld [vmem:[%s3 + $0x68] sm:$0xff]
    %v1458 = vld [vmem:[%s3 + $0x70] sm:$0xff]
    %v1459 = vld [vmem:[%s3 + $0x78] sm:$0xff]
    %v1460 = vld [vmem:[%s3 + $0x80] sm:$0xff]
    %v1461 = vld [vmem:[%s3 + $0x88] sm:$0xff]
    %v1462 = vld [vmem:[%s3 + $0x90] sm:$0xff]
    %v1463 = vld [vmem:[%s3 + $0x98] sm:$0xff]
    %v1464 = vld [vmem:[%s3 + $0xa0] sm:$0xff]
    %v1465 = vld [vmem:[%s3 + $0xa8] sm:$0xff]
    %v1466 = vld [vmem:[%s3 + $0xb0] sm:$0xff]
    %v1467 = vld [vmem:[%s3 + $0xb8] sm:$0xff]
    %v1468 = vld [vmem:[%s3 + $0xc0] sm:$0xff]
    %v1469 = vld [vmem:[%s3 + $0xc8] sm:$0xff]
    %v1470 = vld [vmem:[%s3 + $0xd0] sm:$0xff]
    %v1471 = vld [vmem:[%s3 + $0xd8] sm:$0xff]
    %v1472 = vld [vmem:[%s3 + $0xe0] sm:$0xff]
    %v1473 = vld [vmem:[%s3 + $0xe8] sm:$0xff]
    %v1474 = vld [vmem:[%s3 + $0xf0] sm:$0xff]
    %v1475 = vld [vmem:[%s3 + $0xf8] sm:$0xff]
    %v1476 = vld [vmem:[%s4] sm:$0x1]
    %v1478 = vlaneseq
    %v1479 = vshrl.u32 %v1478, 7
    %v1480 = vsub.s32 0, %v1479
    %v1481 = vrot.slane %v1476, %v1480
    %1483 = vmatprep.subr.mxu0 0.0
    %v1484 = vand.u32 %v1444, 4294901760
    %1485 = vmatpush1.msra.mxu0 %v1484
    %1486 = vmatprep.subr.mxu0 0.0
    %v1487 = vand.u32 %v1445, 4294901760
    %1488 = vmatpush1.msra.mxu0 %v1487
    %1489 = vmatprep.subr.mxu0 0.0
    %v1490 = vand.u32 %v1446, 4294901760
    %1491 = vmatpush1.msra.mxu0 %v1490
    %1492 = vmatprep.subr.mxu0 0.0
    %v1493 = vand.u32 %v1447, 4294901760
    %1494 = vmatpush1.msra.mxu0 %v1493
    %1495 = vmatprep.subr.mxu0 0.0
    %v1496 = vand.u32 %v1448, 4294901760
    %1497 = vmatpush1.msra.mxu0 %v1496
    %1498 = vmatprep.subr.mxu0 0.0
    %v1499 = vand.u32 %v1449, 4294901760
    %1500 = vmatpush1.msra.mxu0 %v1499
    %1501 = vmatprep.subr.mxu0 0.0
    %v1502 = vand.u32 %v1450, 4294901760
    %1503 = vmatpush1.msra.mxu0 %v1502
    %1504 = vmatprep.subr.mxu0 0.0
    %v1505 = vand.u32 %v1451, 4294901760
    %1506 = vmatpush1.msra.mxu0 %v1505
    %1507 = vmatprep.subr.mxu0 0.0
    %v1508 = vand.u32 %v1452, 4294901760
    %1509 = vmatpush1.msra.mxu0 %v1508
    %1510 = vmatprep.subr.mxu0 0.0
    %v1511 = vand.u32 %v1453, 4294901760
    %1512 = vmatpush1.msra.mxu0 %v1511
    %1513 = vmatprep.subr.mxu0 0.0
    %v1514 = vand.u32 %v1454, 4294901760
    %1515 = vmatpush1.msra.mxu0 %v1514
    %1516 = vmatprep.subr.mxu0 0.0
    %v1517 = vand.u32 %v1455, 4294901760
    %1518 = vmatpush1.msra.mxu0 %v1517
    %1519 = vmatprep.subr.mxu0 0.0
    %v1520 = vand.u32 %v1456, 4294901760
    %1521 = vmatpush1.msra.mxu0 %v1520
    %1522 = vmatprep.subr.mxu0 0.0
    %v1523 = vand.u32 %v1457, 4294901760
    %1524 = vmatpush1.msra.mxu0 %v1523
    %1525 = vmatprep.subr.mxu0 0.0
    %v1526 = vand.u32 %v1458, 4294901760
    %1527 = vmatpush1.msra.mxu0 %v1526
    %1528 = vmatprep.subr.mxu0 0.0
    %v1529 = vand.u32 %v1459, 4294901760
    %1530 = vmatpush1.msra.mxu0 %v1529
    %1531 = vmatprep.subr.mxu0 0.0
    %v1532 = vand.u32 %v1460, 4294901760
    %1533 = vmatpush1.msra.mxu0 %v1532
    %1534 = vmatprep.subr.mxu0 0.0
    %v1535 = vand.u32 %v1461, 4294901760
    %1536 = vmatpush1.msra.mxu0 %v1535
    %1537 = vmatprep.subr.mxu0 0.0
    %v1538 = vand.u32 %v1462, 4294901760
    %1539 = vmatpush1.msra.mxu0 %v1538
    %1540 = vmatprep.subr.mxu0 0.0
    %v1541 = vand.u32 %v1463, 4294901760
    %1542 = vmatpush1.msra.mxu0 %v1541
    %1543 = vmatprep.subr.mxu0 0.0
    %v1544 = vand.u32 %v1464, 4294901760
    %1545 = vmatpush1.msra.mxu0 %v1544
    %1546 = vmatprep.subr.mxu0 0.0
    %v1547 = vand.u32 %v1465, 4294901760
    %1548 = vmatpush1.msra.mxu0 %v1547
    %1549 = vmatprep.subr.mxu0 0.0
    %v1550 = vand.u32 %v1466, 4294901760
    %1551 = vmatpush1.msra.mxu0 %v1550
    %1552 = vmatprep.subr.mxu0 0.0
    %v1553 = vand.u32 %v1467, 4294901760
    %1554 = vmatpush1.msra.mxu0 %v1553
    %1555 = vmatprep.subr.mxu0 0.0
    %v1556 = vand.u32 %v1468, 4294901760
    %1557 = vmatpush1.msra.mxu0 %v1556
    %1558 = vmatprep.subr.mxu0 0.0
    %v1559 = vand.u32 %v1469, 4294901760
    %1560 = vmatpush1.msra.mxu0 %v1559
    %1561 = vmatprep.subr.mxu0 0.0
    %v1562 = vand.u32 %v1470, 4294901760
    %1563 = vmatpush1.msra.mxu0 %v1562
    %1564 = vmatprep.subr.mxu0 0.0
    %v1565 = vand.u32 %v1471, 4294901760
    %1566 = vmatpush1.msra.mxu0 %v1565
    %1567 = vmatprep.subr.mxu0 0.0
    %v1568 = vand.u32 %v1472, 4294901760
    %1569 = vmatpush1.msra.mxu0 %v1568
    %1570 = vmatprep.subr.mxu0 0.0
    %v1571 = vand.u32 %v1473, 4294901760
    %1572 = vmatpush1.msra.mxu0 %v1571
    %1573 = vmatprep.subr.mxu0 0.0
    %v1574 = vand.u32 %v1474, 4294901760
    %1575 = vmatpush1.msra.mxu0 %v1574
    %1576 = vmatprep.subr.mxu0 0.0
    %v1577 = vand.u32 %v1475, 4294901760
    %1578 = vmatpush1.msra.mxu0 %v1577
    %v1579 = vand.u32 %v1413, 4294901760
    %v1580 = vsub.f32 %v1413, %v1579
    %v1581 = vand.u32 %v1580, 4294901760
    %v1582 = vsub.f32 %v1580, %v1581
    %v1583 = vand.u32 %v1582, 4294901760
    %1584 = vmatprep.mubr.f32.mxu0 %v1583
    %v1585 = vand.u32 %v1412, 4294901760
    %v1586 = vsub.f32 %v1412, %v1585
    %v1587 = vand.u32 %v1586, 4294901760
    %v1588 = vsub.f32 %v1586, %v1587
    %v1589 = vand.u32 %v1588, 4294901760
    %1590 = vmatmul.mubr.f32.gmra.mrb[0].mxu0 %v1589
    %v1591 = vpop.f32.mrb[0].mxu0
    %v1592 = vadd.f32 %v1481, %v1591
    %v1593 = vpop.f32.mrb[0].mxu0
    %v1594 = vand.u32 %v1415, 4294901760
    %v1595 = vsub.f32 %v1415, %v1594
    %v1596 = vand.u32 %v1595, 4294901760
    %v1597 = vsub.f32 %v1595, %v1596
    %v1598 = vand.u32 %v1597, 4294901760
    %1599 = vmatprep.mubr.f32.mxu0 %v1598
    %v1600 = vand.u32 %v1414, 4294901760
    %v1601 = vsub.f32 %v1414, %v1600
    %v1602 = vand.u32 %v1601, 4294901760
    %v1603 = vsub.f32 %v1601, %v1602
    %v1604 = vand.u32 %v1603, 4294901760
    %1605 = vmatmul.mubr.f32.gmra.mrb[0].mxu0 %v1604
    %v1606 = vpop.f32.mrb[0].mxu0
    %v1607 = vadd.f32 %v1481, %v1606
    %v1608 = vpop.f32.mrb[0].mxu0
    %v1609 = vand.u32 %v1417, 4294901760
    %v1610 = vsub.f32 %v1417, %v1609
    %v1611 = vand.u32 %v1610, 4294901760
    %v1612 = vsub.f32 %v1610, %v1611
    %v1613 = vand.u32 %v1612, 4294901760
    %1614 = vmatprep.mubr.f32.mxu0 %v1613
    %v1615 = vand.u32 %v1416, 4294901760
    %v1616 = vsub.f32 %v1416, %v1615
    %v1617 = vand.u32 %v1616, 4294901760
    %v1618 = vsub.f32 %v1616, %v1617
    %v1619 = vand.u32 %v1618, 4294901760
    %1620 = vmatmul.mubr.f32.gmra.mrb[0].mxu0 %v1619
    %v1621 = vpop.f32.mrb[0].mxu0
    %v1622 = vadd.f32 %v1481, %v1621
    %v1623 = vpop.f32.mrb[0].mxu0
    %v1624 = vand.u32 %v1419, 4294901760
    %v1625 = vsub.f32 %v1419, %v1624
    %v1626 = vand.u32 %v1625, 4294901760
    %v1627 = vsub.f32 %v1625, %v1626
    %v1628 = vand.u32 %v1627, 4294901760
    %1629 = vmatprep.mubr.f32.mxu0 %v1628
    %v1630 = vand.u32 %v1418, 4294901760
    %v1631 = vsub.f32 %v1418, %v1630
    %v1632 = vand.u32 %v1631, 4294901760
    %v1633 = vsub.f32 %v1631, %v1632
    %v1634 = vand.u32 %v1633, 4294901760
    %1635 = vmatmul.mubr.f32.gmra.mrb[0].mxu0 %v1634
    %v1636 = vpop.f32.mrb[0].mxu0
    %v1637 = vadd.f32 %v1481, %v1636
    %v1638 = vpop.f32.mrb[0].mxu0
    %v1639 = vand.u32 %v1421, 4294901760
    %v1640 = vsub.f32 %v1421, %v1639
    %v1641 = vand.u32 %v1640, 4294901760
    %v1642 = vsub.f32 %v1640, %v1641
    %v1643 = vand.u32 %v1642, 4294901760
    %1644 = vmatprep.mubr.f32.mxu0 %v1643
    %v1645 = vand.u32 %v1420, 4294901760
    %v1646 = vsub.f32 %v1420, %v1645
    %v1647 = vand.u32 %v1646, 4294901760
    %v1648 = vsub.f32 %v1646, %v1647
    %v1649 = vand.u32 %v1648, 4294901760
    %1650 = vmatmul.mubr.f32.gmra.mrb[0].mxu0 %v1649
    %v1651 = vpop.f32.mrb[0].mxu0
    %v1652 = vadd.f32 %v1481, %v1651
    %v1653 = vpop.f32.mrb[0].mxu0
    %v1654 = vand.u32 %v1423, 4294901760
    %v1655 = vsub.f32 %v1423, %v1654
    %v1656 = vand.u32 %v1655, 4294901760
    %v1657 = vsub.f32 %v1655, %v1656
    %v1658 = vand.u32 %v1657, 4294901760
    %1659 = vmatprep.mubr.f32.mxu0 %v1658
    %v1660 = vand.u32 %v1422, 4294901760
    %v1661 = vsub.f32 %v1422, %v1660
    %v1662 = vand.u32 %v1661, 4294901760
    %v1663 = vsub.f32 %v1661, %v1662
    %v1664 = vand.u32 %v1663, 4294901760
    %1665 = vmatmul.mubr.f32.gmra.mrb[0].mxu0 %v1664
    %v1666 = vpop.f32.mrb[0].mxu0
    %v1667 = vadd.f32 %v1481, %v1666
    %v1668 = vpop.f32.mrb[0].mxu0
    %v1669 = vand.u32 %v1425, 4294901760
    %v1670 = vsub.f32 %v1425, %v1669
    %v1671 = vand.u32 %v1670, 4294901760
    %v1672 = vsub.f32 %v1670, %v1671
    %v1673 = vand.u32 %v1672, 4294901760
    %1674 = vmatprep.mubr.f32.mxu0 %v1673
    %v1675 = vand.u32 %v1424, 4294901760
    %v1676 = vsub.f32 %v1424, %v1675
    %v1677 = vand.u32 %v1676, 4294901760
    %v1678 = vsub.f32 %v1676, %v1677
    %v1679 = vand.u32 %v1678, 4294901760
    %1680 = vmatmul.mubr.f32.gmra.mrb[0].mxu0 %v1679
    %v1681 = vpop.f32.mrb[0].mxu0
    %v1682 = vadd.f32 %v1481, %v1681
    %v1683 = vpop.f32.mrb[0].mxu0
    %v1684 = vand.u32 %v1427, 4294901760
    %v1685 = vsub.f32 %v1427, %v1684
    %v1686 = vand.u32 %v1685, 4294901760
    %v1687 = vsub.f32 %v1685, %v1686
    %v1688 = vand.u32 %v1687, 4294901760
    %1689 = vmatprep.mubr.f32.mxu0 %v1688
    %v1690 = vand.u32 %v1426, 4294901760
    %v1691 = vsub.f32 %v1426, %v1690
    %v1692 = vand.u32 %v1691, 4294901760
    %v1693 = vsub.f32 %v1691, %v1692
    %v1694 = vand.u32 %v1693, 4294901760
    %1695 = vmatmul.mubr.f32.gmra.mrb[0].mxu0 %v1694
    %v1696 = vpop.f32.mrb[0].mxu0
    %v1697 = vadd.f32 %v1481, %v1696
    %v1698 = vpop.f32.mrb[0].mxu0
    %v1699 = vand.u32 %v1429, 4294901760
    %v1700 = vsub.f32 %v1429, %v1699
    %v1701 = vand.u32 %v1700, 4294901760
    %v1702 = vsub.f32 %v1700, %v1701
    %v1703 = vand.u32 %v1702, 4294901760
    %1704 = vmatprep.mubr.f32.mxu0 %v1703
    %v1705 = vand.u32 %v1428, 4294901760
    %v1706 = vsub.f32 %v1428, %v1705
    %v1707 = vand.u32 %v1706, 4294901760
    %v1708 = vsub.f32 %v1706, %v1707
    %v1709 = vand.u32 %v1708, 4294901760
    %1710 = vmatmul.mubr.f32.gmra.mrb[0].mxu0 %v1709
    %v1711 = vpop.f32.mrb[0].mxu0
    %v1712 = vadd.f32 %v1481, %v1711
    %v1713 = vpop.f32.mrb[0].mxu0
    %v1714 = vand.u32 %v1431, 4294901760
    %v1715 = vsub.f32 %v1431, %v1714
    %v1716 = vand.u32 %v1715, 4294901760
    %v1717 = vsub.f32 %v1715, %v1716
    %v1718 = vand.u32 %v1717, 4294901760
    %1719 = vmatprep.mubr.f32.mxu0 %v1718
    %v1720 = vand.u32 %v1430, 4294901760
    %v1721 = vsub.f32 %v1430, %v1720
    %v1722 = vand.u32 %v1721, 4294901760
    %v1723 = vsub.f32 %v1721, %v1722
    %v1724 = vand.u32 %v1723, 4294901760
    %1725 = vmatmul.mubr.f32.gmra.mrb[0].mxu0 %v1724
    %v1726 = vpop.f32.mrb[0].mxu0
    %v1727 = vadd.f32 %v1481, %v1726
    %v1728 = vpop.f32.mrb[0].mxu0
    %v1729 = vand.u32 %v1433, 4294901760
    %v1730 = vsub.f32 %v1433, %v1729
    %v1731 = vand.u32 %v1730, 4294901760
    %v1732 = vsub.f32 %v1730, %v1731
    %v1733 = vand.u32 %v1732, 4294901760
    %1734 = vmatprep.mubr.f32.mxu0 %v1733
    %v1735 = vand.u32 %v1432, 4294901760
    %v1736 = vsub.f32 %v1432, %v1735
    %v1737 = vand.u32 %v1736, 4294901760
    %v1738 = vsub.f32 %v1736, %v1737
    %v1739 = vand.u32 %v1738, 4294901760
    %1740 = vmatmul.mubr.f32.gmra.mrb[0].mxu0 %v1739
    %v1741 = vpop.f32.mrb[0].mxu0
    %v1742 = vadd.f32 %v1481, %v1741
    %v1743 = vpop.f32.mrb[0].mxu0
    %v1744 = vand.u32 %v1435, 4294901760
    %v1745 = vsub.f32 %v1435, %v1744
    %v1746 = vand.u32 %v1745, 4294901760
    %v1747 = vsub.f32 %v1745, %v1746
    %v1748 = vand.u32 %v1747, 4294901760
    %1749 = vmatprep.mubr.f32.mxu0 %v1748
    %v1750 = vand.u32 %v1434, 4294901760
    %v1751 = vsub.f32 %v1434, %v1750
    %v1752 = vand.u32 %v1751, 4294901760
    %v1753 = vsub.f32 %v1751, %v1752
    %v1754 = vand.u32 %v1753, 4294901760
    %1755 = vmatmul.mubr.f32.gmra.mrb[0].mxu0 %v1754
    %v1756 = vpop.f32.mrb[0].mxu0
    %v1757 = vadd.f32 %v1481, %v1756
    %v1758 = vpop.f32.mrb[0].mxu0
    %v1759 = vand.u32 %v1437, 4294901760
    %v1760 = vsub.f32 %v1437, %v1759
    %v1761 = vand.u32 %v1760, 4294901760
    %v1762 = vsub.f32 %v1760, %v1761
    %v1763 = vand.u32 %v1762, 4294901760
    %1764 = vmatprep.mubr.f32.mxu0 %v1763
    %v1765 = vand.u32 %v1436, 4294901760
    %v1766 = vsub.f32 %v1436, %v1765
    %v1767 = vand.u32 %v1766, 4294901760
    %v1768 = vsub.f32 %v1766, %v1767
    %v1769 = vand.u32 %v1768, 4294901760
    %1770 = vmatmul.mubr.f32.gmra.mrb[0].mxu0 %v1769
    %v1771 = vpop.f32.mrb[0].mxu0
    %v1772 = vadd.f32 %v1481, %v1771
    %v1773 = vpop.f32.mrb[0].mxu0
    %v1774 = vand.u32 %v1439, 4294901760
    %v1775 = vsub.f32 %v1439, %v1774
    %v1776 = vand.u32 %v1775, 4294901760
    %v1777 = vsub.f32 %v1775, %v1776
    %v1778 = vand.u32 %v1777, 4294901760
    %1779 = vmatprep.mubr.f32.mxu0 %v1778
    %v1780 = vand.u32 %v1438, 4294901760
    %v1781 = vsub.f32 %v1438, %v1780
    %v1782 = vand.u32 %v1781, 4294901760
    %v1783 = vsub.f32 %v1781, %v1782
    %v1784 = vand.u32 %v1783, 4294901760
    %1785 = vmatmul.mubr.f32.gmra.mrb[0].mxu0 %v1784
    %v1786 = vpop.f32.mrb[0].mxu0
    %v1787 = vadd.f32 %v1481, %v1786
    %v1788 = vpop.f32.mrb[0].mxu0
    %v1789 = vand.u32 %v1441, 4294901760
    %v1790 = vsub.f32 %v1441, %v1789
    %v1791 = vand.u32 %v1790, 4294901760
    %v1792 = vsub.f32 %v1790, %v1791
    %v1793 = vand.u32 %v1792, 4294901760
    %1794 = vmatprep.mubr.f32.mxu0 %v1793
    %v1795 = vand.u32 %v1440, 4294901760
    %v1796 = vsub.f32 %v1440, %v1795
    %v1797 = vand.u32 %v1796, 4294901760
    %v1798 = vsub.f32 %v1796, %v1797
    %v1799 = vand.u32 %v1798, 4294901760
    %1800 = vmatmul.mubr.f32.gmra.mrb[0].mxu0 %v1799
    %v1801 = vpop.f32.mrb[0].mxu0
    %v1802 = vadd.f32 %v1481, %v1801
    %v1803 = vpop.f32.mrb[0].mxu0
    %v1804 = vand.u32 %v1443, 4294901760
    %v1805 = vsub.f32 %v1443, %v1804
    %v1806 = vand.u32 %v1805, 4294901760
    %v1807 = vsub.f32 %v1805, %v1806
    %v1808 = vand.u32 %v1807, 4294901760
    %1809 = vmatprep.mubr.f32.mxu0 %v1808
    %v1810 = vand.u32 %v1442, 4294901760
    %v1811 = vsub.f32 %v1442, %v1810
    %v1812 = vand.u32 %v1811, 4294901760
    %v1813 = vsub.f32 %v1811, %v1812
    %v1814 = vand.u32 %v1813, 4294901760
    %1815 = vmatmul.mubr.f32.gmra.mrb[0].mxu0 %v1814
    %v1816 = vpop.f32.mrb[0].mxu0
    %v1817 = vadd.f32 %v1481, %v1816
    %v1818 = vpop.f32.mrb[0].mxu0
    %1819 = vdwg.mxu0
    %1820 = vmatprep.subr.mxu0 0.0
    %v1821 = vand.u32 %v1444, 4294901760
    %v1822 = vsub.f32 %v1444, %v1821
    %v1823 = vand.u32 %v1822, 4294901760
    %v1824 = vsub.f32 %v1822, %v1823
    %v1825 = vand.u32 %v1824, 4294901760
    %1826 = vmatpush1.msra.mxu0 %v1825
    %1827 = vmatprep.subr.mxu0 0.0
    %v1828 = vand.u32 %v1445, 4294901760
    %v1829 = vsub.f32 %v1445, %v1828
    %v1830 = vand.u32 %v1829, 4294901760
    %v1831 = vsub.f32 %v1829, %v1830
    %v1832 = vand.u32 %v1831, 4294901760
    %1833 = vmatpush1.msra.mxu0 %v1832
    %1834 = vmatprep.subr.mxu0 0.0
    %v1835 = vand.u32 %v1446, 4294901760
    %v1836 = vsub.f32 %v1446, %v1835
    %v1837 = vand.u32 %v1836, 4294901760
    %v1838 = vsub.f32 %v1836, %v1837
    %v1839 = vand.u32 %v1838, 4294901760
    %1840 = vmatpush1.msra.mxu0 %v1839
    %1841 = vmatprep.subr.mxu0 0.0
    %v1842 = vand.u32 %v1447, 4294901760
    %v1843 = vsub.f32 %v1447, %v1842
    %v1844 = vand.u32 %v1843, 4294901760
    %v1845 = vsub.f32 %v1843, %v1844
    %v1846 = vand.u32 %v1845, 4294901760
    %1847 = vmatpush1.msra.mxu0 %v1846
    %1848 = vmatprep.subr.mxu0 0.0
    %v1849 = vand.u32 %v1448, 4294901760
    %v1850 = vsub.f32 %v1448, %v1849
    %v1851 = vand.u32 %v1850, 4294901760
    %v1852 = vsub.f32 %v1850, %v1851
    %v1853 = vand.u32 %v1852, 4294901760
    %1854 = vmatpush1.msra.mxu0 %v1853
    %1855 = vmatprep.subr.mxu0 0.0
    %v1856 = vand.u32 %v1449, 4294901760
    %v1857 = vsub.f32 %v1449, %v1856
    %v1858 = vand.u32 %v1857, 4294901760
    %v1859 = vsub.f32 %v1857, %v1858
    %v1860 = vand.u32 %v1859, 4294901760
    %1861 = vmatpush1.msra.mxu0 %v1860
    %1862 = vmatprep.subr.mxu0 0.0
    %v1863 = vand.u32 %v1450, 4294901760
    %v1864 = vsub.f32 %v1450, %v1863
    %v1865 = vand.u32 %v1864, 4294901760
    %v1866 = vsub.f32 %v1864, %v1865
    %v1867 = vand.u32 %v1866, 4294901760
    %1868 = vmatpush1.msra.mxu0 %v1867
    %1869 = vmatprep.subr.mxu0 0.0
    %v1870 = vand.u32 %v1451, 4294901760
    %v1871 = vsub.f32 %v1451, %v1870
    %v1872 = vand.u32 %v1871, 4294901760
    %v1873 = vsub.f32 %v1871, %v1872
    %v1874 = vand.u32 %v1873, 4294901760
    %1875 = vmatpush1.msra.mxu0 %v1874
    %1876 = vmatprep.subr.mxu0 0.0
    %v1877 = vand.u32 %v1452, 4294901760
    %v1878 = vsub.f32 %v1452, %v1877
    %v1879 = vand.u32 %v1878, 4294901760
    %v1880 = vsub.f32 %v1878, %v1879
    %v1881 = vand.u32 %v1880, 4294901760
    %1882 = vmatpush1.msra.mxu0 %v1881
    %1883 = vmatprep.subr.mxu0 0.0
    %v1884 = vand.u32 %v1453, 4294901760
    %v1885 = vsub.f32 %v1453, %v1884
    %v1886 = vand.u32 %v1885, 4294901760
    %v1887 = vsub.f32 %v1885, %v1886
    %v1888 = vand.u32 %v1887, 4294901760
    %1889 = vmatpush1.msra.mxu0 %v1888
    %1890 = vmatprep.subr.mxu0 0.0
    %v1891 = vand.u32 %v1454, 4294901760
    %v1892 = vsub.f32 %v1454, %v1891
    %v1893 = vand.u32 %v1892, 4294901760
    %v1894 = vsub.f32 %v1892, %v1893
    %v1895 = vand.u32 %v1894, 4294901760
    %1896 = vmatpush1.msra.mxu0 %v1895
    %1897 = vmatprep.subr.mxu0 0.0
    %v1898 = vand.u32 %v1455, 4294901760
    %v1899 = vsub.f32 %v1455, %v1898
    %v1900 = vand.u32 %v1899, 4294901760
    %v1901 = vsub.f32 %v1899, %v1900
    %v1902 = vand.u32 %v1901, 4294901760
    %1903 = vmatpush1.msra.mxu0 %v1902
    %1904 = vmatprep.subr.mxu0 0.0
    %v1905 = vand.u32 %v1456, 4294901760
    %v1906 = vsub.f32 %v1456, %v1905
    %v1907 = vand.u32 %v1906, 4294901760
    %v1908 = vsub.f32 %v1906, %v1907
    %v1909 = vand.u32 %v1908, 4294901760
    %1910 = vmatpush1.msra.mxu0 %v1909
    %1911 = vmatprep.subr.mxu0 0.0
    %v1912 = vand.u32 %v1457, 4294901760
    %v1913 = vsub.f32 %v1457, %v1912
    %v1914 = vand.u32 %v1913, 4294901760
    %v1915 = vsub.f32 %v1913, %v1914
    %v1916 = vand.u32 %v1915, 4294901760
    %1917 = vmatpush1.msra.mxu0 %v1916
    %1918 = vmatprep.subr.mxu0 0.0
    %v1919 = vand.u32 %v1458, 4294901760
    %v1920 = vsub.f32 %v1458, %v1919
    %v1921 = vand.u32 %v1920, 4294901760
    %v1922 = vsub.f32 %v1920, %v1921
    %v1923 = vand.u32 %v1922, 4294901760
    %1924 = vmatpush1.msra.mxu0 %v1923
    %1925 = vmatprep.subr.mxu0 0.0
    %v1926 = vand.u32 %v1459, 4294901760
    %v1927 = vsub.f32 %v1459, %v1926
    %v1928 = vand.u32 %v1927, 4294901760
    %v1929 = vsub.f32 %v1927, %v1928
    %v1930 = vand.u32 %v1929, 4294901760
    %1931 = vmatpush1.msra.mxu0 %v1930
    %1932 = vmatprep.subr.mxu0 0.0
    %v1933 = vand.u32 %v1460, 4294901760
    %v1934 = vsub.f32 %v1460, %v1933
    %v1935 = vand.u32 %v1934, 4294901760
    %v1936 = vsub.f32 %v1934, %v1935
    %v1937 = vand.u32 %v1936, 4294901760
    %1938 = vmatpush1.msra.mxu0 %v1937
    %1939 = vmatprep.subr.mxu0 0.0
    %v1940 = vand.u32 %v1461, 4294901760
    %v1941 = vsub.f32 %v1461, %v1940
    %v1942 = vand.u32 %v1941, 4294901760
    %v1943 = vsub.f32 %v1941, %v1942
    %v1944 = vand.u32 %v1943, 4294901760
    %1945 = vmatpush1.msra.mxu0 %v1944
    %1946 = vmatprep.subr.mxu0 0.0
    %v1947 = vand.u32 %v1462, 4294901760
    %v1948 = vsub.f32 %v1462, %v1947
    %v1949 = vand.u32 %v1948, 4294901760
    %v1950 = vsub.f32 %v1948, %v1949
    %v1951 = vand.u32 %v1950, 4294901760
    %1952 = vmatpush1.msra.mxu0 %v1951
    %1953 = vmatprep.subr.mxu0 0.0
    %v1954 = vand.u32 %v1463, 4294901760
    %v1955 = vsub.f32 %v1463, %v1954
    %v1956 = vand.u32 %v1955, 4294901760
    %v1957 = vsub.f32 %v1955, %v1956
    %v1958 = vand.u32 %v1957, 4294901760
    %1959 = vmatpush1.msra.mxu0 %v1958
    %1960 = vmatprep.subr.mxu0 0.0
    %v1961 = vand.u32 %v1464, 4294901760
    %v1962 = vsub.f32 %v1464, %v1961
    %v1963 = vand.u32 %v1962, 4294901760
    %v1964 = vsub.f32 %v1962, %v1963
    %v1965 = vand.u32 %v1964, 4294901760
    %1966 = vmatpush1.msra.mxu0 %v1965
    %1967 = vmatprep.subr.mxu0 0.0
    %v1968 = vand.u32 %v1465, 4294901760
    %v1969 = vsub.f32 %v1465, %v1968
    %v1970 = vand.u32 %v1969, 4294901760
    %v1971 = vsub.f32 %v1969, %v1970
    %v1972 = vand.u32 %v1971, 4294901760
    %1973 = vmatpush1.msra.mxu0 %v1972
    %1974 = vmatprep.subr.mxu0 0.0
    %v1975 = vand.u32 %v1466, 4294901760
    %v1976 = vsub.f32 %v1466, %v1975
    %v1977 = vand.u32 %v1976, 4294901760
    %v1978 = vsub.f32 %v1976, %v1977
    %v1979 = vand.u32 %v1978, 4294901760
    %1980 = vmatpush1.msra.mxu0 %v1979
    %1981 = vmatprep.subr.mxu0 0.0
    %v1982 = vand.u32 %v1467, 4294901760
    %v1983 = vsub.f32 %v1467, %v1982
    %v1984 = vand.u32 %v1983, 4294901760
    %v1985 = vsub.f32 %v1983, %v1984
    %v1986 = vand.u32 %v1985, 4294901760
    %1987 = vmatpush1.msra.mxu0 %v1986
    %1988 = vmatprep.subr.mxu0 0.0
    %v1989 = vand.u32 %v1468, 4294901760
    %v1990 = vsub.f32 %v1468, %v1989
    %v1991 = vand.u32 %v1990, 4294901760
    %v1992 = vsub.f32 %v1990, %v1991
    %v1993 = vand.u32 %v1992, 4294901760
    %1994 = vmatpush1.msra.mxu0 %v1993
    %1995 = vmatprep.subr.mxu0 0.0
    %v1996 = vand.u32 %v1469, 4294901760
    %v1997 = vsub.f32 %v1469, %v1996
    %v1998 = vand.u32 %v1997, 4294901760
    %v1999 = vsub.f32 %v1997, %v1998
    %v2000 = vand.u32 %v1999, 4294901760
    %2001 = vmatpush1.msra.mxu0 %v2000
    %2002 = vmatprep.subr.mxu0 0.0
    %v2003 = vand.u32 %v1470, 4294901760
    %v2004 = vsub.f32 %v1470, %v2003
    %v2005 = vand.u32 %v2004, 4294901760
    %v2006 = vsub.f32 %v2004, %v2005
    %v2007 = vand.u32 %v2006, 4294901760
    %2008 = vmatpush1.msra.mxu0 %v2007
    %2009 = vmatprep.subr.mxu0 0.0
    %v2010 = vand.u32 %v1471, 4294901760
    %v2011 = vsub.f32 %v1471, %v2010
    %v2012 = vand.u32 %v2011, 4294901760
    %v2013 = vsub.f32 %v2011, %v2012
    %v2014 = vand.u32 %v2013, 4294901760
    %2015 = vmatpush1.msra.mxu0 %v2014
    %2016 = vmatprep.subr.mxu0 0.0
    %v2017 = vand.u32 %v1472, 4294901760
    %v2018 = vsub.f32 %v1472, %v2017
    %v2019 = vand.u32 %v2018, 4294901760
    %v2020 = vsub.f32 %v2018, %v2019
    %v2021 = vand.u32 %v2020, 4294901760
    %2022 = vmatpush1.msra.mxu0 %v2021
    %2023 = vmatprep.subr.mxu0 0.0
    %v2024 = vand.u32 %v1473, 4294901760
    %v2025 = vsub.f32 %v1473, %v2024
    %v2026 = vand.u32 %v2025, 4294901760
    %v2027 = vsub.f32 %v2025, %v2026
    %v2028 = vand.u32 %v2027, 4294901760
    %2029 = vmatpush1.msra.mxu0 %v2028
    %2030 = vmatprep.subr.mxu0 0.0
    %v2031 = vand.u32 %v1474, 4294901760
    %v2032 = vsub.f32 %v1474, %v2031
    %v2033 = vand.u32 %v2032, 4294901760
    %v2034 = vsub.f32 %v2032, %v2033
    %v2035 = vand.u32 %v2034, 4294901760
    %2036 = vmatpush1.msra.mxu0 %v2035
    %2037 = vmatprep.subr.mxu0 0.0
    %v2038 = vand.u32 %v1475, 4294901760
    %v2039 = vsub.f32 %v1475, %v2038
    %v2040 = vand.u32 %v2039, 4294901760
    %v2041 = vsub.f32 %v2039, %v2040
    %v2042 = vand.u32 %v2041, 4294901760
    %2043 = vmatpush1.msra.mxu0 %v2042
    %v2044 = vand.u32 %v1413, 4294901760
    %2045 = vmatprep.mubr.f32.mxu0 %v2044
    %v2046 = vand.u32 %v1412, 4294901760
    %2047 = vmatmul.mubr.f32.gmra.mrb[0].mxu0 %v2046
    %v2048 = vpop.f32.mrb[0].mxu0
    %v2049 = vadd.f32 %v1592, %v2048
    %v2050 = vpop.f32.mrb[0].mxu0
    %v2051 = vand.u32 %v1415, 4294901760
    %2052 = vmatprep.mubr.f32.mxu0 %v2051
    %v2053 = vand.u32 %v1414, 4294901760
    %2054 = vmatmul.mubr.f32.gmra.mrb[0].mxu0 %v2053
    %v2055 = vpop.f32.mrb[0].mxu0
    %v2056 = vadd.f32 %v1607, %v2055
    %v2057 = vpop.f32.mrb[0].mxu0
    %v2058 = vand.u32 %v1417, 4294901760
    %2059 = vmatprep.mubr.f32.mxu0 %v2058
    %v2060 = vand.u32 %v1416, 4294901760
    %2061 = vmatmul.mubr.f32.gmra.mrb[0].mxu0 %v2060
    %v2062 = vpop.f32.mrb[0].mxu0
    %v2063 = vadd.f32 %v1622, %v2062
    %v2064 = vpop.f32.mrb[0].mxu0
    %v2065 = vand.u32 %v1419, 4294901760
    %2066 = vmatprep.mubr.f32.mxu0 %v2065
    %v2067 = vand.u32 %v1418, 4294901760
    %2068 = vmatmul.mubr.f32.gmra.mrb[0].mxu0 %v2067
    %v2069 = vpop.f32.mrb[0].mxu0
    %v2070 = vadd.f32 %v1637, %v2069
    %v2071 = vpop.f32.mrb[0].mxu0
    %v2072 = vand.u32 %v1421, 4294901760
    %2073 = vmatprep.mubr.f32.mxu0 %v2072
    %v2074 = vand.u32 %v1420, 4294901760
    %2075 = vmatmul.mubr.f32.gmra.mrb[0].mxu0 %v2074
    %v2076 = vpop.f32.mrb[0].mxu0
    %v2077 = vadd.f32 %v1652, %v2076
    %v2078 = vpop.f32.mrb[0].mxu0
    %v2079 = vand.u32 %v1423, 4294901760
    %2080 = vmatprep.mubr.f32.mxu0 %v2079
    %v2081 = vand.u32 %v1422, 4294901760
    %2082 = vmatmul.mubr.f32.gmra.mrb[0].mxu0 %v2081
    %v2083 = vpop.f32.mrb[0].mxu0
    %v2084 = vadd.f32 %v1667, %v2083
    %v2085 = vpop.f32.mrb[0].mxu0
    %v2086 = vand.u32 %v1425, 4294901760
    %2087 = vmatprep.mubr.f32.mxu0 %v2086
    %v2088 = vand.u32 %v1424, 4294901760
    %2089 = vmatmul.mubr.f32.gmra.mrb[0].mxu0 %v2088
    %v2090 = vpop.f32.mrb[0].mxu0
    %v2091 = vadd.f32 %v1682, %v2090
    %v2092 = vpop.f32.mrb[0].mxu0
    %v2093 = vand.u32 %v1427, 4294901760
    %2094 = vmatprep.mubr.f32.mxu0 %v2093
    %v2095 = vand.u32 %v1426, 4294901760
    %2096 = vmatmul.mubr.f32.gmra.mrb[0].mxu0 %v2095
    %v2097 = vpop.f32.mrb[0].mxu0
    %v2098 = vadd.f32 %v1697, %v2097
    %v2099 = vpop.f32.mrb[0].mxu0
    %v2100 = vand.u32 %v1429, 4294901760
    %2101 = vmatprep.mubr.f32.mxu0 %v2100
    %v2102 = vand.u32 %v1428, 4294901760
    %2103 = vmatmul.mubr.f32.gmra.mrb[0].mxu0 %v2102
    %v2104 = vpop.f32.mrb[0].mxu0
    %v2105 = vadd.f32 %v1712, %v2104
    %v2106 = vpop.f32.mrb[0].mxu0
    %v2107 = vand.u32 %v1431, 4294901760
    %2108 = vmatprep.mubr.f32.mxu0 %v2107
    %v2109 = vand.u32 %v1430, 4294901760
    %2110 = vmatmul.mubr.f32.gmra.mrb[0].mxu0 %v2109
    %v2111 = vpop.f32.mrb[0].mxu0
    %v2112 = vadd.f32 %v1727, %v2111
    %v2113 = vpop.f32.mrb[0].mxu0
    %v2114 = vand.u32 %v1433, 4294901760
    %2115 = vmatprep.mubr.f32.mxu0 %v2114
    %v2116 = vand.u32 %v1432, 4294901760
    %2117 = vmatmul.mubr.f32.gmra.mrb[0].mxu0 %v2116
    %v2118 = vpop.f32.mrb[0].mxu0
    %v2119 = vadd.f32 %v1742, %v2118
    %v2120 = vpop.f32.mrb[0].mxu0
    %v2121 = vand.u32 %v1435, 4294901760
    %2122 = vmatprep.mubr.f32.mxu0 %v2121
    %v2123 = vand.u32 %v1434, 4294901760
    %2124 = vmatmul.mubr.f32.gmra.mrb[0].mxu0 %v2123
    %v2125 = vpop.f32.mrb[0].mxu0
    %v2126 = vadd.f32 %v1757, %v2125
    %v2127 = vpop.f32.mrb[0].mxu0
    %v2128 = vand.u32 %v1437, 4294901760
    %2129 = vmatprep.mubr.f32.mxu0 %v2128
    %v2130 = vand.u32 %v1436, 4294901760
    %2131 = vmatmul.mubr.f32.gmra.mrb[0].mxu0 %v2130
    %v2132 = vpop.f32.mrb[0].mxu0
    %v2133 = vadd.f32 %v1772, %v2132
    %v2134 = vpop.f32.mrb[0].mxu0
    %v2135 = vand.u32 %v1439, 4294901760
    %2136 = vmatprep.mubr.f32.mxu0 %v2135
    %v2137 = vand.u32 %v1438, 4294901760
    %2138 = vmatmul.mubr.f32.gmra.mrb[0].mxu0 %v2137
    %v2139 = vpop.f32.mrb[0].mxu0
    %v2140 = vadd.f32 %v1787, %v2139
    %v2141 = vpop.f32.mrb[0].mxu0
    %v2142 = vand.u32 %v1441, 4294901760
    %2143 = vmatprep.mubr.f32.mxu0 %v2142
    %v2144 = vand.u32 %v1440, 4294901760
    %2145 = vmatmul.mubr.f32.gmra.mrb[0].mxu0 %v2144
    %v2146 = vpop.f32.mrb[0].mxu0
    %v2147 = vadd.f32 %v1802, %v2146
    %v2148 = vpop.f32.mrb[0].mxu0
    %v2149 = vand.u32 %v1443, 4294901760
    %2150 = vmatprep.mubr.f32.mxu0 %v2149
    %v2151 = vand.u32 %v1442, 4294901760
    %2152 = vmatmul.mubr.f32.gmra.mrb[0].mxu0 %v2151
    %v2153 = vpop.f32.mrb[0].mxu0
    %v2154 = vadd.f32 %v1817, %v2153
    %v2155 = vpop.f32.mrb[0].mxu0
    %2156 = vdwg.mxu0
    %2157 = vmatprep.subr.mxu0 0.0
    %v2158 = vand.u32 %v1444, 4294901760
    %v2159 = vsub.f32 %v1444, %v2158
    %2160 = vmatpush1.msra.mxu0 %v2159
    %2161 = vmatprep.subr.mxu0 0.0
    %v2162 = vand.u32 %v1445, 4294901760
    %v2163 = vsub.f32 %v1445, %v2162
    %2164 = vmatpush1.msra.mxu0 %v2163
    %2165 = vmatprep.subr.mxu0 0.0
    %v2166 = vand.u32 %v1446, 4294901760
    %v2167 = vsub.f32 %v1446, %v2166
    %2168 = vmatpush1.msra.mxu0 %v2167
    %2169 = vmatprep.subr.mxu0 0.0
    %v2170 = vand.u32 %v1447, 4294901760
    %v2171 = vsub.f32 %v1447, %v2170
    %2172 = vmatpush1.msra.mxu0 %v2171
    %2173 = vmatprep.subr.mxu0 0.0
    %v2174 = vand.u32 %v1448, 4294901760
    %v2175 = vsub.f32 %v1448, %v2174
    %2176 = vmatpush1.msra.mxu0 %v2175
    %2177 = vmatprep.subr.mxu0 0.0
    %v2178 = vand.u32 %v1449, 4294901760
    %v2179 = vsub.f32 %v1449, %v2178
    %2180 = vmatpush1.msra.mxu0 %v2179
    %2181 = vmatprep.subr.mxu0 0.0
    %v2182 = vand.u32 %v1450, 4294901760
    %v2183 = vsub.f32 %v1450, %v2182
    %2184 = vmatpush1.msra.mxu0 %v2183
    %2185 = vmatprep.subr.mxu0 0.0
    %v2186 = vand.u32 %v1451, 4294901760
    %v2187 = vsub.f32 %v1451, %v2186
    %2188 = vmatpush1.msra.mxu0 %v2187
    %2189 = vmatprep.subr.mxu0 0.0
    %v2190 = vand.u32 %v1452, 4294901760
    %v2191 = vsub.f32 %v1452, %v2190
    %2192 = vmatpush1.msra.mxu0 %v2191
    %2193 = vmatprep.subr.mxu0 0.0
    %v2194 = vand.u32 %v1453, 4294901760
    %v2195 = vsub.f32 %v1453, %v2194
    %2196 = vmatpush1.msra.mxu0 %v2195
    %2197 = vmatprep.subr.mxu0 0.0
    %v2198 = vand.u32 %v1454, 4294901760
    %v2199 = vsub.f32 %v1454, %v2198
    %2200 = vmatpush1.msra.mxu0 %v2199
    %2201 = vmatprep.subr.mxu0 0.0
    %v2202 = vand.u32 %v1455, 4294901760
    %v2203 = vsub.f32 %v1455, %v2202
    %2204 = vmatpush1.msra.mxu0 %v2203
    %2205 = vmatprep.subr.mxu0 0.0
    %v2206 = vand.u32 %v1456, 4294901760
    %v2207 = vsub.f32 %v1456, %v2206
    %2208 = vmatpush1.msra.mxu0 %v2207
    %2209 = vmatprep.subr.mxu0 0.0
    %v2210 = vand.u32 %v1457, 4294901760
    %v2211 = vsub.f32 %v1457, %v2210
    %2212 = vmatpush1.msra.mxu0 %v2211
    %2213 = vmatprep.subr.mxu0 0.0
    %v2214 = vand.u32 %v1458, 4294901760
    %v2215 = vsub.f32 %v1458, %v2214
    %2216 = vmatpush1.msra.mxu0 %v2215
    %2217 = vmatprep.subr.mxu0 0.0
    %v2218 = vand.u32 %v1459, 4294901760
    %v2219 = vsub.f32 %v1459, %v2218
    %2220 = vmatpush1.msra.mxu0 %v2219
    %2221 = vmatprep.subr.mxu0 0.0
    %v2222 = vand.u32 %v1460, 4294901760
    %v2223 = vsub.f32 %v1460, %v2222
    %2224 = vmatpush1.msra.mxu0 %v2223
    %2225 = vmatprep.subr.mxu0 0.0
    %v2226 = vand.u32 %v1461, 4294901760
    %v2227 = vsub.f32 %v1461, %v2226
    %2228 = vmatpush1.msra.mxu0 %v2227
    %2229 = vmatprep.subr.mxu0 0.0
    %v2230 = vand.u32 %v1462, 4294901760
    %v2231 = vsub.f32 %v1462, %v2230
    %2232 = vmatpush1.msra.mxu0 %v2231
    %2233 = vmatprep.subr.mxu0 0.0
    %v2234 = vand.u32 %v1463, 4294901760
    %v2235 = vsub.f32 %v1463, %v2234
    %2236 = vmatpush1.msra.mxu0 %v2235
    %2237 = vmatprep.subr.mxu0 0.0
    %v2238 = vand.u32 %v1464, 4294901760
    %v2239 = vsub.f32 %v1464, %v2238
    %2240 = vmatpush1.msra.mxu0 %v2239
    %2241 = vmatprep.subr.mxu0 0.0
    %v2242 = vand.u32 %v1465, 4294901760
    %v2243 = vsub.f32 %v1465, %v2242
    %2244 = vmatpush1.msra.mxu0 %v2243
    %2245 = vmatprep.subr.mxu0 0.0
    %v2246 = vand.u32 %v1466, 4294901760
    %v2247 = vsub.f32 %v1466, %v2246
    %2248 = vmatpush1.msra.mxu0 %v2247
    %2249 = vmatprep.subr.mxu0 0.0
    %v2250 = vand.u32 %v1467, 4294901760
    %v2251 = vsub.f32 %v1467, %v2250
    %2252 = vmatpush1.msra.mxu0 %v2251
    %2253 = vmatprep.subr.mxu0 0.0
    %v2254 = vand.u32 %v1468, 4294901760
    %v2255 = vsub.f32 %v1468, %v2254
    %2256 = vmatpush1.msra.mxu0 %v2255
    %2257 = vmatprep.subr.mxu0 0.0
    %v2258 = vand.u32 %v1469, 4294901760
    %v2259 = vsub.f32 %v1469, %v2258
    %2260 = vmatpush1.msra.mxu0 %v2259
    %2261 = vmatprep.subr.mxu0 0.0
    %v2262 = vand.u32 %v1470, 4294901760
    %v2263 = vsub.f32 %v1470, %v2262
    %2264 = vmatpush1.msra.mxu0 %v2263
    %2265 = vmatprep.subr.mxu0 0.0
    %v2266 = vand.u32 %v1471, 4294901760
    %v2267 = vsub.f32 %v1471, %v2266
    %2268 = vmatpush1.msra.mxu0 %v2267
    %2269 = vmatprep.subr.mxu0 0.0
    %v2270 = vand.u32 %v1472, 4294901760
    %v2271 = vsub.f32 %v1472, %v2270
    %2272 = vmatpush1.msra.mxu0 %v2271
    %2273 = vmatprep.subr.mxu0 0.0
    %v2274 = vand.u32 %v1473, 4294901760
    %v2275 = vsub.f32 %v1473, %v2274
    %2276 = vmatpush1.msra.mxu0 %v2275
    %2277 = vmatprep.subr.mxu0 0.0
    %v2278 = vand.u32 %v1474, 4294901760
    %v2279 = vsub.f32 %v1474, %v2278
    %2280 = vmatpush1.msra.mxu0 %v2279
    %2281 = vmatprep.subr.mxu0 0.0
    %v2282 = vand.u32 %v1475, 4294901760
    %v2283 = vsub.f32 %v1475, %v2282
    %2284 = vmatpush1.msra.mxu0 %v2283
    %v2285 = vand.u32 %v1413, 4294901760
    %v2286 = vsub.f32 %v1413, %v2285
    %2287 = vmatprep.mubr.f32.mxu0 %v2286
    %v2288 = vand.u32 %v1412, 4294901760
    %v2289 = vsub.f32 %v1412, %v2288
    %2290 = vmatmul.mubr.f32.gmra.mrb[0].mxu0 %v2289
    %v2291 = vpop.f32.mrb[0].mxu0
    %v2292 = vadd.f32 %v2049, %v2291
    %v2293 = vpop.f32.mrb[0].mxu0
    %v2294 = vand.u32 %v1415, 4294901760
    %v2295 = vsub.f32 %v1415, %v2294
    %2296 = vmatprep.mubr.f32.mxu0 %v2295
    %v2297 = vand.u32 %v1414, 4294901760
    %v2298 = vsub.f32 %v1414, %v2297
    %2299 = vmatmul.mubr.f32.gmra.mrb[0].mxu0 %v2298
    %v2300 = vpop.f32.mrb[0].mxu0
    %v2301 = vadd.f32 %v2056, %v2300
    %v2302 = vpop.f32.mrb[0].mxu0
    %v2303 = vand.u32 %v1417, 4294901760
    %v2304 = vsub.f32 %v1417, %v2303
    %2305 = vmatprep.mubr.f32.mxu0 %v2304
    %v2306 = vand.u32 %v1416, 4294901760
    %v2307 = vsub.f32 %v1416, %v2306
    %2308 = vmatmul.mubr.f32.gmra.mrb[0].mxu0 %v2307
    %v2309 = vpop.f32.mrb[0].mxu0
    %v2310 = vadd.f32 %v2063, %v2309
    %v2311 = vpop.f32.mrb[0].mxu0
    %v2312 = vand.u32 %v1419, 4294901760
    %v2313 = vsub.f32 %v1419, %v2312
    %2314 = vmatprep.mubr.f32.mxu0 %v2313
    %v2315 = vand.u32 %v1418, 4294901760
    %v2316 = vsub.f32 %v1418, %v2315
    %2317 = vmatmul.mubr.f32.gmra.mrb[0].mxu0 %v2316
    %v2318 = vpop.f32.mrb[0].mxu0
    %v2319 = vadd.f32 %v2070, %v2318
    %v2320 = vpop.f32.mrb[0].mxu0
    %v2321 = vand.u32 %v1421, 4294901760
    %v2322 = vsub.f32 %v1421, %v2321
    %2323 = vmatprep.mubr.f32.mxu0 %v2322
    %v2324 = vand.u32 %v1420, 4294901760
    %v2325 = vsub.f32 %v1420, %v2324
    %2326 = vmatmul.mubr.f32.gmra.mrb[0].mxu0 %v2325
    %v2327 = vpop.f32.mrb[0].mxu0
    %v2328 = vadd.f32 %v2077, %v2327
    %v2329 = vpop.f32.mrb[0].mxu0
    %v2330 = vand.u32 %v1423, 4294901760
    %v2331 = vsub.f32 %v1423, %v2330
    %2332 = vmatprep.mubr.f32.mxu0 %v2331
    %v2333 = vand.u32 %v1422, 4294901760
    %v2334 = vsub.f32 %v1422, %v2333
    %2335 = vmatmul.mubr.f32.gmra.mrb[0].mxu0 %v2334
    %v2336 = vpop.f32.mrb[0].mxu0
    %v2337 = vadd.f32 %v2084, %v2336
    %v2338 = vpop.f32.mrb[0].mxu0
    %v2339 = vand.u32 %v1425, 4294901760
    %v2340 = vsub.f32 %v1425, %v2339
    %2341 = vmatprep.mubr.f32.mxu0 %v2340
    %v2342 = vand.u32 %v1424, 4294901760
    %v2343 = vsub.f32 %v1424, %v2342
    %2344 = vmatmul.mubr.f32.gmra.mrb[0].mxu0 %v2343
    %v2345 = vpop.f32.mrb[0].mxu0
    %v2346 = vadd.f32 %v2091, %v2345
    %v2347 = vpop.f32.mrb[0].mxu0
    %v2348 = vand.u32 %v1427, 4294901760
    %v2349 = vsub.f32 %v1427, %v2348
    %2350 = vmatprep.mubr.f32.mxu0 %v2349
    %v2351 = vand.u32 %v1426, 4294901760
    %v2352 = vsub.f32 %v1426, %v2351
    %2353 = vmatmul.mubr.f32.gmra.mrb[0].mxu0 %v2352
    %v2354 = vpop.f32.mrb[0].mxu0
    %v2355 = vadd.f32 %v2098, %v2354
    %v2356 = vpop.f32.mrb[0].mxu0
    %v2357 = vand.u32 %v1429, 4294901760
    %v2358 = vsub.f32 %v1429, %v2357
    %2359 = vmatprep.mubr.f32.mxu0 %v2358
    %v2360 = vand.u32 %v1428, 4294901760
    %v2361 = vsub.f32 %v1428, %v2360
    %2362 = vmatmul.mubr.f32.gmra.mrb[0].mxu0 %v2361
    %v2363 = vpop.f32.mrb[0].mxu0
    %v2364 = vadd.f32 %v2105, %v2363
    %v2365 = vpop.f32.mrb[0].mxu0
    %v2366 = vand.u32 %v1431, 4294901760
    %v2367 = vsub.f32 %v1431, %v2366
    %2368 = vmatprep.mubr.f32.mxu0 %v2367
    %v2369 = vand.u32 %v1430, 4294901760
    %v2370 = vsub.f32 %v1430, %v2369
    %2371 = vmatmul.mubr.f32.gmra.mrb[0].mxu0 %v2370
    %v2372 = vpop.f32.mrb[0].mxu0
    %v2373 = vadd.f32 %v2112, %v2372
    %v2374 = vpop.f32.mrb[0].mxu0
    %v2375 = vand.u32 %v1433, 4294901760
    %v2376 = vsub.f32 %v1433, %v2375
    %2377 = vmatprep.mubr.f32.mxu0 %v2376
    %v2378 = vand.u32 %v1432, 4294901760
    %v2379 = vsub.f32 %v1432, %v2378
    %2380 = vmatmul.mubr.f32.gmra.mrb[0].mxu0 %v2379
    %v2381 = vpop.f32.mrb[0].mxu0
    %v2382 = vadd.f32 %v2119, %v2381
    %v2383 = vpop.f32.mrb[0].mxu0
    %v2384 = vand.u32 %v1435, 4294901760
    %v2385 = vsub.f32 %v1435, %v2384
    %2386 = vmatprep.mubr.f32.mxu0 %v2385
    %v2387 = vand.u32 %v1434, 4294901760
    %v2388 = vsub.f32 %v1434, %v2387
    %2389 = vmatmul.mubr.f32.gmra.mrb[0].mxu0 %v2388
    %v2390 = vpop.f32.mrb[0].mxu0
    %v2391 = vadd.f32 %v2126, %v2390
    %v2392 = vpop.f32.mrb[0].mxu0
    %v2393 = vand.u32 %v1437, 4294901760
    %v2394 = vsub.f32 %v1437, %v2393
    %2395 = vmatprep.mubr.f32.mxu0 %v2394
    %v2396 = vand.u32 %v1436, 4294901760
    %v2397 = vsub.f32 %v1436, %v2396
    %2398 = vmatmul.mubr.f32.gmra.mrb[0].mxu0 %v2397
    %v2399 = vpop.f32.mrb[0].mxu0
    %v2400 = vadd.f32 %v2133, %v2399
    %v2401 = vpop.f32.mrb[0].mxu0
    %v2402 = vand.u32 %v1439, 4294901760
    %v2403 = vsub.f32 %v1439, %v2402
    %2404 = vmatprep.mubr.f32.mxu0 %v2403
    %v2405 = vand.u32 %v1438, 4294901760
    %v2406 = vsub.f32 %v1438, %v2405
    %2407 = vmatmul.mubr.f32.gmra.mrb[0].mxu0 %v2406
    %v2408 = vpop.f32.mrb[0].mxu0
    %v2409 = vadd.f32 %v2140, %v2408
    %v2410 = vpop.f32.mrb[0].mxu0
    %v2411 = vand.u32 %v1441, 4294901760
    %v2412 = vsub.f32 %v1441, %v2411
    %2413 = vmatprep.mubr.f32.mxu0 %v2412
    %v2414 = vand.u32 %v1440, 4294901760
    %v2415 = vsub.f32 %v1440, %v2414
    %2416 = vmatmul.mubr.f32.gmra.mrb[0].mxu0 %v2415
    %v2417 = vpop.f32.mrb[0].mxu0
    %v2418 = vadd.f32 %v2147, %v2417
    %v2419 = vpop.f32.mrb[0].mxu0
    %v2420 = vand.u32 %v1443, 4294901760
    %v2421 = vsub.f32 %v1443, %v2420
    %2422 = vmatprep.mubr.f32.mxu0 %v2421
    %v2423 = vand.u32 %v1442, 4294901760
    %v2424 = vsub.f32 %v1442, %v2423
    %2425 = vmatmul.mubr.f32.gmra.mrb[0].mxu0 %v2424
    %v2426 = vpop.f32.mrb[0].mxu0
    %v2427 = vadd.f32 %v2154, %v2426
    %v2428 = vpop.f32.mrb[0].mxu0
    %2429 = vdwg.mxu0
    %2430 = vmatprep.subr.mxu0 0.0
    %v2431 = vand.u32 %v1444, 4294901760
    %2432 = vmatpush1.msra.mxu0 %v2431
    %2433 = vmatprep.subr.mxu0 0.0
    %v2434 = vand.u32 %v1445, 4294901760
    %2435 = vmatpush1.msra.mxu0 %v2434
    %2436 = vmatprep.subr.mxu0 0.0
    %v2437 = vand.u32 %v1446, 4294901760
    %2438 = vmatpush1.msra.mxu0 %v2437
    %2439 = vmatprep.subr.mxu0 0.0
    %v2440 = vand.u32 %v1447, 4294901760
    %2441 = vmatpush1.msra.mxu0 %v2440
    %2442 = vmatprep.subr.mxu0 0.0
    %v2443 = vand.u32 %v1448, 4294901760
    %2444 = vmatpush1.msra.mxu0 %v2443
    %2445 = vmatprep.subr.mxu0 0.0
    %v2446 = vand.u32 %v1449, 4294901760
    %2447 = vmatpush1.msra.mxu0 %v2446
    %2448 = vmatprep.subr.mxu0 0.0
    %v2449 = vand.u32 %v1450, 4294901760
    %2450 = vmatpush1.msra.mxu0 %v2449
    %2451 = vmatprep.subr.mxu0 0.0
    %v2452 = vand.u32 %v1451, 4294901760
    %2453 = vmatpush1.msra.mxu0 %v2452
    %2454 = vmatprep.subr.mxu0 0.0
    %v2455 = vand.u32 %v1452, 4294901760
    %2456 = vmatpush1.msra.mxu0 %v2455
    %2457 = vmatprep.subr.mxu0 0.0
    %v2458 = vand.u32 %v1453, 4294901760
    %2459 = vmatpush1.msra.mxu0 %v2458
    %2460 = vmatprep.subr.mxu0 0.0
    %v2461 = vand.u32 %v1454, 4294901760
    %2462 = vmatpush1.msra.mxu0 %v2461
    %2463 = vmatprep.subr.mxu0 0.0
    %v2464 = vand.u32 %v1455, 4294901760
    %2465 = vmatpush1.msra.mxu0 %v2464
    %2466 = vmatprep.subr.mxu0 0.0
    %v2467 = vand.u32 %v1456, 4294901760
    %2468 = vmatpush1.msra.mxu0 %v2467
    %2469 = vmatprep.subr.mxu0 0.0
    %v2470 = vand.u32 %v1457, 4294901760
    %2471 = vmatpush1.msra.mxu0 %v2470
    %2472 = vmatprep.subr.mxu0 0.0
    %v2473 = vand.u32 %v1458, 4294901760
    %2474 = vmatpush1.msra.mxu0 %v2473
    %2475 = vmatprep.subr.mxu0 0.0
    %v2476 = vand.u32 %v1459, 4294901760
    %2477 = vmatpush1.msra.mxu0 %v2476
    %2478 = vmatprep.subr.mxu0 0.0
    %v2479 = vand.u32 %v1460, 4294901760
    %2480 = vmatpush1.msra.mxu0 %v2479
    %2481 = vmatprep.subr.mxu0 0.0
    %v2482 = vand.u32 %v1461, 4294901760
    %2483 = vmatpush1.msra.mxu0 %v2482
    %2484 = vmatprep.subr.mxu0 0.0
    %v2485 = vand.u32 %v1462, 4294901760
    %2486 = vmatpush1.msra.mxu0 %v2485
    %2487 = vmatprep.subr.mxu0 0.0
    %v2488 = vand.u32 %v1463, 4294901760
    %2489 = vmatpush1.msra.mxu0 %v2488
    %2490 = vmatprep.subr.mxu0 0.0
    %v2491 = vand.u32 %v1464, 4294901760
    %2492 = vmatpush1.msra.mxu0 %v2491
    %2493 = vmatprep.subr.mxu0 0.0
    %v2494 = vand.u32 %v1465, 4294901760
    %2495 = vmatpush1.msra.mxu0 %v2494
    %2496 = vmatprep.subr.mxu0 0.0
    %v2497 = vand.u32 %v1466, 4294901760
    %2498 = vmatpush1.msra.mxu0 %v2497
    %2499 = vmatprep.subr.mxu0 0.0
    %v2500 = vand.u32 %v1467, 4294901760
    %2501 = vmatpush1.msra.mxu0 %v2500
    %2502 = vmatprep.subr.mxu0 0.0
    %v2503 = vand.u32 %v1468, 4294901760
    %2504 = vmatpush1.msra.mxu0 %v2503
    %2505 = vmatprep.subr.mxu0 0.0
    %v2506 = vand.u32 %v1469, 4294901760
    %2507 = vmatpush1.msra.mxu0 %v2506
    %2508 = vmatprep.subr.mxu0 0.0
    %v2509 = vand.u32 %v1470, 4294901760
    %2510 = vmatpush1.msra.mxu0 %v2509
    %2511 = vmatprep.subr.mxu0 0.0
    %v2512 = vand.u32 %v1471, 4294901760
    %2513 = vmatpush1.msra.mxu0 %v2512
    %2514 = vmatprep.subr.mxu0 0.0
    %v2515 = vand.u32 %v1472, 4294901760
    %2516 = vmatpush1.msra.mxu0 %v2515
    %2517 = vmatprep.subr.mxu0 0.0
    %v2518 = vand.u32 %v1473, 4294901760
    %2519 = vmatpush1.msra.mxu0 %v2518
    %2520 = vmatprep.subr.mxu0 0.0
    %v2521 = vand.u32 %v1474, 4294901760
    %2522 = vmatpush1.msra.mxu0 %v2521
    %2523 = vmatprep.subr.mxu0 0.0
    %v2524 = vand.u32 %v1475, 4294901760
    %2525 = vmatpush1.msra.mxu0 %v2524
    %v2526 = vand.u32 %v1413, 4294901760
    %v2527 = vsub.f32 %v1413, %v2526
    %v2528 = vand.u32 %v2527, 4294901760
    %2529 = vmatprep.mubr.f32.mxu0 %v2528
    %v2530 = vand.u32 %v1412, 4294901760
    %v2531 = vsub.f32 %v1412, %v2530
    %v2532 = vand.u32 %v2531, 4294901760
    %2533 = vmatmul.mubr.f32.gmra.mrb[0].mxu0 %v2532
    %v2534 = vpop.f32.mrb[0].mxu0
    %v2535 = vadd.f32 %v2292, %v2534
    %v2536 = vpop.f32.mrb[0].mxu0
    %v2537 = vand.u32 %v1415, 4294901760
    %v2538 = vsub.f32 %v1415, %v2537
    %v2539 = vand.u32 %v2538, 4294901760
    %2540 = vmatprep.mubr.f32.mxu0 %v2539
    %v2541 = vand.u32 %v1414, 4294901760
    %v2542 = vsub.f32 %v1414, %v2541
    %v2543 = vand.u32 %v2542, 4294901760
    %2544 = vmatmul.mubr.f32.gmra.mrb[0].mxu0 %v2543
    %v2545 = vpop.f32.mrb[0].mxu0
    %v2546 = vadd.f32 %v2301, %v2545
    %v2547 = vpop.f32.mrb[0].mxu0
    %v2548 = vand.u32 %v1417, 4294901760
    %v2549 = vsub.f32 %v1417, %v2548
    %v2550 = vand.u32 %v2549, 4294901760
    %2551 = vmatprep.mubr.f32.mxu0 %v2550
    %v2552 = vand.u32 %v1416, 4294901760
    %v2553 = vsub.f32 %v1416, %v2552
    %v2554 = vand.u32 %v2553, 4294901760
    %2555 = vmatmul.mubr.f32.gmra.mrb[0].mxu0 %v2554
    %v2556 = vpop.f32.mrb[0].mxu0
    %v2557 = vadd.f32 %v2310, %v2556
    %v2558 = vpop.f32.mrb[0].mxu0
    %v2559 = vand.u32 %v1419, 4294901760
    %v2560 = vsub.f32 %v1419, %v2559
    %v2561 = vand.u32 %v2560, 4294901760
    %2562 = vmatprep.mubr.f32.mxu0 %v2561
    %v2563 = vand.u32 %v1418, 4294901760
    %v2564 = vsub.f32 %v1418, %v2563
    %v2565 = vand.u32 %v2564, 4294901760
    %2566 = vmatmul.mubr.f32.gmra.mrb[0].mxu0 %v2565
    %v2567 = vpop.f32.mrb[0].mxu0
    %v2568 = vadd.f32 %v2319, %v2567
    %v2569 = vpop.f32.mrb[0].mxu0
    %v2570 = vand.u32 %v1421, 4294901760
    %v2571 = vsub.f32 %v1421, %v2570
    %v2572 = vand.u32 %v2571, 4294901760
    %2573 = vmatprep.mubr.f32.mxu0 %v2572
    %v2574 = vand.u32 %v1420, 4294901760
    %v2575 = vsub.f32 %v1420, %v2574
    %v2576 = vand.u32 %v2575, 4294901760
    %2577 = vmatmul.mubr.f32.gmra.mrb[0].mxu0 %v2576
    %v2578 = vpop.f32.mrb[0].mxu0
    %v2579 = vadd.f32 %v2328, %v2578
    %v2580 = vpop.f32.mrb[0].mxu0
    %v2581 = vand.u32 %v1423, 4294901760
    %v2582 = vsub.f32 %v1423, %v2581
    %v2583 = vand.u32 %v2582, 4294901760
    %2584 = vmatprep.mubr.f32.mxu0 %v2583
    %v2585 = vand.u32 %v1422, 4294901760
    %v2586 = vsub.f32 %v1422, %v2585
    %v2587 = vand.u32 %v2586, 4294901760
    %2588 = vmatmul.mubr.f32.gmra.mrb[0].mxu0 %v2587
    %v2589 = vpop.f32.mrb[0].mxu0
    %v2590 = vadd.f32 %v2337, %v2589
    %v2591 = vpop.f32.mrb[0].mxu0
    %v2592 = vand.u32 %v1425, 4294901760
    %v2593 = vsub.f32 %v1425, %v2592
    %v2594 = vand.u32 %v2593, 4294901760
    %2595 = vmatprep.mubr.f32.mxu0 %v2594
    %v2596 = vand.u32 %v1424, 4294901760
    %v2597 = vsub.f32 %v1424, %v2596
    %v2598 = vand.u32 %v2597, 4294901760
    %2599 = vmatmul.mubr.f32.gmra.mrb[0].mxu0 %v2598
    %v2600 = vpop.f32.mrb[0].mxu0
    %v2601 = vadd.f32 %v2346, %v2600
    %v2602 = vpop.f32.mrb[0].mxu0
    %v2603 = vand.u32 %v1427, 4294901760
    %v2604 = vsub.f32 %v1427, %v2603
    %v2605 = vand.u32 %v2604, 4294901760
    %2606 = vmatprep.mubr.f32.mxu0 %v2605
    %v2607 = vand.u32 %v1426, 4294901760
    %v2608 = vsub.f32 %v1426, %v2607
    %v2609 = vand.u32 %v2608, 4294901760
    %2610 = vmatmul.mubr.f32.gmra.mrb[0].mxu0 %v2609
    %v2611 = vpop.f32.mrb[0].mxu0
    %v2612 = vadd.f32 %v2355, %v2611
    %v2613 = vpop.f32.mrb[0].mxu0
    %v2614 = vand.u32 %v1429, 4294901760
    %v2615 = vsub.f32 %v1429, %v2614
    %v2616 = vand.u32 %v2615, 4294901760
    %2617 = vmatprep.mubr.f32.mxu0 %v2616
    %v2618 = vand.u32 %v1428, 4294901760
    %v2619 = vsub.f32 %v1428, %v2618
    %v2620 = vand.u32 %v2619, 4294901760
    %2621 = vmatmul.mubr.f32.gmra.mrb[0].mxu0 %v2620
    %v2622 = vpop.f32.mrb[0].mxu0
    %v2623 = vadd.f32 %v2364, %v2622
    %v2624 = vpop.f32.mrb[0].mxu0
    %v2625 = vand.u32 %v1431, 4294901760
    %v2626 = vsub.f32 %v1431, %v2625
    %v2627 = vand.u32 %v2626, 4294901760
    %2628 = vmatprep.mubr.f32.mxu0 %v2627
    %v2629 = vand.u32 %v1430, 4294901760
    %v2630 = vsub.f32 %v1430, %v2629
    %v2631 = vand.u32 %v2630, 4294901760
    %2632 = vmatmul.mubr.f32.gmra.mrb[0].mxu0 %v2631
    %v2633 = vpop.f32.mrb[0].mxu0
    %v2634 = vadd.f32 %v2373, %v2633
    %v2635 = vpop.f32.mrb[0].mxu0
    %v2636 = vand.u32 %v1433, 4294901760
    %v2637 = vsub.f32 %v1433, %v2636
    %v2638 = vand.u32 %v2637, 4294901760
    %2639 = vmatprep.mubr.f32.mxu0 %v2638
    %v2640 = vand.u32 %v1432, 4294901760
    %v2641 = vsub.f32 %v1432, %v2640
    %v2642 = vand.u32 %v2641, 4294901760
    %2643 = vmatmul.mubr.f32.gmra.mrb[0].mxu0 %v2642
    %v2644 = vpop.f32.mrb[0].mxu0
    %v2645 = vadd.f32 %v2382, %v2644
    %v2646 = vpop.f32.mrb[0].mxu0
    %v2647 = vand.u32 %v1435, 4294901760
    %v2648 = vsub.f32 %v1435, %v2647
    %v2649 = vand.u32 %v2648, 4294901760
    %2650 = vmatprep.mubr.f32.mxu0 %v2649
    %v2651 = vand.u32 %v1434, 4294901760
    %v2652 = vsub.f32 %v1434, %v2651
    %v2653 = vand.u32 %v2652, 4294901760
    %2654 = vmatmul.mubr.f32.gmra.mrb[0].mxu0 %v2653
    %v2655 = vpop.f32.mrb[0].mxu0
    %v2656 = vadd.f32 %v2391, %v2655
    %v2657 = vpop.f32.mrb[0].mxu0
    %v2658 = vand.u32 %v1437, 4294901760
    %v2659 = vsub.f32 %v1437, %v2658
    %v2660 = vand.u32 %v2659, 4294901760
    %2661 = vmatprep.mubr.f32.mxu0 %v2660
    %v2662 = vand.u32 %v1436, 4294901760
    %v2663 = vsub.f32 %v1436, %v2662
    %v2664 = vand.u32 %v2663, 4294901760
    %2665 = vmatmul.mubr.f32.gmra.mrb[0].mxu0 %v2664
    %v2666 = vpop.f32.mrb[0].mxu0
    %v2667 = vadd.f32 %v2400, %v2666
    %v2668 = vpop.f32.mrb[0].mxu0
    %v2669 = vand.u32 %v1439, 4294901760
    %v2670 = vsub.f32 %v1439, %v2669
    %v2671 = vand.u32 %v2670, 4294901760
    %2672 = vmatprep.mubr.f32.mxu0 %v2671
    %v2673 = vand.u32 %v1438, 4294901760
    %v2674 = vsub.f32 %v1438, %v2673
    %v2675 = vand.u32 %v2674, 4294901760
    %2676 = vmatmul.mubr.f32.gmra.mrb[0].mxu0 %v2675
    %v2677 = vpop.f32.mrb[0].mxu0
    %v2678 = vadd.f32 %v2409, %v2677
    %v2679 = vpop.f32.mrb[0].mxu0
    %v2680 = vand.u32 %v1441, 4294901760
    %v2681 = vsub.f32 %v1441, %v2680
    %v2682 = vand.u32 %v2681, 4294901760
    %2683 = vmatprep.mubr.f32.mxu0 %v2682
    %v2684 = vand.u32 %v1440, 4294901760
    %v2685 = vsub.f32 %v1440, %v2684
    %v2686 = vand.u32 %v2685, 4294901760
    %2687 = vmatmul.mubr.f32.gmra.mrb[0].mxu0 %v2686
    %v2688 = vpop.f32.mrb[0].mxu0
    %v2689 = vadd.f32 %v2418, %v2688
    %v2690 = vpop.f32.mrb[0].mxu0
    %v2691 = vand.u32 %v1443, 4294901760
    %v2692 = vsub.f32 %v1443, %v2691
    %v2693 = vand.u32 %v2692, 4294901760
    %2694 = vmatprep.mubr.f32.mxu0 %v2693
    %v2695 = vand.u32 %v1442, 4294901760
    %v2696 = vsub.f32 %v1442, %v2695
    %v2697 = vand.u32 %v2696, 4294901760
    %2698 = vmatmul.mubr.f32.gmra.mrb[0].mxu0 %v2697
    %v2699 = vpop.f32.mrb[0].mxu0
    %v2700 = vadd.f32 %v2427, %v2699
    %v2701 = vpop.f32.mrb[0].mxu0
    %2702 = vdwg.mxu0
    %2703 = vmatprep.subr.mxu0 0.0
    %v2704 = vand.u32 %v1444, 4294901760
    %v2705 = vsub.f32 %v1444, %v2704
    %v2706 = vand.u32 %v2705, 4294901760
    %2707 = vmatpush1.msra.mxu0 %v2706
    %2708 = vmatprep.subr.mxu0 0.0
    %v2709 = vand.u32 %v1445, 4294901760
    %v2710 = vsub.f32 %v1445, %v2709
    %v2711 = vand.u32 %v2710, 4294901760
    %2712 = vmatpush1.msra.mxu0 %v2711
    %2713 = vmatprep.subr.mxu0 0.0
    %v2714 = vand.u32 %v1446, 4294901760
    %v2715 = vsub.f32 %v1446, %v2714
    %v2716 = vand.u32 %v2715, 4294901760
    %2717 = vmatpush1.msra.mxu0 %v2716
    %2718 = vmatprep.subr.mxu0 0.0
    %v2719 = vand.u32 %v1447, 4294901760
    %v2720 = vsub.f32 %v1447, %v2719
    %v2721 = vand.u32 %v2720, 4294901760
    %2722 = vmatpush1.msra.mxu0 %v2721
    %2723 = vmatprep.subr.mxu0 0.0
    %v2724 = vand.u32 %v1448, 4294901760
    %v2725 = vsub.f32 %v1448, %v2724
    %v2726 = vand.u32 %v2725, 4294901760
    %2727 = vmatpush1.msra.mxu0 %v2726
    %2728 = vmatprep.subr.mxu0 0.0
    %v2729 = vand.u32 %v1449, 4294901760
    %v2730 = vsub.f32 %v1449, %v2729
    %v2731 = vand.u32 %v2730, 4294901760
    %2732 = vmatpush1.msra.mxu0 %v2731
    %2733 = vmatprep.subr.mxu0 0.0
    %v2734 = vand.u32 %v1450, 4294901760
    %v2735 = vsub.f32 %v1450, %v2734
    %v2736 = vand.u32 %v2735, 4294901760
    %2737 = vmatpush1.msra.mxu0 %v2736
    %2738 = vmatprep.subr.mxu0 0.0
    %v2739 = vand.u32 %v1451, 4294901760
    %v2740 = vsub.f32 %v1451, %v2739
    %v2741 = vand.u32 %v2740, 4294901760
    %2742 = vmatpush1.msra.mxu0 %v2741
    %2743 = vmatprep.subr.mxu0 0.0
    %v2744 = vand.u32 %v1452, 4294901760
    %v2745 = vsub.f32 %v1452, %v2744
    %v2746 = vand.u32 %v2745, 4294901760
    %2747 = vmatpush1.msra.mxu0 %v2746
    %2748 = vmatprep.subr.mxu0 0.0
    %v2749 = vand.u32 %v1453, 4294901760
    %v2750 = vsub.f32 %v1453, %v2749
    %v2751 = vand.u32 %v2750, 4294901760
    %2752 = vmatpush1.msra.mxu0 %v2751
    %2753 = vmatprep.subr.mxu0 0.0
    %v2754 = vand.u32 %v1454, 4294901760
    %v2755 = vsub.f32 %v1454, %v2754
    %v2756 = vand.u32 %v2755, 4294901760
    %2757 = vmatpush1.msra.mxu0 %v2756
    %2758 = vmatprep.subr.mxu0 0.0
    %v2759 = vand.u32 %v1455, 4294901760
    %v2760 = vsub.f32 %v1455, %v2759
    %v2761 = vand.u32 %v2760, 4294901760
    %2762 = vmatpush1.msra.mxu0 %v2761
    %2763 = vmatprep.subr.mxu0 0.0
    %v2764 = vand.u32 %v1456, 4294901760
    %v2765 = vsub.f32 %v1456, %v2764
    %v2766 = vand.u32 %v2765, 4294901760
    %2767 = vmatpush1.msra.mxu0 %v2766
    %2768 = vmatprep.subr.mxu0 0.0
    %v2769 = vand.u32 %v1457, 4294901760
    %v2770 = vsub.f32 %v1457, %v2769
    %v2771 = vand.u32 %v2770, 4294901760
    %2772 = vmatpush1.msra.mxu0 %v2771
    %2773 = vmatprep.subr.mxu0 0.0
    %v2774 = vand.u32 %v1458, 4294901760
    %v2775 = vsub.f32 %v1458, %v2774
    %v2776 = vand.u32 %v2775, 4294901760
    %2777 = vmatpush1.msra.mxu0 %v2776
    %2778 = vmatprep.subr.mxu0 0.0
    %v2779 = vand.u32 %v1459, 4294901760
    %v2780 = vsub.f32 %v1459, %v2779
    %v2781 = vand.u32 %v2780, 4294901760
    %2782 = vmatpush1.msra.mxu0 %v2781
    %2783 = vmatprep.subr.mxu0 0.0
    %v2784 = vand.u32 %v1460, 4294901760
    %v2785 = vsub.f32 %v1460, %v2784
    %v2786 = vand.u32 %v2785, 4294901760
    %2787 = vmatpush1.msra.mxu0 %v2786
    %2788 = vmatprep.subr.mxu0 0.0
    %v2789 = vand.u32 %v1461, 4294901760
    %v2790 = vsub.f32 %v1461, %v2789
    %v2791 = vand.u32 %v2790, 4294901760
    %2792 = vmatpush1.msra.mxu0 %v2791
    %2793 = vmatprep.subr.mxu0 0.0
    %v2794 = vand.u32 %v1462, 4294901760
    %v2795 = vsub.f32 %v1462, %v2794
    %v2796 = vand.u32 %v2795, 4294901760
    %2797 = vmatpush1.msra.mxu0 %v2796
    %2798 = vmatprep.subr.mxu0 0.0
    %v2799 = vand.u32 %v1463, 4294901760
    %v2800 = vsub.f32 %v1463, %v2799
    %v2801 = vand.u32 %v2800, 4294901760
    %2802 = vmatpush1.msra.mxu0 %v2801
    %2803 = vmatprep.subr.mxu0 0.0
    %v2804 = vand.u32 %v1464, 4294901760
    %v2805 = vsub.f32 %v1464, %v2804
    %v2806 = vand.u32 %v2805, 4294901760
    %2807 = vmatpush1.msra.mxu0 %v2806
    %2808 = vmatprep.subr.mxu0 0.0
    %v2809 = vand.u32 %v1465, 4294901760
    %v2810 = vsub.f32 %v1465, %v2809
    %v2811 = vand.u32 %v2810, 4294901760
    %2812 = vmatpush1.msra.mxu0 %v2811
    %2813 = vmatprep.subr.mxu0 0.0
    %v2814 = vand.u32 %v1466, 4294901760
    %v2815 = vsub.f32 %v1466, %v2814
    %v2816 = vand.u32 %v2815, 4294901760
    %2817 = vmatpush1.msra.mxu0 %v2816
    %2818 = vmatprep.subr.mxu0 0.0
    %v2819 = vand.u32 %v1467, 4294901760
    %v2820 = vsub.f32 %v1467, %v2819
    %v2821 = vand.u32 %v2820, 4294901760
    %2822 = vmatpush1.msra.mxu0 %v2821
    %2823 = vmatprep.subr.mxu0 0.0
    %v2824 = vand.u32 %v1468, 4294901760
    %v2825 = vsub.f32 %v1468, %v2824
    %v2826 = vand.u32 %v2825, 4294901760
    %2827 = vmatpush1.msra.mxu0 %v2826
    %2828 = vmatprep.subr.mxu0 0.0
    %v2829 = vand.u32 %v1469, 4294901760
    %v2830 = vsub.f32 %v1469, %v2829
    %v2831 = vand.u32 %v2830, 4294901760
    %2832 = vmatpush1.msra.mxu0 %v2831
    %2833 = vmatprep.subr.mxu0 0.0
    %v2834 = vand.u32 %v1470, 4294901760
    %v2835 = vsub.f32 %v1470, %v2834
    %v2836 = vand.u32 %v2835, 4294901760
    %2837 = vmatpush1.msra.mxu0 %v2836
    %2838 = vmatprep.subr.mxu0 0.0
    %v2839 = vand.u32 %v1471, 4294901760
    %v2840 = vsub.f32 %v1471, %v2839
    %v2841 = vand.u32 %v2840, 4294901760
    %2842 = vmatpush1.msra.mxu0 %v2841
    %2843 = vmatprep.subr.mxu0 0.0
    %v2844 = vand.u32 %v1472, 4294901760
    %v2845 = vsub.f32 %v1472, %v2844
    %v2846 = vand.u32 %v2845, 4294901760
    %2847 = vmatpush1.msra.mxu0 %v2846
    %2848 = vmatprep.subr.mxu0 0.0
    %v2849 = vand.u32 %v1473, 4294901760
    %v2850 = vsub.f32 %v1473, %v2849
    %v2851 = vand.u32 %v2850, 4294901760
    %2852 = vmatpush1.msra.mxu0 %v2851
    %2853 = vmatprep.subr.mxu0 0.0
    %v2854 = vand.u32 %v1474, 4294901760
    %v2855 = vsub.f32 %v1474, %v2854
    %v2856 = vand.u32 %v2855, 4294901760
    %2857 = vmatpush1.msra.mxu0 %v2856
    %2858 = vmatprep.subr.mxu0 0.0
    %v2859 = vand.u32 %v1475, 4294901760
    %v2860 = vsub.f32 %v1475, %v2859
    %v2861 = vand.u32 %v2860, 4294901760
    %2862 = vmatpush1.msra.mxu0 %v2861
    %v2863 = vand.u32 %v1413, 4294901760
    %2864 = vmatprep.mubr.f32.mxu0 %v2863
    %v2865 = vand.u32 %v1412, 4294901760
    %2866 = vmatmul.mubr.f32.gmra.mrb[0].mxu0 %v2865
    %v2867 = vpop.f32.mrb[0].mxu0
    %v2868 = vadd.f32 %v2535, %v2867
    %v2869 = vpop.f32.mrb[0].mxu0
    %v2870 = vand.u32 %v1415, 4294901760
    %2871 = vmatprep.mubr.f32.mxu0 %v2870
    %v2872 = vand.u32 %v1414, 4294901760
    %2873 = vmatmul.mubr.f32.gmra.mrb[0].mxu0 %v2872
    %v2874 = vpop.f32.mrb[0].mxu0
    %v2875 = vadd.f32 %v2546, %v2874
    %v2876 = vpop.f32.mrb[0].mxu0
    %v2877 = vand.u32 %v1417, 4294901760
    %2878 = vmatprep.mubr.f32.mxu0 %v2877
    %v2879 = vand.u32 %v1416, 4294901760
    %2880 = vmatmul.mubr.f32.gmra.mrb[0].mxu0 %v2879
    %v2881 = vpop.f32.mrb[0].mxu0
    %v2882 = vadd.f32 %v2557, %v2881
    %v2883 = vpop.f32.mrb[0].mxu0
    %v2884 = vand.u32 %v1419, 4294901760
    %2885 = vmatprep.mubr.f32.mxu0 %v2884
    %v2886 = vand.u32 %v1418, 4294901760
    %2887 = vmatmul.mubr.f32.gmra.mrb[0].mxu0 %v2886
    %v2888 = vpop.f32.mrb[0].mxu0
    %v2889 = vadd.f32 %v2568, %v2888
    %v2890 = vpop.f32.mrb[0].mxu0
    %v2891 = vand.u32 %v1421, 4294901760
    %2892 = vmatprep.mubr.f32.mxu0 %v2891
    %v2893 = vand.u32 %v1420, 4294901760
    %2894 = vmatmul.mubr.f32.gmra.mrb[0].mxu0 %v2893
    %v2895 = vpop.f32.mrb[0].mxu0
    %v2896 = vadd.f32 %v2579, %v2895
    %v2897 = vpop.f32.mrb[0].mxu0
    %v2898 = vand.u32 %v1423, 4294901760
    %2899 = vmatprep.mubr.f32.mxu0 %v2898
    %v2900 = vand.u32 %v1422, 4294901760
    %2901 = vmatmul.mubr.f32.gmra.mrb[0].mxu0 %v2900
    %v2902 = vpop.f32.mrb[0].mxu0
    %v2903 = vadd.f32 %v2590, %v2902
    %v2904 = vpop.f32.mrb[0].mxu0
    %v2905 = vand.u32 %v1425, 4294901760
    %2906 = vmatprep.mubr.f32.mxu0 %v2905
    %v2907 = vand.u32 %v1424, 4294901760
    %2908 = vmatmul.mubr.f32.gmra.mrb[0].mxu0 %v2907
    %v2909 = vpop.f32.mrb[0].mxu0
    %v2910 = vadd.f32 %v2601, %v2909
    %v2911 = vpop.f32.mrb[0].mxu0
    %v2912 = vand.u32 %v1427, 4294901760
    %2913 = vmatprep.mubr.f32.mxu0 %v2912
    %v2914 = vand.u32 %v1426, 4294901760
    %2915 = vmatmul.mubr.f32.gmra.mrb[0].mxu0 %v2914
    %v2916 = vpop.f32.mrb[0].mxu0
    %v2917 = vadd.f32 %v2612, %v2916
    %v2918 = vpop.f32.mrb[0].mxu0
    %v2919 = vand.u32 %v1429, 4294901760
    %2920 = vmatprep.mubr.f32.mxu0 %v2919
    %v2921 = vand.u32 %v1428, 4294901760
    %2922 = vmatmul.mubr.f32.gmra.mrb[0].mxu0 %v2921
    %v2923 = vpop.f32.mrb[0].mxu0
    %v2924 = vadd.f32 %v2623, %v2923
    %v2925 = vpop.f32.mrb[0].mxu0
    %v2926 = vand.u32 %v1431, 4294901760
    %2927 = vmatprep.mubr.f32.mxu0 %v2926
    %v2928 = vand.u32 %v1430, 4294901760
    %2929 = vmatmul.mubr.f32.gmra.mrb[0].mxu0 %v2928
    %v2930 = vpop.f32.mrb[0].mxu0
    %v2931 = vadd.f32 %v2634, %v2930
    %v2932 = vpop.f32.mrb[0].mxu0
    %v2933 = vand.u32 %v1433, 4294901760
    %2934 = vmatprep.mubr.f32.mxu0 %v2933
    %v2935 = vand.u32 %v1432, 4294901760
    %2936 = vmatmul.mubr.f32.gmra.mrb[0].mxu0 %v2935
    %v2937 = vpop.f32.mrb[0].mxu0
    %v2938 = vadd.f32 %v2645, %v2937
    %v2939 = vpop.f32.mrb[0].mxu0
    %v2940 = vand.u32 %v1435, 4294901760
    %2941 = vmatprep.mubr.f32.mxu0 %v2940
    %v2942 = vand.u32 %v1434, 4294901760
    %2943 = vmatmul.mubr.f32.gmra.mrb[0].mxu0 %v2942
    %v2944 = vpop.f32.mrb[0].mxu0
    %v2945 = vadd.f32 %v2656, %v2944
    %v2946 = vpop.f32.mrb[0].mxu0
    %v2947 = vand.u32 %v1437, 4294901760
    %2948 = vmatprep.mubr.f32.mxu0 %v2947
    %v2949 = vand.u32 %v1436, 4294901760
    %2950 = vmatmul.mubr.f32.gmra.mrb[0].mxu0 %v2949
    %v2951 = vpop.f32.mrb[0].mxu0
    %v2952 = vadd.f32 %v2667, %v2951
    %v2953 = vpop.f32.mrb[0].mxu0
    %v2954 = vand.u32 %v1439, 4294901760
    %2955 = vmatprep.mubr.f32.mxu0 %v2954
    %v2956 = vand.u32 %v1438, 4294901760
    %2957 = vmatmul.mubr.f32.gmra.mrb[0].mxu0 %v2956
    %v2958 = vpop.f32.mrb[0].mxu0
    %v2959 = vadd.f32 %v2678, %v2958
    %v2960 = vpop.f32.mrb[0].mxu0
    %v2961 = vand.u32 %v1441, 4294901760
    %2962 = vmatprep.mubr.f32.mxu0 %v2961
    %v2963 = vand.u32 %v1440, 4294901760
    %2964 = vmatmul.mubr.f32.gmra.mrb[0].mxu0 %v2963
    %v2965 = vpop.f32.mrb[0].mxu0
    %v2966 = vadd.f32 %v2689, %v2965
    %v2967 = vpop.f32.mrb[0].mxu0
    %v2968 = vand.u32 %v1443, 4294901760
    %2969 = vmatprep.mubr.f32.mxu0 %v2968
    %v2970 = vand.u32 %v1442, 4294901760
    %2971 = vmatmul.mubr.f32.gmra.mrb[0].mxu0 %v2970
    %v2972 = vpop.f32.mrb[0].mxu0
    %v2973 = vadd.f32 %v2700, %v2972
    %v2974 = vpop.f32.mrb[0].mxu0
    %2975 = vdwg.mxu0
    %2976 = vmatprep.subr.mxu0 0.0
    %v2977 = vand.u32 %v1444, 4294901760
    %2978 = vmatpush1.msra.mxu0 %v2977
    %2979 = vmatprep.subr.mxu0 0.0
    %v2980 = vand.u32 %v1445, 4294901760
    %2981 = vmatpush1.msra.mxu0 %v2980
    %2982 = vmatprep.subr.mxu0 0.0
    %v2983 = vand.u32 %v1446, 4294901760
    %2984 = vmatpush1.msra.mxu0 %v2983
    %2985 = vmatprep.subr.mxu0 0.0
    %v2986 = vand.u32 %v1447, 4294901760
    %2987 = vmatpush1.msra.mxu0 %v2986
    %2988 = vmatprep.subr.mxu0 0.0
    %v2989 = vand.u32 %v1448, 4294901760
    %2990 = vmatpush1.msra.mxu0 %v2989
    %2991 = vmatprep.subr.mxu0 0.0
    %v2992 = vand.u32 %v1449, 4294901760
    %2993 = vmatpush1.msra.mxu0 %v2992
    %2994 = vmatprep.subr.mxu0 0.0
    %v2995 = vand.u32 %v1450, 4294901760
    %2996 = vmatpush1.msra.mxu0 %v2995
    %2997 = vmatprep.subr.mxu0 0.0
    %v2998 = vand.u32 %v1451, 4294901760
    %2999 = vmatpush1.msra.mxu0 %v2998
    %3000 = vmatprep.subr.mxu0 0.0
    %v3001 = vand.u32 %v1452, 4294901760
    %3002 = vmatpush1.msra.mxu0 %v3001
    %3003 = vmatprep.subr.mxu0 0.0
    %v3004 = vand.u32 %v1453, 4294901760
    %3005 = vmatpush1.msra.mxu0 %v3004
    %3006 = vmatprep.subr.mxu0 0.0
    %v3007 = vand.u32 %v1454, 4294901760
    %3008 = vmatpush1.msra.mxu0 %v3007
    %3009 = vmatprep.subr.mxu0 0.0
    %v3010 = vand.u32 %v1455, 4294901760
    %3011 = vmatpush1.msra.mxu0 %v3010
    %3012 = vmatprep.subr.mxu0 0.0
    %v3013 = vand.u32 %v1456, 4294901760
    %3014 = vmatpush1.msra.mxu0 %v3013
    %3015 = vmatprep.subr.mxu0 0.0
    %v3016 = vand.u32 %v1457, 4294901760
    %3017 = vmatpush1.msra.mxu0 %v3016
    %3018 = vmatprep.subr.mxu0 0.0
    %v3019 = vand.u32 %v1458, 4294901760
    %3020 = vmatpush1.msra.mxu0 %v3019
    %3021 = vmatprep.subr.mxu0 0.0
    %v3022 = vand.u32 %v1459, 4294901760
    %3023 = vmatpush1.msra.mxu0 %v3022
    %3024 = vmatprep.subr.mxu0 0.0
    %v3025 = vand.u32 %v1460, 4294901760
    %3026 = vmatpush1.msra.mxu0 %v3025
    %3027 = vmatprep.subr.mxu0 0.0
    %v3028 = vand.u32 %v1461, 4294901760
    %3029 = vmatpush1.msra.mxu0 %v3028
    %3030 = vmatprep.subr.mxu0 0.0
    %v3031 = vand.u32 %v1462, 4294901760
    %3032 = vmatpush1.msra.mxu0 %v3031
    %3033 = vmatprep.subr.mxu0 0.0
    %v3034 = vand.u32 %v1463, 4294901760
    %3035 = vmatpush1.msra.mxu0 %v3034
    %3036 = vmatprep.subr.mxu0 0.0
    %v3037 = vand.u32 %v1464, 4294901760
    %3038 = vmatpush1.msra.mxu0 %v3037
    %3039 = vmatprep.subr.mxu0 0.0
    %v3040 = vand.u32 %v1465, 4294901760
    %3041 = vmatpush1.msra.mxu0 %v3040
    %3042 = vmatprep.subr.mxu0 0.0
    %v3043 = vand.u32 %v1466, 4294901760
    %3044 = vmatpush1.msra.mxu0 %v3043
    %3045 = vmatprep.subr.mxu0 0.0
    %v3046 = vand.u32 %v1467, 4294901760
    %3047 = vmatpush1.msra.mxu0 %v3046
    %3048 = vmatprep.subr.mxu0 0.0
    %v3049 = vand.u32 %v1468, 4294901760
    %3050 = vmatpush1.msra.mxu0 %v3049
    %3051 = vmatprep.subr.mxu0 0.0
    %v3052 = vand.u32 %v1469, 4294901760
    %3053 = vmatpush1.msra.mxu0 %v3052
    %3054 = vmatprep.subr.mxu0 0.0
    %v3055 = vand.u32 %v1470, 4294901760
    %3056 = vmatpush1.msra.mxu0 %v3055
    %3057 = vmatprep.subr.mxu0 0.0
    %v3058 = vand.u32 %v1471, 4294901760
    %3059 = vmatpush1.msra.mxu0 %v3058
    %3060 = vmatprep.subr.mxu0 0.0
    %v3061 = vand.u32 %v1472, 4294901760
    %3062 = vmatpush1.msra.mxu0 %v3061
    %3063 = vmatprep.subr.mxu0 0.0
    %v3064 = vand.u32 %v1473, 4294901760
    %3065 = vmatpush1.msra.mxu0 %v3064
    %3066 = vmatprep.subr.mxu0 0.0
    %v3067 = vand.u32 %v1474, 4294901760
    %3068 = vmatpush1.msra.mxu0 %v3067
    %3069 = vmatprep.subr.mxu0 0.0
    %v3070 = vand.u32 %v1475, 4294901760
    %3071 = vmatpush1.msra.mxu0 %v3070
    %v3072 = vand.u32 %v1413, 4294901760
    %3073 = vmatprep.mubr.f32.mxu0 %v3072
    %v3074 = vand.u32 %v1412, 4294901760
    %3075 = vmatmul.mubr.f32.gmra.mrb[0].mxu0 %v3074
    %v3076 = vpop.f32.mrb[0].mxu0
    %v3077 = vadd.f32 %v2868, %v3076
    %v3078 = vpop.f32.mrb[0].mxu0
    %v3079 = vand.u32 %v1415, 4294901760
    %3080 = vmatprep.mubr.f32.mxu0 %v3079
    %v3081 = vand.u32 %v1414, 4294901760
    %3082 = vmatmul.mubr.f32.gmra.mrb[0].mxu0 %v3081
    %v3083 = vpop.f32.mrb[0].mxu0
    %v3084 = vadd.f32 %v2875, %v3083
    %v3085 = vpop.f32.mrb[0].mxu0
    %v3086 = vand.u32 %v1417, 4294901760
    %3087 = vmatprep.mubr.f32.mxu0 %v3086
    %v3088 = vand.u32 %v1416, 4294901760
    %3089 = vmatmul.mubr.f32.gmra.mrb[0].mxu0 %v3088
    %v3090 = vpop.f32.mrb[0].mxu0
    %v3091 = vadd.f32 %v2882, %v3090
    %v3092 = vpop.f32.mrb[0].mxu0
    %v3093 = vand.u32 %v1419, 4294901760
    %3094 = vmatprep.mubr.f32.mxu0 %v3093
    %v3095 = vand.u32 %v1418, 4294901760
    %3096 = vmatmul.mubr.f32.gmra.mrb[0].mxu0 %v3095
    %v3097 = vpop.f32.mrb[0].mxu0
    %v3098 = vadd.f32 %v2889, %v3097
    %v3099 = vpop.f32.mrb[0].mxu0
    %v3100 = vand.u32 %v1421, 4294901760
    %3101 = vmatprep.mubr.f32.mxu0 %v3100
    %v3102 = vand.u32 %v1420, 4294901760
    %3103 = vmatmul.mubr.f32.gmra.mrb[0].mxu0 %v3102
    %v3104 = vpop.f32.mrb[0].mxu0
    %v3105 = vadd.f32 %v2896, %v3104
    %v3106 = vpop.f32.mrb[0].mxu0
    %v3107 = vand.u32 %v1423, 4294901760
    %3108 = vmatprep.mubr.f32.mxu0 %v3107
    %v3109 = vand.u32 %v1422, 4294901760
    %3110 = vmatmul.mubr.f32.gmra.mrb[0].mxu0 %v3109
    %v3111 = vpop.f32.mrb[0].mxu0
    %v3112 = vadd.f32 %v2903, %v3111
    %v3113 = vpop.f32.mrb[0].mxu0
    %v3114 = vand.u32 %v1425, 4294901760
    %3115 = vmatprep.mubr.f32.mxu0 %v3114
    %v3116 = vand.u32 %v1424, 4294901760
    %3117 = vmatmul.mubr.f32.gmra.mrb[0].mxu0 %v3116
    %v3118 = vpop.f32.mrb[0].mxu0
    %v3119 = vadd.f32 %v2910, %v3118
    %v3120 = vpop.f32.mrb[0].mxu0
    %v3121 = vand.u32 %v1427, 4294901760
    %3122 = vmatprep.mubr.f32.mxu0 %v3121
    %v3123 = vand.u32 %v1426, 4294901760
    %3124 = vmatmul.mubr.f32.gmra.mrb[0].mxu0 %v3123
    %v3125 = vpop.f32.mrb[0].mxu0
    %v3126 = vadd.f32 %v2917, %v3125
    %v3127 = vpop.f32.mrb[0].mxu0
    %v3128 = vand.u32 %v1429, 4294901760
    %3129 = vmatprep.mubr.f32.mxu0 %v3128
    %v3130 = vand.u32 %v1428, 4294901760
    %3131 = vmatmul.mubr.f32.gmra.mrb[0].mxu0 %v3130
    %v3132 = vpop.f32.mrb[0].mxu0
    %v3133 = vadd.f32 %v2924, %v3132
    %v3134 = vpop.f32.mrb[0].mxu0
    %v3135 = vand.u32 %v1431, 4294901760
    %3136 = vmatprep.mubr.f32.mxu0 %v3135
    %v3137 = vand.u32 %v1430, 4294901760
    %3138 = vmatmul.mubr.f32.gmra.mrb[0].mxu0 %v3137
    %v3139 = vpop.f32.mrb[0].mxu0
    %v3140 = vadd.f32 %v2931, %v3139
    %v3141 = vpop.f32.mrb[0].mxu0
    %v3142 = vand.u32 %v1433, 4294901760
    %3143 = vmatprep.mubr.f32.mxu0 %v3142
    %v3144 = vand.u32 %v1432, 4294901760
    %3145 = vmatmul.mubr.f32.gmra.mrb[0].mxu0 %v3144
    %v3146 = vpop.f32.mrb[0].mxu0
    %v3147 = vadd.f32 %v2938, %v3146
    %v3148 = vpop.f32.mrb[0].mxu0
    %v3149 = vand.u32 %v1435, 4294901760
    %3150 = vmatprep.mubr.f32.mxu0 %v3149
    %v3151 = vand.u32 %v1434, 4294901760
    %3152 = vmatmul.mubr.f32.gmra.mrb[0].mxu0 %v3151
    %v3153 = vpop.f32.mrb[0].mxu0
    %v3154 = vadd.f32 %v2945, %v3153
    %v3155 = vpop.f32.mrb[0].mxu0
    %v3156 = vand.u32 %v1437, 4294901760
    %3157 = vmatprep.mubr.f32.mxu0 %v3156
    %v3158 = vand.u32 %v1436, 4294901760
    %3159 = vmatmul.mubr.f32.gmra.mrb[0].mxu0 %v3158
    %v3160 = vpop.f32.mrb[0].mxu0
    %v3161 = vadd.f32 %v2952, %v3160
    %v3162 = vpop.f32.mrb[0].mxu0
    %v3163 = vand.u32 %v1439, 4294901760
    %3164 = vmatprep.mubr.f32.mxu0 %v3163
    %v3165 = vand.u32 %v1438, 4294901760
    %3166 = vmatmul.mubr.f32.gmra.mrb[0].mxu0 %v3165
    %v3167 = vpop.f32.mrb[0].mxu0
    %v3168 = vadd.f32 %v2959, %v3167
    %v3169 = vpop.f32.mrb[0].mxu0
    %v3170 = vand.u32 %v1441, 4294901760
    %3171 = vmatprep.mubr.f32.mxu0 %v3170
    %v3172 = vand.u32 %v1440, 4294901760
    %3173 = vmatmul.mubr.f32.gmra.mrb[0].mxu0 %v3172
    %v3174 = vpop.f32.mrb[0].mxu0
    %v3175 = vadd.f32 %v2966, %v3174
    %v3176 = vpop.f32.mrb[0].mxu0
    %v3177 = vand.u32 %v1443, 4294901760
    %3178 = vmatprep.mubr.f32.mxu0 %v3177
    %v3179 = vand.u32 %v1442, 4294901760
    %3180 = vmatmul.mubr.f32.gmra.mrb[0].mxu0 %v3179
    %v3181 = vpop.f32.mrb[0].mxu0
    %v3182 = vadd.f32 %v2973, %v3181
    %v3183 = vpop.f32.mrb[0].mxu0
    %3184 = vdwg.mxu0
    %v3185 = vmax.f32 %v3077, 0.0
    %v3186 = vmax.f32 %v3084, 0.0
    %v3187 = vmax.f32 %v3091, 0.0
    %v3188 = vmax.f32 %v3098, 0.0
    %v3189 = vmax.f32 %v3105, 0.0
    %v3190 = vmax.f32 %v3112, 0.0
    %v3191 = vmax.f32 %v3119, 0.0
    %v3192 = vmax.f32 %v3126, 0.0
    %v3193 = vmax.f32 %v3133, 0.0
    %v3194 = vmax.f32 %v3140, 0.0
    %v3195 = vmax.f32 %v3147, 0.0
    %v3196 = vmax.f32 %v3154, 0.0
    %v3197 = vmax.f32 %v3161, 0.0
    %v3198 = vmax.f32 %v3168, 0.0
    %v3199 = vmax.f32 %v3175, 0.0
    %v3200 = vmax.f32 %v3182, 0.0
    %v3201 = vld [vmem:[%s5] sm:$0xff]
    %v3202 = vld [vmem:[%s5 + $0x8] sm:$0xff]
    %v3203 = vld [vmem:[%s5 + $0x10] sm:$0xff]
    %v3204 = vld [vmem:[%s5 + $0x18] sm:$0xff]
    %v3205 = vld [vmem:[%s5 + $0x20] sm:$0xff]
    %v3206 = vld [vmem:[%s5 + $0x28] sm:$0xff]
    %v3207 = vld [vmem:[%s5 + $0x30] sm:$0xff]
    %v3208 = vld [vmem:[%s5 + $0x38] sm:$0xff]
    %v3209 = vld [vmem:[%s5 + $0x40] sm:$0xff]
    %v3210 = vld [vmem:[%s5 + $0x48] sm:$0xff]
    %v3211 = vld [vmem:[%s5 + $0x50] sm:$0xff]
    %v3212 = vld [vmem:[%s5 + $0x58] sm:$0xff]
    %v3213 = vld [vmem:[%s5 + $0x60] sm:$0xff]
    %v3214 = vld [vmem:[%s5 + $0x68] sm:$0xff]
    %v3215 = vld [vmem:[%s5 + $0x70] sm:$0xff]
    %v3216 = vld [vmem:[%s5 + $0x78] sm:$0xff]
    %v3217 = vld [vmem:[%s6] sm:$0x1]
    %v3219 = vlaneseq
    %v3220 = vshrl.u32 %v3219, 7
    %v3221 = vsub.s32 0, %v3220
    %v3222 = vrot.slane %v3217, %v3221
    %3224 = vmatprep.subr.mxu0 0.0
    %v3225 = vand.u32 %v3201, 4294901760
    %3226 = vmatpush1.msra.mxu0 %v3225
    %3227 = vmatprep.subr.mxu0 0.0
    %v3228 = vand.u32 %v3202, 4294901760
    %3229 = vmatpush1.msra.mxu0 %v3228
    %3230 = vmatprep.subr.mxu0 0.0
    %v3231 = vand.u32 %v3203, 4294901760
    %3232 = vmatpush1.msra.mxu0 %v3231
    %3233 = vmatprep.subr.mxu0 0.0
    %v3234 = vand.u32 %v3204, 4294901760
    %3235 = vmatpush1.msra.mxu0 %v3234
    %3236 = vmatprep.subr.mxu0 0.0
    %v3237 = vand.u32 %v3205, 4294901760
    %3238 = vmatpush1.msra.mxu0 %v3237
    %3239 = vmatprep.subr.mxu0 0.0
    %v3240 = vand.u32 %v3206, 4294901760
    %3241 = vmatpush1.msra.mxu0 %v3240
    %3242 = vmatprep.subr.mxu0 0.0
    %v3243 = vand.u32 %v3207, 4294901760
    %3244 = vmatpush1.msra.mxu0 %v3243
    %3245 = vmatprep.subr.mxu0 0.0
    %v3246 = vand.u32 %v3208, 4294901760
    %3247 = vmatpush1.msra.mxu0 %v3246
    %3248 = vmatprep.subr.mxu0 0.0
    %v3249 = vand.u32 %v3209, 4294901760
    %3250 = vmatpush1.msra.mxu0 %v3249
    %3251 = vmatprep.subr.mxu0 0.0
    %v3252 = vand.u32 %v3210, 4294901760
    %3253 = vmatpush1.msra.mxu0 %v3252
    %3254 = vmatprep.subr.mxu0 0.0
    %v3255 = vand.u32 %v3211, 4294901760
    %3256 = vmatpush1.msra.mxu0 %v3255
    %3257 = vmatprep.subr.mxu0 0.0
    %v3258 = vand.u32 %v3212, 4294901760
    %3259 = vmatpush1.msra.mxu0 %v3258
    %3260 = vmatprep.subr.mxu0 0.0
    %v3261 = vand.u32 %v3213, 4294901760
    %3262 = vmatpush1.msra.mxu0 %v3261
    %3263 = vmatprep.subr.mxu0 0.0
    %v3264 = vand.u32 %v3214, 4294901760
    %3265 = vmatpush1.msra.mxu0 %v3264
    %3266 = vmatprep.subr.mxu0 0.0
    %v3267 = vand.u32 %v3215, 4294901760
    %3268 = vmatpush1.msra.mxu0 %v3267
    %3269 = vmatprep.subr.mxu0 0.0
    %v3270 = vand.u32 %v3216, 4294901760
    %3271 = vmatpush1.msra.mxu0 %v3270
    %3272 = vmatprep.subr.mxu0 0.0
    %3273 = vmatpush1.msra.mxu0 0.0
    %3274 = vmatprep.subr.mxu0 0.0
    %3275 = vmatpush1.msra.mxu0 0.0
    %3276 = vmatprep.subr.mxu0 0.0
    %3277 = vmatpush1.msra.mxu0 0.0
    %3278 = vmatprep.subr.mxu0 0.0
    %3279 = vmatpush1.msra.mxu0 0.0
    %3280 = vmatprep.subr.mxu0 0.0
    %3281 = vmatpush1.msra.mxu0 0.0
    %3282 = vmatprep.subr.mxu0 0.0
    %3283 = vmatpush1.msra.mxu0 0.0
    %3284 = vmatprep.subr.mxu0 0.0
    %3285 = vmatpush1.msra.mxu0 0.0
    %3286 = vmatprep.subr.mxu0 0.0
    %3287 = vmatpush1.msra.mxu0 0.0
    %3288 = vmatprep.subr.mxu0 0.0
    %3289 = vmatpush1.msra.mxu0 0.0
    %3290 = vmatprep.subr.mxu0 0.0
    %3291 = vmatpush1.msra.mxu0 0.0
    %3292 = vmatprep.subr.mxu0 0.0
    %3293 = vmatpush1.msra.mxu0 0.0
    %3294 = vmatprep.subr.mxu0 0.0
    %3295 = vmatpush1.msra.mxu0 0.0
    %3296 = vmatprep.subr.mxu0 0.0
    %3297 = vmatpush1.msra.mxu0 0.0
    %3298 = vmatprep.subr.mxu0 0.0
    %3299 = vmatpush1.msra.mxu0 0.0
    %3300 = vmatprep.subr.mxu0 0.0
    %3301 = vmatpush1.msra.mxu0 0.0
    %3302 = vmatprep.subr.mxu0 0.0
    %3303 = vmatpush1.msra.mxu0 0.0
    %3304 = vmatprep.mubr.f32.mxu0 0.0
    %v3305 = vand.u32 %v3185, 4294901760
    %v3306 = vsub.f32 %v3185, %v3305
    %v3307 = vand.u32 %v3306, 4294901760
    %v3308 = vsub.f32 %v3306, %v3307
    %v3309 = vand.u32 %v3308, 4294901760
    %3310 = vmatmul.mubr.f32.gmra.mrb[0].mxu0 %v3309
    %v3311 = vpop.f32.mrb[0].mxu0
    %v3312 = vadd.f32 %v3222, %v3311
    %v3313 = vpop.f32.mrb[0].mxu0
    %3314 = vmatprep.mubr.f32.mxu0 0.0
    %v3315 = vand.u32 %v3186, 4294901760
    %v3316 = vsub.f32 %v3186, %v3315
    %v3317 = vand.u32 %v3316, 4294901760
    %v3318 = vsub.f32 %v3316, %v3317
    %v3319 = vand.u32 %v3318, 4294901760
    %3320 = vmatmul.mubr.f32.gmra.mrb[0].mxu0 %v3319
    %v3321 = vpop.f32.mrb[0].mxu0
    %v3322 = vadd.f32 %v3222, %v3321
    %v3323 = vpop.f32.mrb[0].mxu0
    %3324 = vmatprep.mubr.f32.mxu0 0.0
    %v3325 = vand.u32 %v3187, 4294901760
    %v3326 = vsub.f32 %v3187, %v3325
    %v3327 = vand.u32 %v3326, 4294901760
    %v3328 = vsub.f32 %v3326, %v3327
    %v3329 = vand.u32 %v3328, 4294901760
    %3330 = vmatmul.mubr.f32.gmra.mrb[0].mxu0 %v3329
    %v3331 = vpop.f32.mrb[0].mxu0
    %v3332 = vadd.f32 %v3222, %v3331
    %v3333 = vpop.f32.mrb[0].mxu0
    %3334 = vmatprep.mubr.f32.mxu0 0.0
    %v3335 = vand.u32 %v3188, 4294901760
    %v3336 = vsub.f32 %v3188, %v3335
    %v3337 = vand.u32 %v3336, 4294901760
    %v3338 = vsub.f32 %v3336, %v3337
    %v3339 = vand.u32 %v3338, 4294901760
    %3340 = vmatmul.mubr.f32.gmra.mrb[0].mxu0 %v3339
    %v3341 = vpop.f32.mrb[0].mxu0
    %v3342 = vadd.f32 %v3222, %v3341
    %v3343 = vpop.f32.mrb[0].mxu0
    %3344 = vmatprep.mubr.f32.mxu0 0.0
    %v3345 = vand.u32 %v3189, 4294901760
    %v3346 = vsub.f32 %v3189, %v3345
    %v3347 = vand.u32 %v3346, 4294901760
    %v3348 = vsub.f32 %v3346, %v3347
    %v3349 = vand.u32 %v3348, 4294901760
    %3350 = vmatmul.mubr.f32.gmra.mrb[0].mxu0 %v3349
    %v3351 = vpop.f32.mrb[0].mxu0
    %v3352 = vadd.f32 %v3222, %v3351
    %v3353 = vpop.f32.mrb[0].mxu0
    %3354 = vmatprep.mubr.f32.mxu0 0.0
    %v3355 = vand.u32 %v3190, 4294901760
    %v3356 = vsub.f32 %v3190, %v3355
    %v3357 = vand.u32 %v3356, 4294901760
    %v3358 = vsub.f32 %v3356, %v3357
    %v3359 = vand.u32 %v3358, 4294901760
    %3360 = vmatmul.mubr.f32.gmra.mrb[0].mxu0 %v3359
    %v3361 = vpop.f32.mrb[0].mxu0
    %v3362 = vadd.f32 %v3222, %v3361
    %v3363 = vpop.f32.mrb[0].mxu0
    %3364 = vmatprep.mubr.f32.mxu0 0.0
    %v3365 = vand.u32 %v3191, 4294901760
    %v3366 = vsub.f32 %v3191, %v3365
    %v3367 = vand.u32 %v3366, 4294901760
    %v3368 = vsub.f32 %v3366, %v3367
    %v3369 = vand.u32 %v3368, 4294901760
    %3370 = vmatmul.mubr.f32.gmra.mrb[0].mxu0 %v3369
    %v3371 = vpop.f32.mrb[0].mxu0
    %v3372 = vadd.f32 %v3222, %v3371
    %v3373 = vpop.f32.mrb[0].mxu0
    %3374 = vmatprep.mubr.f32.mxu0 0.0
    %v3375 = vand.u32 %v3192, 4294901760
    %v3376 = vsub.f32 %v3192, %v3375
    %v3377 = vand.u32 %v3376, 4294901760
    %v3378 = vsub.f32 %v3376, %v3377
    %v3379 = vand.u32 %v3378, 4294901760
    %3380 = vmatmul.mubr.f32.gmra.mrb[0].mxu0 %v3379
    %v3381 = vpop.f32.mrb[0].mxu0
    %v3382 = vadd.f32 %v3222, %v3381
    %v3383 = vpop.f32.mrb[0].mxu0
    %3384 = vmatprep.mubr.f32.mxu0 0.0
    %v3385 = vand.u32 %v3193, 4294901760
    %v3386 = vsub.f32 %v3193, %v3385
    %v3387 = vand.u32 %v3386, 4294901760
    %v3388 = vsub.f32 %v3386, %v3387
    %v3389 = vand.u32 %v3388, 4294901760
    %3390 = vmatmul.mubr.f32.gmra.mrb[0].mxu0 %v3389
    %v3391 = vpop.f32.mrb[0].mxu0
    %v3392 = vadd.f32 %v3222, %v3391
    %v3393 = vpop.f32.mrb[0].mxu0
    %3394 = vmatprep.mubr.f32.mxu0 0.0
    %v3395 = vand.u32 %v3194, 4294901760
    %v3396 = vsub.f32 %v3194, %v3395
    %v3397 = vand.u32 %v3396, 4294901760
    %v3398 = vsub.f32 %v3396, %v3397
    %v3399 = vand.u32 %v3398, 4294901760
    %3400 = vmatmul.mubr.f32.gmra.mrb[0].mxu0 %v3399
    %v3401 = vpop.f32.mrb[0].mxu0
    %v3402 = vadd.f32 %v3222, %v3401
    %v3403 = vpop.f32.mrb[0].mxu0
    %3404 = vmatprep.mubr.f32.mxu0 0.0
    %v3405 = vand.u32 %v3195, 4294901760
    %v3406 = vsub.f32 %v3195, %v3405
    %v3407 = vand.u32 %v3406, 4294901760
    %v3408 = vsub.f32 %v3406, %v3407
    %v3409 = vand.u32 %v3408, 4294901760
    %3410 = vmatmul.mubr.f32.gmra.mrb[0].mxu0 %v3409
    %v3411 = vpop.f32.mrb[0].mxu0
    %v3412 = vadd.f32 %v3222, %v3411
    %v3413 = vpop.f32.mrb[0].mxu0
    %3414 = vmatprep.mubr.f32.mxu0 0.0
    %v3415 = vand.u32 %v3196, 4294901760
    %v3416 = vsub.f32 %v3196, %v3415
    %v3417 = vand.u32 %v3416, 4294901760
    %v3418 = vsub.f32 %v3416, %v3417
    %v3419 = vand.u32 %v3418, 4294901760
    %3420 = vmatmul.mubr.f32.gmra.mrb[0].mxu0 %v3419
    %v3421 = vpop.f32.mrb[0].mxu0
    %v3422 = vadd.f32 %v3222, %v3421
    %v3423 = vpop.f32.mrb[0].mxu0
    %3424 = vmatprep.mubr.f32.mxu0 0.0
    %v3425 = vand.u32 %v3197, 4294901760
    %v3426 = vsub.f32 %v3197, %v3425
    %v3427 = vand.u32 %v3426, 4294901760
    %v3428 = vsub.f32 %v3426, %v3427
    %v3429 = vand.u32 %v3428, 4294901760
    %3430 = vmatmul.mubr.f32.gmra.mrb[0].mxu0 %v3429
    %v3431 = vpop.f32.mrb[0].mxu0
    %v3432 = vadd.f32 %v3222, %v3431
    %v3433 = vpop.f32.mrb[0].mxu0
    %3434 = vmatprep.mubr.f32.mxu0 0.0
    %v3435 = vand.u32 %v3198, 4294901760
    %v3436 = vsub.f32 %v3198, %v3435
    %v3437 = vand.u32 %v3436, 4294901760
    %v3438 = vsub.f32 %v3436, %v3437
    %v3439 = vand.u32 %v3438, 4294901760
    %3440 = vmatmul.mubr.f32.gmra.mrb[0].mxu0 %v3439
    %v3441 = vpop.f32.mrb[0].mxu0
    %v3442 = vadd.f32 %v3222, %v3441
    %v3443 = vpop.f32.mrb[0].mxu0
    %3444 = vmatprep.mubr.f32.mxu0 0.0
    %v3445 = vand.u32 %v3199, 4294901760
    %v3446 = vsub.f32 %v3199, %v3445
    %v3447 = vand.u32 %v3446, 4294901760
    %v3448 = vsub.f32 %v3446, %v3447
    %v3449 = vand.u32 %v3448, 4294901760
    %3450 = vmatmul.mubr.f32.gmra.mrb[0].mxu0 %v3449
    %v3451 = vpop.f32.mrb[0].mxu0
    %v3452 = vadd.f32 %v3222, %v3451
    %v3453 = vpop.f32.mrb[0].mxu0
    %3454 = vmatprep.mubr.f32.mxu0 0.0
    %v3455 = vand.u32 %v3200, 4294901760
    %v3456 = vsub.f32 %v3200, %v3455
    %v3457 = vand.u32 %v3456, 4294901760
    %v3458 = vsub.f32 %v3456, %v3457
    %v3459 = vand.u32 %v3458, 4294901760
    %3460 = vmatmul.mubr.f32.gmra.mrb[0].mxu0 %v3459
    %v3461 = vpop.f32.mrb[0].mxu0
    %v3462 = vadd.f32 %v3222, %v3461
    %v3463 = vpop.f32.mrb[0].mxu0
    %3464 = vdwg.mxu0
    %3465 = vmatprep.subr.mxu0 0.0
    %v3466 = vand.u32 %v3201, 4294901760
    %v3467 = vsub.f32 %v3201, %v3466
    %v3468 = vand.u32 %v3467, 4294901760
    %v3469 = vsub.f32 %v3467, %v3468
    %v3470 = vand.u32 %v3469, 4294901760
    %3471 = vmatpush1.msra.mxu0 %v3470
    %3472 = vmatprep.subr.mxu0 0.0
    %v3473 = vand.u32 %v3202, 4294901760
    %v3474 = vsub.f32 %v3202, %v3473
    %v3475 = vand.u32 %v3474, 4294901760
    %v3476 = vsub.f32 %v3474, %v3475
    %v3477 = vand.u32 %v3476, 4294901760
    %3478 = vmatpush1.msra.mxu0 %v3477
    %3479 = vmatprep.subr.mxu0 0.0
    %v3480 = vand.u32 %v3203, 4294901760
    %v3481 = vsub.f32 %v3203, %v3480
    %v3482 = vand.u32 %v3481, 4294901760
    %v3483 = vsub.f32 %v3481, %v3482
    %v3484 = vand.u32 %v3483, 4294901760
    %3485 = vmatpush1.msra.mxu0 %v3484
    %3486 = vmatprep.subr.mxu0 0.0
    %v3487 = vand.u32 %v3204, 4294901760
    %v3488 = vsub.f32 %v3204, %v3487
    %v3489 = vand.u32 %v3488, 4294901760
    %v3490 = vsub.f32 %v3488, %v3489
    %v3491 = vand.u32 %v3490, 4294901760
    %3492 = vmatpush1.msra.mxu0 %v3491
    %3493 = vmatprep.subr.mxu0 0.0
    %v3494 = vand.u32 %v3205, 4294901760
    %v3495 = vsub.f32 %v3205, %v3494
    %v3496 = vand.u32 %v3495, 4294901760
    %v3497 = vsub.f32 %v3495, %v3496
    %v3498 = vand.u32 %v3497, 4294901760
    %3499 = vmatpush1.msra.mxu0 %v3498
    %3500 = vmatprep.subr.mxu0 0.0
    %v3501 = vand.u32 %v3206, 4294901760
    %v3502 = vsub.f32 %v3206, %v3501
    %v3503 = vand.u32 %v3502, 4294901760
    %v3504 = vsub.f32 %v3502, %v3503
    %v3505 = vand.u32 %v3504, 4294901760
    %3506 = vmatpush1.msra.mxu0 %v3505
    %3507 = vmatprep.subr.mxu0 0.0
    %v3508 = vand.u32 %v3207, 4294901760
    %v3509 = vsub.f32 %v3207, %v3508
    %v3510 = vand.u32 %v3509, 4294901760
    %v3511 = vsub.f32 %v3509, %v3510
    %v3512 = vand.u32 %v3511, 4294901760
    %3513 = vmatpush1.msra.mxu0 %v3512
    %3514 = vmatprep.subr.mxu0 0.0
    %v3515 = vand.u32 %v3208, 4294901760
    %v3516 = vsub.f32 %v3208, %v3515
    %v3517 = vand.u32 %v3516, 4294901760
    %v3518 = vsub.f32 %v3516, %v3517
    %v3519 = vand.u32 %v3518, 4294901760
    %3520 = vmatpush1.msra.mxu0 %v3519
    %3521 = vmatprep.subr.mxu0 0.0
    %v3522 = vand.u32 %v3209, 4294901760
    %v3523 = vsub.f32 %v3209, %v3522
    %v3524 = vand.u32 %v3523, 4294901760
    %v3525 = vsub.f32 %v3523, %v3524
    %v3526 = vand.u32 %v3525, 4294901760
    %3527 = vmatpush1.msra.mxu0 %v3526
    %3528 = vmatprep.subr.mxu0 0.0
    %v3529 = vand.u32 %v3210, 4294901760
    %v3530 = vsub.f32 %v3210, %v3529
    %v3531 = vand.u32 %v3530, 4294901760
    %v3532 = vsub.f32 %v3530, %v3531
    %v3533 = vand.u32 %v3532, 4294901760
    %3534 = vmatpush1.msra.mxu0 %v3533
    %3535 = vmatprep.subr.mxu0 0.0
    %v3536 = vand.u32 %v3211, 4294901760
    %v3537 = vsub.f32 %v3211, %v3536
    %v3538 = vand.u32 %v3537, 4294901760
    %v3539 = vsub.f32 %v3537, %v3538
    %v3540 = vand.u32 %v3539, 4294901760
    %3541 = vmatpush1.msra.mxu0 %v3540
    %3542 = vmatprep.subr.mxu0 0.0
    %v3543 = vand.u32 %v3212, 4294901760
    %v3544 = vsub.f32 %v3212, %v3543
    %v3545 = vand.u32 %v3544, 4294901760
    %v3546 = vsub.f32 %v3544, %v3545
    %v3547 = vand.u32 %v3546, 4294901760
    %3548 = vmatpush1.msra.mxu0 %v3547
    %3549 = vmatprep.subr.mxu0 0.0
    %v3550 = vand.u32 %v3213, 4294901760
    %v3551 = vsub.f32 %v3213, %v3550
    %v3552 = vand.u32 %v3551, 4294901760
    %v3553 = vsub.f32 %v3551, %v3552
    %v3554 = vand.u32 %v3553, 4294901760
    %3555 = vmatpush1.msra.mxu0 %v3554
    %3556 = vmatprep.subr.mxu0 0.0
    %v3557 = vand.u32 %v3214, 4294901760
    %v3558 = vsub.f32 %v3214, %v3557
    %v3559 = vand.u32 %v3558, 4294901760
    %v3560 = vsub.f32 %v3558, %v3559
    %v3561 = vand.u32 %v3560, 4294901760
    %3562 = vmatpush1.msra.mxu0 %v3561
    %3563 = vmatprep.subr.mxu0 0.0
    %v3564 = vand.u32 %v3215, 4294901760
    %v3565 = vsub.f32 %v3215, %v3564
    %v3566 = vand.u32 %v3565, 4294901760
    %v3567 = vsub.f32 %v3565, %v3566
    %v3568 = vand.u32 %v3567, 4294901760
    %3569 = vmatpush1.msra.mxu0 %v3568
    %3570 = vmatprep.subr.mxu0 0.0
    %v3571 = vand.u32 %v3216, 4294901760
    %v3572 = vsub.f32 %v3216, %v3571
    %v3573 = vand.u32 %v3572, 4294901760
    %v3574 = vsub.f32 %v3572, %v3573
    %v3575 = vand.u32 %v3574, 4294901760
    %3576 = vmatpush1.msra.mxu0 %v3575
    %3577 = vmatprep.subr.mxu0 0.0
    %3578 = vmatpush1.msra.mxu0 0.0
    %3579 = vmatprep.subr.mxu0 0.0
    %3580 = vmatpush1.msra.mxu0 0.0
    %3581 = vmatprep.subr.mxu0 0.0
    %3582 = vmatpush1.msra.mxu0 0.0
    %3583 = vmatprep.subr.mxu0 0.0
    %3584 = vmatpush1.msra.mxu0 0.0
    %3585 = vmatprep.subr.mxu0 0.0
    %3586 = vmatpush1.msra.mxu0 0.0
    %3587 = vmatprep.subr.mxu0 0.0
    %3588 = vmatpush1.msra.mxu0 0.0
    %3589 = vmatprep.subr.mxu0 0.0
    %3590 = vmatpush1.msra.mxu0 0.0
    %3591 = vmatprep.subr.mxu0 0.0
    %3592 = vmatpush1.msra.mxu0 0.0
    %3593 = vmatprep.subr.mxu0 0.0
    %3594 = vmatpush1.msra.mxu0 0.0
    %3595 = vmatprep.subr.mxu0 0.0
    %3596 = vmatpush1.msra.mxu0 0.0
    %3597 = vmatprep.subr.mxu0 0.0
    %3598 = vmatpush1.msra.mxu0 0.0
    %3599 = vmatprep.subr.mxu0 0.0
    %3600 = vmatpush1.msra.mxu0 0.0
    %3601 = vmatprep.subr.mxu0 0.0
    %3602 = vmatpush1.msra.mxu0 0.0
    %3603 = vmatprep.subr.mxu0 0.0
    %3604 = vmatpush1.msra.mxu0 0.0
    %3605 = vmatprep.subr.mxu0 0.0
    %3606 = vmatpush1.msra.mxu0 0.0
    %3607 = vmatprep.subr.mxu0 0.0
    %3608 = vmatpush1.msra.mxu0 0.0
    %3609 = vmatprep.mubr.f32.mxu0 0.0
    %v3610 = vand.u32 %v3185, 4294901760
    %3611 = vmatmul.mubr.f32.gmra.mrb[0].mxu0 %v3610
    %v3612 = vpop.f32.mrb[0].mxu0
    %v3613 = vadd.f32 %v3312, %v3612
    %v3614 = vpop.f32.mrb[0].mxu0
    %3615 = vmatprep.mubr.f32.mxu0 0.0
    %v3616 = vand.u32 %v3186, 4294901760
    %3617 = vmatmul.mubr.f32.gmra.mrb[0].mxu0 %v3616
    %v3618 = vpop.f32.mrb[0].mxu0
    %v3619 = vadd.f32 %v3322, %v3618
    %v3620 = vpop.f32.mrb[0].mxu0
    %3621 = vmatprep.mubr.f32.mxu0 0.0
    %v3622 = vand.u32 %v3187, 4294901760
    %3623 = vmatmul.mubr.f32.gmra.mrb[0].mxu0 %v3622
    %v3624 = vpop.f32.mrb[0].mxu0
    %v3625 = vadd.f32 %v3332, %v3624
    %v3626 = vpop.f32.mrb[0].mxu0
    %3627 = vmatprep.mubr.f32.mxu0 0.0
    %v3628 = vand.u32 %v3188, 4294901760
    %3629 = vmatmul.mubr.f32.gmra.mrb[0].mxu0 %v3628
    %v3630 = vpop.f32.mrb[0].mxu0
    %v3631 = vadd.f32 %v3342, %v3630
    %v3632 = vpop.f32.mrb[0].mxu0
    %3633 = vmatprep.mubr.f32.mxu0 0.0
    %v3634 = vand.u32 %v3189, 4294901760
    %3635 = vmatmul.mubr.f32.gmra.mrb[0].mxu0 %v3634
    %v3636 = vpop.f32.mrb[0].mxu0
    %v3637 = vadd.f32 %v3352, %v3636
    %v3638 = vpop.f32.mrb[0].mxu0
    %3639 = vmatprep.mubr.f32.mxu0 0.0
    %v3640 = vand.u32 %v3190, 4294901760
    %3641 = vmatmul.mubr.f32.gmra.mrb[0].mxu0 %v3640
    %v3642 = vpop.f32.mrb[0].mxu0
    %v3643 = vadd.f32 %v3362, %v3642
    %v3644 = vpop.f32.mrb[0].mxu0
    %3645 = vmatprep.mubr.f32.mxu0 0.0
    %v3646 = vand.u32 %v3191, 4294901760
    %3647 = vmatmul.mubr.f32.gmra.mrb[0].mxu0 %v3646
    %v3648 = vpop.f32.mrb[0].mxu0
    %v3649 = vadd.f32 %v3372, %v3648
    %v3650 = vpop.f32.mrb[0].mxu0
    %3651 = vmatprep.mubr.f32.mxu0 0.0
    %v3652 = vand.u32 %v3192, 4294901760
    %3653 = vmatmul.mubr.f32.gmra.mrb[0].mxu0 %v3652
    %v3654 = vpop.f32.mrb[0].mxu0
    %v3655 = vadd.f32 %v3382, %v3654
    %v3656 = vpop.f32.mrb[0].mxu0
    %3657 = vmatprep.mubr.f32.mxu0 0.0
    %v3658 = vand.u32 %v3193, 4294901760
    %3659 = vmatmul.mubr.f32.gmra.mrb[0].mxu0 %v3658
    %v3660 = vpop.f32.mrb[0].mxu0
    %v3661 = vadd.f32 %v3392, %v3660
    %v3662 = vpop.f32.mrb[0].mxu0
    %3663 = vmatprep.mubr.f32.mxu0 0.0
    %v3664 = vand.u32 %v3194, 4294901760
    %3665 = vmatmul.mubr.f32.gmra.mrb[0].mxu0 %v3664
    %v3666 = vpop.f32.mrb[0].mxu0
    %v3667 = vadd.f32 %v3402, %v3666
    %v3668 = vpop.f32.mrb[0].mxu0
    %3669 = vmatprep.mubr.f32.mxu0 0.0
    %v3670 = vand.u32 %v3195, 4294901760
    %3671 = vmatmul.mubr.f32.gmra.mrb[0].mxu0 %v3670
    %v3672 = vpop.f32.mrb[0].mxu0
    %v3673 = vadd.f32 %v3412, %v3672
    %v3674 = vpop.f32.mrb[0].mxu0
    %3675 = vmatprep.mubr.f32.mxu0 0.0
    %v3676 = vand.u32 %v3196, 4294901760
    %3677 = vmatmul.mubr.f32.gmra.mrb[0].mxu0 %v3676
    %v3678 = vpop.f32.mrb[0].mxu0
    %v3679 = vadd.f32 %v3422, %v3678
    %v3680 = vpop.f32.mrb[0].mxu0
    %3681 = vmatprep.mubr.f32.mxu0 0.0
    %v3682 = vand.u32 %v3197, 4294901760
    %3683 = vmatmul.mubr.f32.gmra.mrb[0].mxu0 %v3682
    %v3684 = vpop.f32.mrb[0].mxu0
    %v3685 = vadd.f32 %v3432, %v3684
    %v3686 = vpop.f32.mrb[0].mxu0
    %3687 = vmatprep.mubr.f32.mxu0 0.0
    %v3688 = vand.u32 %v3198, 4294901760
    %3689 = vmatmul.mubr.f32.gmra.mrb[0].mxu0 %v3688
    %v3690 = vpop.f32.mrb[0].mxu0
    %v3691 = vadd.f32 %v3442, %v3690
    %v3692 = vpop.f32.mrb[0].mxu0
    %3693 = vmatprep.mubr.f32.mxu0 0.0
    %v3694 = vand.u32 %v3199, 4294901760
    %3695 = vmatmul.mubr.f32.gmra.mrb[0].mxu0 %v3694
    %v3696 = vpop.f32.mrb[0].mxu0
    %v3697 = vadd.f32 %v3452, %v3696
    %v3698 = vpop.f32.mrb[0].mxu0
    %3699 = vmatprep.mubr.f32.mxu0 0.0
    %v3700 = vand.u32 %v3200, 4294901760
    %3701 = vmatmul.mubr.f32.gmra.mrb[0].mxu0 %v3700
    %v3702 = vpop.f32.mrb[0].mxu0
    %v3703 = vadd.f32 %v3462, %v3702
    %v3704 = vpop.f32.mrb[0].mxu0
    %3705 = vdwg.mxu0
    %3706 = vmatprep.subr.mxu0 0.0
    %v3707 = vand.u32 %v3201, 4294901760
    %v3708 = vsub.f32 %v3201, %v3707
    %3709 = vmatpush1.msra.mxu0 %v3708
    %3710 = vmatprep.subr.mxu0 0.0
    %v3711 = vand.u32 %v3202, 4294901760
    %v3712 = vsub.f32 %v3202, %v3711
    %3713 = vmatpush1.msra.mxu0 %v3712
    %3714 = vmatprep.subr.mxu0 0.0
    %v3715 = vand.u32 %v3203, 4294901760
    %v3716 = vsub.f32 %v3203, %v3715
    %3717 = vmatpush1.msra.mxu0 %v3716
    %3718 = vmatprep.subr.mxu0 0.0
    %v3719 = vand.u32 %v3204, 4294901760
    %v3720 = vsub.f32 %v3204, %v3719
    %3721 = vmatpush1.msra.mxu0 %v3720
    %3722 = vmatprep.subr.mxu0 0.0
    %v3723 = vand.u32 %v3205, 4294901760
    %v3724 = vsub.f32 %v3205, %v3723
    %3725 = vmatpush1.msra.mxu0 %v3724
    %3726 = vmatprep.subr.mxu0 0.0
    %v3727 = vand.u32 %v3206, 4294901760
    %v3728 = vsub.f32 %v3206, %v3727
    %3729 = vmatpush1.msra.mxu0 %v3728
    %3730 = vmatprep.subr.mxu0 0.0
    %v3731 = vand.u32 %v3207, 4294901760
    %v3732 = vsub.f32 %v3207, %v3731
    %3733 = vmatpush1.msra.mxu0 %v3732
    %3734 = vmatprep.subr.mxu0 0.0
    %v3735 = vand.u32 %v3208, 4294901760
    %v3736 = vsub.f32 %v3208, %v3735
    %3737 = vmatpush1.msra.mxu0 %v3736
    %3738 = vmatprep.subr.mxu0 0.0
    %v3739 = vand.u32 %v3209, 4294901760
    %v3740 = vsub.f32 %v3209, %v3739
    %3741 = vmatpush1.msra.mxu0 %v3740
    %3742 = vmatprep.subr.mxu0 0.0
    %v3743 = vand.u32 %v3210, 4294901760
    %v3744 = vsub.f32 %v3210, %v3743
    %3745 = vmatpush1.msra.mxu0 %v3744
    %3746 = vmatprep.subr.mxu0 0.0
    %v3747 = vand.u32 %v3211, 4294901760
    %v3748 = vsub.f32 %v3211, %v3747
    %3749 = vmatpush1.msra.mxu0 %v3748
    %3750 = vmatprep.subr.mxu0 0.0
    %v3751 = vand.u32 %v3212, 4294901760
    %v3752 = vsub.f32 %v3212, %v3751
    %3753 = vmatpush1.msra.mxu0 %v3752
    %3754 = vmatprep.subr.mxu0 0.0
    %v3755 = vand.u32 %v3213, 4294901760
    %v3756 = vsub.f32 %v3213, %v3755
    %3757 = vmatpush1.msra.mxu0 %v3756
    %3758 = vmatprep.subr.mxu0 0.0
    %v3759 = vand.u32 %v3214, 4294901760
    %v3760 = vsub.f32 %v3214, %v3759
    %3761 = vmatpush1.msra.mxu0 %v3760
    %3762 = vmatprep.subr.mxu0 0.0
    %v3763 = vand.u32 %v3215, 4294901760
    %v3764 = vsub.f32 %v3215, %v3763
    %3765 = vmatpush1.msra.mxu0 %v3764
    %3766 = vmatprep.subr.mxu0 0.0
    %v3767 = vand.u32 %v3216, 4294901760
    %v3768 = vsub.f32 %v3216, %v3767
    %3769 = vmatpush1.msra.mxu0 %v3768
    %3770 = vmatprep.subr.mxu0 0.0
    %3771 = vmatpush1.msra.mxu0 0.0
    %3772 = vmatprep.subr.mxu0 0.0
    %3773 = vmatpush1.msra.mxu0 0.0
    %3774 = vmatprep.subr.mxu0 0.0
    %3775 = vmatpush1.msra.mxu0 0.0
    %3776 = vmatprep.subr.mxu0 0.0
    %3777 = vmatpush1.msra.mxu0 0.0
    %3778 = vmatprep.subr.mxu0 0.0
    %3779 = vmatpush1.msra.mxu0 0.0
    %3780 = vmatprep.subr.mxu0 0.0
    %3781 = vmatpush1.msra.mxu0 0.0
    %3782 = vmatprep.subr.mxu0 0.0
    %3783 = vmatpush1.msra.mxu0 0.0
    %3784 = vmatprep.subr.mxu0 0.0
    %3785 = vmatpush1.msra.mxu0 0.0
    %3786 = vmatprep.subr.mxu0 0.0
    %3787 = vmatpush1.msra.mxu0 0.0
    %3788 = vmatprep.subr.mxu0 0.0
    %3789 = vmatpush1.msra.mxu0 0.0
    %3790 = vmatprep.subr.mxu0 0.0
    %3791 = vmatpush1.msra.mxu0 0.0
    %3792 = vmatprep.subr.mxu0 0.0
    %3793 = vmatpush1.msra.mxu0 0.0
    %3794 = vmatprep.subr.mxu0 0.0
    %3795 = vmatpush1.msra.mxu0 0.0
    %3796 = vmatprep.subr.mxu0 0.0
    %3797 = vmatpush1.msra.mxu0 0.0
    %3798 = vmatprep.subr.mxu0 0.0
    %3799 = vmatpush1.msra.mxu0 0.0
    %3800 = vmatprep.subr.mxu0 0.0
    %3801 = vmatpush1.msra.mxu0 0.0
    %3802 = vmatprep.mubr.f32.mxu0 0.0
    %v3803 = vand.u32 %v3185, 4294901760
    %v3804 = vsub.f32 %v3185, %v3803
    %3805 = vmatmul.mubr.f32.gmra.mrb[0].mxu0 %v3804
    %v3806 = vpop.f32.mrb[0].mxu0
    %v3807 = vadd.f32 %v3613, %v3806
    %v3808 = vpop.f32.mrb[0].mxu0
    %3809 = vmatprep.mubr.f32.mxu0 0.0
    %v3810 = vand.u32 %v3186, 4294901760
    %v3811 = vsub.f32 %v3186, %v3810
    %3812 = vmatmul.mubr.f32.gmra.mrb[0].mxu0 %v3811
    %v3813 = vpop.f32.mrb[0].mxu0
    %v3814 = vadd.f32 %v3619, %v3813
    %v3815 = vpop.f32.mrb[0].mxu0
    %3816 = vmatprep.mubr.f32.mxu0 0.0
    %v3817 = vand.u32 %v3187, 4294901760
    %v3818 = vsub.f32 %v3187, %v3817
    %3819 = vmatmul.mubr.f32.gmra.mrb[0].mxu0 %v3818
    %v3820 = vpop.f32.mrb[0].mxu0
    %v3821 = vadd.f32 %v3625, %v3820
    %v3822 = vpop.f32.mrb[0].mxu0
    %3823 = vmatprep.mubr.f32.mxu0 0.0
    %v3824 = vand.u32 %v3188, 4294901760
    %v3825 = vsub.f32 %v3188, %v3824
    %3826 = vmatmul.mubr.f32.gmra.mrb[0].mxu0 %v3825
    %v3827 = vpop.f32.mrb[0].mxu0
    %v3828 = vadd.f32 %v3631, %v3827
    %v3829 = vpop.f32.mrb[0].mxu0
    %3830 = vmatprep.mubr.f32.mxu0 0.0
    %v3831 = vand.u32 %v3189, 4294901760
    %v3832 = vsub.f32 %v3189, %v3831
    %3833 = vmatmul.mubr.f32.gmra.mrb[0].mxu0 %v3832
    %v3834 = vpop.f32.mrb[0].mxu0
    %v3835 = vadd.f32 %v3637, %v3834
    %v3836 = vpop.f32.mrb[0].mxu0
    %3837 = vmatprep.mubr.f32.mxu0 0.0
    %v3838 = vand.u32 %v3190, 4294901760
    %v3839 = vsub.f32 %v3190, %v3838
    %3840 = vmatmul.mubr.f32.gmra.mrb[0].mxu0 %v3839
    %v3841 = vpop.f32.mrb[0].mxu0
    %v3842 = vadd.f32 %v3643, %v3841
    %v3843 = vpop.f32.mrb[0].mxu0
    %3844 = vmatprep.mubr.f32.mxu0 0.0
    %v3845 = vand.u32 %v3191, 4294901760
    %v3846 = vsub.f32 %v3191, %v3845
    %3847 = vmatmul.mubr.f32.gmra.mrb[0].mxu0 %v3846
    %v3848 = vpop.f32.mrb[0].mxu0
    %v3849 = vadd.f32 %v3649, %v3848
    %v3850 = vpop.f32.mrb[0].mxu0
    %3851 = vmatprep.mubr.f32.mxu0 0.0
    %v3852 = vand.u32 %v3192, 4294901760
    %v3853 = vsub.f32 %v3192, %v3852
    %3854 = vmatmul.mubr.f32.gmra.mrb[0].mxu0 %v3853
    %v3855 = vpop.f32.mrb[0].mxu0
    %v3856 = vadd.f32 %v3655, %v3855
    %v3857 = vpop.f32.mrb[0].mxu0
    %3858 = vmatprep.mubr.f32.mxu0 0.0
    %v3859 = vand.u32 %v3193, 4294901760
    %v3860 = vsub.f32 %v3193, %v3859
    %3861 = vmatmul.mubr.f32.gmra.mrb[0].mxu0 %v3860
    %v3862 = vpop.f32.mrb[0].mxu0
    %v3863 = vadd.f32 %v3661, %v3862
    %v3864 = vpop.f32.mrb[0].mxu0
    %3865 = vmatprep.mubr.f32.mxu0 0.0
    %v3866 = vand.u32 %v3194, 4294901760
    %v3867 = vsub.f32 %v3194, %v3866
    %3868 = vmatmul.mubr.f32.gmra.mrb[0].mxu0 %v3867
    %v3869 = vpop.f32.mrb[0].mxu0
    %v3870 = vadd.f32 %v3667, %v3869
    %v3871 = vpop.f32.mrb[0].mxu0
    %3872 = vmatprep.mubr.f32.mxu0 0.0
    %v3873 = vand.u32 %v3195, 4294901760
    %v3874 = vsub.f32 %v3195, %v3873
    %3875 = vmatmul.mubr.f32.gmra.mrb[0].mxu0 %v3874
    %v3876 = vpop.f32.mrb[0].mxu0
    %v3877 = vadd.f32 %v3673, %v3876
    %v3878 = vpop.f32.mrb[0].mxu0
    %3879 = vmatprep.mubr.f32.mxu0 0.0
    %v3880 = vand.u32 %v3196, 4294901760
    %v3881 = vsub.f32 %v3196, %v3880
    %3882 = vmatmul.mubr.f32.gmra.mrb[0].mxu0 %v3881
    %v3883 = vpop.f32.mrb[0].mxu0
    %v3884 = vadd.f32 %v3679, %v3883
    %v3885 = vpop.f32.mrb[0].mxu0
    %3886 = vmatprep.mubr.f32.mxu0 0.0
    %v3887 = vand.u32 %v3197, 4294901760
    %v3888 = vsub.f32 %v3197, %v3887
    %3889 = vmatmul.mubr.f32.gmra.mrb[0].mxu0 %v3888
    %v3890 = vpop.f32.mrb[0].mxu0
    %v3891 = vadd.f32 %v3685, %v3890
    %v3892 = vpop.f32.mrb[0].mxu0
    %3893 = vmatprep.mubr.f32.mxu0 0.0
    %v3894 = vand.u32 %v3198, 4294901760
    %v3895 = vsub.f32 %v3198, %v3894
    %3896 = vmatmul.mubr.f32.gmra.mrb[0].mxu0 %v3895
    %v3897 = vpop.f32.mrb[0].mxu0
    %v3898 = vadd.f32 %v3691, %v3897
    %v3899 = vpop.f32.mrb[0].mxu0
    %3900 = vmatprep.mubr.f32.mxu0 0.0
    %v3901 = vand.u32 %v3199, 4294901760
    %v3902 = vsub.f32 %v3199, %v3901
    %3903 = vmatmul.mubr.f32.gmra.mrb[0].mxu0 %v3902
    %v3904 = vpop.f32.mrb[0].mxu0
    %v3905 = vadd.f32 %v3697, %v3904
    %v3906 = vpop.f32.mrb[0].mxu0
    %3907 = vmatprep.mubr.f32.mxu0 0.0
    %v3908 = vand.u32 %v3200, 4294901760
    %v3909 = vsub.f32 %v3200, %v3908
    %3910 = vmatmul.mubr.f32.gmra.mrb[0].mxu0 %v3909
    %v3911 = vpop.f32.mrb[0].mxu0
    %v3912 = vadd.f32 %v3703, %v3911
    %v3913 = vpop.f32.mrb[0].mxu0
    %3914 = vdwg.mxu0
    %3915 = vmatprep.subr.mxu0 0.0
    %v3916 = vand.u32 %v3201, 4294901760
    %3917 = vmatpush1.msra.mxu0 %v3916
    %3918 = vmatprep.subr.mxu0 0.0
    %v3919 = vand.u32 %v3202, 4294901760
    %3920 = vmatpush1.msra.mxu0 %v3919
    %3921 = vmatprep.subr.mxu0 0.0
    %v3922 = vand.u32 %v3203, 4294901760
    %3923 = vmatpush1.msra.mxu0 %v3922
    %3924 = vmatprep.subr.mxu0 0.0
    %v3925 = vand.u32 %v3204, 4294901760
    %3926 = vmatpush1.msra.mxu0 %v3925
    %3927 = vmatprep.subr.mxu0 0.0
    %v3928 = vand.u32 %v3205, 4294901760
    %3929 = vmatpush1.msra.mxu0 %v3928
    %3930 = vmatprep.subr.mxu0 0.0
    %v3931 = vand.u32 %v3206, 4294901760
    %3932 = vmatpush1.msra.mxu0 %v3931
    %3933 = vmatprep.subr.mxu0 0.0
    %v3934 = vand.u32 %v3207, 4294901760
    %3935 = vmatpush1.msra.mxu0 %v3934
    %3936 = vmatprep.subr.mxu0 0.0
    %v3937 = vand.u32 %v3208, 4294901760
    %3938 = vmatpush1.msra.mxu0 %v3937
    %3939 = vmatprep.subr.mxu0 0.0
    %v3940 = vand.u32 %v3209, 4294901760
    %3941 = vmatpush1.msra.mxu0 %v3940
    %3942 = vmatprep.subr.mxu0 0.0
    %v3943 = vand.u32 %v3210, 4294901760
    %3944 = vmatpush1.msra.mxu0 %v3943
    %3945 = vmatprep.subr.mxu0 0.0
    %v3946 = vand.u32 %v3211, 4294901760
    %3947 = vmatpush1.msra.mxu0 %v3946
    %3948 = vmatprep.subr.mxu0 0.0
    %v3949 = vand.u32 %v3212, 4294901760
    %3950 = vmatpush1.msra.mxu0 %v3949
    %3951 = vmatprep.subr.mxu0 0.0
    %v3952 = vand.u32 %v3213, 4294901760
    %3953 = vmatpush1.msra.mxu0 %v3952
    %3954 = vmatprep.subr.mxu0 0.0
    %v3955 = vand.u32 %v3214, 4294901760
    %3956 = vmatpush1.msra.mxu0 %v3955
    %3957 = vmatprep.subr.mxu0 0.0
    %v3958 = vand.u32 %v3215, 4294901760
    %3959 = vmatpush1.msra.mxu0 %v3958
    %3960 = vmatprep.subr.mxu0 0.0
    %v3961 = vand.u32 %v3216, 4294901760
    %3962 = vmatpush1.msra.mxu0 %v3961
    %3963 = vmatprep.subr.mxu0 0.0
    %3964 = vmatpush1.msra.mxu0 0.0
    %3965 = vmatprep.subr.mxu0 0.0
    %3966 = vmatpush1.msra.mxu0 0.0
    %3967 = vmatprep.subr.mxu0 0.0
    %3968 = vmatpush1.msra.mxu0 0.0
    %3969 = vmatprep.subr.mxu0 0.0
    %3970 = vmatpush1.msra.mxu0 0.0
    %3971 = vmatprep.subr.mxu0 0.0
    %3972 = vmatpush1.msra.mxu0 0.0
    %3973 = vmatprep.subr.mxu0 0.0
    %3974 = vmatpush1.msra.mxu0 0.0
    %3975 = vmatprep.subr.mxu0 0.0
    %3976 = vmatpush1.msra.mxu0 0.0
    %3977 = vmatprep.subr.mxu0 0.0
    %3978 = vmatpush1.msra.mxu0 0.0
    %3979 = vmatprep.subr.mxu0 0.0
    %3980 = vmatpush1.msra.mxu0 0.0
    %3981 = vmatprep.subr.mxu0 0.0
    %3982 = vmatpush1.msra.mxu0 0.0
    %3983 = vmatprep.subr.mxu0 0.0
    %3984 = vmatpush1.msra.mxu0 0.0
    %3985 = vmatprep.subr.mxu0 0.0
    %3986 = vmatpush1.msra.mxu0 0.0
    %3987 = vmatprep.subr.mxu0 0.0
    %3988 = vmatpush1.msra.mxu0 0.0
    %3989 = vmatprep.subr.mxu0 0.0
    %3990 = vmatpush1.msra.mxu0 0.0
    %3991 = vmatprep.subr.mxu0 0.0
    %3992 = vmatpush1.msra.mxu0 0.0
    %3993 = vmatprep.subr.mxu0 0.0
    %3994 = vmatpush1.msra.mxu0 0.0
    %3995 = vmatprep.mubr.f32.mxu0 0.0
    %v3996 = vand.u32 %v3185, 4294901760
    %v3997 = vsub.f32 %v3185, %v3996
    %v3998 = vand.u32 %v3997, 4294901760
    %3999 = vmatmul.mubr.f32.gmra.mrb[0].mxu0 %v3998
    %v4000 = vpop.f32.mrb[0].mxu0
    %v4001 = vadd.f32 %v3807, %v4000
    %v4002 = vpop.f32.mrb[0].mxu0
    %4003 = vmatprep.mubr.f32.mxu0 0.0
    %v4004 = vand.u32 %v3186, 4294901760
    %v4005 = vsub.f32 %v3186, %v4004
    %v4006 = vand.u32 %v4005, 4294901760
    %4007 = vmatmul.mubr.f32.gmra.mrb[0].mxu0 %v4006
    %v4008 = vpop.f32.mrb[0].mxu0
    %v4009 = vadd.f32 %v3814, %v4008
    %v4010 = vpop.f32.mrb[0].mxu0
    %4011 = vmatprep.mubr.f32.mxu0 0.0
    %v4012 = vand.u32 %v3187, 4294901760
    %v4013 = vsub.f32 %v3187, %v4012
    %v4014 = vand.u32 %v4013, 4294901760
    %4015 = vmatmul.mubr.f32.gmra.mrb[0].mxu0 %v4014
    %v4016 = vpop.f32.mrb[0].mxu0
    %v4017 = vadd.f32 %v3821, %v4016
    %v4018 = vpop.f32.mrb[0].mxu0
    %4019 = vmatprep.mubr.f32.mxu0 0.0
    %v4020 = vand.u32 %v3188, 4294901760
    %v4021 = vsub.f32 %v3188, %v4020
    %v4022 = vand.u32 %v4021, 4294901760
    %4023 = vmatmul.mubr.f32.gmra.mrb[0].mxu0 %v4022
    %v4024 = vpop.f32.mrb[0].mxu0
    %v4025 = vadd.f32 %v3828, %v4024
    %v4026 = vpop.f32.mrb[0].mxu0
    %4027 = vmatprep.mubr.f32.mxu0 0.0
    %v4028 = vand.u32 %v3189, 4294901760
    %v4029 = vsub.f32 %v3189, %v4028
    %v4030 = vand.u32 %v4029, 4294901760
    %4031 = vmatmul.mubr.f32.gmra.mrb[0].mxu0 %v4030
    %v4032 = vpop.f32.mrb[0].mxu0
    %v4033 = vadd.f32 %v3835, %v4032
    %v4034 = vpop.f32.mrb[0].mxu0
    %4035 = vmatprep.mubr.f32.mxu0 0.0
    %v4036 = vand.u32 %v3190, 4294901760
    %v4037 = vsub.f32 %v3190, %v4036
    %v4038 = vand.u32 %v4037, 4294901760
    %4039 = vmatmul.mubr.f32.gmra.mrb[0].mxu0 %v4038
    %v4040 = vpop.f32.mrb[0].mxu0
    %v4041 = vadd.f32 %v3842, %v4040
    %v4042 = vpop.f32.mrb[0].mxu0
    %4043 = vmatprep.mubr.f32.mxu0 0.0
    %v4044 = vand.u32 %v3191, 4294901760
    %v4045 = vsub.f32 %v3191, %v4044
    %v4046 = vand.u32 %v4045, 4294901760
    %4047 = vmatmul.mubr.f32.gmra.mrb[0].mxu0 %v4046
    %v4048 = vpop.f32.mrb[0].mxu0
    %v4049 = vadd.f32 %v3849, %v4048
    %v4050 = vpop.f32.mrb[0].mxu0
    %4051 = vmatprep.mubr.f32.mxu0 0.0
    %v4052 = vand.u32 %v3192, 4294901760
    %v4053 = vsub.f32 %v3192, %v4052
    %v4054 = vand.u32 %v4053, 4294901760
    %4055 = vmatmul.mubr.f32.gmra.mrb[0].mxu0 %v4054
    %v4056 = vpop.f32.mrb[0].mxu0
    %v4057 = vadd.f32 %v3856, %v4056
    %v4058 = vpop.f32.mrb[0].mxu0
    %4059 = vmatprep.mubr.f32.mxu0 0.0
    %v4060 = vand.u32 %v3193, 4294901760
    %v4061 = vsub.f32 %v3193, %v4060
    %v4062 = vand.u32 %v4061, 4294901760
    %4063 = vmatmul.mubr.f32.gmra.mrb[0].mxu0 %v4062
    %v4064 = vpop.f32.mrb[0].mxu0
    %v4065 = vadd.f32 %v3863, %v4064
    %v4066 = vpop.f32.mrb[0].mxu0
    %4067 = vmatprep.mubr.f32.mxu0 0.0
    %v4068 = vand.u32 %v3194, 4294901760
    %v4069 = vsub.f32 %v3194, %v4068
    %v4070 = vand.u32 %v4069, 4294901760
    %4071 = vmatmul.mubr.f32.gmra.mrb[0].mxu0 %v4070
    %v4072 = vpop.f32.mrb[0].mxu0
    %v4073 = vadd.f32 %v3870, %v4072
    %v4074 = vpop.f32.mrb[0].mxu0
    %4075 = vmatprep.mubr.f32.mxu0 0.0
    %v4076 = vand.u32 %v3195, 4294901760
    %v4077 = vsub.f32 %v3195, %v4076
    %v4078 = vand.u32 %v4077, 4294901760
    %4079 = vmatmul.mubr.f32.gmra.mrb[0].mxu0 %v4078
    %v4080 = vpop.f32.mrb[0].mxu0
    %v4081 = vadd.f32 %v3877, %v4080
    %v4082 = vpop.f32.mrb[0].mxu0
    %4083 = vmatprep.mubr.f32.mxu0 0.0
    %v4084 = vand.u32 %v3196, 4294901760
    %v4085 = vsub.f32 %v3196, %v4084
    %v4086 = vand.u32 %v4085, 4294901760
    %4087 = vmatmul.mubr.f32.gmra.mrb[0].mxu0 %v4086
    %v4088 = vpop.f32.mrb[0].mxu0
    %v4089 = vadd.f32 %v3884, %v4088
    %v4090 = vpop.f32.mrb[0].mxu0
    %4091 = vmatprep.mubr.f32.mxu0 0.0
    %v4092 = vand.u32 %v3197, 4294901760
    %v4093 = vsub.f32 %v3197, %v4092
    %v4094 = vand.u32 %v4093, 4294901760
    %4095 = vmatmul.mubr.f32.gmra.mrb[0].mxu0 %v4094
    %v4096 = vpop.f32.mrb[0].mxu0
    %v4097 = vadd.f32 %v3891, %v4096
    %v4098 = vpop.f32.mrb[0].mxu0
    %4099 = vmatprep.mubr.f32.mxu0 0.0
    %v4100 = vand.u32 %v3198, 4294901760
    %v4101 = vsub.f32 %v3198, %v4100
    %v4102 = vand.u32 %v4101, 4294901760
    %4103 = vmatmul.mubr.f32.gmra.mrb[0].mxu0 %v4102
    %v4104 = vpop.f32.mrb[0].mxu0
    %v4105 = vadd.f32 %v3898, %v4104
    %v4106 = vpop.f32.mrb[0].mxu0
    %4107 = vmatprep.mubr.f32.mxu0 0.0
    %v4108 = vand.u32 %v3199, 4294901760
    %v4109 = vsub.f32 %v3199, %v4108
    %v4110 = vand.u32 %v4109, 4294901760
    %4111 = vmatmul.mubr.f32.gmra.mrb[0].mxu0 %v4110
    %v4112 = vpop.f32.mrb[0].mxu0
    %v4113 = vadd.f32 %v3905, %v4112
    %v4114 = vpop.f32.mrb[0].mxu0
    %4115 = vmatprep.mubr.f32.mxu0 0.0
    %v4116 = vand.u32 %v3200, 4294901760
    %v4117 = vsub.f32 %v3200, %v4116
    %v4118 = vand.u32 %v4117, 4294901760
    %4119 = vmatmul.mubr.f32.gmra.mrb[0].mxu0 %v4118
    %v4120 = vpop.f32.mrb[0].mxu0
    %v4121 = vadd.f32 %v3912, %v4120
    %v4122 = vpop.f32.mrb[0].mxu0
    %4123 = vdwg.mxu0
    %4124 = vmatprep.subr.mxu0 0.0
    %v4125 = vand.u32 %v3201, 4294901760
    %v4126 = vsub.f32 %v3201, %v4125
    %v4127 = vand.u32 %v4126, 4294901760
    %4128 = vmatpush1.msra.mxu0 %v4127
    %4129 = vmatprep.subr.mxu0 0.0
    %v4130 = vand.u32 %v3202, 4294901760
    %v4131 = vsub.f32 %v3202, %v4130
    %v4132 = vand.u32 %v4131, 4294901760
    %4133 = vmatpush1.msra.mxu0 %v4132
    %4134 = vmatprep.subr.mxu0 0.0
    %v4135 = vand.u32 %v3203, 4294901760
    %v4136 = vsub.f32 %v3203, %v4135
    %v4137 = vand.u32 %v4136, 4294901760
    %4138 = vmatpush1.msra.mxu0 %v4137
    %4139 = vmatprep.subr.mxu0 0.0
    %v4140 = vand.u32 %v3204, 4294901760
    %v4141 = vsub.f32 %v3204, %v4140
    %v4142 = vand.u32 %v4141, 4294901760
    %4143 = vmatpush1.msra.mxu0 %v4142
    %4144 = vmatprep.subr.mxu0 0.0
    %v4145 = vand.u32 %v3205, 4294901760
    %v4146 = vsub.f32 %v3205, %v4145
    %v4147 = vand.u32 %v4146, 4294901760
    %4148 = vmatpush1.msra.mxu0 %v4147
    %4149 = vmatprep.subr.mxu0 0.0
    %v4150 = vand.u32 %v3206, 4294901760
    %v4151 = vsub.f32 %v3206, %v4150
    %v4152 = vand.u32 %v4151, 4294901760
    %4153 = vmatpush1.msra.mxu0 %v4152
    %4154 = vmatprep.subr.mxu0 0.0
    %v4155 = vand.u32 %v3207, 4294901760
    %v4156 = vsub.f32 %v3207, %v4155
    %v4157 = vand.u32 %v4156, 4294901760
    %4158 = vmatpush1.msra.mxu0 %v4157
    %4159 = vmatprep.subr.mxu0 0.0
    %v4160 = vand.u32 %v3208, 4294901760
    %v4161 = vsub.f32 %v3208, %v4160
    %v4162 = vand.u32 %v4161, 4294901760
    %4163 = vmatpush1.msra.mxu0 %v4162
    %4164 = vmatprep.subr.mxu0 0.0
    %v4165 = vand.u32 %v3209, 4294901760
    %v4166 = vsub.f32 %v3209, %v4165
    %v4167 = vand.u32 %v4166, 4294901760
    %4168 = vmatpush1.msra.mxu0 %v4167
    %4169 = vmatprep.subr.mxu0 0.0
    %v4170 = vand.u32 %v3210, 4294901760
    %v4171 = vsub.f32 %v3210, %v4170
    %v4172 = vand.u32 %v4171, 4294901760
    %4173 = vmatpush1.msra.mxu0 %v4172
    %4174 = vmatprep.subr.mxu0 0.0
    %v4175 = vand.u32 %v3211, 4294901760
    %v4176 = vsub.f32 %v3211, %v4175
    %v4177 = vand.u32 %v4176, 4294901760
    %4178 = vmatpush1.msra.mxu0 %v4177
    %4179 = vmatprep.subr.mxu0 0.0
    %v4180 = vand.u32 %v3212, 4294901760
    %v4181 = vsub.f32 %v3212, %v4180
    %v4182 = vand.u32 %v4181, 4294901760
    %4183 = vmatpush1.msra.mxu0 %v4182
    %4184 = vmatprep.subr.mxu0 0.0
    %v4185 = vand.u32 %v3213, 4294901760
    %v4186 = vsub.f32 %v3213, %v4185
    %v4187 = vand.u32 %v4186, 4294901760
    %4188 = vmatpush1.msra.mxu0 %v4187
    %4189 = vmatprep.subr.mxu0 0.0
    %v4190 = vand.u32 %v3214, 4294901760
    %v4191 = vsub.f32 %v3214, %v4190
    %v4192 = vand.u32 %v4191, 4294901760
    %4193 = vmatpush1.msra.mxu0 %v4192
    %4194 = vmatprep.subr.mxu0 0.0
    %v4195 = vand.u32 %v3215, 4294901760
    %v4196 = vsub.f32 %v3215, %v4195
    %v4197 = vand.u32 %v4196, 4294901760
    %4198 = vmatpush1.msra.mxu0 %v4197
    %4199 = vmatprep.subr.mxu0 0.0
    %v4200 = vand.u32 %v3216, 4294901760
    %v4201 = vsub.f32 %v3216, %v4200
    %v4202 = vand.u32 %v4201, 4294901760
    %4203 = vmatpush1.msra.mxu0 %v4202
    %4204 = vmatprep.subr.mxu0 0.0
    %4205 = vmatpush1.msra.mxu0 0.0
    %4206 = vmatprep.subr.mxu0 0.0
    %4207 = vmatpush1.msra.mxu0 0.0
    %4208 = vmatprep.subr.mxu0 0.0
    %4209 = vmatpush1.msra.mxu0 0.0
    %4210 = vmatprep.subr.mxu0 0.0
    %4211 = vmatpush1.msra.mxu0 0.0
    %4212 = vmatprep.subr.mxu0 0.0
    %4213 = vmatpush1.msra.mxu0 0.0
    %4214 = vmatprep.subr.mxu0 0.0
    %4215 = vmatpush1.msra.mxu0 0.0
    %4216 = vmatprep.subr.mxu0 0.0
    %4217 = vmatpush1.msra.mxu0 0.0
    %4218 = vmatprep.subr.mxu0 0.0
    %4219 = vmatpush1.msra.mxu0 0.0
    %4220 = vmatprep.subr.mxu0 0.0
    %4221 = vmatpush1.msra.mxu0 0.0
    %4222 = vmatprep.subr.mxu0 0.0
    %4223 = vmatpush1.msra.mxu0 0.0
    %4224 = vmatprep.subr.mxu0 0.0
    %4225 = vmatpush1.msra.mxu0 0.0
    %4226 = vmatprep.subr.mxu0 0.0
    %4227 = vmatpush1.msra.mxu0 0.0
    %4228 = vmatprep.subr.mxu0 0.0
    %4229 = vmatpush1.msra.mxu0 0.0
    %4230 = vmatprep.subr.mxu0 0.0
    %4231 = vmatpush1.msra.mxu0 0.0
    %4232 = vmatprep.subr.mxu0 0.0
    %4233 = vmatpush1.msra.mxu0 0.0
    %4234 = vmatprep.subr.mxu0 0.0
    %4235 = vmatpush1.msra.mxu0 0.0
    %4236 = vmatprep.mubr.f32.mxu0 0.0
    %v4237 = vand.u32 %v3185, 4294901760
    %4238 = vmatmul.mubr.f32.gmra.mrb[0].mxu0 %v4237
    %v4239 = vpop.f32.mrb[0].mxu0
    %v4240 = vadd.f32 %v4001, %v4239
    %v4241 = vpop.f32.mrb[0].mxu0
    %4242 = vmatprep.mubr.f32.mxu0 0.0
    %v4243 = vand.u32 %v3186, 4294901760
    %4244 = vmatmul.mubr.f32.gmra.mrb[0].mxu0 %v4243
    %v4245 = vpop.f32.mrb[0].mxu0
    %v4246 = vadd.f32 %v4009, %v4245
    %v4247 = vpop.f32.mrb[0].mxu0
    %4248 = vmatprep.mubr.f32.mxu0 0.0
    %v4249 = vand.u32 %v3187, 4294901760
    %4250 = vmatmul.mubr.f32.gmra.mrb[0].mxu0 %v4249
    %v4251 = vpop.f32.mrb[0].mxu0
    %v4252 = vadd.f32 %v4017, %v4251
    %v4253 = vpop.f32.mrb[0].mxu0
    %4254 = vmatprep.mubr.f32.mxu0 0.0
    %v4255 = vand.u32 %v3188, 4294901760
    %4256 = vmatmul.mubr.f32.gmra.mrb[0].mxu0 %v4255
    %v4257 = vpop.f32.mrb[0].mxu0
    %v4258 = vadd.f32 %v4025, %v4257
    %v4259 = vpop.f32.mrb[0].mxu0
    %4260 = vmatprep.mubr.f32.mxu0 0.0
    %v4261 = vand.u32 %v3189, 4294901760
    %4262 = vmatmul.mubr.f32.gmra.mrb[0].mxu0 %v4261
    %v4263 = vpop.f32.mrb[0].mxu0
    %v4264 = vadd.f32 %v4033, %v4263
    %v4265 = vpop.f32.mrb[0].mxu0
    %4266 = vmatprep.mubr.f32.mxu0 0.0
    %v4267 = vand.u32 %v3190, 4294901760
    %4268 = vmatmul.mubr.f32.gmra.mrb[0].mxu0 %v4267
    %v4269 = vpop.f32.mrb[0].mxu0
    %v4270 = vadd.f32 %v4041, %v4269
    %v4271 = vpop.f32.mrb[0].mxu0
    %4272 = vmatprep.mubr.f32.mxu0 0.0
    %v4273 = vand.u32 %v3191, 4294901760
    %4274 = vmatmul.mubr.f32.gmra.mrb[0].mxu0 %v4273
    %v4275 = vpop.f32.mrb[0].mxu0
    %v4276 = vadd.f32 %v4049, %v4275
    %v4277 = vpop.f32.mrb[0].mxu0
    %4278 = vmatprep.mubr.f32.mxu0 0.0
    %v4279 = vand.u32 %v3192, 4294901760
    %4280 = vmatmul.mubr.f32.gmra.mrb[0].mxu0 %v4279
    %v4281 = vpop.f32.mrb[0].mxu0
    %v4282 = vadd.f32 %v4057, %v4281
    %v4283 = vpop.f32.mrb[0].mxu0
    %4284 = vmatprep.mubr.f32.mxu0 0.0
    %v4285 = vand.u32 %v3193, 4294901760
    %4286 = vmatmul.mubr.f32.gmra.mrb[0].mxu0 %v4285
    %v4287 = vpop.f32.mrb[0].mxu0
    %v4288 = vadd.f32 %v4065, %v4287
    %v4289 = vpop.f32.mrb[0].mxu0
    %4290 = vmatprep.mubr.f32.mxu0 0.0
    %v4291 = vand.u32 %v3194, 4294901760
    %4292 = vmatmul.mubr.f32.gmra.mrb[0].mxu0 %v4291
    %v4293 = vpop.f32.mrb[0].mxu0
    %v4294 = vadd.f32 %v4073, %v4293
    %v4295 = vpop.f32.mrb[0].mxu0
    %4296 = vmatprep.mubr.f32.mxu0 0.0
    %v4297 = vand.u32 %v3195, 4294901760
    %4298 = vmatmul.mubr.f32.gmra.mrb[0].mxu0 %v4297
    %v4299 = vpop.f32.mrb[0].mxu0
    %v4300 = vadd.f32 %v4081, %v4299
    %v4301 = vpop.f32.mrb[0].mxu0
    %4302 = vmatprep.mubr.f32.mxu0 0.0
    %v4303 = vand.u32 %v3196, 4294901760
    %4304 = vmatmul.mubr.f32.gmra.mrb[0].mxu0 %v4303
    %v4305 = vpop.f32.mrb[0].mxu0
    %v4306 = vadd.f32 %v4089, %v4305
    %v4307 = vpop.f32.mrb[0].mxu0
    %4308 = vmatprep.mubr.f32.mxu0 0.0
    %v4309 = vand.u32 %v3197, 4294901760
    %4310 = vmatmul.mubr.f32.gmra.mrb[0].mxu0 %v4309
    %v4311 = vpop.f32.mrb[0].mxu0
    %v4312 = vadd.f32 %v4097, %v4311
    %v4313 = vpop.f32.mrb[0].mxu0
    %4314 = vmatprep.mubr.f32.mxu0 0.0
    %v4315 = vand.u32 %v3198, 4294901760
    %4316 = vmatmul.mubr.f32.gmra.mrb[0].mxu0 %v4315
    %v4317 = vpop.f32.mrb[0].mxu0
    %v4318 = vadd.f32 %v4105, %v4317
    %v4319 = vpop.f32.mrb[0].mxu0
    %4320 = vmatprep.mubr.f32.mxu0 0.0
    %v4321 = vand.u32 %v3199, 4294901760
    %4322 = vmatmul.mubr.f32.gmra.mrb[0].mxu0 %v4321
    %v4323 = vpop.f32.mrb[0].mxu0
    %v4324 = vadd.f32 %v4113, %v4323
    %v4325 = vpop.f32.mrb[0].mxu0
    %4326 = vmatprep.mubr.f32.mxu0 0.0
    %v4327 = vand.u32 %v3200, 4294901760
    %4328 = vmatmul.mubr.f32.gmra.mrb[0].mxu0 %v4327
    %v4329 = vpop.f32.mrb[0].mxu0
    %v4330 = vadd.f32 %v4121, %v4329
    %v4331 = vpop.f32.mrb[0].mxu0
    %4332 = vdwg.mxu0
    %4333 = vmatprep.subr.mxu0 0.0
    %v4334 = vand.u32 %v3201, 4294901760
    %4335 = vmatpush1.msra.mxu0 %v4334
    %4336 = vmatprep.subr.mxu0 0.0
    %v4337 = vand.u32 %v3202, 4294901760
    %4338 = vmatpush1.msra.mxu0 %v4337
    %4339 = vmatprep.subr.mxu0 0.0
    %v4340 = vand.u32 %v3203, 4294901760
    %4341 = vmatpush1.msra.mxu0 %v4340
    %4342 = vmatprep.subr.mxu0 0.0
    %v4343 = vand.u32 %v3204, 4294901760
    %4344 = vmatpush1.msra.mxu0 %v4343
    %4345 = vmatprep.subr.mxu0 0.0
    %v4346 = vand.u32 %v3205, 4294901760
    %4347 = vmatpush1.msra.mxu0 %v4346
    %4348 = vmatprep.subr.mxu0 0.0
    %v4349 = vand.u32 %v3206, 4294901760
    %4350 = vmatpush1.msra.mxu0 %v4349
    %4351 = vmatprep.subr.mxu0 0.0
    %v4352 = vand.u32 %v3207, 4294901760
    %4353 = vmatpush1.msra.mxu0 %v4352
    %4354 = vmatprep.subr.mxu0 0.0
    %v4355 = vand.u32 %v3208, 4294901760
    %4356 = vmatpush1.msra.mxu0 %v4355
    %4357 = vmatprep.subr.mxu0 0.0
    %v4358 = vand.u32 %v3209, 4294901760
    %4359 = vmatpush1.msra.mxu0 %v4358
    %4360 = vmatprep.subr.mxu0 0.0
    %v4361 = vand.u32 %v3210, 4294901760
    %4362 = vmatpush1.msra.mxu0 %v4361
    %4363 = vmatprep.subr.mxu0 0.0
    %v4364 = vand.u32 %v3211, 4294901760
    %4365 = vmatpush1.msra.mxu0 %v4364
    %4366 = vmatprep.subr.mxu0 0.0
    %v4367 = vand.u32 %v3212, 4294901760
    %4368 = vmatpush1.msra.mxu0 %v4367
    %4369 = vmatprep.subr.mxu0 0.0
    %v4370 = vand.u32 %v3213, 4294901760
    %4371 = vmatpush1.msra.mxu0 %v4370
    %4372 = vmatprep.subr.mxu0 0.0
    %v4373 = vand.u32 %v3214, 4294901760
    %4374 = vmatpush1.msra.mxu0 %v4373
    %4375 = vmatprep.subr.mxu0 0.0
    %v4376 = vand.u32 %v3215, 4294901760
    %4377 = vmatpush1.msra.mxu0 %v4376
    %4378 = vmatprep.subr.mxu0 0.0
    %v4379 = vand.u32 %v3216, 4294901760
    %4380 = vmatpush1.msra.mxu0 %v4379
    %4381 = vmatprep.subr.mxu0 0.0
    %4382 = vmatpush1.msra.mxu0 0.0
    %4383 = vmatprep.subr.mxu0 0.0
    %4384 = vmatpush1.msra.mxu0 0.0
    %4385 = vmatprep.subr.mxu0 0.0
    %4386 = vmatpush1.msra.mxu0 0.0
    %4387 = vmatprep.subr.mxu0 0.0
    %4388 = vmatpush1.msra.mxu0 0.0
    %4389 = vmatprep.subr.mxu0 0.0
    %4390 = vmatpush1.msra.mxu0 0.0
    %4391 = vmatprep.subr.mxu0 0.0
    %4392 = vmatpush1.msra.mxu0 0.0
    %4393 = vmatprep.subr.mxu0 0.0
    %4394 = vmatpush1.msra.mxu0 0.0
    %4395 = vmatprep.subr.mxu0 0.0
    %4396 = vmatpush1.msra.mxu0 0.0
    %4397 = vmatprep.subr.mxu0 0.0
    %4398 = vmatpush1.msra.mxu0 0.0
    %4399 = vmatprep.subr.mxu0 0.0
    %4400 = vmatpush1.msra.mxu0 0.0
    %4401 = vmatprep.subr.mxu0 0.0
    %4402 = vmatpush1.msra.mxu0 0.0
    %4403 = vmatprep.subr.mxu0 0.0
    %4404 = vmatpush1.msra.mxu0 0.0
    %4405 = vmatprep.subr.mxu0 0.0
    %4406 = vmatpush1.msra.mxu0 0.0
    %4407 = vmatprep.subr.mxu0 0.0
    %4408 = vmatpush1.msra.mxu0 0.0
    %4409 = vmatprep.subr.mxu0 0.0
    %4410 = vmatpush1.msra.mxu0 0.0
    %4411 = vmatprep.subr.mxu0 0.0
    %4412 = vmatpush1.msra.mxu0 0.0
    %4413 = vmatprep.mubr.f32.mxu0 0.0
    %v4414 = vand.u32 %v3185, 4294901760
    %4415 = vmatmul.mubr.f32.gmra.mrb[0].mxu0 %v4414
    %v4416 = vpop.f32.mrb[0].mxu0
    %v4417 = vadd.f32 %v4240, %v4416
    %v4418 = vpop.f32.mrb[0].mxu0
    %4419 = vmatprep.mubr.f32.mxu0 0.0
    %v4420 = vand.u32 %v3186, 4294901760
    %4421 = vmatmul.mubr.f32.gmra.mrb[0].mxu0 %v4420
    %v4422 = vpop.f32.mrb[0].mxu0
    %v4423 = vadd.f32 %v4246, %v4422
    %v4424 = vpop.f32.mrb[0].mxu0
    %4425 = vmatprep.mubr.f32.mxu0 0.0
    %v4426 = vand.u32 %v3187, 4294901760
    %4427 = vmatmul.mubr.f32.gmra.mrb[0].mxu0 %v4426
    %v4428 = vpop.f32.mrb[0].mxu0
    %v4429 = vadd.f32 %v4252, %v4428
    %v4430 = vpop.f32.mrb[0].mxu0
    %4431 = vmatprep.mubr.f32.mxu0 0.0
    %v4432 = vand.u32 %v3188, 4294901760
    %4433 = vmatmul.mubr.f32.gmra.mrb[0].mxu0 %v4432
    %v4434 = vpop.f32.mrb[0].mxu0
    %v4435 = vadd.f32 %v4258, %v4434
    %v4436 = vpop.f32.mrb[0].mxu0
    %4437 = vmatprep.mubr.f32.mxu0 0.0
    %v4438 = vand.u32 %v3189, 4294901760
    %4439 = vmatmul.mubr.f32.gmra.mrb[0].mxu0 %v4438
    %v4440 = vpop.f32.mrb[0].mxu0
    %v4441 = vadd.f32 %v4264, %v4440
    %v4442 = vpop.f32.mrb[0].mxu0
    %4443 = vmatprep.mubr.f32.mxu0 0.0
    %v4444 = vand.u32 %v3190, 4294901760
    %4445 = vmatmul.mubr.f32.gmra.mrb[0].mxu0 %v4444
    %v4446 = vpop.f32.mrb[0].mxu0
    %v4447 = vadd.f32 %v4270, %v4446
    %v4448 = vpop.f32.mrb[0].mxu0
    %4449 = vmatprep.mubr.f32.mxu0 0.0
    %v4450 = vand.u32 %v3191, 4294901760
    %4451 = vmatmul.mubr.f32.gmra.mrb[0].mxu0 %v4450
    %v4452 = vpop.f32.mrb[0].mxu0
    %v4453 = vadd.f32 %v4276, %v4452
    %v4454 = vpop.f32.mrb[0].mxu0
    %4455 = vmatprep.mubr.f32.mxu0 0.0
    %v4456 = vand.u32 %v3192, 4294901760
    %4457 = vmatmul.mubr.f32.gmra.mrb[0].mxu0 %v4456
    %v4458 = vpop.f32.mrb[0].mxu0
    %v4459 = vadd.f32 %v4282, %v4458
    %v4460 = vpop.f32.mrb[0].mxu0
    %4461 = vmatprep.mubr.f32.mxu0 0.0
    %v4462 = vand.u32 %v3193, 4294901760
    %4463 = vmatmul.mubr.f32.gmra.mrb[0].mxu0 %v4462
    %v4464 = vpop.f32.mrb[0].mxu0
    %v4465 = vadd.f32 %v4288, %v4464
    %v4466 = vpop.f32.mrb[0].mxu0
    %4467 = vmatprep.mubr.f32.mxu0 0.0
    %v4468 = vand.u32 %v3194, 4294901760
    %4469 = vmatmul.mubr.f32.gmra.mrb[0].mxu0 %v4468
    %v4470 = vpop.f32.mrb[0].mxu0
    %v4471 = vadd.f32 %v4294, %v4470
    %v4472 = vpop.f32.mrb[0].mxu0
    %4473 = vmatprep.mubr.f32.mxu0 0.0
    %v4474 = vand.u32 %v3195, 4294901760
    %4475 = vmatmul.mubr.f32.gmra.mrb[0].mxu0 %v4474
    %v4476 = vpop.f32.mrb[0].mxu0
    %v4477 = vadd.f32 %v4300, %v4476
    %v4478 = vpop.f32.mrb[0].mxu0
    %4479 = vmatprep.mubr.f32.mxu0 0.0
    %v4480 = vand.u32 %v3196, 4294901760
    %4481 = vmatmul.mubr.f32.gmra.mrb[0].mxu0 %v4480
    %v4482 = vpop.f32.mrb[0].mxu0
    %v4483 = vadd.f32 %v4306, %v4482
    %v4484 = vpop.f32.mrb[0].mxu0
    %4485 = vmatprep.mubr.f32.mxu0 0.0
    %v4486 = vand.u32 %v3197, 4294901760
    %4487 = vmatmul.mubr.f32.gmra.mrb[0].mxu0 %v4486
    %v4488 = vpop.f32.mrb[0].mxu0
    %v4489 = vadd.f32 %v4312, %v4488
    %v4490 = vpop.f32.mrb[0].mxu0
    %4491 = vmatprep.mubr.f32.mxu0 0.0
    %v4492 = vand.u32 %v3198, 4294901760
    %4493 = vmatmul.mubr.f32.gmra.mrb[0].mxu0 %v4492
    %v4494 = vpop.f32.mrb[0].mxu0
    %v4495 = vadd.f32 %v4318, %v4494
    %v4496 = vpop.f32.mrb[0].mxu0
    %4497 = vmatprep.mubr.f32.mxu0 0.0
    %v4498 = vand.u32 %v3199, 4294901760
    %4499 = vmatmul.mubr.f32.gmra.mrb[0].mxu0 %v4498
    %v4500 = vpop.f32.mrb[0].mxu0
    %v4501 = vadd.f32 %v4324, %v4500
    %v4502 = vpop.f32.mrb[0].mxu0
    %4503 = vmatprep.mubr.f32.mxu0 0.0
    %v4504 = vand.u32 %v3200, 4294901760
    %4505 = vmatmul.mubr.f32.gmra.mrb[0].mxu0 %v4504
    %v4506 = vpop.f32.mrb[0].mxu0
    %v4507 = vadd.f32 %v4330, %v4506
    %v4508 = vpop.f32.mrb[0].mxu0
    %4509 = vdwg.mxu0
    %v4510 = vmax.f32 %v4417, 0.0
    %v4511 = vmax.f32 %v4423, 0.0
    %v4512 = vmax.f32 %v4429, 0.0
    %v4513 = vmax.f32 %v4435, 0.0
    %v4514 = vmax.f32 %v4441, 0.0
    %v4515 = vmax.f32 %v4447, 0.0
    %v4516 = vmax.f32 %v4453, 0.0
    %v4517 = vmax.f32 %v4459, 0.0
    %v4518 = vmax.f32 %v4465, 0.0
    %v4519 = vmax.f32 %v4471, 0.0
    %v4520 = vmax.f32 %v4477, 0.0
    %v4521 = vmax.f32 %v4483, 0.0
    %v4522 = vmax.f32 %v4489, 0.0
    %v4523 = vmax.f32 %v4495, 0.0
    %v4524 = vmax.f32 %v4501, 0.0
    %v4525 = vmax.f32 %v4507, 0.0
    %v4526 = vld [vmem:[%s7] sm:$0x1]
    %v4528 = vlaneseq
    %v4529 = vshrl.u32 %v4528, 7
    %v4530 = vsub.s32 0, %v4529
    %v4531 = vrot.slane %v4526, %v4530
    %v4533 = vmul.f32 %v4510, %v4531
    %v4534 = vmul.f32 %v4511, %v4531
    %v4535 = vmul.f32 %v4512, %v4531
    %v4536 = vmul.f32 %v4513, %v4531
    %v4537 = vmul.f32 %v4514, %v4531
    %v4538 = vmul.f32 %v4515, %v4531
    %v4539 = vmul.f32 %v4516, %v4531
    %v4540 = vmul.f32 %v4517, %v4531
    %v4541 = vmul.f32 %v4518, %v4531
    %v4542 = vmul.f32 %v4519, %v4531
    %v4543 = vmul.f32 %v4520, %v4531
    %v4544 = vmul.f32 %v4521, %v4531
    %v4545 = vmul.f32 %v4522, %v4531
    %v4546 = vmul.f32 %v4523, %v4531
    %v4547 = vmul.f32 %v4524, %v4531
    %v4548 = vmul.f32 %v4525, %v4531
    %vm4549 = vcmask 523264
    %v4550 = vsel %vm4549, %v4533, 0.0
    %4551 = vadd.xlane.f32.xlu0 %v4550
    %v4552 = vpop.xlane.xlu0 %4551
    %v4553 = vsel %vm4549, %v4534, 0.0
    %4554 = vadd.xlane.f32.xlu0 %v4553
    %v4555 = vpop.xlane.xlu0 %4554
    %v4556 = vsel %vm4549, %v4535, 0.0
    %4557 = vadd.xlane.f32.xlu0 %v4556
    %v4558 = vpop.xlane.xlu0 %4557
    %v4559 = vsel %vm4549, %v4536, 0.0
    %4560 = vadd.xlane.f32.xlu0 %v4559
    %v4561 = vpop.xlane.xlu0 %4560
    %v4562 = vsel %vm4549, %v4537, 0.0
    %4563 = vadd.xlane.f32.xlu0 %v4562
    %v4564 = vpop.xlane.xlu0 %4563
    %v4565 = vsel %vm4549, %v4538, 0.0
    %4566 = vadd.xlane.f32.xlu0 %v4565
    %v4567 = vpop.xlane.xlu0 %4566
    %v4568 = vsel %vm4549, %v4539, 0.0
    %4569 = vadd.xlane.f32.xlu0 %v4568
    %v4570 = vpop.xlane.xlu0 %4569
    %v4571 = vsel %vm4549, %v4540, 0.0
    %4572 = vadd.xlane.f32.xlu0 %v4571
    %v4573 = vpop.xlane.xlu0 %4572
    %v4574 = vsel %vm4549, %v4541, 0.0
    %4575 = vadd.xlane.f32.xlu0 %v4574
    %v4576 = vpop.xlane.xlu0 %4575
    %v4577 = vsel %vm4549, %v4542, 0.0
    %4578 = vadd.xlane.f32.xlu0 %v4577
    %v4579 = vpop.xlane.xlu0 %4578
    %v4580 = vsel %vm4549, %v4543, 0.0
    %4581 = vadd.xlane.f32.xlu0 %v4580
    %v4582 = vpop.xlane.xlu0 %4581
    %v4583 = vsel %vm4549, %v4544, 0.0
    %4584 = vadd.xlane.f32.xlu0 %v4583
    %v4585 = vpop.xlane.xlu0 %4584
    %v4586 = vsel %vm4549, %v4545, 0.0
    %4587 = vadd.xlane.f32.xlu0 %v4586
    %v4588 = vpop.xlane.xlu0 %4587
    %v4589 = vsel %vm4549, %v4546, 0.0
    %4590 = vadd.xlane.f32.xlu0 %v4589
    %v4591 = vpop.xlane.xlu0 %4590
    %v4592 = vsel %vm4549, %v4547, 0.0
    %4593 = vadd.xlane.f32.xlu0 %v4592
    %v4594 = vpop.xlane.xlu0 %4593
    %v4595 = vsel %vm4549, %v4548, 0.0
    %4596 = vadd.xlane.f32.xlu0 %v4595
    %v4597 = vpop.xlane.xlu0 %4596
    %v4598 = vld [vmem:[#allocation2] sm:$0x1]
    %4600 = vset.pattern.permute.xlu0 0
    %4601 = vperm.xlu0 %4600, %v4598
    %v4602 = vpop.permute.xlu0 %4601
    %v4604 = vlaneseq
    %v4605 = vshrl.u32 %v4604, 7
    %v4606 = vsub.s32 0, %v4605
    %v4607 = vrot.slane %v4602, %v4606
    %v4608 = vadd.f32 %v4552, %v4607
    %v4609 = vadd.f32 %v4555, %v4607
    %v4610 = vadd.f32 %v4558, %v4607
    %v4611 = vadd.f32 %v4561, %v4607
    %v4612 = vadd.f32 %v4564, %v4607
    %v4613 = vadd.f32 %v4567, %v4607
    %v4614 = vadd.f32 %v4570, %v4607
    %v4615 = vadd.f32 %v4573, %v4607
    %v4616 = vadd.f32 %v4576, %v4607
    %v4617 = vadd.f32 %v4579, %v4607
    %v4618 = vadd.f32 %v4582, %v4607
    %v4619 = vadd.f32 %v4585, %v4607
    %v4620 = vadd.f32 %v4588, %v4607
    %v4621 = vadd.f32 %v4591, %v4607
    %v4622 = vadd.f32 %v4594, %v4607
    %v4623 = vadd.f32 %v4597, %v4607
    %v4640 = vlaneseq
    %v4641 = vand.u32 %v4640, 127
    %v4642 = vlaneseq
    %v4643 = vshrl.u32 %v4642, 7
    %v4644 = vsub.s32 %v4641, %v4643
    %v4645 = vrot.slane %v4608, %v4644
    %v4646 = vadd.s32 %v4641, 4294967288
    %v4647 = vlaneseq
    %v4648 = vshrl.u32 %v4647, 7
    %v4649 = vsub.s32 %v4646, %v4648
    %v4650 = vrot.slane %v4609, %v4649
    %vm4651 = vcmask 130112
    %v4652 = vsel %vm4651, %v4650, %v4645
    %v4653 = vadd.s32 %v4641, 4294967280
    %v4654 = vlaneseq
    %v4655 = vshrl.u32 %v4654, 7
    %v4656 = vsub.s32 %v4653, %v4655
    %v4657 = vrot.slane %v4610, %v4656
    %vm4658 = vcmask 195712
    %v4659 = vsel %vm4658, %v4657, %v4652
    %v4660 = vadd.s32 %v4641, 4294967272
    %v4661 = vlaneseq
    %v4662 = vshrl.u32 %v4661, 7
    %v4663 = vsub.s32 %v4660, %v4662
    %v4664 = vrot.slane %v4611, %v4663
    %vm4665 = vcmask 261312
    %v4666 = vsel %vm4665, %v4664, %v4659
    %v4667 = vadd.s32 %v4641, 4294967264
    %v4668 = vlaneseq
    %v4669 = vshrl.u32 %v4668, 7
    %v4670 = vsub.s32 %v4667, %v4669
    %v4671 = vrot.slane %v4612, %v4670
    %vm4672 = vcmask 326912
    %v4673 = vsel %vm4672, %v4671, %v4666
    %v4674 = vadd.s32 %v4641, 4294967256
    %v4675 = vlaneseq
    %v4676 = vshrl.u32 %v4675, 7
    %v4677 = vsub.s32 %v4674, %v4676
    %v4678 = vrot.slane %v4613, %v4677
    %vm4679 = vcmask 392512
    %v4680 = vsel %vm4679, %v4678, %v4673
    %v4681 = vadd.s32 %v4641, 4294967248
    %v4682 = vlaneseq
    %v4683 = vshrl.u32 %v4682, 7
    %v4684 = vsub.s32 %v4681, %v4683
    %v4685 = vrot.slane %v4614, %v4684
    %vm4686 = vcmask 458112
    %v4687 = vsel %vm4686, %v4685, %v4680
    %v4688 = vadd.s32 %v4641, 4294967240
    %v4689 = vlaneseq
    %v4690 = vshrl.u32 %v4689, 7
    %v4691 = vsub.s32 %v4688, %v4690
    %v4692 = vrot.slane %v4615, %v4691
    %vm4693 = vcmask 523712
    %v4694 = vsel %vm4693, %v4692, %v4687
    %v4695 = vadd.s32 %v4641, 4294967232
    %v4696 = vlaneseq
    %v4697 = vshrl.u32 %v4696, 7
    %v4698 = vsub.s32 %v4695, %v4697
    %v4699 = vrot.slane %v4616, %v4698
    %vm4700 = vcmask 589312
    %v4701 = vsel %vm4700, %v4699, %v4694
    %v4702 = vadd.s32 %v4641, 4294967224
    %v4703 = vlaneseq
    %v4704 = vshrl.u32 %v4703, 7
    %v4705 = vsub.s32 %v4702, %v4704
    %v4706 = vrot.slane %v4617, %v4705
    %vm4707 = vcmask 654912
    %v4708 = vsel %vm4707, %v4706, %v4701
    %v4709 = vadd.s32 %v4641, 4294967216
    %v4710 = vlaneseq
    %v4711 = vshrl.u32 %v4710, 7
    %v4712 = vsub.s32 %v4709, %v4711
    %v4713 = vrot.slane %v4618, %v4712
    %vm4714 = vcmask 720512
    %v4715 = vsel %vm4714, %v4713, %v4708
    %v4716 = vadd.s32 %v4641, 4294967208
    %v4717 = vlaneseq
    %v4718 = vshrl.u32 %v4717, 7
    %v4719 = vsub.s32 %v4716, %v4718
    %v4720 = vrot.slane %v4619, %v4719
    %vm4721 = vcmask 786112
    %v4722 = vsel %vm4721, %v4720, %v4715
    %v4723 = vadd.s32 %v4641, 4294967200
    %v4724 = vlaneseq
    %v4725 = vshrl.u32 %v4724, 7
    %v4726 = vsub.s32 %v4723, %v4725
    %v4727 = vrot.slane %v4620, %v4726
    %vm4728 = vcmask 851712
    %v4729 = vsel %vm4728, %v4727, %v4722
    %v4730 = vadd.s32 %v4641, 4294967192
    %v4731 = vlaneseq
    %v4732 = vshrl.u32 %v4731, 7
    %v4733 = vsub.s32 %v4730, %v4732
    %v4734 = vrot.slane %v4621, %v4733
    %vm4735 = vcmask 917312
    %v4736 = vsel %vm4735, %v4734, %v4729
    %v4737 = vadd.s32 %v4641, 4294967184
    %v4738 = vlaneseq
    %v4739 = vshrl.u32 %v4738, 7
    %v4740 = vsub.s32 %v4737, %v4739
    %v4741 = vrot.slane %v4622, %v4740
    %vm4742 = vcmask 982912
    %v4743 = vsel %vm4742, %v4741, %v4736
    %v4744 = vadd.s32 %v4641, 4294967176
    %v4745 = vlaneseq
    %v4746 = vshrl.u32 %v4745, 7
    %v4747 = vsub.s32 %v4744, %v4746
    %v4748 = vrot.slane %v4623, %v4747
    %vm4749 = vcmask 1048512
    %v4750 = vsel %vm4749, %v4748, %v4743
    %4752 = vst [vmem:[#allocation6] sm:$0x1] %v4750
    // Predicated region
    $region42: #{tpu_custom_call.1} parent=1 // pred_check
      _
    $region43: #{tpu_custom_call.1} parent=1 // pred_check_branch
      %4754 = sbr.rel (0) target = $region45
    $region44: #{tpu_custom_call.1} parent=1 // pred_region
      %s4756 = ssub.s32 16, 16
      %4757 = vsyncadd [#allocation5], %s4756
      %s4759 = sshll.u32 [#allocation6], 4
      %s4760 = int_to_ptr.vmem [resolvable:$true] %s4759
      %4762 = dma.vmem_to_hbm [thread:$0]  %s4760, 16, %s9, [#allocation5]
    $region45: #{tpu_custom_call.1} parent=1 // pred_fallthru
      _
    // Predicated region
    $region46: #{tpu_custom_call.1} parent=1 // pred_check
      _
    $region47: #{tpu_custom_call.1} parent=1 // pred_check_branch
      %4764 = sbr.rel (0) target = $region49
    $region48: #{tpu_custom_call.1} parent=1 // pred_region
      %4765 = dma.done [#allocation5], 16
    $region49: #{tpu_custom_call.1} parent=1 // pred_fallthru
      _
    %4766 = vsyncpa [#allocation4], 1
    %4767 = vsyncpa [#allocation5], 1

// kernel: tpu_custom_call.1
$region0: #{tpu_custom_call.1}
  #allocation0 [shape = 'u32[]', space=smem, size = 0x4, offset = 0x4, fixed_abs, tag = 'smem constant byte address 0x4 - core index']
  #allocation1 [shape = 'u32[144,128]{1,0:T(1,128)}', space=vmem, size = 0x12000, scoped, tag = 'internal scratch']
  #allocation2 [shape = 'f32[1,1]{1,0:T(1,128)S(1)}', space=vmem, size = 0x200, scoped, tag = 'scoped memory for tpu_custom_call.1']
  %s0 = inlined_call_operand.vmem [shape: f32[128,32], index: 0, kind: input, shape index: {}]
  %s1 = inlined_call_operand.hbm [shape: f32[32,256], index: 1, kind: input, shape index: {}]
  %s2 = inlined_call_operand.vmem [shape: f32[1,256], index: 2, kind: input, shape index: {}]
  %s3 = inlined_call_operand.vmem [shape: f32[256,128], index: 3, kind: input, shape index: {}]
  %s4 = inlined_call_operand.vmem [shape: f32[1,128], index: 4, kind: input, shape index: {}]
  %s5 = inlined_call_operand.vmem [shape: f32[128,64], index: 5, kind: input, shape index: {}]
  %s6 = inlined_call_operand.vmem [shape: f32[1,64], index: 6, kind: input, shape index: {}]
  %s7 = inlined_call_operand.vmem [shape: f32[1,64], index: 7, kind: input, shape index: {}]
  %s8 = inlined_call_operand.<no memory space> [shape: f32[1,1], index: 8, kind: input, shape index: {}]
  %s9 = inlined_call_operand.vmem [shape: f32[128,1], index: 9, kind: output, shape index: {}]
  %s10 = sld [smem:[#allocation0]]
  $region50: #{tpu_custom_call.1} parent=0
    _
  %s12 = ssub.s32 1, %s10
  %s13 = scalar_select 0, %s12, %s10
  %v14 = vstv %s8
  %15 = vst [vmem:[#allocation2] sm:$0x1] %v14
  $region1: #{tpu_custom_call.1} parent=0
    #allocation3 [shape = 'u8[32768]{0}', space=vmem, size = 0x8000, scoped, tag = 'input window, operand 1, single buffered']
    #allocation4 [shape = 's32[1]{0}', space=sflag, size = 0x4, scoped, tag = 'scoped memory for tpu_custom_call.1']
    %16 = vsyncpa [#allocation4], 0
    // Predicated region
    $region2: #{tpu_custom_call.1} parent=1 // pred_check
      _
    $region3: #{tpu_custom_call.1} parent=1 // pred_check_branch
      %18 = sbr.rel (0) target = $region5
    $region4: #{tpu_custom_call.1} parent=1 // pred_region
      _
    $region5: #{tpu_custom_call.1} parent=1 // pred_fallthru
      _
    // Predicated region
    $region6: #{tpu_custom_call.1} parent=1 // pred_check
      _
    $region7: #{tpu_custom_call.1} parent=1 // pred_check_branch
      %20 = sbr.rel (0) target = $region9
    $region8: #{tpu_custom_call.1} parent=1 // pred_region
      %s22 = ssub.s32 1024, 1024
      %23 = vsyncadd [#allocation4], %s22
      %s24 = sshll.u32 [#allocation3], 4
      %s25 = int_to_ptr.vmem [resolvable:$true] %s24
      %30 = dma.hbm_to_vmem [thread:$0]  %s1, 1024, %s25, [#allocation4], 256, 256, 16
    $region9: #{tpu_custom_call.1} parent=1 // pred_fallthru
      _
    // Predicated region
    $region10: #{tpu_custom_call.1} parent=1 // pred_check
      _
    $region11: #{tpu_custom_call.1} parent=1 // pred_check_branch
      %32 = sbr.rel (0) target = $region13
    $region12: #{tpu_custom_call.1} parent=1 // pred_region
      _
    $region13: #{tpu_custom_call.1} parent=1 // pred_fallthru
      _
    // Predicated region
    $region14: #{tpu_custom_call.1} parent=1 // pred_check
      _
    $region15: #{tpu_custom_call.1} parent=1 // pred_check_branch
      %34 = sbr.rel (0) target = $region17
    $region16: #{tpu_custom_call.1} parent=1 // pred_region
      _
    $region17: #{tpu_custom_call.1} parent=1 // pred_fallthru
      _
    // Predicated region
    $region18: #{tpu_custom_call.1} parent=1 // pred_check
      _
    $region19: #{tpu_custom_call.1} parent=1 // pred_check_branch
      %36 = sbr.rel (0) target = $region21
    $region20: #{tpu_custom_call.1} parent=1 // pred_region
      _
    $region21: #{tpu_custom_call.1} parent=1 // pred_fallthru
      _
    // Predicated region
    $region22: #{tpu_custom_call.1} parent=1 // pred_check
      _
    $region23: #{tpu_custom_call.1} parent=1 // pred_check_branch
      %38 = sbr.rel (0) target = $region25
    $region24: #{tpu_custom_call.1} parent=1 // pred_region
      _
    $region25: #{tpu_custom_call.1} parent=1 // pred_fallthru
      _
    // Predicated region
    $region26: #{tpu_custom_call.1} parent=1 // pred_check
      _
    $region27: #{tpu_custom_call.1} parent=1 // pred_check_branch
      %40 = sbr.rel (0) target = $region29
    $region28: #{tpu_custom_call.1} parent=1 // pred_region
      _
    $region29: #{tpu_custom_call.1} parent=1 // pred_fallthru
      _
    // Predicated region
    $region30: #{tpu_custom_call.1} parent=1 // pred_check
      _
    $region31: #{tpu_custom_call.1} parent=1 // pred_check_branch
      %42 = sbr.rel (0) target = $region33
    $region32: #{tpu_custom_call.1} parent=1 // pred_region
      _
    $region33: #{tpu_custom_call.1} parent=1 // pred_fallthru
      _
    // Predicated region
    $region34: #{tpu_custom_call.1} parent=1 // pred_check
      _
    $region35: #{tpu_custom_call.1} parent=1 // pred_check_branch
      %44 = sbr.rel (0) target = $region37
    $region36: #{tpu_custom_call.1} parent=1 // pred_region
      _
    $region37: #{tpu_custom_call.1} parent=1 // pred_fallthru
      _
    // Predicated region
    $region38: #{tpu_custom_call.1} parent=1 // pred_check
      _
    $region39: #{tpu_custom_call.1} parent=1 // pred_check_branch
      %46 = sbr.rel (0) target = $region41
    $region40: #{tpu_custom_call.1} parent=1 // pred_region
      %47 = dma.done [#allocation4], 1024
    $region41: #{tpu_custom_call.1} parent=1 // pred_fallthru
      _
    %v48 = vld [vmem:[%s0] sm:$0xff]
    %v49 = vld [vmem:[%s0 + $0x8] sm:$0xff]
    %v50 = vld [vmem:[%s0 + $0x10] sm:$0xff]
    %v51 = vld [vmem:[%s0 + $0x18] sm:$0xff]
    %v52 = vld [vmem:[%s0 + $0x20] sm:$0xff]
    %v53 = vld [vmem:[%s0 + $0x28] sm:$0xff]
    %v54 = vld [vmem:[%s0 + $0x30] sm:$0xff]
    %v55 = vld [vmem:[%s0 + $0x38] sm:$0xff]
    %v56 = vld [vmem:[%s0 + $0x40] sm:$0xff]
    %v57 = vld [vmem:[%s0 + $0x48] sm:$0xff]
    %v58 = vld [vmem:[%s0 + $0x50] sm:$0xff]
    %v59 = vld [vmem:[%s0 + $0x58] sm:$0xff]
    %v60 = vld [vmem:[%s0 + $0x60] sm:$0xff]
    %v61 = vld [vmem:[%s0 + $0x68] sm:$0xff]
    %v62 = vld [vmem:[%s0 + $0x70] sm:$0xff]
    %v63 = vld [vmem:[%s0 + $0x78] sm:$0xff]
    %v64 = vld [vmem:[#allocation3] sm:$0xff]
    %v65 = vld [vmem:[#allocation3 + $0x8] sm:$0xff]
    %v66 = vld [vmem:[#allocation3 + $0x10] sm:$0xff]
    %v67 = vld [vmem:[#allocation3 + $0x18] sm:$0xff]
    %v68 = vld [vmem:[#allocation3 + $0x20] sm:$0xff]
    %v69 = vld [vmem:[#allocation3 + $0x28] sm:$0xff]
    %v70 = vld [vmem:[#allocation3 + $0x30] sm:$0xff]
    %v71 = vld [vmem:[#allocation3 + $0x38] sm:$0xff]
    %v72 = vld [vmem:[%s2] sm:$0x3]
    %v74 = vlaneseq
    %v75 = vshrl.u32 %v74, 7
    %v76 = vsub.s32 0, %v75
    %v77 = vrot.slane %v72, %v76
    %v78 = vlaneseq
    %v79 = vshrl.u32 %v78, 7
    %v80 = vsub.s32 1, %v79
    %v81 = vrot.slane %v72, %v80
    %vm84 = vcmask 261120
    %v86 = vsel %vm84, %v48, 0
    %v89 = vsel %vm84, %v49, 0
    %v92 = vsel %vm84, %v50, 0
    %v95 = vsel %vm84, %v51, 0
    %v98 = vsel %vm84, %v52, 0
    %v101 = vsel %vm84, %v53, 0
    %v104 = vsel %vm84, %v54, 0
    %v107 = vsel %vm84, %v55, 0
    %v110 = vsel %vm84, %v56, 0
    %v113 = vsel %vm84, %v57, 0
    %v116 = vsel %vm84, %v58, 0
    %v119 = vsel %vm84, %v59, 0
    %v122 = vsel %vm84, %v60, 0
    %v125 = vsel %vm84, %v61, 0
    %v128 = vsel %vm84, %v62, 0
    %v131 = vsel %vm84, %v63, 0
    %v133 = vand.u32 %v65, 4294901760
    %134 = vmatprep.subr.mxu0 %v133
    %v135 = vand.u32 %v64, 4294901760
    %136 = vmatpush1.msra.mxu0 %v135
    %v137 = vand.u32 %v67, 4294901760
    %138 = vmatprep.subr.mxu0 %v137
    %v139 = vand.u32 %v66, 4294901760
    %140 = vmatpush1.msra.mxu0 %v139
    %v141 = vand.u32 %v69, 4294901760
    %142 = vmatprep.subr.mxu0 %v141
    %v143 = vand.u32 %v68, 4294901760
    %144 = vmatpush1.msra.mxu0 %v143
    %v145 = vand.u32 %v71, 4294901760
    %146 = vmatprep.subr.mxu0 %v145
    %v147 = vand.u32 %v70, 4294901760
    %148 = vmatpush1.msra.mxu0 %v147
    %149 = vmatprep.subr.mxu0 0.0
    %150 = vmatpush1.msra.mxu0 0.0
    %151 = vmatprep.subr.mxu0 0.0
    %152 = vmatpush1.msra.mxu0 0.0
    %153 = vmatprep.subr.mxu0 0.0
    %154 = vmatpush1.msra.mxu0 0.0
    %155 = vmatprep.subr.mxu0 0.0
    %156 = vmatpush1.msra.mxu0 0.0
    %157 = vmatprep.subr.mxu0 0.0
    %158 = vmatpush1.msra.mxu0 0.0
    %159 = vmatprep.subr.mxu0 0.0
    %160 = vmatpush1.msra.mxu0 0.0
    %161 = vmatprep.subr.mxu0 0.0
    %162 = vmatpush1.msra.mxu0 0.0
    %163 = vmatprep.subr.mxu0 0.0
    %164 = vmatpush1.msra.mxu0 0.0
    %165 = vmatprep.subr.mxu0 0.0
    %166 = vmatpush1.msra.mxu0 0.0
    %167 = vmatprep.subr.mxu0 0.0
    %168 = vmatpush1.msra.mxu0 0.0
    %169 = vmatprep.subr.mxu0 0.0
    %170 = vmatpush1.msra.mxu0 0.0
    %171 = vmatprep.subr.mxu0 0.0
    %172 = vmatpush1.msra.mxu0 0.0
    %173 = vmatprep.subr.mxu0 0.0
    %174 = vmatpush1.msra.mxu0 0.0
    %175 = vmatprep.subr.mxu0 0.0
    %176 = vmatpush1.msra.mxu0 0.0
    %177 = vmatprep.subr.mxu0 0.0
    %178 = vmatpush1.msra.mxu0 0.0
    %179 = vmatprep.subr.mxu0 0.0
    %180 = vmatpush1.msra.mxu0 0.0
    %181 = vmatprep.subr.mxu0 0.0
    %182 = vmatpush1.msra.mxu0 0.0
    %183 = vmatprep.subr.mxu0 0.0
    %184 = vmatpush1.msra.mxu0 0.0
    %185 = vmatprep.subr.mxu0 0.0
    %186 = vmatpush1.msra.mxu0 0.0
    %187 = vmatprep.subr.mxu0 0.0
    %188 = vmatpush1.msra.mxu0 0.0
    %189 = vmatprep.subr.mxu0 0.0
    %190 = vmatpush1.msra.mxu0 0.0
    %191 = vmatprep.subr.mxu0 0.0
    %192 = vmatpush1.msra.mxu0 0.0
    %193 = vmatprep.subr.mxu0 0.0
    %194 = vmatpush1.msra.mxu0 0.0
    %195 = vmatprep.subr.mxu0 0.0
    %196 = vmatpush1.msra.mxu0 0.0
    %197 = vmatprep.subr.mxu0 0.0
    %198 = vmatpush1.msra.mxu0 0.0
    %199 = vmatprep.subr.mxu0 0.0
    %200 = vmatpush1.msra.mxu0 0.0
    %201 = vmatprep.subr.mxu0 0.0
    %202 = vmatpush1.msra.mxu0 0.0
    %203 = vmatprep.subr.mxu0 0.0
    %204 = vmatpush1.msra.mxu0 0.0
    %205 = vmatprep.mubr.f32.mxu0 0.0
    %v206 = vand.u32 %v86, 4294901760
    %v207 = vsub.f32 %v86, %v206
    %v208 = vand.u32 %v207, 4294901760
    %v209 = vsub.f32 %v207, %v208
    %v210 = vand.u32 %v209, 4294901760
    %211 = vmatmul.mubr.f32.gmra.mrb[0].mxu0 %v210
    %v212 = vpop.f32.mrb[0].mxu0
    %v213 = vadd.f32 %v77, %v212
    %v214 = vpop.f32.mrb[0].mxu0
    %v215 = vadd.f32 %v81, %v214
    %216 = vmatprep.mubr.f32.mxu0 0.0
    %v217 = vand.u32 %v89, 4294901760
    %v218 = vsub.f32 %v89, %v217
    %v219 = vand.u32 %v218, 4294901760
    %v220 = vsub.f32 %v218, %v219
    %v221 = vand.u32 %v220, 4294901760
    %222 = vmatmul.mubr.f32.gmra.mrb[0].mxu0 %v221
    %v223 = vpop.f32.mrb[0].mxu0
    %v224 = vadd.f32 %v77, %v223
    %v225 = vpop.f32.mrb[0].mxu0
    %v226 = vadd.f32 %v81, %v225
    %227 = vmatprep.mubr.f32.mxu0 0.0
    %v228 = vand.u32 %v92, 4294901760
    %v229 = vsub.f32 %v92, %v228
    %v230 = vand.u32 %v229, 4294901760
    %v231 = vsub.f32 %v229, %v230
    %v232 = vand.u32 %v231, 4294901760
    %233 = vmatmul.mubr.f32.gmra.mrb[0].mxu0 %v232
    %v234 = vpop.f32.mrb[0].mxu0
    %v235 = vadd.f32 %v77, %v234
    %v236 = vpop.f32.mrb[0].mxu0
    %v237 = vadd.f32 %v81, %v236
    %238 = vmatprep.mubr.f32.mxu0 0.0
    %v239 = vand.u32 %v95, 4294901760
    %v240 = vsub.f32 %v95, %v239
    %v241 = vand.u32 %v240, 4294901760
    %v242 = vsub.f32 %v240, %v241
    %v243 = vand.u32 %v242, 4294901760
    %244 = vmatmul.mubr.f32.gmra.mrb[0].mxu0 %v243
    %v245 = vpop.f32.mrb[0].mxu0
    %v246 = vadd.f32 %v77, %v245
    %v247 = vpop.f32.mrb[0].mxu0
    %v248 = vadd.f32 %v81, %v247
    %249 = vmatprep.mubr.f32.mxu0 0.0
    %v250 = vand.u32 %v98, 4294901760
    %v251 = vsub.f32 %v98, %v250
    %v252 = vand.u32 %v251, 4294901760
    %v253 = vsub.f32 %v251, %v252
    %v254 = vand.u32 %v253, 4294901760
    %255 = vmatmul.mubr.f32.gmra.mrb[0].mxu0 %v254
    %v256 = vpop.f32.mrb[0].mxu0
    %v257 = vadd.f32 %v77, %v256
    %v258 = vpop.f32.mrb[0].mxu0
    %v259 = vadd.f32 %v81, %v258
    %260 = vmatprep.mubr.f32.mxu0 0.0
    %v261 = vand.u32 %v101, 4294901760
    %v262 = vsub.f32 %v101, %v261
    %v263 = vand.u32 %v262, 4294901760
    %v264 = vsub.f32 %v262, %v263
    %v265 = vand.u32 %v264, 4294901760
    %266 = vmatmul.mubr.f32.gmra.mrb[0].mxu0 %v265
    %v267 = vpop.f32.mrb[0].mxu0
    %v268 = vadd.f32 %v77, %v267
    %v269 = vpop.f32.mrb[0].mxu0
    %v270 = vadd.f32 %v81, %v269
    %271 = vmatprep.mubr.f32.mxu0 0.0
    %v272 = vand.u32 %v104, 4294901760
    %v273 = vsub.f32 %v104, %v272
    %v274 = vand.u32 %v273, 4294901760
    %v275 = vsub.f32 %v273, %v274
    %v276 = vand.u32 %v275, 4294901760
    %277 = vmatmul.mubr.f32.gmra.mrb[0].mxu0 %v276
    %v278 = vpop.f32.mrb[0].mxu0
    %v279 = vadd.f32 %v77, %v278
    %v280 = vpop.f32.mrb[0].mxu0
    %v281 = vadd.f32 %v81, %v280
    %282 = vmatprep.mubr.f32.mxu0 0.0
    %v283 = vand.u32 %v107, 4294901760
    %v284 = vsub.f32 %v107, %v283
    %v285 = vand.u32 %v284, 4294901760
    %v286 = vsub.f32 %v284, %v285
    %v287 = vand.u32 %v286, 4294901760
    %288 = vmatmul.mubr.f32.gmra.mrb[0].mxu0 %v287
    %v289 = vpop.f32.mrb[0].mxu0
    %v290 = vadd.f32 %v77, %v289
    %v291 = vpop.f32.mrb[0].mxu0
    %v292 = vadd.f32 %v81, %v291
    %293 = vmatprep.mubr.f32.mxu0 0.0
    %v294 = vand.u32 %v110, 4294901760
    %v295 = vsub.f32 %v110, %v294
    %v296 = vand.u32 %v295, 4294901760
    %v297 = vsub.f32 %v295, %v296
    %v298 = vand.u32 %v297, 4294901760
    %299 = vmatmul.mubr.f32.gmra.mrb[0].mxu0 %v298
    %v300 = vpop.f32.mrb[0].mxu0
    %v301 = vadd.f32 %v77, %v300
    %v302 = vpop.f32.mrb[0].mxu0
    %v303 = vadd.f32 %v81, %v302
    %304 = vmatprep.mubr.f32.mxu0 0.0
    %v305 = vand.u32 %v113, 4294901760
    %v306 = vsub.f32 %v113, %v305
    %v307 = vand.u32 %v306, 4294901760
    %v308 = vsub.f32 %v306, %v307
    %v309 = vand.u32 %v308, 4294901760
    %310 = vmatmul.mubr.f32.gmra.mrb[0].mxu0 %v309
    %v311 = vpop.f32.mrb[0].mxu0
    %v312 = vadd.f32 %v77, %v311
    %v313 = vpop.f32.mrb[0].mxu0
    %v314 = vadd.f32 %v81, %v313
    %315 = vmatprep.mubr.f32.mxu0 0.0
    %v316 = vand.u32 %v116, 4294901760
    %v317 = vsub.f32 %v116, %v316
    %v318 = vand.u32 %v317, 4294901760
    %v319 = vsub.f32 %v317, %v318
    %v320 = vand.u32 %v319, 4294901760
    %321 = vmatmul.mubr.f32.gmra.mrb[0].mxu0 %v320
    %v322 = vpop.f32.mrb[0].mxu0
    %v323 = vadd.f32 %v77, %v322
    %v324 = vpop.f32.mrb[0].mxu0
    %v325 = vadd.f32 %v81, %v324
    %326 = vmatprep.mubr.f32.mxu0 0.0
    %v327 = vand.u32 %v119, 4294901760
    %v328 = vsub.f32 %v119, %v327
    %v329 = vand.u32 %v328, 4294901760
    %v330 = vsub.f32 %v328, %v329
    %v331 = vand.u32 %v330, 4294901760
    %332 = vmatmul.mubr.f32.gmra.mrb[0].mxu0 %v331
    %v333 = vpop.f32.mrb[0].mxu0
    %v334 = vadd.f32 %v77, %v333
    %v335 = vpop.f32.mrb[0].mxu0
    %v336 = vadd.f32 %v81, %v335
    %337 = vmatprep.mubr.f32.mxu0 0.0
    %v338 = vand.u32 %v122, 4294901760
    %v339 = vsub.f32 %v122, %v338
    %v340 = vand.u32 %v339, 4294901760
    %v341 = vsub.f32 %v339, %v340
    %v342 = vand.u32 %v341, 4294901760
    %343 = vmatmul.mubr.f32.gmra.mrb[0].mxu0 %v342
    %v344 = vpop.f32.mrb[0].mxu0
    %v345 = vadd.f32 %v77, %v344
    %v346 = vpop.f32.mrb[0].mxu0
    %v347 = vadd.f32 %v81, %v346
    %348 = vmatprep.mubr.f32.mxu0 0.0
    %v349 = vand.u32 %v125, 4294901760
    %v350 = vsub.f32 %v125, %v349
    %v351 = vand.u32 %v350, 4294901760
    %v352 = vsub.f32 %v350, %v351
    %v353 = vand.u32 %v352, 4294901760
    %354 = vmatmul.mubr.f32.gmra.mrb[0].mxu0 %v353
    %v355 = vpop.f32.mrb[0].mxu0
    %v356 = vadd.f32 %v77, %v355
    %v357 = vpop.f32.mrb[0].mxu0
    %v358 = vadd.f32 %v81, %v357
    %359 = vmatprep.mubr.f32.mxu0 0.0
    %v360 = vand.u32 %v128, 4294901760
    %v361 = vsub.f32 %v128, %v360
    %v362 = vand.u32 %v361, 4294901760
    %v363 = vsub.f32 %v361, %v362
    %v364 = vand.u32 %v363, 4294901760
    %365 = vmatmul.mubr.f32.gmra.mrb[0].mxu0 %v364
    %v366 = vpop.f32.mrb[0].mxu0
    %v367 = vadd.f32 %v77, %v366
    %v368 = vpop.f32.mrb[0].mxu0
    %v369 = vadd.f32 %v81, %v368
    %370 = vmatprep.mubr.f32.mxu0 0.0
    %v371 = vand.u32 %v131, 4294901760
    %v372 = vsub.f32 %v131, %v371
    %v373 = vand.u32 %v372, 4294901760
    %v374 = vsub.f32 %v372, %v373
    %v375 = vand.u32 %v374, 4294901760
    %376 = vmatmul.mubr.f32.gmra.mrb[0].mxu0 %v375
    %v377 = vpop.f32.mrb[0].mxu0
    %v378 = vadd.f32 %v77, %v377
    %v379 = vpop.f32.mrb[0].mxu0
    %v380 = vadd.f32 %v81, %v379
    %381 = vdwg.mxu0
    %v382 = vand.u32 %v65, 4294901760
    %v383 = vsub.f32 %v65, %v382
    %v384 = vand.u32 %v383, 4294901760
    %v385 = vsub.f32 %v383, %v384
    %v386 = vand.u32 %v385, 4294901760
    %387 = vmatprep.subr.mxu0 %v386
    %v388 = vand.u32 %v64, 4294901760
    %v389 = vsub.f32 %v64, %v388
    %v390 = vand.u32 %v389, 4294901760
    %v391 = vsub.f32 %v389, %v390
    %v392 = vand.u32 %v391, 4294901760
    %393 = vmatpush1.msra.mxu0 %v392
    %v394 = vand.u32 %v67, 4294901760
    %v395 = vsub.f32 %v67, %v394
    %v396 = vand.u32 %v395, 4294901760
    %v397 = vsub.f32 %v395, %v396
    %v398 = vand.u32 %v397, 4294901760
    %399 = vmatprep.subr.mxu0 %v398
    %v400 = vand.u32 %v66, 4294901760
    %v401 = vsub.f32 %v66, %v400
    %v402 = vand.u32 %v401, 4294901760
    %v403 = vsub.f32 %v401, %v402
    %v404 = vand.u32 %v403, 4294901760
    %405 = vmatpush1.msra.mxu0 %v404
    %v406 = vand.u32 %v69, 4294901760
    %v407 = vsub.f32 %v69, %v406
    %v408 = vand.u32 %v407, 4294901760
    %v409 = vsub.f32 %v407, %v408
    %v410 = vand.u32 %v409, 4294901760
    %411 = vmatprep.subr.mxu0 %v410
    %v412 = vand.u32 %v68, 4294901760
    %v413 = vsub.f32 %v68, %v412
    %v414 = vand.u32 %v413, 4294901760
    %v415 = vsub.f32 %v413, %v414
    %v416 = vand.u32 %v415, 4294901760
    %417 = vmatpush1.msra.mxu0 %v416
    %v418 = vand.u32 %v71, 4294901760
    %v419 = vsub.f32 %v71, %v418
    %v420 = vand.u32 %v419, 4294901760
    %v421 = vsub.f32 %v419, %v420
    %v422 = vand.u32 %v421, 4294901760
    %423 = vmatprep.subr.mxu0 %v422
    %v424 = vand.u32 %v70, 4294901760
    %v425 = vsub.f32 %v70, %v424
    %v426 = vand.u32 %v425, 4294901760
    %v427 = vsub.f32 %v425, %v426
    %v428 = vand.u32 %v427, 4294901760
    %429 = vmatpush1.msra.mxu0 %v428
    %430 = vmatprep.subr.mxu0 0.0
    %431 = vmatpush1.msra.mxu0 0.0
    %432 = vmatprep.subr.mxu0 0.0
    %433 = vmatpush1.msra.mxu0 0.0
    %434 = vmatprep.subr.mxu0 0.0
    %435 = vmatpush1.msra.mxu0 0.0
    %436 = vmatprep.subr.mxu0 0.0
    %437 = vmatpush1.msra.mxu0 0.0
    %438 = vmatprep.subr.mxu0 0.0
    %439 = vmatpush1.msra.mxu0 0.0
    %440 = vmatprep.subr.mxu0 0.0
    %441 = vmatpush1.msra.mxu0 0.0
    %442 = vmatprep.subr.mxu0 0.0
    %443 = vmatpush1.msra.mxu0 0.0
    %444 = vmatprep.subr.mxu0 0.0
    %445 = vmatpush1.msra.mxu0 0.0
    %446 = vmatprep.subr.mxu0 0.0
    %447 = vmatpush1.msra.mxu0 0.0
    %448 = vmatprep.subr.mxu0 0.0
    %449 = vmatpush1.msra.mxu0 0.0
    %450 = vmatprep.subr.mxu0 0.0
    %451 = vmatpush1.msra.mxu0 0.0
    %452 = vmatprep.subr.mxu0 0.0
    %453 = vmatpush1.msra.mxu0 0.0
    %454 = vmatprep.subr.mxu0 0.0
    %455 = vmatpush1.msra.mxu0 0.0
    %456 = vmatprep.subr.mxu0 0.0
    %457 = vmatpush1.msra.mxu0 0.0
    %458 = vmatprep.subr.mxu0 0.0
    %459 = vmatpush1.msra.mxu0 0.0
    %460 = vmatprep.subr.mxu0 0.0
    %461 = vmatpush1.msra.mxu0 0.0
    %462 = vmatprep.subr.mxu0 0.0
    %463 = vmatpush1.msra.mxu0 0.0
    %464 = vmatprep.subr.mxu0 0.0
    %465 = vmatpush1.msra.mxu0 0.0
    %466 = vmatprep.subr.mxu0 0.0
    %467 = vmatpush1.msra.mxu0 0.0
    %468 = vmatprep.subr.mxu0 0.0
    %469 = vmatpush1.msra.mxu0 0.0
    %470 = vmatprep.subr.mxu0 0.0
    %471 = vmatpush1.msra.mxu0 0.0
    %472 = vmatprep.subr.mxu0 0.0
    %473 = vmatpush1.msra.mxu0 0.0
    %474 = vmatprep.subr.mxu0 0.0
    %475 = vmatpush1.msra.mxu0 0.0
    %476 = vmatprep.subr.mxu0 0.0
    %477 = vmatpush1.msra.mxu0 0.0
    %478 = vmatprep.subr.mxu0 0.0
    %479 = vmatpush1.msra.mxu0 0.0
    %480 = vmatprep.subr.mxu0 0.0
    %481 = vmatpush1.msra.mxu0 0.0
    %482 = vmatprep.subr.mxu0 0.0
    %483 = vmatpush1.msra.mxu0 0.0
    %484 = vmatprep.subr.mxu0 0.0
    %485 = vmatpush1.msra.mxu0 0.0
    %486 = vmatprep.mubr.f32.mxu0 0.0
    %v487 = vand.u32 %v86, 4294901760
    %488 = vmatmul.mubr.f32.gmra.mrb[0].mxu0 %v487
    %v489 = vpop.f32.mrb[0].mxu0
    %v490 = vadd.f32 %v213, %v489
    %v491 = vpop.f32.mrb[0].mxu0
    %v492 = vadd.f32 %v215, %v491
    %493 = vmatprep.mubr.f32.mxu0 0.0
    %v494 = vand.u32 %v89, 4294901760
    %495 = vmatmul.mubr.f32.gmra.mrb[0].mxu0 %v494
    %v496 = vpop.f32.mrb[0].mxu0
    %v497 = vadd.f32 %v224, %v496
    %v498 = vpop.f32.mrb[0].mxu0
    %v499 = vadd.f32 %v226, %v498
    %500 = vmatprep.mubr.f32.mxu0 0.0
    %v501 = vand.u32 %v92, 4294901760
    %502 = vmatmul.mubr.f32.gmra.mrb[0].mxu0 %v501
    %v503 = vpop.f32.mrb[0].mxu0
    %v504 = vadd.f32 %v235, %v503
    %v505 = vpop.f32.mrb[0].mxu0
    %v506 = vadd.f32 %v237, %v505
    %507 = vmatprep.mubr.f32.mxu0 0.0
    %v508 = vand.u32 %v95, 4294901760
    %509 = vmatmul.mubr.f32.gmra.mrb[0].mxu0 %v508
    %v510 = vpop.f32.mrb[0].mxu0
    %v511 = vadd.f32 %v246, %v510
    %v512 = vpop.f32.mrb[0].mxu0
    %v513 = vadd.f32 %v248, %v512
    %514 = vmatprep.mubr.f32.mxu0 0.0
    %v515 = vand.u32 %v98, 4294901760
    %516 = vmatmul.mubr.f32.gmra.mrb[0].mxu0 %v515
    %v517 = vpop.f32.mrb[0].mxu0
    %v518 = vadd.f32 %v257, %v517
    %v519 = vpop.f32.mrb[0].mxu0
    %v520 = vadd.f32 %v259, %v519
    %521 = vmatprep.mubr.f32.mxu0 0.0
    %v522 = vand.u32 %v101, 4294901760
    %523 = vmatmul.mubr.f32.gmra.mrb[0].mxu0 %v522
    %v524 = vpop.f32.mrb[0].mxu0
    %v525 = vadd.f32 %v268, %v524
    %v526 = vpop.f32.mrb[0].mxu0
    %v527 = vadd.f32 %v270, %v526
    %528 = vmatprep.mubr.f32.mxu0 0.0
    %v529 = vand.u32 %v104, 4294901760
    %530 = vmatmul.mubr.f32.gmra.mrb[0].mxu0 %v529
    %v531 = vpop.f32.mrb[0].mxu0
    %v532 = vadd.f32 %v279, %v531
    %v533 = vpop.f32.mrb[0].mxu0
    %v534 = vadd.f32 %v281, %v533
    %535 = vmatprep.mubr.f32.mxu0 0.0
    %v536 = vand.u32 %v107, 4294901760
    %537 = vmatmul.mubr.f32.gmra.mrb[0].mxu0 %v536
    %v538 = vpop.f32.mrb[0].mxu0
    %v539 = vadd.f32 %v290, %v538
    %v540 = vpop.f32.mrb[0].mxu0
    %v541 = vadd.f32 %v292, %v540
    %542 = vmatprep.mubr.f32.mxu0 0.0
    %v543 = vand.u32 %v110, 4294901760
    %544 = vmatmul.mubr.f32.gmra.mrb[0].mxu0 %v543
    %v545 = vpop.f32.mrb[0].mxu0
    %v546 = vadd.f32 %v301, %v545
    %v547 = vpop.f32.mrb[0].mxu0
    %v548 = vadd.f32 %v303, %v547
    %549 = vmatprep.mubr.f32.mxu0 0.0
    %v550 = vand.u32 %v113, 4294901760
    %551 = vmatmul.mubr.f32.gmra.mrb[0].mxu0 %v550
    %v552 = vpop.f32.mrb[0].mxu0
    %v553 = vadd.f32 %v312, %v552
    %v554 = vpop.f32.mrb[0].mxu0
    %v555 = vadd.f32 %v314, %v554
    %556 = vmatprep.mubr.f32.mxu0 0.0
    %v557 = vand.u32 %v116, 4294901760
    %558 = vmatmul.mubr.f32.gmra.mrb[0].mxu0 %v557
    %v559 = vpop.f32.mrb[0].mxu0
    %v560 = vadd.f32 %v323, %v559
    %v561 = vpop.f32.mrb[0].mxu0
    %v562 = vadd.f32 %v325, %v561
    %563 = vmatprep.mubr.f32.mxu0 0.0
    %v564 = vand.u32 %v119, 4294901760
    %565 = vmatmul.mubr.f32.gmra.mrb[0].mxu0 %v564
    %v566 = vpop.f32.mrb[0].mxu0
    %v567 = vadd.f32 %v334, %v566
    %v568 = vpop.f32.mrb[0].mxu0
    %v569 = vadd.f32 %v336, %v568
    %570 = vmatprep.mubr.f32.mxu0 0.0
    %v571 = vand.u32 %v122, 4294901760
    %572 = vmatmul.mubr.f32.gmra.mrb[0].mxu0 %v571
    %v573 = vpop.f32.mrb[0].mxu0
    %v574 = vadd.f32 %v345, %v573
    %v575 = vpop.f32.mrb[0].mxu0
    %v576 = vadd.f32 %v347, %v575
    %577 = vmatprep.mubr.f32.mxu0 0.0
    %v578 = vand.u32 %v125, 4294901760
    %579 = vmatmul.mubr.f32.gmra.mrb[0].mxu0 %v578
    %v580 = vpop.f32.mrb[0].mxu0
    %v581 = vadd.f32 %v356, %v580
    %v582 = vpop.f32.mrb[0].mxu0
    %v583 = vadd.f32 %v358, %v582
    %584 = vmatprep.mubr.f32.mxu0 0.0
    %v585 = vand.u32 %v128, 4294901760
    %586 = vmatmul.mubr.f32.gmra.mrb[0].mxu0 %v585
    %v587 = vpop.f32.mrb[0].mxu0
    %v588 = vadd.f32 %v367, %v587
    %v589 = vpop.f32.mrb[0].mxu0
    %v590 = vadd.f32 %v369, %v589
    %591 = vmatprep.mubr.f32.mxu0 0.0
    %v592 = vand.u32 %v131, 4294901760
    %593 = vmatmul.mubr.f32.gmra.mrb[0].mxu0 %v592
    %v594 = vpop.f32.mrb[0].mxu0
    %v595 = vadd.f32 %v378, %v594
    %v596 = vpop.f32.mrb[0].mxu0
    %v597 = vadd.f32 %v380, %v596
    %598 = vdwg.mxu0
    %v599 = vand.u32 %v65, 4294901760
    %v600 = vsub.f32 %v65, %v599
    %601 = vmatprep.subr.mxu0 %v600
    %v602 = vand.u32 %v64, 4294901760
    %v603 = vsub.f32 %v64, %v602
    %604 = vmatpush1.msra.mxu0 %v603
    %v605 = vand.u32 %v67, 4294901760
    %v606 = vsub.f32 %v67, %v605
    %607 = vmatprep.subr.mxu0 %v606
    %v608 = vand.u32 %v66, 4294901760
    %v609 = vsub.f32 %v66, %v608
    %610 = vmatpush1.msra.mxu0 %v609
    %v611 = vand.u32 %v69, 4294901760
    %v612 = vsub.f32 %v69, %v611
    %613 = vmatprep.subr.mxu0 %v612
    %v614 = vand.u32 %v68, 4294901760
    %v615 = vsub.f32 %v68, %v614
    %616 = vmatpush1.msra.mxu0 %v615
    %v617 = vand.u32 %v71, 4294901760
    %v618 = vsub.f32 %v71, %v617
    %619 = vmatprep.subr.mxu0 %v618
    %v620 = vand.u32 %v70, 4294901760
    %v621 = vsub.f32 %v70, %v620
    %622 = vmatpush1.msra.mxu0 %v621
    %623 = vmatprep.subr.mxu0 0.0
    %624 = vmatpush1.msra.mxu0 0.0
    %625 = vmatprep.subr.mxu0 0.0
    %626 = vmatpush1.msra.mxu0 0.0
    %627 = vmatprep.subr.mxu0 0.0
    %628 = vmatpush1.msra.mxu0 0.0
    %629 = vmatprep.subr.mxu0 0.0
    %630 = vmatpush1.msra.mxu0 0.0
    %631 = vmatprep.subr.mxu0 0.0
    %632 = vmatpush1.msra.mxu0 0.0
    %633 = vmatprep.subr.mxu0 0.0
    %634 = vmatpush1.msra.mxu0 0.0
    %635 = vmatprep.subr.mxu0 0.0
    %636 = vmatpush1.msra.mxu0 0.0
    %637 = vmatprep.subr.mxu0 0.0
    %638 = vmatpush1.msra.mxu0 0.0
    %639 = vmatprep.subr.mxu0 0.0
    %640 = vmatpush1.msra.mxu0 0.0
    %641 = vmatprep.subr.mxu0 0.0
    %642 = vmatpush1.msra.mxu0 0.0
    %643 = vmatprep.subr.mxu0 0.0
    %644 = vmatpush1.msra.mxu0 0.0
    %645 = vmatprep.subr.mxu0 0.0
    %646 = vmatpush1.msra.mxu0 0.0
    %647 = vmatprep.subr.mxu0 0.0
    %648 = vmatpush1.msra.mxu0 0.0
    %649 = vmatprep.subr.mxu0 0.0
    %650 = vmatpush1.msra.mxu0 0.0
    %651 = vmatprep.subr.mxu0 0.0
    %652 = vmatpush1.msra.mxu0 0.0
    %653 = vmatprep.subr.mxu0 0.0
    %654 = vmatpush1.msra.mxu0 0.0
    %655 = vmatprep.subr.mxu0 0.0
    %656 = vmatpush1.msra.mxu0 0.0
    %657 = vmatprep.subr.mxu0 0.0
    %658 = vmatpush1.msra.mxu0 0.0
    %659 = vmatprep.subr.mxu0 0.0
    %660 = vmatpush1.msra.mxu0 0.0
    %661 = vmatprep.subr.mxu0 0.0
    %662 = vmatpush1.msra.mxu0 0.0
    %663 = vmatprep.subr.mxu0 0.0
    %664 = vmatpush1.msra.mxu0 0.0
    %665 = vmatprep.subr.mxu0 0.0
    %666 = vmatpush1.msra.mxu0 0.0
    %667 = vmatprep.subr.mxu0 0.0
    %668 = vmatpush1.msra.mxu0 0.0
    %669 = vmatprep.subr.mxu0 0.0
    %670 = vmatpush1.msra.mxu0 0.0
    %671 = vmatprep.subr.mxu0 0.0
    %672 = vmatpush1.msra.mxu0 0.0
    %673 = vmatprep.subr.mxu0 0.0
    %674 = vmatpush1.msra.mxu0 0.0
    %675 = vmatprep.subr.mxu0 0.0
    %676 = vmatpush1.msra.mxu0 0.0
    %677 = vmatprep.subr.mxu0 0.0
    %678 = vmatpush1.msra.mxu0 0.0
    %679 = vmatprep.mubr.f32.mxu0 0.0
    %v680 = vand.u32 %v86, 4294901760
    %v681 = vsub.f32 %v86, %v680
    %682 = vmatmul.mubr.f32.gmra.mrb[0].mxu0 %v681
    %v683 = vpop.f32.mrb[0].mxu0
    %v684 = vadd.f32 %v490, %v683
    %v685 = vpop.f32.mrb[0].mxu0
    %v686 = vadd.f32 %v492, %v685
    %687 = vmatprep.mubr.f32.mxu0 0.0
    %v688 = vand.u32 %v89, 4294901760
    %v689 = vsub.f32 %v89, %v688
    %690 = vmatmul.mubr.f32.gmra.mrb[0].mxu0 %v689
    %v691 = vpop.f32.mrb[0].mxu0
    %v692 = vadd.f32 %v497, %v691
    %v693 = vpop.f32.mrb[0].mxu0
    %v694 = vadd.f32 %v499, %v693
    %695 = vmatprep.mubr.f32.mxu0 0.0
    %v696 = vand.u32 %v92, 4294901760
    %v697 = vsub.f32 %v92, %v696
    %698 = vmatmul.mubr.f32.gmra.mrb[0].mxu0 %v697
    %v699 = vpop.f32.mrb[0].mxu0
    %v700 = vadd.f32 %v504, %v699
    %v701 = vpop.f32.mrb[0].mxu0
    %v702 = vadd.f32 %v506, %v701
    %703 = vmatprep.mubr.f32.mxu0 0.0
    %v704 = vand.u32 %v95, 4294901760
    %v705 = vsub.f32 %v95, %v704
    %706 = vmatmul.mubr.f32.gmra.mrb[0].mxu0 %v705
    %v707 = vpop.f32.mrb[0].mxu0
    %v708 = vadd.f32 %v511, %v707
    %v709 = vpop.f32.mrb[0].mxu0
    %v710 = vadd.f32 %v513, %v709
    %711 = vmatprep.mubr.f32.mxu0 0.0
    %v712 = vand.u32 %v98, 4294901760
    %v713 = vsub.f32 %v98, %v712
    %714 = vmatmul.mubr.f32.gmra.mrb[0].mxu0 %v713
    %v715 = vpop.f32.mrb[0].mxu0
    %v716 = vadd.f32 %v518, %v715
    %v717 = vpop.f32.mrb[0].mxu0
    %v718 = vadd.f32 %v520, %v717
    %719 = vmatprep.mubr.f32.mxu0 0.0
    %v720 = vand.u32 %v101, 4294901760
    %v721 = vsub.f32 %v101, %v720
    %722 = vmatmul.mubr.f32.gmra.mrb[0].mxu0 %v721
    %v723 = vpop.f32.mrb[0].mxu0
    %v724 = vadd.f32 %v525, %v723
    %v725 = vpop.f32.mrb[0].mxu0
    %v726 = vadd.f32 %v527, %v725
    %727 = vmatprep.mubr.f32.mxu0 0.0
    %v728 = vand.u32 %v104, 4294901760
    %v729 = vsub.f32 %v104, %v728
    %730 = vmatmul.mubr.f32.gmra.mrb[0].mxu0 %v729
    %v731 = vpop.f32.mrb[0].mxu0
    %v732 = vadd.f32 %v532, %v731
    %v733 = vpop.f32.mrb[0].mxu0
    %v734 = vadd.f32 %v534, %v733
    %735 = vmatprep.mubr.f32.mxu0 0.0
    %v736 = vand.u32 %v107, 4294901760
    %v737 = vsub.f32 %v107, %v736
    %738 = vmatmul.mubr.f32.gmra.mrb[0].mxu0 %v737
    %v739 = vpop.f32.mrb[0].mxu0
    %v740 = vadd.f32 %v539, %v739
    %v741 = vpop.f32.mrb[0].mxu0
    %v742 = vadd.f32 %v541, %v741
    %743 = vmatprep.mubr.f32.mxu0 0.0
    %v744 = vand.u32 %v110, 4294901760
    %v745 = vsub.f32 %v110, %v744
    %746 = vmatmul.mubr.f32.gmra.mrb[0].mxu0 %v745
    %v747 = vpop.f32.mrb[0].mxu0
    %v748 = vadd.f32 %v546, %v747
    %v749 = vpop.f32.mrb[0].mxu0
    %v750 = vadd.f32 %v548, %v749
    %751 = vmatprep.mubr.f32.mxu0 0.0
    %v752 = vand.u32 %v113, 4294901760
    %v753 = vsub.f32 %v113, %v752
    %754 = vmatmul.mubr.f32.gmra.mrb[0].mxu0 %v753
    %v755 = vpop.f32.mrb[0].mxu0
    %v756 = vadd.f32 %v553, %v755
    %v757 = vpop.f32.mrb[0].mxu0
    %v758 = vadd.f32 %v555, %v757
    %759 = vmatprep.mubr.f32.mxu0 0.0
    %v760 = vand.u32 %v116, 4294901760
    %v761 = vsub.f32 %v116, %v760
    %762 = vmatmul.mubr.f32.gmra.mrb[0].mxu0 %v761
    %v763 = vpop.f32.mrb[0].mxu0
    %v764 = vadd.f32 %v560, %v763
    %v765 = vpop.f32.mrb[0].mxu0
    %v766 = vadd.f32 %v562, %v765
    %767 = vmatprep.mubr.f32.mxu0 0.0
    %v768 = vand.u32 %v119, 4294901760
    %v769 = vsub.f32 %v119, %v768
    %770 = vmatmul.mubr.f32.gmra.mrb[0].mxu0 %v769
    %v771 = vpop.f32.mrb[0].mxu0
    %v772 = vadd.f32 %v567, %v771
    %v773 = vpop.f32.mrb[0].mxu0
    %v774 = vadd.f32 %v569, %v773
    %775 = vmatprep.mubr.f32.mxu0 0.0
    %v776 = vand.u32 %v122, 4294901760
    %v777 = vsub.f32 %v122, %v776
    %778 = vmatmul.mubr.f32.gmra.mrb[0].mxu0 %v777
    %v779 = vpop.f32.mrb[0].mxu0
    %v780 = vadd.f32 %v574, %v779
    %v781 = vpop.f32.mrb[0].mxu0
    %v782 = vadd.f32 %v576, %v781
    %783 = vmatprep.mubr.f32.mxu0 0.0
    %v784 = vand.u32 %v125, 4294901760
    %v785 = vsub.f32 %v125, %v784
    %786 = vmatmul.mubr.f32.gmra.mrb[0].mxu0 %v785
    %v787 = vpop.f32.mrb[0].mxu0
    %v788 = vadd.f32 %v581, %v787
    %v789 = vpop.f32.mrb[0].mxu0
    %v790 = vadd.f32 %v583, %v789
    %791 = vmatprep.mubr.f32.mxu0 0.0
    %v792 = vand.u32 %v128, 4294901760
    %v793 = vsub.f32 %v128, %v792
    %794 = vmatmul.mubr.f32.gmra.mrb[0].mxu0 %v793
    %v795 = vpop.f32.mrb[0].mxu0
    %v796 = vadd.f32 %v588, %v795
    %v797 = vpop.f32.mrb[0].mxu0
    %v798 = vadd.f32 %v590, %v797
    %799 = vmatprep.mubr.f32.mxu0 0.0
    %v800 = vand.u32 %v131, 4294901760
    %v801 = vsub.f32 %v131, %v800
    %802 = vmatmul.mubr.f32.gmra.mrb[0].mxu0 %v801
    %v803 = vpop.f32.mrb[0].mxu0
    %v804 = vadd.f32 %v595, %v803
    %v805 = vpop.f32.mrb[0].mxu0
    %v806 = vadd.f32 %v597, %v805
    %807 = vdwg.mxu0
    %v808 = vand.u32 %v65, 4294901760
    %809 = vmatprep.subr.mxu0 %v808
    %v810 = vand.u32 %v64, 4294901760
    %811 = vmatpush1.msra.mxu0 %v810
    %v812 = vand.u32 %v67, 4294901760
    %813 = vmatprep.subr.mxu0 %v812
    %v814 = vand.u32 %v66, 4294901760
    %815 = vmatpush1.msra.mxu0 %v814
    %v816 = vand.u32 %v69, 4294901760
    %817 = vmatprep.subr.mxu0 %v816
    %v818 = vand.u32 %v68, 4294901760
    %819 = vmatpush1.msra.mxu0 %v818
    %v820 = vand.u32 %v71, 4294901760
    %821 = vmatprep.subr.mxu0 %v820
    %v822 = vand.u32 %v70, 4294901760
    %823 = vmatpush1.msra.mxu0 %v822
    %824 = vmatprep.subr.mxu0 0.0
    %825 = vmatpush1.msra.mxu0 0.0
    %826 = vmatprep.subr.mxu0 0.0
    %827 = vmatpush1.msra.mxu0 0.0
    %828 = vmatprep.subr.mxu0 0.0
    %829 = vmatpush1.msra.mxu0 0.0
    %830 = vmatprep.subr.mxu0 0.0
    %831 = vmatpush1.msra.mxu0 0.0
    %832 = vmatprep.subr.mxu0 0.0
    %833 = vmatpush1.msra.mxu0 0.0
    %834 = vmatprep.subr.mxu0 0.0
    %835 = vmatpush1.msra.mxu0 0.0
    %836 = vmatprep.subr.mxu0 0.0
    %837 = vmatpush1.msra.mxu0 0.0
    %838 = vmatprep.subr.mxu0 0.0
    %839 = vmatpush1.msra.mxu0 0.0
    %840 = vmatprep.subr.mxu0 0.0
    %841 = vmatpush1.msra.mxu0 0.0
    %842 = vmatprep.subr.mxu0 0.0
    %843 = vmatpush1.msra.mxu0 0.0
    %844 = vmatprep.subr.mxu0 0.0
    %845 = vmatpush1.msra.mxu0 0.0
    %846 = vmatprep.subr.mxu0 0.0
    %847 = vmatpush1.msra.mxu0 0.0
    %848 = vmatprep.subr.mxu0 0.0
    %849 = vmatpush1.msra.mxu0 0.0
    %850 = vmatprep.subr.mxu0 0.0
    %851 = vmatpush1.msra.mxu0 0.0
    %852 = vmatprep.subr.mxu0 0.0
    %853 = vmatpush1.msra.mxu0 0.0
    %854 = vmatprep.subr.mxu0 0.0
    %855 = vmatpush1.msra.mxu0 0.0
    %856 = vmatprep.subr.mxu0 0.0
    %857 = vmatpush1.msra.mxu0 0.0
    %858 = vmatprep.subr.mxu0 0.0
    %859 = vmatpush1.msra.mxu0 0.0
    %860 = vmatprep.subr.mxu0 0.0
    %861 = vmatpush1.msra.mxu0 0.0
    %862 = vmatprep.subr.mxu0 0.0
    %863 = vmatpush1.msra.mxu0 0.0
    %864 = vmatprep.subr.mxu0 0.0
    %865 = vmatpush1.msra.mxu0 0.0
    %866 = vmatprep.subr.mxu0 0.0
    %867 = vmatpush1.msra.mxu0 0.0
    %868 = vmatprep.subr.mxu0 0.0
    %869 = vmatpush1.msra.mxu0 0.0
    %870 = vmatprep.subr.mxu0 0.0
    %871 = vmatpush1.msra.mxu0 0.0
    %872 = vmatprep.subr.mxu0 0.0
    %873 = vmatpush1.msra.mxu0 0.0
    %874 = vmatprep.subr.mxu0 0.0
    %875 = vmatpush1.msra.mxu0 0.0
    %876 = vmatprep.subr.mxu0 0.0
    %877 = vmatpush1.msra.mxu0 0.0
    %878 = vmatprep.subr.mxu0 0.0
    %879 = vmatpush1.msra.mxu0 0.0
    %880 = vmatprep.mubr.f32.mxu0 0.0
    %v881 = vand.u32 %v86, 4294901760
    %v882 = vsub.f32 %v86, %v881
    %v883 = vand.u32 %v882, 4294901760
    %884 = vmatmul.mubr.f32.gmra.mrb[0].mxu0 %v883
    %v885 = vpop.f32.mrb[0].mxu0
    %v886 = vadd.f32 %v684, %v885
    %v887 = vpop.f32.mrb[0].mxu0
    %v888 = vadd.f32 %v686, %v887
    %889 = vmatprep.mubr.f32.mxu0 0.0
    %v890 = vand.u32 %v89, 4294901760
    %v891 = vsub.f32 %v89, %v890
    %v892 = vand.u32 %v891, 4294901760
    %893 = vmatmul.mubr.f32.gmra.mrb[0].mxu0 %v892
    %v894 = vpop.f32.mrb[0].mxu0
    %v895 = vadd.f32 %v692, %v894
    %v896 = vpop.f32.mrb[0].mxu0
    %v897 = vadd.f32 %v694, %v896
    %898 = vmatprep.mubr.f32.mxu0 0.0
    %v899 = vand.u32 %v92, 4294901760
    %v900 = vsub.f32 %v92, %v899
    %v901 = vand.u32 %v900, 4294901760
    %902 = vmatmul.mubr.f32.gmra.mrb[0].mxu0 %v901
    %v903 = vpop.f32.mrb[0].mxu0
    %v904 = vadd.f32 %v700, %v903
    %v905 = vpop.f32.mrb[0].mxu0
    %v906 = vadd.f32 %v702, %v905
    %907 = vmatprep.mubr.f32.mxu0 0.0
    %v908 = vand.u32 %v95, 4294901760
    %v909 = vsub.f32 %v95, %v908
    %v910 = vand.u32 %v909, 4294901760
    %911 = vmatmul.mubr.f32.gmra.mrb[0].mxu0 %v910
    %v912 = vpop.f32.mrb[0].mxu0
    %v913 = vadd.f32 %v708, %v912
    %v914 = vpop.f32.mrb[0].mxu0
    %v915 = vadd.f32 %v710, %v914
    %916 = vmatprep.mubr.f32.mxu0 0.0
    %v917 = vand.u32 %v98, 4294901760
    %v918 = vsub.f32 %v98, %v917
    %v919 = vand.u32 %v918, 4294901760
    %920 = vmatmul.mubr.f32.gmra.mrb[0].mxu0 %v919
    %v921 = vpop.f32.mrb[0].mxu0
    %v922 = vadd.f32 %v716, %v921
    %v923 = vpop.f32.mrb[0].mxu0
    %v924 = vadd.f32 %v718, %v923
    %925 = vmatprep.mubr.f32.mxu0 0.0
    %v926 = vand.u32 %v101, 4294901760
    %v927 = vsub.f32 %v101, %v926
    %v928 = vand.u32 %v927, 4294901760
    %929 = vmatmul.mubr.f32.gmra.mrb[0].mxu0 %v928
    %v930 = vpop.f32.mrb[0].mxu0
    %v931 = vadd.f32 %v724, %v930
    %v932 = vpop.f32.mrb[0].mxu0
    %v933 = vadd.f32 %v726, %v932
    %934 = vmatprep.mubr.f32.mxu0 0.0
    %v935 = vand.u32 %v104, 4294901760
    %v936 = vsub.f32 %v104, %v935
    %v937 = vand.u32 %v936, 4294901760
    %938 = vmatmul.mubr.f32.gmra.mrb[0].mxu0 %v937
    %v939 = vpop.f32.mrb[0].mxu0
    %v940 = vadd.f32 %v732, %v939
    %v941 = vpop.f32.mrb[0].mxu0
    %v942 = vadd.f32 %v734, %v941
    %943 = vmatprep.mubr.f32.mxu0 0.0
    %v944 = vand.u32 %v107, 4294901760
    %v945 = vsub.f32 %v107, %v944
    %v946 = vand.u32 %v945, 4294901760
    %947 = vmatmul.mubr.f32.gmra.mrb[0].mxu0 %v946
    %v948 = vpop.f32.mrb[0].mxu0
    %v949 = vadd.f32 %v740, %v948
    %v950 = vpop.f32.mrb[0].mxu0
    %v951 = vadd.f32 %v742, %v950
    %952 = vmatprep.mubr.f32.mxu0 0.0
    %v953 = vand.u32 %v110, 4294901760
    %v954 = vsub.f32 %v110, %v953
    %v955 = vand.u32 %v954, 4294901760
    %956 = vmatmul.mubr.f32.gmra.mrb[0].mxu0 %v955
    %v957 = vpop.f32.mrb[0].mxu0
    %v958 = vadd.f32 %v748, %v957
    %v959 = vpop.f32.mrb[0].mxu0
    %v960 = vadd.f32 %v750, %v959
    %961 = vmatprep.mubr.f32.mxu0 0.0
    %v962 = vand.u32 %v113, 4294901760
    %v963 = vsub.f32 %v113, %v962
    %v964 = vand.u32 %v963, 4294901760
    %965 = vmatmul.mubr.f32.gmra.mrb[0].mxu0 %v964
    %v966 = vpop.f32.mrb[0].mxu0
    %v967 = vadd.f32 %v756, %v966
    %v968 = vpop.f32.mrb[0].mxu0
    %v969 = vadd.f32 %v758, %v968
    %970 = vmatprep.mubr.f32.mxu0 0.0
    %v971 = vand.u32 %v116, 4294901760
    %v972 = vsub.f32 %v116, %v971
    %v973 = vand.u32 %v972, 4294901760
    %974 = vmatmul.mubr.f32.gmra.mrb[0].mxu0 %v973
    %v975 = vpop.f32.mrb[0].mxu0
    %v976 = vadd.f32 %v764, %v975
    %v977 = vpop.f32.mrb[0].mxu0
    %v978 = vadd.f32 %v766, %v977
    %979 = vmatprep.mubr.f32.mxu0 0.0
    %v980 = vand.u32 %v119, 4294901760
    %v981 = vsub.f32 %v119, %v980
    %v982 = vand.u32 %v981, 4294901760
    %983 = vmatmul.mubr.f32.gmra.mrb[0].mxu0 %v982
    %v984 = vpop.f32.mrb[0].mxu0
    %v985 = vadd.f32 %v772, %v984
    %v986 = vpop.f32.mrb[0].mxu0
    %v987 = vadd.f32 %v774, %v986
    %988 = vmatprep.mubr.f32.mxu0 0.0
    %v989 = vand.u32 %v122, 4294901760
    %v990 = vsub.f32 %v122, %v989
    %v991 = vand.u32 %v990, 4294901760
    %992 = vmatmul.mubr.f32.gmra.mrb[0].mxu0 %v991
    %v993 = vpop.f32.mrb[0].mxu0
    %v994 = vadd.f32 %v780, %v993
    %v995 = vpop.f32.mrb[0].mxu0
    %v996 = vadd.f32 %v782, %v995
    %997 = vmatprep.mubr.f32.mxu0 0.0
    %v998 = vand.u32 %v125, 4294901760
    %v999 = vsub.f32 %v125, %v998
    %v1000 = vand.u32 %v999, 4294901760
    %1001 = vmatmul.mubr.f32.gmra.mrb[0].mxu0 %v1000
    %v1002 = vpop.f32.mrb[0].mxu0
    %v1003 = vadd.f32 %v788, %v1002
    %v1004 = vpop.f32.mrb[0].mxu0
    %v1005 = vadd.f32 %v790, %v1004
    %1006 = vmatprep.mubr.f32.mxu0 0.0
    %v1007 = vand.u32 %v128, 4294901760
    %v1008 = vsub.f32 %v128, %v1007
    %v1009 = vand.u32 %v1008, 4294901760
    %1010 = vmatmul.mubr.f32.gmra.mrb[0].mxu0 %v1009
    %v1011 = vpop.f32.mrb[0].mxu0
    %v1012 = vadd.f32 %v796, %v1011
    %v1013 = vpop.f32.mrb[0].mxu0
    %v1014 = vadd.f32 %v798, %v1013
    %1015 = vmatprep.mubr.f32.mxu0 0.0
    %v1016 = vand.u32 %v131, 4294901760
    %v1017 = vsub.f32 %v131, %v1016
    %v1018 = vand.u32 %v1017, 4294901760
    %1019 = vmatmul.mubr.f32.gmra.mrb[0].mxu0 %v1018
    %v1020 = vpop.f32.mrb[0].mxu0
    %v1021 = vadd.f32 %v804, %v1020
    %v1022 = vpop.f32.mrb[0].mxu0
    %v1023 = vadd.f32 %v806, %v1022
    %1024 = vdwg.mxu0
    %v1025 = vand.u32 %v65, 4294901760
    %v1026 = vsub.f32 %v65, %v1025
    %v1027 = vand.u32 %v1026, 4294901760
    %1028 = vmatprep.subr.mxu0 %v1027
    %v1029 = vand.u32 %v64, 4294901760
    %v1030 = vsub.f32 %v64, %v1029
    %v1031 = vand.u32 %v1030, 4294901760
    %1032 = vmatpush1.msra.mxu0 %v1031
    %v1033 = vand.u32 %v67, 4294901760
    %v1034 = vsub.f32 %v67, %v1033
    %v1035 = vand.u32 %v1034, 4294901760
    %1036 = vmatprep.subr.mxu0 %v1035
    %v1037 = vand.u32 %v66, 4294901760
    %v1038 = vsub.f32 %v66, %v1037
    %v1039 = vand.u32 %v1038, 4294901760
    %1040 = vmatpush1.msra.mxu0 %v1039
    %v1041 = vand.u32 %v69, 4294901760
    %v1042 = vsub.f32 %v69, %v1041
    %v1043 = vand.u32 %v1042, 4294901760
    %1044 = vmatprep.subr.mxu0 %v1043
    %v1045 = vand.u32 %v68, 4294901760
    %v1046 = vsub.f32 %v68, %v1045
    %v1047 = vand.u32 %v1046, 4294901760
    %1048 = vmatpush1.msra.mxu0 %v1047
    %v1049 = vand.u32 %v71, 4294901760
    %v1050 = vsub.f32 %v71, %v1049
    %v1051 = vand.u32 %v1050, 4294901760
    %1052 = vmatprep.subr.mxu0 %v1051
    %v1053 = vand.u32 %v70, 4294901760
    %v1054 = vsub.f32 %v70, %v1053
    %v1055 = vand.u32 %v1054, 4294901760
    %1056 = vmatpush1.msra.mxu0 %v1055
    %1057 = vmatprep.subr.mxu0 0.0
    %1058 = vmatpush1.msra.mxu0 0.0
    %1059 = vmatprep.subr.mxu0 0.0
    %1060 = vmatpush1.msra.mxu0 0.0
    %1061 = vmatprep.subr.mxu0 0.0
    %1062 = vmatpush1.msra.mxu0 0.0
    %1063 = vmatprep.subr.mxu0 0.0
    %1064 = vmatpush1.msra.mxu0 0.0
    %1065 = vmatprep.subr.mxu0 0.0
    %1066 = vmatpush1.msra.mxu0 0.0
    %1067 = vmatprep.subr.mxu0 0.0
    %1068 = vmatpush1.msra.mxu0 0.0
    %1069 = vmatprep.subr.mxu0 0.0
    %1070 = vmatpush1.msra.mxu0 0.0
    %1071 = vmatprep.subr.mxu0 0.0
    %1072 = vmatpush1.msra.mxu0 0.0
    %1073 = vmatprep.subr.mxu0 0.0
    %1074 = vmatpush1.msra.mxu0 0.0
    %1075 = vmatprep.subr.mxu0 0.0
    %1076 = vmatpush1.msra.mxu0 0.0
    %1077 = vmatprep.subr.mxu0 0.0
    %1078 = vmatpush1.msra.mxu0 0.0
    %1079 = vmatprep.subr.mxu0 0.0
    %1080 = vmatpush1.msra.mxu0 0.0
    %1081 = vmatprep.subr.mxu0 0.0
    %1082 = vmatpush1.msra.mxu0 0.0
    %1083 = vmatprep.subr.mxu0 0.0
    %1084 = vmatpush1.msra.mxu0 0.0
    %1085 = vmatprep.subr.mxu0 0.0
    %1086 = vmatpush1.msra.mxu0 0.0
    %1087 = vmatprep.subr.mxu0 0.0
    %1088 = vmatpush1.msra.mxu0 0.0
    %1089 = vmatprep.subr.mxu0 0.0
    %1090 = vmatpush1.msra.mxu0 0.0
    %1091 = vmatprep.subr.mxu0 0.0
    %1092 = vmatpush1.msra.mxu0 0.0
    %1093 = vmatprep.subr.mxu0 0.0
    %1094 = vmatpush1.msra.mxu0 0.0
    %1095 = vmatprep.subr.mxu0 0.0
    %1096 = vmatpush1.msra.mxu0 0.0
    %1097 = vmatprep.subr.mxu0 0.0
    %1098 = vmatpush1.msra.mxu0 0.0
    %1099 = vmatprep.subr.mxu0 0.0
    %1100 = vmatpush1.msra.mxu0 0.0
    %1101 = vmatprep.subr.mxu0 0.0
    %1102 = vmatpush1.msra.mxu0 0.0
    %1103 = vmatprep.subr.mxu0 0.0
    %1104 = vmatpush1.msra.mxu0 0.0
    %1105 = vmatprep.subr.mxu0 0.0
    %1106 = vmatpush1.msra.mxu0 0.0
    %1107 = vmatprep.subr.mxu0 0.0
    %1108 = vmatpush1.msra.mxu0 0.0
    %1109 = vmatprep.subr.mxu0 0.0
    %1110 = vmatpush1.msra.mxu0 0.0
    %1111 = vmatprep.subr.mxu0 0.0
    %1112 = vmatpush1.msra.mxu0 0.0
    %1113 = vmatprep.mubr.f32.mxu0 0.0
    %v1114 = vand.u32 %v86, 4294901760
    %1115 = vmatmul.mubr.f32.gmra.mrb[0].mxu0 %v1114
    %v1116 = vpop.f32.mrb[0].mxu0
    %v1117 = vadd.f32 %v886, %v1116
    %v1118 = vpop.f32.mrb[0].mxu0
    %v1119 = vadd.f32 %v888, %v1118
    %1120 = vmatprep.mubr.f32.mxu0 0.0
    %v1121 = vand.u32 %v89, 4294901760
    %1122 = vmatmul.mubr.f32.gmra.mrb[0].mxu0 %v1121
    %v1123 = vpop.f32.mrb[0].mxu0
    %v1124 = vadd.f32 %v895, %v1123
    %v1125 = vpop.f32.mrb[0].mxu0
    %v1126 = vadd.f32 %v897, %v1125
    %1127 = vmatprep.mubr.f32.mxu0 0.0
    %v1128 = vand.u32 %v92, 4294901760
    %1129 = vmatmul.mubr.f32.gmra.mrb[0].mxu0 %v1128
    %v1130 = vpop.f32.mrb[0].mxu0
    %v1131 = vadd.f32 %v904, %v1130
    %v1132 = vpop.f32.mrb[0].mxu0
    %v1133 = vadd.f32 %v906, %v1132
    %1134 = vmatprep.mubr.f32.mxu0 0.0
    %v1135 = vand.u32 %v95, 4294901760
    %1136 = vmatmul.mubr.f32.gmra.mrb[0].mxu0 %v1135
    %v1137 = vpop.f32.mrb[0].mxu0
    %v1138 = vadd.f32 %v913, %v1137
    %v1139 = vpop.f32.mrb[0].mxu0
    %v1140 = vadd.f32 %v915, %v1139
    %1141 = vmatprep.mubr.f32.mxu0 0.0
    %v1142 = vand.u32 %v98, 4294901760
    %1143 = vmatmul.mubr.f32.gmra.mrb[0].mxu0 %v1142
    %v1144 = vpop.f32.mrb[0].mxu0
    %v1145 = vadd.f32 %v922, %v1144
    %v1146 = vpop.f32.mrb[0].mxu0
    %v1147 = vadd.f32 %v924, %v1146
    %1148 = vmatprep.mubr.f32.mxu0 0.0
    %v1149 = vand.u32 %v101, 4294901760
    %1150 = vmatmul.mubr.f32.gmra.mrb[0].mxu0 %v1149
    %v1151 = vpop.f32.mrb[0].mxu0
    %v1152 = vadd.f32 %v931, %v1151
    %v1153 = vpop.f32.mrb[0].mxu0
    %v1154 = vadd.f32 %v933, %v1153
    %1155 = vmatprep.mubr.f32.mxu0 0.0
    %v1156 = vand.u32 %v104, 4294901760
    %1157 = vmatmul.mubr.f32.gmra.mrb[0].mxu0 %v1156
    %v1158 = vpop.f32.mrb[0].mxu0
    %v1159 = vadd.f32 %v940, %v1158
    %v1160 = vpop.f32.mrb[0].mxu0
    %v1161 = vadd.f32 %v942, %v1160
    %1162 = vmatprep.mubr.f32.mxu0 0.0
    %v1163 = vand.u32 %v107, 4294901760
    %1164 = vmatmul.mubr.f32.gmra.mrb[0].mxu0 %v1163
    %v1165 = vpop.f32.mrb[0].mxu0
    %v1166 = vadd.f32 %v949, %v1165
    %v1167 = vpop.f32.mrb[0].mxu0
    %v1168 = vadd.f32 %v951, %v1167
    %1169 = vmatprep.mubr.f32.mxu0 0.0
    %v1170 = vand.u32 %v110, 4294901760
    %1171 = vmatmul.mubr.f32.gmra.mrb[0].mxu0 %v1170
    %v1172 = vpop.f32.mrb[0].mxu0
    %v1173 = vadd.f32 %v958, %v1172
    %v1174 = vpop.f32.mrb[0].mxu0
    %v1175 = vadd.f32 %v960, %v1174
    %1176 = vmatprep.mubr.f32.mxu0 0.0
    %v1177 = vand.u32 %v113, 4294901760
    %1178 = vmatmul.mubr.f32.gmra.mrb[0].mxu0 %v1177
    %v1179 = vpop.f32.mrb[0].mxu0
    %v1180 = vadd.f32 %v967, %v1179
    %v1181 = vpop.f32.mrb[0].mxu0
    %v1182 = vadd.f32 %v969, %v1181
    %1183 = vmatprep.mubr.f32.mxu0 0.0
    %v1184 = vand.u32 %v116, 4294901760
    %1185 = vmatmul.mubr.f32.gmra.mrb[0].mxu0 %v1184
    %v1186 = vpop.f32.mrb[0].mxu0
    %v1187 = vadd.f32 %v976, %v1186
    %v1188 = vpop.f32.mrb[0].mxu0
    %v1189 = vadd.f32 %v978, %v1188
    %1190 = vmatprep.mubr.f32.mxu0 0.0
    %v1191 = vand.u32 %v119, 4294901760
    %1192 = vmatmul.mubr.f32.gmra.mrb[0].mxu0 %v1191
    %v1193 = vpop.f32.mrb[0].mxu0
    %v1194 = vadd.f32 %v985, %v1193
    %v1195 = vpop.f32.mrb[0].mxu0
    %v1196 = vadd.f32 %v987, %v1195
    %1197 = vmatprep.mubr.f32.mxu0 0.0
    %v1198 = vand.u32 %v122, 4294901760
    %1199 = vmatmul.mubr.f32.gmra.mrb[0].mxu0 %v1198
    %v1200 = vpop.f32.mrb[0].mxu0
    %v1201 = vadd.f32 %v994, %v1200
    %v1202 = vpop.f32.mrb[0].mxu0
    %v1203 = vadd.f32 %v996, %v1202
    %1204 = vmatprep.mubr.f32.mxu0 0.0
    %v1205 = vand.u32 %v125, 4294901760
    %1206 = vmatmul.mubr.f32.gmra.mrb[0].mxu0 %v1205
    %v1207 = vpop.f32.mrb[0].mxu0
    %v1208 = vadd.f32 %v1003, %v1207
    %v1209 = vpop.f32.mrb[0].mxu0
    %v1210 = vadd.f32 %v1005, %v1209
    %1211 = vmatprep.mubr.f32.mxu0 0.0
    %v1212 = vand.u32 %v128, 4294901760
    %1213 = vmatmul.mubr.f32.gmra.mrb[0].mxu0 %v1212
    %v1214 = vpop.f32.mrb[0].mxu0
    %v1215 = vadd.f32 %v1012, %v1214
    %v1216 = vpop.f32.mrb[0].mxu0
    %v1217 = vadd.f32 %v1014, %v1216
    %1218 = vmatprep.mubr.f32.mxu0 0.0
    %v1219 = vand.u32 %v131, 4294901760
    %1220 = vmatmul.mubr.f32.gmra.mrb[0].mxu0 %v1219
    %v1221 = vpop.f32.mrb[0].mxu0
    %v1222 = vadd.f32 %v1021, %v1221
    %v1223 = vpop.f32.mrb[0].mxu0
    %v1224 = vadd.f32 %v1023, %v1223
    %1225 = vdwg.mxu0
    %v1226 = vand.u32 %v65, 4294901760
    %1227 = vmatprep.subr.mxu0 %v1226
    %v1228 = vand.u32 %v64, 4294901760
    %1229 = vmatpush1.msra.mxu0 %v1228
    %v1230 = vand.u32 %v67, 4294901760
    %1231 = vmatprep.subr.mxu0 %v1230
    %v1232 = vand.u32 %v66, 4294901760
    %1233 = vmatpush1.msra.mxu0 %v1232
    %v1234 = vand.u32 %v69, 4294901760
    %1235 = vmatprep.subr.mxu0 %v1234
    %v1236 = vand.u32 %v68, 4294901760
    %1237 = vmatpush1.msra.mxu0 %v1236
    %v1238 = vand.u32 %v71, 4294901760
    %1239 = vmatprep.subr.mxu0 %v1238
    %v1240 = vand.u32 %v70, 4294901760
    %1241 = vmatpush1.msra.mxu0 %v1240
    %1242 = vmatprep.subr.mxu0 0.0
    %1243 = vmatpush1.msra.mxu0 0.0
    %1244 = vmatprep.subr.mxu0 0.0
    %1245 = vmatpush1.msra.mxu0 0.0
    %1246 = vmatprep.subr.mxu0 0.0
    %1247 = vmatpush1.msra.mxu0 0.0
    %1248 = vmatprep.subr.mxu0 0.0
    %1249 = vmatpush1.msra.mxu0 0.0
    %1250 = vmatprep.subr.mxu0 0.0
    %1251 = vmatpush1.msra.mxu0 0.0
    %1252 = vmatprep.subr.mxu0 0.0
    %1253 = vmatpush1.msra.mxu0 0.0
    %1254 = vmatprep.subr.mxu0 0.0
    %1255 = vmatpush1.msra.mxu0 0.0
    %1256 = vmatprep.subr.mxu0 0.0
    %1257 = vmatpush1.msra.mxu0 0.0
    %1258 = vmatprep.subr.mxu0 0.0
    %1259 = vmatpush1.msra.mxu0 0.0
    %1260 = vmatprep.subr.mxu0 0.0
    %1261 = vmatpush1.msra.mxu0 0.0
    %1262 = vmatprep.subr.mxu0 0.0
    %1263 = vmatpush1.msra.mxu0 0.0
    %1264 = vmatprep.subr.mxu0 0.0
    %1265 = vmatpush1.msra.mxu0 0.0
    %1266 = vmatprep.subr.mxu0 0.0
    %1267 = vmatpush1.msra.mxu0 0.0
    %1268 = vmatprep.subr.mxu0 0.0
    %1269 = vmatpush1.msra.mxu0 0.0
    %1270 = vmatprep.subr.mxu0 0.0
    %1271 = vmatpush1.msra.mxu0 0.0
    %1272 = vmatprep.subr.mxu0 0.0
    %1273 = vmatpush1.msra.mxu0 0.0
    %1274 = vmatprep.subr.mxu0 0.0
    %1275 = vmatpush1.msra.mxu0 0.0
    %1276 = vmatprep.subr.mxu0 0.0
    %1277 = vmatpush1.msra.mxu0 0.0
    %1278 = vmatprep.subr.mxu0 0.0
    %1279 = vmatpush1.msra.mxu0 0.0
    %1280 = vmatprep.subr.mxu0 0.0
    %1281 = vmatpush1.msra.mxu0 0.0
    %1282 = vmatprep.subr.mxu0 0.0
    %1283 = vmatpush1.msra.mxu0 0.0
    %1284 = vmatprep.subr.mxu0 0.0
    %1285 = vmatpush1.msra.mxu0 0.0
    %1286 = vmatprep.subr.mxu0 0.0
    %1287 = vmatpush1.msra.mxu0 0.0
    %1288 = vmatprep.subr.mxu0 0.0
    %1289 = vmatpush1.msra.mxu0 0.0
    %1290 = vmatprep.subr.mxu0 0.0
    %1291 = vmatpush1.msra.mxu0 0.0
    %1292 = vmatprep.subr.mxu0 0.0
    %1293 = vmatpush1.msra.mxu0 0.0
    %1294 = vmatprep.subr.mxu0 0.0
    %1295 = vmatpush1.msra.mxu0 0.0
    %1296 = vmatprep.subr.mxu0 0.0
    %1297 = vmatpush1.msra.mxu0 0.0
    %1298 = vmatprep.mubr.f32.mxu0 0.0
    %v1299 = vand.u32 %v86, 4294901760
    %1300 = vmatmul.mubr.f32.gmra.mrb[0].mxu0 %v1299
    %v1301 = vpop.f32.mrb[0].mxu0
    %v1302 = vadd.f32 %v1117, %v1301
    %v1303 = vpop.f32.mrb[0].mxu0
    %v1304 = vadd.f32 %v1119, %v1303
    %1305 = vmatprep.mubr.f32.mxu0 0.0
    %v1306 = vand.u32 %v89, 4294901760
    %1307 = vmatmul.mubr.f32.gmra.mrb[0].mxu0 %v1306
    %v1308 = vpop.f32.mrb[0].mxu0
    %v1309 = vadd.f32 %v1124, %v1308
    %v1310 = vpop.f32.mrb[0].mxu0
    %v1311 = vadd.f32 %v1126, %v1310
    %1312 = vmatprep.mubr.f32.mxu0 0.0
    %v1313 = vand.u32 %v92, 4294901760
    %1314 = vmatmul.mubr.f32.gmra.mrb[0].mxu0 %v1313
    %v1315 = vpop.f32.mrb[0].mxu0
    %v1316 = vadd.f32 %v1131, %v1315
    %v1317 = vpop.f32.mrb[0].mxu0
    %v1318 = vadd.f32 %v1133, %v1317
    %1319 = vmatprep.mubr.f32.mxu0 0.0
    %v1320 = vand.u32 %v95, 4294901760
    %1321 = vmatmul.mubr.f32.gmra.mrb[0].mxu0 %v1320
    %v1322 = vpop.f32.mrb[0].mxu0
    %v1323 = vadd.f32 %v1138, %v1322
    %v1324 = vpop.f32.mrb[0].mxu0
    %v1325 = vadd.f32 %v1140, %v1324
    %1326 = vmatprep.mubr.f32.mxu0 0.0
    %v1327 = vand.u32 %v98, 4294901760
    %1328 = vmatmul.mubr.f32.gmra.mrb[0].mxu0 %v1327
    %v1329 = vpop.f32.mrb[0].mxu0
    %v1330 = vadd.f32 %v1145, %v1329
    %v1331 = vpop.f32.mrb[0].mxu0
    %v1332 = vadd.f32 %v1147, %v1331
    %1333 = vmatprep.mubr.f32.mxu0 0.0
    %v1334 = vand.u32 %v101, 4294901760
    %1335 = vmatmul.mubr.f32.gmra.mrb[0].mxu0 %v1334
    %v1336 = vpop.f32.mrb[0].mxu0
    %v1337 = vadd.f32 %v1152, %v1336
    %v1338 = vpop.f32.mrb[0].mxu0
    %v1339 = vadd.f32 %v1154, %v1338
    %1340 = vmatprep.mubr.f32.mxu0 0.0
    %v1341 = vand.u32 %v104, 4294901760
    %1342 = vmatmul.mubr.f32.gmra.mrb[0].mxu0 %v1341
    %v1343 = vpop.f32.mrb[0].mxu0
    %v1344 = vadd.f32 %v1159, %v1343
    %v1345 = vpop.f32.mrb[0].mxu0
    %v1346 = vadd.f32 %v1161, %v1345
    %1347 = vmatprep.mubr.f32.mxu0 0.0
    %v1348 = vand.u32 %v107, 4294901760
    %1349 = vmatmul.mubr.f32.gmra.mrb[0].mxu0 %v1348
    %v1350 = vpop.f32.mrb[0].mxu0
    %v1351 = vadd.f32 %v1166, %v1350
    %v1352 = vpop.f32.mrb[0].mxu0
    %v1353 = vadd.f32 %v1168, %v1352
    %1354 = vmatprep.mubr.f32.mxu0 0.0
    %v1355 = vand.u32 %v110, 4294901760
    %1356 = vmatmul.mubr.f32.gmra.mrb[0].mxu0 %v1355
    %v1357 = vpop.f32.mrb[0].mxu0
    %v1358 = vadd.f32 %v1173, %v1357
    %v1359 = vpop.f32.mrb[0].mxu0
    %v1360 = vadd.f32 %v1175, %v1359
    %1361 = vmatprep.mubr.f32.mxu0 0.0
    %v1362 = vand.u32 %v113, 4294901760
    %1363 = vmatmul.mubr.f32.gmra.mrb[0].mxu0 %v1362
    %v1364 = vpop.f32.mrb[0].mxu0
    %v1365 = vadd.f32 %v1180, %v1364
    %v1366 = vpop.f32.mrb[0].mxu0
    %v1367 = vadd.f32 %v1182, %v1366
    %1368 = vmatprep.mubr.f32.mxu0 0.0
    %v1369 = vand.u32 %v116, 4294901760
    %1370 = vmatmul.mubr.f32.gmra.mrb[0].mxu0 %v1369
    %v1371 = vpop.f32.mrb[0].mxu0
    %v1372 = vadd.f32 %v1187, %v1371
    %v1373 = vpop.f32.mrb[0].mxu0
    %v1374 = vadd.f32 %v1189, %v1373
    %1375 = vmatprep.mubr.f32.mxu0 0.0
    %v1376 = vand.u32 %v119, 4294901760
    %1377 = vmatmul.mubr.f32.gmra.mrb[0].mxu0 %v1376
    %v1378 = vpop.f32.mrb[0].mxu0
    %v1379 = vadd.f32 %v1194, %v1378
    %v1380 = vpop.f32.mrb[0].mxu0
    %v1381 = vadd.f32 %v1196, %v1380
    %1382 = vmatprep.mubr.f32.mxu0 0.0
    %v1383 = vand.u32 %v122, 4294901760
    %1384 = vmatmul.mubr.f32.gmra.mrb[0].mxu0 %v1383
    %v1385 = vpop.f32.mrb[0].mxu0
    %v1386 = vadd.f32 %v1201, %v1385
    %v1387 = vpop.f32.mrb[0].mxu0
    %v1388 = vadd.f32 %v1203, %v1387
    %1389 = vmatprep.mubr.f32.mxu0 0.0
    %v1390 = vand.u32 %v125, 4294901760
    %1391 = vmatmul.mubr.f32.gmra.mrb[0].mxu0 %v1390
    %v1392 = vpop.f32.mrb[0].mxu0
    %v1393 = vadd.f32 %v1208, %v1392
    %v1394 = vpop.f32.mrb[0].mxu0
    %v1395 = vadd.f32 %v1210, %v1394
    %1396 = vmatprep.mubr.f32.mxu0 0.0
    %v1397 = vand.u32 %v128, 4294901760
    %1398 = vmatmul.mubr.f32.gmra.mrb[0].mxu0 %v1397
    %v1399 = vpop.f32.mrb[0].mxu0
    %v1400 = vadd.f32 %v1215, %v1399
    %v1401 = vpop.f32.mrb[0].mxu0
    %v1402 = vadd.f32 %v1217, %v1401
    %1403 = vmatprep.mubr.f32.mxu0 0.0
    %v1404 = vand.u32 %v131, 4294901760
    %1405 = vmatmul.mubr.f32.gmra.mrb[0].mxu0 %v1404
    %v1406 = vpop.f32.mrb[0].mxu0
    %v1407 = vadd.f32 %v1222, %v1406
    %v1408 = vpop.f32.mrb[0].mxu0
    %v1409 = vadd.f32 %v1224, %v1408
    %1410 = vdwg.mxu0
    %v1411 = vmax.f32 %v1302, 0.0
    %v1412 = vmax.f32 %v1304, 0.0
    %v1413 = vmax.f32 %v1309, 0.0
    %v1414 = vmax.f32 %v1311, 0.0
    %v1415 = vmax.f32 %v1316, 0.0
    %v1416 = vmax.f32 %v1318, 0.0
    %v1417 = vmax.f32 %v1323, 0.0
    %v1418 = vmax.f32 %v1325, 0.0
    %v1419 = vmax.f32 %v1330, 0.0
    %v1420 = vmax.f32 %v1332, 0.0
    %v1421 = vmax.f32 %v1337, 0.0
    %v1422 = vmax.f32 %v1339, 0.0
    %v1423 = vmax.f32 %v1344, 0.0
    %v1424 = vmax.f32 %v1346, 0.0
    %v1425 = vmax.f32 %v1351, 0.0
    %v1426 = vmax.f32 %v1353, 0.0
    %v1427 = vmax.f32 %v1358, 0.0
    %v1428 = vmax.f32 %v1360, 0.0
    %v1429 = vmax.f32 %v1365, 0.0
    %v1430 = vmax.f32 %v1367, 0.0
    %v1431 = vmax.f32 %v1372, 0.0
    %v1432 = vmax.f32 %v1374, 0.0
    %v1433 = vmax.f32 %v1379, 0.0
    %v1434 = vmax.f32 %v1381, 0.0
    %v1435 = vmax.f32 %v1386, 0.0
    %v1436 = vmax.f32 %v1388, 0.0
    %v1437 = vmax.f32 %v1393, 0.0
    %v1438 = vmax.f32 %v1395, 0.0
    %v1439 = vmax.f32 %v1400, 0.0
    %v1440 = vmax.f32 %v1402, 0.0
    %v1441 = vmax.f32 %v1407, 0.0
    %v1442 = vmax.f32 %v1409, 0.0
    %v1443 = vld [vmem:[%s3] sm:$0xff]
    %v1444 = vld [vmem:[%s3 + $0x8] sm:$0xff]
    %v1445 = vld [vmem:[%s3 + $0x10] sm:$0xff]
    %v1446 = vld [vmem:[%s3 + $0x18] sm:$0xff]
    %v1447 = vld [vmem:[%s3 + $0x20] sm:$0xff]
    %v1448 = vld [vmem:[%s3 + $0x28] sm:$0xff]
    %v1449 = vld [vmem:[%s3 + $0x30] sm:$0xff]
    %v1450 = vld [vmem:[%s3 + $0x38] sm:$0xff]
    %v1451 = vld [vmem:[%s3 + $0x40] sm:$0xff]
    %v1452 = vld [vmem:[%s3 + $0x48] sm:$0xff]
    %v1453 = vld [vmem:[%s3 + $0x50] sm:$0xff]
    %v1454 = vld [vmem:[%s3 + $0x58] sm:$0xff]
    %v1455 = vld [vmem:[%s3 + $0x60] sm:$0xff]
    %v1456 = vld [vmem:[%s3 + $0x68] sm:$0xff]
    %v1457 = vld [vmem:[%s3 + $0x70] sm:$0xff]
    %v1458 = vld [vmem:[%s3 + $0x78] sm:$0xff]
    %v1459 = vld [vmem:[%s3 + $0x80] sm:$0xff]
    %v1460 = vld [vmem:[%s3 + $0x88] sm:$0xff]
    %v1461 = vld [vmem:[%s3 + $0x90] sm:$0xff]
    %v1462 = vld [vmem:[%s3 + $0x98] sm:$0xff]
    %v1463 = vld [vmem:[%s3 + $0xa0] sm:$0xff]
    %v1464 = vld [vmem:[%s3 + $0xa8] sm:$0xff]
    %v1465 = vld [vmem:[%s3 + $0xb0] sm:$0xff]
    %v1466 = vld [vmem:[%s3 + $0xb8] sm:$0xff]
    %v1467 = vld [vmem:[%s3 + $0xc0] sm:$0xff]
    %v1468 = vld [vmem:[%s3 + $0xc8] sm:$0xff]
    %v1469 = vld [vmem:[%s3 + $0xd0] sm:$0xff]
    %v1470 = vld [vmem:[%s3 + $0xd8] sm:$0xff]
    %v1471 = vld [vmem:[%s3 + $0xe0] sm:$0xff]
    %v1472 = vld [vmem:[%s3 + $0xe8] sm:$0xff]
    %v1473 = vld [vmem:[%s3 + $0xf0] sm:$0xff]
    %v1474 = vld [vmem:[%s3 + $0xf8] sm:$0xff]
    %v1475 = vld [vmem:[%s4] sm:$0x1]
    %v1477 = vlaneseq
    %v1478 = vshrl.u32 %v1477, 7
    %v1479 = vsub.s32 0, %v1478
    %v1480 = vrot.slane %v1475, %v1479
    %1482 = vmatprep.subr.mxu0 0.0
    %v1483 = vand.u32 %v1443, 4294901760
    %1484 = vmatpush1.msra.mxu0 %v1483
    %1485 = vmatprep.subr.mxu0 0.0
    %v1486 = vand.u32 %v1444, 4294901760
    %1487 = vmatpush1.msra.mxu0 %v1486
    %1488 = vmatprep.subr.mxu0 0.0
    %v1489 = vand.u32 %v1445, 4294901760
    %1490 = vmatpush1.msra.mxu0 %v1489
    %1491 = vmatprep.subr.mxu0 0.0
    %v1492 = vand.u32 %v1446, 4294901760
    %1493 = vmatpush1.msra.mxu0 %v1492
    %1494 = vmatprep.subr.mxu0 0.0
    %v1495 = vand.u32 %v1447, 4294901760
    %1496 = vmatpush1.msra.mxu0 %v1495
    %1497 = vmatprep.subr.mxu0 0.0
    %v1498 = vand.u32 %v1448, 4294901760
    %1499 = vmatpush1.msra.mxu0 %v1498
    %1500 = vmatprep.subr.mxu0 0.0
    %v1501 = vand.u32 %v1449, 4294901760
    %1502 = vmatpush1.msra.mxu0 %v1501
    %1503 = vmatprep.subr.mxu0 0.0
    %v1504 = vand.u32 %v1450, 4294901760
    %1505 = vmatpush1.msra.mxu0 %v1504
    %1506 = vmatprep.subr.mxu0 0.0
    %v1507 = vand.u32 %v1451, 4294901760
    %1508 = vmatpush1.msra.mxu0 %v1507
    %1509 = vmatprep.subr.mxu0 0.0
    %v1510 = vand.u32 %v1452, 4294901760
    %1511 = vmatpush1.msra.mxu0 %v1510
    %1512 = vmatprep.subr.mxu0 0.0
    %v1513 = vand.u32 %v1453, 4294901760
    %1514 = vmatpush1.msra.mxu0 %v1513
    %1515 = vmatprep.subr.mxu0 0.0
    %v1516 = vand.u32 %v1454, 4294901760
    %1517 = vmatpush1.msra.mxu0 %v1516
    %1518 = vmatprep.subr.mxu0 0.0
    %v1519 = vand.u32 %v1455, 4294901760
    %1520 = vmatpush1.msra.mxu0 %v1519
    %1521 = vmatprep.subr.mxu0 0.0
    %v1522 = vand.u32 %v1456, 4294901760
    %1523 = vmatpush1.msra.mxu0 %v1522
    %1524 = vmatprep.subr.mxu0 0.0
    %v1525 = vand.u32 %v1457, 4294901760
    %1526 = vmatpush1.msra.mxu0 %v1525
    %1527 = vmatprep.subr.mxu0 0.0
    %v1528 = vand.u32 %v1458, 4294901760
    %1529 = vmatpush1.msra.mxu0 %v1528
    %1530 = vmatprep.subr.mxu0 0.0
    %v1531 = vand.u32 %v1459, 4294901760
    %1532 = vmatpush1.msra.mxu0 %v1531
    %1533 = vmatprep.subr.mxu0 0.0
    %v1534 = vand.u32 %v1460, 4294901760
    %1535 = vmatpush1.msra.mxu0 %v1534
    %1536 = vmatprep.subr.mxu0 0.0
    %v1537 = vand.u32 %v1461, 4294901760
    %1538 = vmatpush1.msra.mxu0 %v1537
    %1539 = vmatprep.subr.mxu0 0.0
    %v1540 = vand.u32 %v1462, 4294901760
    %1541 = vmatpush1.msra.mxu0 %v1540
    %1542 = vmatprep.subr.mxu0 0.0
    %v1543 = vand.u32 %v1463, 4294901760
    %1544 = vmatpush1.msra.mxu0 %v1543
    %1545 = vmatprep.subr.mxu0 0.0
    %v1546 = vand.u32 %v1464, 4294901760
    %1547 = vmatpush1.msra.mxu0 %v1546
    %1548 = vmatprep.subr.mxu0 0.0
    %v1549 = vand.u32 %v1465, 4294901760
    %1550 = vmatpush1.msra.mxu0 %v1549
    %1551 = vmatprep.subr.mxu0 0.0
    %v1552 = vand.u32 %v1466, 4294901760
    %1553 = vmatpush1.msra.mxu0 %v1552
    %1554 = vmatprep.subr.mxu0 0.0
    %v1555 = vand.u32 %v1467, 4294901760
    %1556 = vmatpush1.msra.mxu0 %v1555
    %1557 = vmatprep.subr.mxu0 0.0
    %v1558 = vand.u32 %v1468, 4294901760
    %1559 = vmatpush1.msra.mxu0 %v1558
    %1560 = vmatprep.subr.mxu0 0.0
    %v1561 = vand.u32 %v1469, 4294901760
    %1562 = vmatpush1.msra.mxu0 %v1561
    %1563 = vmatprep.subr.mxu0 0.0
    %v1564 = vand.u32 %v1470, 4294901760
    %1565 = vmatpush1.msra.mxu0 %v1564
    %1566 = vmatprep.subr.mxu0 0.0
    %v1567 = vand.u32 %v1471, 4294901760
    %1568 = vmatpush1.msra.mxu0 %v1567
    %1569 = vmatprep.subr.mxu0 0.0
    %v1570 = vand.u32 %v1472, 4294901760
    %1571 = vmatpush1.msra.mxu0 %v1570
    %1572 = vmatprep.subr.mxu0 0.0
    %v1573 = vand.u32 %v1473, 4294901760
    %1574 = vmatpush1.msra.mxu0 %v1573
    %1575 = vmatprep.subr.mxu0 0.0
    %v1576 = vand.u32 %v1474, 4294901760
    %1577 = vmatpush1.msra.mxu0 %v1576
    %v1578 = vand.u32 %v1412, 4294901760
    %v1579 = vsub.f32 %v1412, %v1578
    %v1580 = vand.u32 %v1579, 4294901760
    %v1581 = vsub.f32 %v1579, %v1580
    %v1582 = vand.u32 %v1581, 4294901760
    %1583 = vmatprep.mubr.f32.mxu0 %v1582
    %v1584 = vand.u32 %v1411, 4294901760
    %v1585 = vsub.f32 %v1411, %v1584
    %v1586 = vand.u32 %v1585, 4294901760
    %v1587 = vsub.f32 %v1585, %v1586
    %v1588 = vand.u32 %v1587, 4294901760
    %1589 = vmatmul.mubr.f32.gmra.mrb[0].mxu0 %v1588
    %v1590 = vpop.f32.mrb[0].mxu0
    %v1591 = vadd.f32 %v1480, %v1590
    %v1592 = vpop.f32.mrb[0].mxu0
    %v1593 = vand.u32 %v1414, 4294901760
    %v1594 = vsub.f32 %v1414, %v1593
    %v1595 = vand.u32 %v1594, 4294901760
    %v1596 = vsub.f32 %v1594, %v1595
    %v1597 = vand.u32 %v1596, 4294901760
    %1598 = vmatprep.mubr.f32.mxu0 %v1597
    %v1599 = vand.u32 %v1413, 4294901760
    %v1600 = vsub.f32 %v1413, %v1599
    %v1601 = vand.u32 %v1600, 4294901760
    %v1602 = vsub.f32 %v1600, %v1601
    %v1603 = vand.u32 %v1602, 4294901760
    %1604 = vmatmul.mubr.f32.gmra.mrb[0].mxu0 %v1603
    %v1605 = vpop.f32.mrb[0].mxu0
    %v1606 = vadd.f32 %v1480, %v1605
    %v1607 = vpop.f32.mrb[0].mxu0
    %v1608 = vand.u32 %v1416, 4294901760
    %v1609 = vsub.f32 %v1416, %v1608
    %v1610 = vand.u32 %v1609, 4294901760
    %v1611 = vsub.f32 %v1609, %v1610
    %v1612 = vand.u32 %v1611, 4294901760
    %1613 = vmatprep.mubr.f32.mxu0 %v1612
    %v1614 = vand.u32 %v1415, 4294901760
    %v1615 = vsub.f32 %v1415, %v1614
    %v1616 = vand.u32 %v1615, 4294901760
    %v1617 = vsub.f32 %v1615, %v1616
    %v1618 = vand.u32 %v1617, 4294901760
    %1619 = vmatmul.mubr.f32.gmra.mrb[0].mxu0 %v1618
    %v1620 = vpop.f32.mrb[0].mxu0
    %v1621 = vadd.f32 %v1480, %v1620
    %v1622 = vpop.f32.mrb[0].mxu0
    %v1623 = vand.u32 %v1418, 4294901760
    %v1624 = vsub.f32 %v1418, %v1623
    %v1625 = vand.u32 %v1624, 4294901760
    %v1626 = vsub.f32 %v1624, %v1625
    %v1627 = vand.u32 %v1626, 4294901760
    %1628 = vmatprep.mubr.f32.mxu0 %v1627
    %v1629 = vand.u32 %v1417, 4294901760
    %v1630 = vsub.f32 %v1417, %v1629
    %v1631 = vand.u32 %v1630, 4294901760
    %v1632 = vsub.f32 %v1630, %v1631
    %v1633 = vand.u32 %v1632, 4294901760
    %1634 = vmatmul.mubr.f32.gmra.mrb[0].mxu0 %v1633
    %v1635 = vpop.f32.mrb[0].mxu0
    %v1636 = vadd.f32 %v1480, %v1635
    %v1637 = vpop.f32.mrb[0].mxu0
    %v1638 = vand.u32 %v1420, 4294901760
    %v1639 = vsub.f32 %v1420, %v1638
    %v1640 = vand.u32 %v1639, 4294901760
    %v1641 = vsub.f32 %v1639, %v1640
    %v1642 = vand.u32 %v1641, 4294901760
    %1643 = vmatprep.mubr.f32.mxu0 %v1642
    %v1644 = vand.u32 %v1419, 4294901760
    %v1645 = vsub.f32 %v1419, %v1644
    %v1646 = vand.u32 %v1645, 4294901760
    %v1647 = vsub.f32 %v1645, %v1646
    %v1648 = vand.u32 %v1647, 4294901760
    %1649 = vmatmul.mubr.f32.gmra.mrb[0].mxu0 %v1648
    %v1650 = vpop.f32.mrb[0].mxu0
    %v1651 = vadd.f32 %v1480, %v1650
    %v1652 = vpop.f32.mrb[0].mxu0
    %v1653 = vand.u32 %v1422, 4294901760
    %v1654 = vsub.f32 %v1422, %v1653
    %v1655 = vand.u32 %v1654, 4294901760
    %v1656 = vsub.f32 %v1654, %v1655
    %v1657 = vand.u32 %v1656, 4294901760
    %1658 = vmatprep.mubr.f32.mxu0 %v1657
    %v1659 = vand.u32 %v1421, 4294901760
    %v1660 = vsub.f32 %v1421, %v1659
    %v1661 = vand.u32 %v1660, 4294901760
    %v1662 = vsub.f32 %v1660, %v1661
    %v1663 = vand.u32 %v1662, 4294901760
    %1664 = vmatmul.mubr.f32.gmra.mrb[0].mxu0 %v1663
    %v1665 = vpop.f32.mrb[0].mxu0
    %v1666 = vadd.f32 %v1480, %v1665
    %v1667 = vpop.f32.mrb[0].mxu0
    %v1668 = vand.u32 %v1424, 4294901760
    %v1669 = vsub.f32 %v1424, %v1668
    %v1670 = vand.u32 %v1669, 4294901760
    %v1671 = vsub.f32 %v1669, %v1670
    %v1672 = vand.u32 %v1671, 4294901760
    %1673 = vmatprep.mubr.f32.mxu0 %v1672
    %v1674 = vand.u32 %v1423, 4294901760
    %v1675 = vsub.f32 %v1423, %v1674
    %v1676 = vand.u32 %v1675, 4294901760
    %v1677 = vsub.f32 %v1675, %v1676
    %v1678 = vand.u32 %v1677, 4294901760
    %1679 = vmatmul.mubr.f32.gmra.mrb[0].mxu0 %v1678
    %v1680 = vpop.f32.mrb[0].mxu0
    %v1681 = vadd.f32 %v1480, %v1680
    %v1682 = vpop.f32.mrb[0].mxu0
    %v1683 = vand.u32 %v1426, 4294901760
    %v1684 = vsub.f32 %v1426, %v1683
    %v1685 = vand.u32 %v1684, 4294901760
    %v1686 = vsub.f32 %v1684, %v1685
    %v1687 = vand.u32 %v1686, 4294901760
    %1688 = vmatprep.mubr.f32.mxu0 %v1687
    %v1689 = vand.u32 %v1425, 4294901760
    %v1690 = vsub.f32 %v1425, %v1689
    %v1691 = vand.u32 %v1690, 4294901760
    %v1692 = vsub.f32 %v1690, %v1691
    %v1693 = vand.u32 %v1692, 4294901760
    %1694 = vmatmul.mubr.f32.gmra.mrb[0].mxu0 %v1693
    %v1695 = vpop.f32.mrb[0].mxu0
    %v1696 = vadd.f32 %v1480, %v1695
    %v1697 = vpop.f32.mrb[0].mxu0
    %v1698 = vand.u32 %v1428, 4294901760
    %v1699 = vsub.f32 %v1428, %v1698
    %v1700 = vand.u32 %v1699, 4294901760
    %v1701 = vsub.f32 %v1699, %v1700
    %v1702 = vand.u32 %v1701, 4294901760
    %1703 = vmatprep.mubr.f32.mxu0 %v1702
    %v1704 = vand.u32 %v1427, 4294901760
    %v1705 = vsub.f32 %v1427, %v1704
    %v1706 = vand.u32 %v1705, 4294901760
    %v1707 = vsub.f32 %v1705, %v1706
    %v1708 = vand.u32 %v1707, 4294901760
    %1709 = vmatmul.mubr.f32.gmra.mrb[0].mxu0 %v1708
    %v1710 = vpop.f32.mrb[0].mxu0
    %v1711 = vadd.f32 %v1480, %v1710
    %v1712 = vpop.f32.mrb[0].mxu0
    %v1713 = vand.u32 %v1430, 4294901760
    %v1714 = vsub.f32 %v1430, %v1713
    %v1715 = vand.u32 %v1714, 4294901760
    %v1716 = vsub.f32 %v1714, %v1715
    %v1717 = vand.u32 %v1716, 4294901760
    %1718 = vmatprep.mubr.f32.mxu0 %v1717
    %v1719 = vand.u32 %v1429, 4294901760
    %v1720 = vsub.f32 %v1429, %v1719
    %v1721 = vand.u32 %v1720, 4294901760
    %v1722 = vsub.f32 %v1720, %v1721
    %v1723 = vand.u32 %v1722, 4294901760
    %1724 = vmatmul.mubr.f32.gmra.mrb[0].mxu0 %v1723
    %v1725 = vpop.f32.mrb[0].mxu0
    %v1726 = vadd.f32 %v1480, %v1725
    %v1727 = vpop.f32.mrb[0].mxu0
    %v1728 = vand.u32 %v1432, 4294901760
    %v1729 = vsub.f32 %v1432, %v1728
    %v1730 = vand.u32 %v1729, 4294901760
    %v1731 = vsub.f32 %v1729, %v1730
    %v1732 = vand.u32 %v1731, 4294901760
    %1733 = vmatprep.mubr.f32.mxu0 %v1732
    %v1734 = vand.u32 %v1431, 4294901760
    %v1735 = vsub.f32 %v1431, %v1734
    %v1736 = vand.u32 %v1735, 4294901760
    %v1737 = vsub.f32 %v1735, %v1736
    %v1738 = vand.u32 %v1737, 4294901760
    %1739 = vmatmul.mubr.f32.gmra.mrb[0].mxu0 %v1738
    %v1740 = vpop.f32.mrb[0].mxu0
    %v1741 = vadd.f32 %v1480, %v1740
    %v1742 = vpop.f32.mrb[0].mxu0
    %v1743 = vand.u32 %v1434, 4294901760
    %v1744 = vsub.f32 %v1434, %v1743
    %v1745 = vand.u32 %v1744, 4294901760
    %v1746 = vsub.f32 %v1744, %v1745
    %v1747 = vand.u32 %v1746, 4294901760
    %1748 = vmatprep.mubr.f32.mxu0 %v1747
    %v1749 = vand.u32 %v1433, 4294901760
    %v1750 = vsub.f32 %v1433, %v1749
    %v1751 = vand.u32 %v1750, 4294901760
    %v1752 = vsub.f32 %v1750, %v1751
    %v1753 = vand.u32 %v1752, 4294901760
    %1754 = vmatmul.mubr.f32.gmra.mrb[0].mxu0 %v1753
    %v1755 = vpop.f32.mrb[0].mxu0
    %v1756 = vadd.f32 %v1480, %v1755
    %v1757 = vpop.f32.mrb[0].mxu0
    %v1758 = vand.u32 %v1436, 4294901760
    %v1759 = vsub.f32 %v1436, %v1758
    %v1760 = vand.u32 %v1759, 4294901760
    %v1761 = vsub.f32 %v1759, %v1760
    %v1762 = vand.u32 %v1761, 4294901760
    %1763 = vmatprep.mubr.f32.mxu0 %v1762
    %v1764 = vand.u32 %v1435, 4294901760
    %v1765 = vsub.f32 %v1435, %v1764
    %v1766 = vand.u32 %v1765, 4294901760
    %v1767 = vsub.f32 %v1765, %v1766
    %v1768 = vand.u32 %v1767, 4294901760
    %1769 = vmatmul.mubr.f32.gmra.mrb[0].mxu0 %v1768
    %v1770 = vpop.f32.mrb[0].mxu0
    %v1771 = vadd.f32 %v1480, %v1770
    %v1772 = vpop.f32.mrb[0].mxu0
    %v1773 = vand.u32 %v1438, 4294901760
    %v1774 = vsub.f32 %v1438, %v1773
    %v1775 = vand.u32 %v1774, 4294901760
    %v1776 = vsub.f32 %v1774, %v1775
    %v1777 = vand.u32 %v1776, 4294901760
    %1778 = vmatprep.mubr.f32.mxu0 %v1777
    %v1779 = vand.u32 %v1437, 4294901760
    %v1780 = vsub.f32 %v1437, %v1779
    %v1781 = vand.u32 %v1780, 4294901760
    %v1782 = vsub.f32 %v1780, %v1781
    %v1783 = vand.u32 %v1782, 4294901760
    %1784 = vmatmul.mubr.f32.gmra.mrb[0].mxu0 %v1783
    %v1785 = vpop.f32.mrb[0].mxu0
    %v1786 = vadd.f32 %v1480, %v1785
    %v1787 = vpop.f32.mrb[0].mxu0
    %v1788 = vand.u32 %v1440, 4294901760
    %v1789 = vsub.f32 %v1440, %v1788
    %v1790 = vand.u32 %v1789, 4294901760
    %v1791 = vsub.f32 %v1789, %v1790
    %v1792 = vand.u32 %v1791, 4294901760
    %1793 = vmatprep.mubr.f32.mxu0 %v1792
    %v1794 = vand.u32 %v1439, 4294901760
    %v1795 = vsub.f32 %v1439, %v1794
    %v1796 = vand.u32 %v1795, 4294901760
    %v1797 = vsub.f32 %v1795, %v1796
    %v1798 = vand.u32 %v1797, 4294901760
    %1799 = vmatmul.mubr.f32.gmra.mrb[0].mxu0 %v1798
    %v1800 = vpop.f32.mrb[0].mxu0
    %v1801 = vadd.f32 %v1480, %v1800
    %v1802 = vpop.f32.mrb[0].mxu0
    %v1803 = vand.u32 %v1442, 4294901760
    %v1804 = vsub.f32 %v1442, %v1803
    %v1805 = vand.u32 %v1804, 4294901760
    %v1806 = vsub.f32 %v1804, %v1805
    %v1807 = vand.u32 %v1806, 4294901760
    %1808 = vmatprep.mubr.f32.mxu0 %v1807
    %v1809 = vand.u32 %v1441, 4294901760
    %v1810 = vsub.f32 %v1441, %v1809
    %v1811 = vand.u32 %v1810, 4294901760
    %v1812 = vsub.f32 %v1810, %v1811
    %v1813 = vand.u32 %v1812, 4294901760
    %1814 = vmatmul.mubr.f32.gmra.mrb[0].mxu0 %v1813
    %v1815 = vpop.f32.mrb[0].mxu0
    %v1816 = vadd.f32 %v1480, %v1815
    %v1817 = vpop.f32.mrb[0].mxu0
    %1818 = vdwg.mxu0
    %1819 = vmatprep.subr.mxu0 0.0
    %v1820 = vand.u32 %v1443, 4294901760
    %v1821 = vsub.f32 %v1443, %v1820
    %v1822 = vand.u32 %v1821, 4294901760
    %v1823 = vsub.f32 %v1821, %v1822
    %v1824 = vand.u32 %v1823, 4294901760
    %1825 = vmatpush1.msra.mxu0 %v1824
    %1826 = vmatprep.subr.mxu0 0.0
    %v1827 = vand.u32 %v1444, 4294901760
    %v1828 = vsub.f32 %v1444, %v1827
    %v1829 = vand.u32 %v1828, 4294901760
    %v1830 = vsub.f32 %v1828, %v1829
    %v1831 = vand.u32 %v1830, 4294901760
    %1832 = vmatpush1.msra.mxu0 %v1831
    %1833 = vmatprep.subr.mxu0 0.0
    %v1834 = vand.u32 %v1445, 4294901760
    %v1835 = vsub.f32 %v1445, %v1834
    %v1836 = vand.u32 %v1835, 4294901760
    %v1837 = vsub.f32 %v1835, %v1836
    %v1838 = vand.u32 %v1837, 4294901760
    %1839 = vmatpush1.msra.mxu0 %v1838
    %1840 = vmatprep.subr.mxu0 0.0
    %v1841 = vand.u32 %v1446, 4294901760
    %v1842 = vsub.f32 %v1446, %v1841
    %v1843 = vand.u32 %v1842, 4294901760
    %v1844 = vsub.f32 %v1842, %v1843
    %v1845 = vand.u32 %v1844, 4294901760
    %1846 = vmatpush1.msra.mxu0 %v1845
    %1847 = vmatprep.subr.mxu0 0.0
    %v1848 = vand.u32 %v1447, 4294901760
    %v1849 = vsub.f32 %v1447, %v1848
    %v1850 = vand.u32 %v1849, 4294901760
    %v1851 = vsub.f32 %v1849, %v1850
    %v1852 = vand.u32 %v1851, 4294901760
    %1853 = vmatpush1.msra.mxu0 %v1852
    %1854 = vmatprep.subr.mxu0 0.0
    %v1855 = vand.u32 %v1448, 4294901760
    %v1856 = vsub.f32 %v1448, %v1855
    %v1857 = vand.u32 %v1856, 4294901760
    %v1858 = vsub.f32 %v1856, %v1857
    %v1859 = vand.u32 %v1858, 4294901760
    %1860 = vmatpush1.msra.mxu0 %v1859
    %1861 = vmatprep.subr.mxu0 0.0
    %v1862 = vand.u32 %v1449, 4294901760
    %v1863 = vsub.f32 %v1449, %v1862
    %v1864 = vand.u32 %v1863, 4294901760
    %v1865 = vsub.f32 %v1863, %v1864
    %v1866 = vand.u32 %v1865, 4294901760
    %1867 = vmatpush1.msra.mxu0 %v1866
    %1868 = vmatprep.subr.mxu0 0.0
    %v1869 = vand.u32 %v1450, 4294901760
    %v1870 = vsub.f32 %v1450, %v1869
    %v1871 = vand.u32 %v1870, 4294901760
    %v1872 = vsub.f32 %v1870, %v1871
    %v1873 = vand.u32 %v1872, 4294901760
    %1874 = vmatpush1.msra.mxu0 %v1873
    %1875 = vmatprep.subr.mxu0 0.0
    %v1876 = vand.u32 %v1451, 4294901760
    %v1877 = vsub.f32 %v1451, %v1876
    %v1878 = vand.u32 %v1877, 4294901760
    %v1879 = vsub.f32 %v1877, %v1878
    %v1880 = vand.u32 %v1879, 4294901760
    %1881 = vmatpush1.msra.mxu0 %v1880
    %1882 = vmatprep.subr.mxu0 0.0
    %v1883 = vand.u32 %v1452, 4294901760
    %v1884 = vsub.f32 %v1452, %v1883
    %v1885 = vand.u32 %v1884, 4294901760
    %v1886 = vsub.f32 %v1884, %v1885
    %v1887 = vand.u32 %v1886, 4294901760
    %1888 = vmatpush1.msra.mxu0 %v1887
    %1889 = vmatprep.subr.mxu0 0.0
    %v1890 = vand.u32 %v1453, 4294901760
    %v1891 = vsub.f32 %v1453, %v1890
    %v1892 = vand.u32 %v1891, 4294901760
    %v1893 = vsub.f32 %v1891, %v1892
    %v1894 = vand.u32 %v1893, 4294901760
    %1895 = vmatpush1.msra.mxu0 %v1894
    %1896 = vmatprep.subr.mxu0 0.0
    %v1897 = vand.u32 %v1454, 4294901760
    %v1898 = vsub.f32 %v1454, %v1897
    %v1899 = vand.u32 %v1898, 4294901760
    %v1900 = vsub.f32 %v1898, %v1899
    %v1901 = vand.u32 %v1900, 4294901760
    %1902 = vmatpush1.msra.mxu0 %v1901
    %1903 = vmatprep.subr.mxu0 0.0
    %v1904 = vand.u32 %v1455, 4294901760
    %v1905 = vsub.f32 %v1455, %v1904
    %v1906 = vand.u32 %v1905, 4294901760
    %v1907 = vsub.f32 %v1905, %v1906
    %v1908 = vand.u32 %v1907, 4294901760
    %1909 = vmatpush1.msra.mxu0 %v1908
    %1910 = vmatprep.subr.mxu0 0.0
    %v1911 = vand.u32 %v1456, 4294901760
    %v1912 = vsub.f32 %v1456, %v1911
    %v1913 = vand.u32 %v1912, 4294901760
    %v1914 = vsub.f32 %v1912, %v1913
    %v1915 = vand.u32 %v1914, 4294901760
    %1916 = vmatpush1.msra.mxu0 %v1915
    %1917 = vmatprep.subr.mxu0 0.0
    %v1918 = vand.u32 %v1457, 4294901760
    %v1919 = vsub.f32 %v1457, %v1918
    %v1920 = vand.u32 %v1919, 4294901760
    %v1921 = vsub.f32 %v1919, %v1920
    %v1922 = vand.u32 %v1921, 4294901760
    %1923 = vmatpush1.msra.mxu0 %v1922
    %1924 = vmatprep.subr.mxu0 0.0
    %v1925 = vand.u32 %v1458, 4294901760
    %v1926 = vsub.f32 %v1458, %v1925
    %v1927 = vand.u32 %v1926, 4294901760
    %v1928 = vsub.f32 %v1926, %v1927
    %v1929 = vand.u32 %v1928, 4294901760
    %1930 = vmatpush1.msra.mxu0 %v1929
    %1931 = vmatprep.subr.mxu0 0.0
    %v1932 = vand.u32 %v1459, 4294901760
    %v1933 = vsub.f32 %v1459, %v1932
    %v1934 = vand.u32 %v1933, 4294901760
    %v1935 = vsub.f32 %v1933, %v1934
    %v1936 = vand.u32 %v1935, 4294901760
    %1937 = vmatpush1.msra.mxu0 %v1936
    %1938 = vmatprep.subr.mxu0 0.0
    %v1939 = vand.u32 %v1460, 4294901760
    %v1940 = vsub.f32 %v1460, %v1939
    %v1941 = vand.u32 %v1940, 4294901760
    %v1942 = vsub.f32 %v1940, %v1941
    %v1943 = vand.u32 %v1942, 4294901760
    %1944 = vmatpush1.msra.mxu0 %v1943
    %1945 = vmatprep.subr.mxu0 0.0
    %v1946 = vand.u32 %v1461, 4294901760
    %v1947 = vsub.f32 %v1461, %v1946
    %v1948 = vand.u32 %v1947, 4294901760
    %v1949 = vsub.f32 %v1947, %v1948
    %v1950 = vand.u32 %v1949, 4294901760
    %1951 = vmatpush1.msra.mxu0 %v1950
    %1952 = vmatprep.subr.mxu0 0.0
    %v1953 = vand.u32 %v1462, 4294901760
    %v1954 = vsub.f32 %v1462, %v1953
    %v1955 = vand.u32 %v1954, 4294901760
    %v1956 = vsub.f32 %v1954, %v1955
    %v1957 = vand.u32 %v1956, 4294901760
    %1958 = vmatpush1.msra.mxu0 %v1957
    %1959 = vmatprep.subr.mxu0 0.0
    %v1960 = vand.u32 %v1463, 4294901760
    %v1961 = vsub.f32 %v1463, %v1960
    %v1962 = vand.u32 %v1961, 4294901760
    %v1963 = vsub.f32 %v1961, %v1962
    %v1964 = vand.u32 %v1963, 4294901760
    %1965 = vmatpush1.msra.mxu0 %v1964
    %1966 = vmatprep.subr.mxu0 0.0
    %v1967 = vand.u32 %v1464, 4294901760
    %v1968 = vsub.f32 %v1464, %v1967
    %v1969 = vand.u32 %v1968, 4294901760
    %v1970 = vsub.f32 %v1968, %v1969
    %v1971 = vand.u32 %v1970, 4294901760
    %1972 = vmatpush1.msra.mxu0 %v1971
    %1973 = vmatprep.subr.mxu0 0.0
    %v1974 = vand.u32 %v1465, 4294901760
    %v1975 = vsub.f32 %v1465, %v1974
    %v1976 = vand.u32 %v1975, 4294901760
    %v1977 = vsub.f32 %v1975, %v1976
    %v1978 = vand.u32 %v1977, 4294901760
    %1979 = vmatpush1.msra.mxu0 %v1978
    %1980 = vmatprep.subr.mxu0 0.0
    %v1981 = vand.u32 %v1466, 4294901760
    %v1982 = vsub.f32 %v1466, %v1981
    %v1983 = vand.u32 %v1982, 4294901760
    %v1984 = vsub.f32 %v1982, %v1983
    %v1985 = vand.u32 %v1984, 4294901760
    %1986 = vmatpush1.msra.mxu0 %v1985
    %1987 = vmatprep.subr.mxu0 0.0
    %v1988 = vand.u32 %v1467, 4294901760
    %v1989 = vsub.f32 %v1467, %v1988
    %v1990 = vand.u32 %v1989, 4294901760
    %v1991 = vsub.f32 %v1989, %v1990
    %v1992 = vand.u32 %v1991, 4294901760
    %1993 = vmatpush1.msra.mxu0 %v1992
    %1994 = vmatprep.subr.mxu0 0.0
    %v1995 = vand.u32 %v1468, 4294901760
    %v1996 = vsub.f32 %v1468, %v1995
    %v1997 = vand.u32 %v1996, 4294901760
    %v1998 = vsub.f32 %v1996, %v1997
    %v1999 = vand.u32 %v1998, 4294901760
    %2000 = vmatpush1.msra.mxu0 %v1999
    %2001 = vmatprep.subr.mxu0 0.0
    %v2002 = vand.u32 %v1469, 4294901760
    %v2003 = vsub.f32 %v1469, %v2002
    %v2004 = vand.u32 %v2003, 4294901760
    %v2005 = vsub.f32 %v2003, %v2004
    %v2006 = vand.u32 %v2005, 4294901760
    %2007 = vmatpush1.msra.mxu0 %v2006
    %2008 = vmatprep.subr.mxu0 0.0
    %v2009 = vand.u32 %v1470, 4294901760
    %v2010 = vsub.f32 %v1470, %v2009
    %v2011 = vand.u32 %v2010, 4294901760
    %v2012 = vsub.f32 %v2010, %v2011
    %v2013 = vand.u32 %v2012, 4294901760
    %2014 = vmatpush1.msra.mxu0 %v2013
    %2015 = vmatprep.subr.mxu0 0.0
    %v2016 = vand.u32 %v1471, 4294901760
    %v2017 = vsub.f32 %v1471, %v2016
    %v2018 = vand.u32 %v2017, 4294901760
    %v2019 = vsub.f32 %v2017, %v2018
    %v2020 = vand.u32 %v2019, 4294901760
    %2021 = vmatpush1.msra.mxu0 %v2020
    %2022 = vmatprep.subr.mxu0 0.0
    %v2023 = vand.u32 %v1472, 4294901760
    %v2024 = vsub.f32 %v1472, %v2023
    %v2025 = vand.u32 %v2024, 4294901760
    %v2026 = vsub.f32 %v2024, %v2025
    %v2027 = vand.u32 %v2026, 4294901760
    %2028 = vmatpush1.msra.mxu0 %v2027
    %2029 = vmatprep.subr.mxu0 0.0
    %v2030 = vand.u32 %v1473, 4294901760
    %v2031 = vsub.f32 %v1473, %v2030
    %v2032 = vand.u32 %v2031, 4294901760
    %v2033 = vsub.f32 %v2031, %v2032
    %v2034 = vand.u32 %v2033, 4294901760
    %2035 = vmatpush1.msra.mxu0 %v2034
    %2036 = vmatprep.subr.mxu0 0.0
    %v2037 = vand.u32 %v1474, 4294901760
    %v2038 = vsub.f32 %v1474, %v2037
    %v2039 = vand.u32 %v2038, 4294901760
    %v2040 = vsub.f32 %v2038, %v2039
    %v2041 = vand.u32 %v2040, 4294901760
    %2042 = vmatpush1.msra.mxu0 %v2041
    %v2043 = vand.u32 %v1412, 4294901760
    %2044 = vmatprep.mubr.f32.mxu0 %v2043
    %v2045 = vand.u32 %v1411, 4294901760
    %2046 = vmatmul.mubr.f32.gmra.mrb[0].mxu0 %v2045
    %v2047 = vpop.f32.mrb[0].mxu0
    %v2048 = vadd.f32 %v1591, %v2047
    %v2049 = vpop.f32.mrb[0].mxu0
    %v2050 = vand.u32 %v1414, 4294901760
    %2051 = vmatprep.mubr.f32.mxu0 %v2050
    %v2052 = vand.u32 %v1413, 4294901760
    %2053 = vmatmul.mubr.f32.gmra.mrb[0].mxu0 %v2052
    %v2054 = vpop.f32.mrb[0].mxu0
    %v2055 = vadd.f32 %v1606, %v2054
    %v2056 = vpop.f32.mrb[0].mxu0
    %v2057 = vand.u32 %v1416, 4294901760
    %2058 = vmatprep.mubr.f32.mxu0 %v2057
    %v2059 = vand.u32 %v1415, 4294901760
    %2060 = vmatmul.mubr.f32.gmra.mrb[0].mxu0 %v2059
    %v2061 = vpop.f32.mrb[0].mxu0
    %v2062 = vadd.f32 %v1621, %v2061
    %v2063 = vpop.f32.mrb[0].mxu0
    %v2064 = vand.u32 %v1418, 4294901760
    %2065 = vmatprep.mubr.f32.mxu0 %v2064
    %v2066 = vand.u32 %v1417, 4294901760
    %2067 = vmatmul.mubr.f32.gmra.mrb[0].mxu0 %v2066
    %v2068 = vpop.f32.mrb[0].mxu0
    %v2069 = vadd.f32 %v1636, %v2068
    %v2070 = vpop.f32.mrb[0].mxu0
    %v2071 = vand.u32 %v1420, 4294901760
    %2072 = vmatprep.mubr.f32.mxu0 %v2071
    %v2073 = vand.u32 %v1419, 4294901760
    %2074 = vmatmul.mubr.f32.gmra.mrb[0].mxu0 %v2073
    %v2075 = vpop.f32.mrb[0].mxu0
    %v2076 = vadd.f32 %v1651, %v2075
    %v2077 = vpop.f32.mrb[0].mxu0
    %v2078 = vand.u32 %v1422, 4294901760
    %2079 = vmatprep.mubr.f32.mxu0 %v2078
    %v2080 = vand.u32 %v1421, 4294901760
    %2081 = vmatmul.mubr.f32.gmra.mrb[0].mxu0 %v2080
    %v2082 = vpop.f32.mrb[0].mxu0
    %v2083 = vadd.f32 %v1666, %v2082
    %v2084 = vpop.f32.mrb[0].mxu0
    %v2085 = vand.u32 %v1424, 4294901760
    %2086 = vmatprep.mubr.f32.mxu0 %v2085
    %v2087 = vand.u32 %v1423, 4294901760
    %2088 = vmatmul.mubr.f32.gmra.mrb[0].mxu0 %v2087
    %v2089 = vpop.f32.mrb[0].mxu0
    %v2090 = vadd.f32 %v1681, %v2089
    %v2091 = vpop.f32.mrb[0].mxu0
    %v2092 = vand.u32 %v1426, 4294901760
    %2093 = vmatprep.mubr.f32.mxu0 %v2092
    %v2094 = vand.u32 %v1425, 4294901760
    %2095 = vmatmul.mubr.f32.gmra.mrb[0].mxu0 %v2094
    %v2096 = vpop.f32.mrb[0].mxu0
    %v2097 = vadd.f32 %v1696, %v2096
    %v2098 = vpop.f32.mrb[0].mxu0
    %v2099 = vand.u32 %v1428, 4294901760
    %2100 = vmatprep.mubr.f32.mxu0 %v2099
    %v2101 = vand.u32 %v1427, 4294901760
    %2102 = vmatmul.mubr.f32.gmra.mrb[0].mxu0 %v2101
    %v2103 = vpop.f32.mrb[0].mxu0
    %v2104 = vadd.f32 %v1711, %v2103
    %v2105 = vpop.f32.mrb[0].mxu0
    %v2106 = vand.u32 %v1430, 4294901760
    %2107 = vmatprep.mubr.f32.mxu0 %v2106
    %v2108 = vand.u32 %v1429, 4294901760
    %2109 = vmatmul.mubr.f32.gmra.mrb[0].mxu0 %v2108
    %v2110 = vpop.f32.mrb[0].mxu0
    %v2111 = vadd.f32 %v1726, %v2110
    %v2112 = vpop.f32.mrb[0].mxu0
    %v2113 = vand.u32 %v1432, 4294901760
    %2114 = vmatprep.mubr.f32.mxu0 %v2113
    %v2115 = vand.u32 %v1431, 4294901760
    %2116 = vmatmul.mubr.f32.gmra.mrb[0].mxu0 %v2115
    %v2117 = vpop.f32.mrb[0].mxu0
    %v2118 = vadd.f32 %v1741, %v2117
    %v2119 = vpop.f32.mrb[0].mxu0
    %v2120 = vand.u32 %v1434, 4294901760
    %2121 = vmatprep.mubr.f32.mxu0 %v2120
    %v2122 = vand.u32 %v1433, 4294901760
    %2123 = vmatmul.mubr.f32.gmra.mrb[0].mxu0 %v2122
    %v2124 = vpop.f32.mrb[0].mxu0
    %v2125 = vadd.f32 %v1756, %v2124
    %v2126 = vpop.f32.mrb[0].mxu0
    %v2127 = vand.u32 %v1436, 4294901760
    %2128 = vmatprep.mubr.f32.mxu0 %v2127
    %v2129 = vand.u32 %v1435, 4294901760
    %2130 = vmatmul.mubr.f32.gmra.mrb[0].mxu0 %v2129
    %v2131 = vpop.f32.mrb[0].mxu0
    %v2132 = vadd.f32 %v1771, %v2131
    %v2133 = vpop.f32.mrb[0].mxu0
    %v2134 = vand.u32 %v1438, 4294901760
    %2135 = vmatprep.mubr.f32.mxu0 %v2134
    %v2136 = vand.u32 %v1437, 4294901760
    %2137 = vmatmul.mubr.f32.gmra.mrb[0].mxu0 %v2136
    %v2138 = vpop.f32.mrb[0].mxu0
    %v2139 = vadd.f32 %v1786, %v2138
    %v2140 = vpop.f32.mrb[0].mxu0
    %v2141 = vand.u32 %v1440, 4294901760
    %2142 = vmatprep.mubr.f32.mxu0 %v2141
    %v2143 = vand.u32 %v1439, 4294901760
    %2144 = vmatmul.mubr.f32.gmra.mrb[0].mxu0 %v2143
    %v2145 = vpop.f32.mrb[0].mxu0
    %v2146 = vadd.f32 %v1801, %v2145
    %v2147 = vpop.f32.mrb[0].mxu0
    %v2148 = vand.u32 %v1442, 4294901760
    %2149 = vmatprep.mubr.f32.mxu0 %v2148
    %v2150 = vand.u32 %v1441, 4294901760
    %2151 = vmatmul.mubr.f32.gmra.mrb[0].mxu0 %v2150
    %v2152 = vpop.f32.mrb[0].mxu0
    %v2153 = vadd.f32 %v1816, %v2152
    %v2154 = vpop.f32.mrb[0].mxu0
    %2155 = vdwg.mxu0
    %2156 = vmatprep.subr.mxu0 0.0
    %v2157 = vand.u32 %v1443, 4294901760
    %v2158 = vsub.f32 %v1443, %v2157
    %2159 = vmatpush1.msra.mxu0 %v2158
    %2160 = vmatprep.subr.mxu0 0.0
    %v2161 = vand.u32 %v1444, 4294901760
    %v2162 = vsub.f32 %v1444, %v2161
    %2163 = vmatpush1.msra.mxu0 %v2162
    %2164 = vmatprep.subr.mxu0 0.0
    %v2165 = vand.u32 %v1445, 4294901760
    %v2166 = vsub.f32 %v1445, %v2165
    %2167 = vmatpush1.msra.mxu0 %v2166
    %2168 = vmatprep.subr.mxu0 0.0
    %v2169 = vand.u32 %v1446, 4294901760
    %v2170 = vsub.f32 %v1446, %v2169
    %2171 = vmatpush1.msra.mxu0 %v2170
    %2172 = vmatprep.subr.mxu0 0.0
    %v2173 = vand.u32 %v1447, 4294901760
    %v2174 = vsub.f32 %v1447, %v2173
    %2175 = vmatpush1.msra.mxu0 %v2174
    %2176 = vmatprep.subr.mxu0 0.0
    %v2177 = vand.u32 %v1448, 4294901760
    %v2178 = vsub.f32 %v1448, %v2177
    %2179 = vmatpush1.msra.mxu0 %v2178
    %2180 = vmatprep.subr.mxu0 0.0
    %v2181 = vand.u32 %v1449, 4294901760
    %v2182 = vsub.f32 %v1449, %v2181
    %2183 = vmatpush1.msra.mxu0 %v2182
    %2184 = vmatprep.subr.mxu0 0.0
    %v2185 = vand.u32 %v1450, 4294901760
    %v2186 = vsub.f32 %v1450, %v2185
    %2187 = vmatpush1.msra.mxu0 %v2186
    %2188 = vmatprep.subr.mxu0 0.0
    %v2189 = vand.u32 %v1451, 4294901760
    %v2190 = vsub.f32 %v1451, %v2189
    %2191 = vmatpush1.msra.mxu0 %v2190
    %2192 = vmatprep.subr.mxu0 0.0
    %v2193 = vand.u32 %v1452, 4294901760
    %v2194 = vsub.f32 %v1452, %v2193
    %2195 = vmatpush1.msra.mxu0 %v2194
    %2196 = vmatprep.subr.mxu0 0.0
    %v2197 = vand.u32 %v1453, 4294901760
    %v2198 = vsub.f32 %v1453, %v2197
    %2199 = vmatpush1.msra.mxu0 %v2198
    %2200 = vmatprep.subr.mxu0 0.0
    %v2201 = vand.u32 %v1454, 4294901760
    %v2202 = vsub.f32 %v1454, %v2201
    %2203 = vmatpush1.msra.mxu0 %v2202
    %2204 = vmatprep.subr.mxu0 0.0
    %v2205 = vand.u32 %v1455, 4294901760
    %v2206 = vsub.f32 %v1455, %v2205
    %2207 = vmatpush1.msra.mxu0 %v2206
    %2208 = vmatprep.subr.mxu0 0.0
    %v2209 = vand.u32 %v1456, 4294901760
    %v2210 = vsub.f32 %v1456, %v2209
    %2211 = vmatpush1.msra.mxu0 %v2210
    %2212 = vmatprep.subr.mxu0 0.0
    %v2213 = vand.u32 %v1457, 4294901760
    %v2214 = vsub.f32 %v1457, %v2213
    %2215 = vmatpush1.msra.mxu0 %v2214
    %2216 = vmatprep.subr.mxu0 0.0
    %v2217 = vand.u32 %v1458, 4294901760
    %v2218 = vsub.f32 %v1458, %v2217
    %2219 = vmatpush1.msra.mxu0 %v2218
    %2220 = vmatprep.subr.mxu0 0.0
    %v2221 = vand.u32 %v1459, 4294901760
    %v2222 = vsub.f32 %v1459, %v2221
    %2223 = vmatpush1.msra.mxu0 %v2222
    %2224 = vmatprep.subr.mxu0 0.0
    %v2225 = vand.u32 %v1460, 4294901760
    %v2226 = vsub.f32 %v1460, %v2225
    %2227 = vmatpush1.msra.mxu0 %v2226
    %2228 = vmatprep.subr.mxu0 0.0
    %v2229 = vand.u32 %v1461, 4294901760
    %v2230 = vsub.f32 %v1461, %v2229
    %2231 = vmatpush1.msra.mxu0 %v2230
    %2232 = vmatprep.subr.mxu0 0.0
    %v2233 = vand.u32 %v1462, 4294901760
    %v2234 = vsub.f32 %v1462, %v2233
    %2235 = vmatpush1.msra.mxu0 %v2234
    %2236 = vmatprep.subr.mxu0 0.0
    %v2237 = vand.u32 %v1463, 4294901760
    %v2238 = vsub.f32 %v1463, %v2237
    %2239 = vmatpush1.msra.mxu0 %v2238
    %2240 = vmatprep.subr.mxu0 0.0
    %v2241 = vand.u32 %v1464, 4294901760
    %v2242 = vsub.f32 %v1464, %v2241
    %2243 = vmatpush1.msra.mxu0 %v2242
    %2244 = vmatprep.subr.mxu0 0.0
    %v2245 = vand.u32 %v1465, 4294901760
    %v2246 = vsub.f32 %v1465, %v2245
    %2247 = vmatpush1.msra.mxu0 %v2246
    %2248 = vmatprep.subr.mxu0 0.0
    %v2249 = vand.u32 %v1466, 4294901760
    %v2250 = vsub.f32 %v1466, %v2249
    %2251 = vmatpush1.msra.mxu0 %v2250
    %2252 = vmatprep.subr.mxu0 0.0
    %v2253 = vand.u32 %v1467, 4294901760
    %v2254 = vsub.f32 %v1467, %v2253
    %2255 = vmatpush1.msra.mxu0 %v2254
    %2256 = vmatprep.subr.mxu0 0.0
    %v2257 = vand.u32 %v1468, 4294901760
    %v2258 = vsub.f32 %v1468, %v2257
    %2259 = vmatpush1.msra.mxu0 %v2258
    %2260 = vmatprep.subr.mxu0 0.0
    %v2261 = vand.u32 %v1469, 4294901760
    %v2262 = vsub.f32 %v1469, %v2261
    %2263 = vmatpush1.msra.mxu0 %v2262
    %2264 = vmatprep.subr.mxu0 0.0
    %v2265 = vand.u32 %v1470, 4294901760
    %v2266 = vsub.f32 %v1470, %v2265
    %2267 = vmatpush1.msra.mxu0 %v2266
    %2268 = vmatprep.subr.mxu0 0.0
    %v2269 = vand.u32 %v1471, 4294901760
    %v2270 = vsub.f32 %v1471, %v2269
    %2271 = vmatpush1.msra.mxu0 %v2270
    %2272 = vmatprep.subr.mxu0 0.0
    %v2273 = vand.u32 %v1472, 4294901760
    %v2274 = vsub.f32 %v1472, %v2273
    %2275 = vmatpush1.msra.mxu0 %v2274
    %2276 = vmatprep.subr.mxu0 0.0
    %v2277 = vand.u32 %v1473, 4294901760
    %v2278 = vsub.f32 %v1473, %v2277
    %2279 = vmatpush1.msra.mxu0 %v2278
    %2280 = vmatprep.subr.mxu0 0.0
    %v2281 = vand.u32 %v1474, 4294901760
    %v2282 = vsub.f32 %v1474, %v2281
    %2283 = vmatpush1.msra.mxu0 %v2282
    %v2284 = vand.u32 %v1412, 4294901760
    %v2285 = vsub.f32 %v1412, %v2284
    %2286 = vmatprep.mubr.f32.mxu0 %v2285
    %v2287 = vand.u32 %v1411, 4294901760
    %v2288 = vsub.f32 %v1411, %v2287
    %2289 = vmatmul.mubr.f32.gmra.mrb[0].mxu0 %v2288
    %v2290 = vpop.f32.mrb[0].mxu0
    %v2291 = vadd.f32 %v2048, %v2290
    %v2292 = vpop.f32.mrb[0].mxu0
    %v2293 = vand.u32 %v1414, 4294901760
    %v2294 = vsub.f32 %v1414, %v2293
    %2295 = vmatprep.mubr.f32.mxu0 %v2294
    %v2296 = vand.u32 %v1413, 4294901760
    %v2297 = vsub.f32 %v1413, %v2296
    %2298 = vmatmul.mubr.f32.gmra.mrb[0].mxu0 %v2297
    %v2299 = vpop.f32.mrb[0].mxu0
    %v2300 = vadd.f32 %v2055, %v2299
    %v2301 = vpop.f32.mrb[0].mxu0
    %v2302 = vand.u32 %v1416, 4294901760
    %v2303 = vsub.f32 %v1416, %v2302
    %2304 = vmatprep.mubr.f32.mxu0 %v2303
    %v2305 = vand.u32 %v1415, 4294901760
    %v2306 = vsub.f32 %v1415, %v2305
    %2307 = vmatmul.mubr.f32.gmra.mrb[0].mxu0 %v2306
    %v2308 = vpop.f32.mrb[0].mxu0
    %v2309 = vadd.f32 %v2062, %v2308
    %v2310 = vpop.f32.mrb[0].mxu0
    %v2311 = vand.u32 %v1418, 4294901760
    %v2312 = vsub.f32 %v1418, %v2311
    %2313 = vmatprep.mubr.f32.mxu0 %v2312
    %v2314 = vand.u32 %v1417, 4294901760
    %v2315 = vsub.f32 %v1417, %v2314
    %2316 = vmatmul.mubr.f32.gmra.mrb[0].mxu0 %v2315
    %v2317 = vpop.f32.mrb[0].mxu0
    %v2318 = vadd.f32 %v2069, %v2317
    %v2319 = vpop.f32.mrb[0].mxu0
    %v2320 = vand.u32 %v1420, 4294901760
    %v2321 = vsub.f32 %v1420, %v2320
    %2322 = vmatprep.mubr.f32.mxu0 %v2321
    %v2323 = vand.u32 %v1419, 4294901760
    %v2324 = vsub.f32 %v1419, %v2323
    %2325 = vmatmul.mubr.f32.gmra.mrb[0].mxu0 %v2324
    %v2326 = vpop.f32.mrb[0].mxu0
    %v2327 = vadd.f32 %v2076, %v2326
    %v2328 = vpop.f32.mrb[0].mxu0
    %v2329 = vand.u32 %v1422, 4294901760
    %v2330 = vsub.f32 %v1422, %v2329
    %2331 = vmatprep.mubr.f32.mxu0 %v2330
    %v2332 = vand.u32 %v1421, 4294901760
    %v2333 = vsub.f32 %v1421, %v2332
    %2334 = vmatmul.mubr.f32.gmra.mrb[0].mxu0 %v2333
    %v2335 = vpop.f32.mrb[0].mxu0
    %v2336 = vadd.f32 %v2083, %v2335
    %v2337 = vpop.f32.mrb[0].mxu0
    %v2338 = vand.u32 %v1424, 4294901760
    %v2339 = vsub.f32 %v1424, %v2338
    %2340 = vmatprep.mubr.f32.mxu0 %v2339
    %v2341 = vand.u32 %v1423, 4294901760
    %v2342 = vsub.f32 %v1423, %v2341
    %2343 = vmatmul.mubr.f32.gmra.mrb[0].mxu0 %v2342
    %v2344 = vpop.f32.mrb[0].mxu0
    %v2345 = vadd.f32 %v2090, %v2344
    %v2346 = vpop.f32.mrb[0].mxu0
    %v2347 = vand.u32 %v1426, 4294901760
    %v2348 = vsub.f32 %v1426, %v2347
    %2349 = vmatprep.mubr.f32.mxu0 %v2348
    %v2350 = vand.u32 %v1425, 4294901760
    %v2351 = vsub.f32 %v1425, %v2350
    %2352 = vmatmul.mubr.f32.gmra.mrb[0].mxu0 %v2351
    %v2353 = vpop.f32.mrb[0].mxu0
    %v2354 = vadd.f32 %v2097, %v2353
    %v2355 = vpop.f32.mrb[0].mxu0
    %v2356 = vand.u32 %v1428, 4294901760
    %v2357 = vsub.f32 %v1428, %v2356
    %2358 = vmatprep.mubr.f32.mxu0 %v2357
    %v2359 = vand.u32 %v1427, 4294901760
    %v2360 = vsub.f32 %v1427, %v2359
    %2361 = vmatmul.mubr.f32.gmra.mrb[0].mxu0 %v2360
    %v2362 = vpop.f32.mrb[0].mxu0
    %v2363 = vadd.f32 %v2104, %v2362
    %v2364 = vpop.f32.mrb[0].mxu0
    %v2365 = vand.u32 %v1430, 4294901760
    %v2366 = vsub.f32 %v1430, %v2365
    %2367 = vmatprep.mubr.f32.mxu0 %v2366
    %v2368 = vand.u32 %v1429, 4294901760
    %v2369 = vsub.f32 %v1429, %v2368
    %2370 = vmatmul.mubr.f32.gmra.mrb[0].mxu0 %v2369
    %v2371 = vpop.f32.mrb[0].mxu0
    %v2372 = vadd.f32 %v2111, %v2371
    %v2373 = vpop.f32.mrb[0].mxu0
    %v2374 = vand.u32 %v1432, 4294901760
    %v2375 = vsub.f32 %v1432, %v2374
    %2376 = vmatprep.mubr.f32.mxu0 %v2375
    %v2377 = vand.u32 %v1431, 4294901760
    %v2378 = vsub.f32 %v1431, %v2377
    %2379 = vmatmul.mubr.f32.gmra.mrb[0].mxu0 %v2378
    %v2380 = vpop.f32.mrb[0].mxu0
    %v2381 = vadd.f32 %v2118, %v2380
    %v2382 = vpop.f32.mrb[0].mxu0
    %v2383 = vand.u32 %v1434, 4294901760
    %v2384 = vsub.f32 %v1434, %v2383
    %2385 = vmatprep.mubr.f32.mxu0 %v2384
    %v2386 = vand.u32 %v1433, 4294901760
    %v2387 = vsub.f32 %v1433, %v2386
    %2388 = vmatmul.mubr.f32.gmra.mrb[0].mxu0 %v2387
    %v2389 = vpop.f32.mrb[0].mxu0
    %v2390 = vadd.f32 %v2125, %v2389
    %v2391 = vpop.f32.mrb[0].mxu0
    %v2392 = vand.u32 %v1436, 4294901760
    %v2393 = vsub.f32 %v1436, %v2392
    %2394 = vmatprep.mubr.f32.mxu0 %v2393
    %v2395 = vand.u32 %v1435, 4294901760
    %v2396 = vsub.f32 %v1435, %v2395
    %2397 = vmatmul.mubr.f32.gmra.mrb[0].mxu0 %v2396
    %v2398 = vpop.f32.mrb[0].mxu0
    %v2399 = vadd.f32 %v2132, %v2398
    %v2400 = vpop.f32.mrb[0].mxu0
    %v2401 = vand.u32 %v1438, 4294901760
    %v2402 = vsub.f32 %v1438, %v2401
    %2403 = vmatprep.mubr.f32.mxu0 %v2402
    %v2404 = vand.u32 %v1437, 4294901760
    %v2405 = vsub.f32 %v1437, %v2404
    %2406 = vmatmul.mubr.f32.gmra.mrb[0].mxu0 %v2405
    %v2407 = vpop.f32.mrb[0].mxu0
    %v2408 = vadd.f32 %v2139, %v2407
    %v2409 = vpop.f32.mrb[0].mxu0
    %v2410 = vand.u32 %v1440, 4294901760
    %v2411 = vsub.f32 %v1440, %v2410
    %2412 = vmatprep.mubr.f32.mxu0 %v2411
    %v2413 = vand.u32 %v1439, 4294901760
    %v2414 = vsub.f32 %v1439, %v2413
    %2415 = vmatmul.mubr.f32.gmra.mrb[0].mxu0 %v2414
    %v2416 = vpop.f32.mrb[0].mxu0
    %v2417 = vadd.f32 %v2146, %v2416
    %v2418 = vpop.f32.mrb[0].mxu0
    %v2419 = vand.u32 %v1442, 4294901760
    %v2420 = vsub.f32 %v1442, %v2419
    %2421 = vmatprep.mubr.f32.mxu0 %v2420
    %v2422 = vand.u32 %v1441, 4294901760
    %v2423 = vsub.f32 %v1441, %v2422
    %2424 = vmatmul.mubr.f32.gmra.mrb[0].mxu0 %v2423
    %v2425 = vpop.f32.mrb[0].mxu0
    %v2426 = vadd.f32 %v2153, %v2425
    %v2427 = vpop.f32.mrb[0].mxu0
    %2428 = vdwg.mxu0
    %2429 = vmatprep.subr.mxu0 0.0
    %v2430 = vand.u32 %v1443, 4294901760
    %2431 = vmatpush1.msra.mxu0 %v2430
    %2432 = vmatprep.subr.mxu0 0.0
    %v2433 = vand.u32 %v1444, 4294901760
    %2434 = vmatpush1.msra.mxu0 %v2433
    %2435 = vmatprep.subr.mxu0 0.0
    %v2436 = vand.u32 %v1445, 4294901760
    %2437 = vmatpush1.msra.mxu0 %v2436
    %2438 = vmatprep.subr.mxu0 0.0
    %v2439 = vand.u32 %v1446, 4294901760
    %2440 = vmatpush1.msra.mxu0 %v2439
    %2441 = vmatprep.subr.mxu0 0.0
    %v2442 = vand.u32 %v1447, 4294901760
    %2443 = vmatpush1.msra.mxu0 %v2442
    %2444 = vmatprep.subr.mxu0 0.0
    %v2445 = vand.u32 %v1448, 4294901760
    %2446 = vmatpush1.msra.mxu0 %v2445
    %2447 = vmatprep.subr.mxu0 0.0
    %v2448 = vand.u32 %v1449, 4294901760
    %2449 = vmatpush1.msra.mxu0 %v2448
    %2450 = vmatprep.subr.mxu0 0.0
    %v2451 = vand.u32 %v1450, 4294901760
    %2452 = vmatpush1.msra.mxu0 %v2451
    %2453 = vmatprep.subr.mxu0 0.0
    %v2454 = vand.u32 %v1451, 4294901760
    %2455 = vmatpush1.msra.mxu0 %v2454
    %2456 = vmatprep.subr.mxu0 0.0
    %v2457 = vand.u32 %v1452, 4294901760
    %2458 = vmatpush1.msra.mxu0 %v2457
    %2459 = vmatprep.subr.mxu0 0.0
    %v2460 = vand.u32 %v1453, 4294901760
    %2461 = vmatpush1.msra.mxu0 %v2460
    %2462 = vmatprep.subr.mxu0 0.0
    %v2463 = vand.u32 %v1454, 4294901760
    %2464 = vmatpush1.msra.mxu0 %v2463
    %2465 = vmatprep.subr.mxu0 0.0
    %v2466 = vand.u32 %v1455, 4294901760
    %2467 = vmatpush1.msra.mxu0 %v2466
    %2468 = vmatprep.subr.mxu0 0.0
    %v2469 = vand.u32 %v1456, 4294901760
    %2470 = vmatpush1.msra.mxu0 %v2469
    %2471 = vmatprep.subr.mxu0 0.0
    %v2472 = vand.u32 %v1457, 4294901760
    %2473 = vmatpush1.msra.mxu0 %v2472
    %2474 = vmatprep.subr.mxu0 0.0
    %v2475 = vand.u32 %v1458, 4294901760
    %2476 = vmatpush1.msra.mxu0 %v2475
    %2477 = vmatprep.subr.mxu0 0.0
    %v2478 = vand.u32 %v1459, 4294901760
    %2479 = vmatpush1.msra.mxu0 %v2478
    %2480 = vmatprep.subr.mxu0 0.0
    %v2481 = vand.u32 %v1460, 4294901760
    %2482 = vmatpush1.msra.mxu0 %v2481
    %2483 = vmatprep.subr.mxu0 0.0
    %v2484 = vand.u32 %v1461, 4294901760
    %2485 = vmatpush1.msra.mxu0 %v2484
    %2486 = vmatprep.subr.mxu0 0.0
    %v2487 = vand.u32 %v1462, 4294901760
    %2488 = vmatpush1.msra.mxu0 %v2487
    %2489 = vmatprep.subr.mxu0 0.0
    %v2490 = vand.u32 %v1463, 4294901760
    %2491 = vmatpush1.msra.mxu0 %v2490
    %2492 = vmatprep.subr.mxu0 0.0
    %v2493 = vand.u32 %v1464, 4294901760
    %2494 = vmatpush1.msra.mxu0 %v2493
    %2495 = vmatprep.subr.mxu0 0.0
    %v2496 = vand.u32 %v1465, 4294901760
    %2497 = vmatpush1.msra.mxu0 %v2496
    %2498 = vmatprep.subr.mxu0 0.0
    %v2499 = vand.u32 %v1466, 4294901760
    %2500 = vmatpush1.msra.mxu0 %v2499
    %2501 = vmatprep.subr.mxu0 0.0
    %v2502 = vand.u32 %v1467, 4294901760
    %2503 = vmatpush1.msra.mxu0 %v2502
    %2504 = vmatprep.subr.mxu0 0.0
    %v2505 = vand.u32 %v1468, 4294901760
    %2506 = vmatpush1.msra.mxu0 %v2505
    %2507 = vmatprep.subr.mxu0 0.0
    %v2508 = vand.u32 %v1469, 4294901760
    %2509 = vmatpush1.msra.mxu0 %v2508
    %2510 = vmatprep.subr.mxu0 0.0
    %v2511 = vand.u32 %v1470, 4294901760
    %2512 = vmatpush1.msra.mxu0 %v2511
    %2513 = vmatprep.subr.mxu0 0.0
    %v2514 = vand.u32 %v1471, 4294901760
    %2515 = vmatpush1.msra.mxu0 %v2514
    %2516 = vmatprep.subr.mxu0 0.0
    %v2517 = vand.u32 %v1472, 4294901760
    %2518 = vmatpush1.msra.mxu0 %v2517
    %2519 = vmatprep.subr.mxu0 0.0
    %v2520 = vand.u32 %v1473, 4294901760
    %2521 = vmatpush1.msra.mxu0 %v2520
    %2522 = vmatprep.subr.mxu0 0.0
    %v2523 = vand.u32 %v1474, 4294901760
    %2524 = vmatpush1.msra.mxu0 %v2523
    %v2525 = vand.u32 %v1412, 4294901760
    %v2526 = vsub.f32 %v1412, %v2525
    %v2527 = vand.u32 %v2526, 4294901760
    %2528 = vmatprep.mubr.f32.mxu0 %v2527
    %v2529 = vand.u32 %v1411, 4294901760
    %v2530 = vsub.f32 %v1411, %v2529
    %v2531 = vand.u32 %v2530, 4294901760
    %2532 = vmatmul.mubr.f32.gmra.mrb[0].mxu0 %v2531
    %v2533 = vpop.f32.mrb[0].mxu0
    %v2534 = vadd.f32 %v2291, %v2533
    %v2535 = vpop.f32.mrb[0].mxu0
    %v2536 = vand.u32 %v1414, 4294901760
    %v2537 = vsub.f32 %v1414, %v2536
    %v2538 = vand.u32 %v2537, 4294901760
    %2539 = vmatprep.mubr.f32.mxu0 %v2538
    %v2540 = vand.u32 %v1413, 4294901760
    %v2541 = vsub.f32 %v1413, %v2540
    %v2542 = vand.u32 %v2541, 4294901760
    %2543 = vmatmul.mubr.f32.gmra.mrb[0].mxu0 %v2542
    %v2544 = vpop.f32.mrb[0].mxu0
    %v2545 = vadd.f32 %v2300, %v2544
    %v2546 = vpop.f32.mrb[0].mxu0
    %v2547 = vand.u32 %v1416, 4294901760
    %v2548 = vsub.f32 %v1416, %v2547
    %v2549 = vand.u32 %v2548, 4294901760
    %2550 = vmatprep.mubr.f32.mxu0 %v2549
    %v2551 = vand.u32 %v1415, 4294901760
    %v2552 = vsub.f32 %v1415, %v2551
    %v2553 = vand.u32 %v2552, 4294901760
    %2554 = vmatmul.mubr.f32.gmra.mrb[0].mxu0 %v2553
    %v2555 = vpop.f32.mrb[0].mxu0
    %v2556 = vadd.f32 %v2309, %v2555
    %v2557 = vpop.f32.mrb[0].mxu0
    %v2558 = vand.u32 %v1418, 4294901760
    %v2559 = vsub.f32 %v1418, %v2558
    %v2560 = vand.u32 %v2559, 4294901760
    %2561 = vmatprep.mubr.f32.mxu0 %v2560
    %v2562 = vand.u32 %v1417, 4294901760
    %v2563 = vsub.f32 %v1417, %v2562
    %v2564 = vand.u32 %v2563, 4294901760
    %2565 = vmatmul.mubr.f32.gmra.mrb[0].mxu0 %v2564
    %v2566 = vpop.f32.mrb[0].mxu0
    %v2567 = vadd.f32 %v2318, %v2566
    %v2568 = vpop.f32.mrb[0].mxu0
    %v2569 = vand.u32 %v1420, 4294901760
    %v2570 = vsub.f32 %v1420, %v2569
    %v2571 = vand.u32 %v2570, 4294901760
    %2572 = vmatprep.mubr.f32.mxu0 %v2571
    %v2573 = vand.u32 %v1419, 4294901760
    %v2574 = vsub.f32 %v1419, %v2573
    %v2575 = vand.u32 %v2574, 4294901760
    %2576 = vmatmul.mubr.f32.gmra.mrb[0].mxu0 %v2575
    %v2577 = vpop.f32.mrb[0].mxu0
    %v2578 = vadd.f32 %v2327, %v2577
    %v2579 = vpop.f32.mrb[0].mxu0
    %v2580 = vand.u32 %v1422, 4294901760
    %v2581 = vsub.f32 %v1422, %v2580
    %v2582 = vand.u32 %v2581, 4294901760
    %2583 = vmatprep.mubr.f32.mxu0 %v2582
    %v2584 = vand.u32 %v1421, 4294901760
    %v2585 = vsub.f32 %v1421, %v2584
    %v2586 = vand.u32 %v2585, 4294901760
    %2587 = vmatmul.mubr.f32.gmra.mrb[0].mxu0 %v2586
    %v2588 = vpop.f32.mrb[0].mxu0
    %v2589 = vadd.f32 %v2336, %v2588
    %v2590 = vpop.f32.mrb[0].mxu0
    %v2591 = vand.u32 %v1424, 4294901760
    %v2592 = vsub.f32 %v1424, %v2591
    %v2593 = vand.u32 %v2592, 4294901760
    %2594 = vmatprep.mubr.f32.mxu0 %v2593
    %v2595 = vand.u32 %v1423, 4294901760
    %v2596 = vsub.f32 %v1423, %v2595
    %v2597 = vand.u32 %v2596, 4294901760
    %2598 = vmatmul.mubr.f32.gmra.mrb[0].mxu0 %v2597
    %v2599 = vpop.f32.mrb[0].mxu0
    %v2600 = vadd.f32 %v2345, %v2599
    %v2601 = vpop.f32.mrb[0].mxu0
    %v2602 = vand.u32 %v1426, 4294901760
    %v2603 = vsub.f32 %v1426, %v2602
    %v2604 = vand.u32 %v2603, 4294901760
    %2605 = vmatprep.mubr.f32.mxu0 %v2604
    %v2606 = vand.u32 %v1425, 4294901760
    %v2607 = vsub.f32 %v1425, %v2606
    %v2608 = vand.u32 %v2607, 4294901760
    %2609 = vmatmul.mubr.f32.gmra.mrb[0].mxu0 %v2608
    %v2610 = vpop.f32.mrb[0].mxu0
    %v2611 = vadd.f32 %v2354, %v2610
    %v2612 = vpop.f32.mrb[0].mxu0
    %v2613 = vand.u32 %v1428, 4294901760
    %v2614 = vsub.f32 %v1428, %v2613
    %v2615 = vand.u32 %v2614, 4294901760
    %2616 = vmatprep.mubr.f32.mxu0 %v2615
    %v2617 = vand.u32 %v1427, 4294901760
    %v2618 = vsub.f32 %v1427, %v2617
    %v2619 = vand.u32 %v2618, 4294901760
    %2620 = vmatmul.mubr.f32.gmra.mrb[0].mxu0 %v2619
    %v2621 = vpop.f32.mrb[0].mxu0
    %v2622 = vadd.f32 %v2363, %v2621
    %v2623 = vpop.f32.mrb[0].mxu0
    %v2624 = vand.u32 %v1430, 4294901760
    %v2625 = vsub.f32 %v1430, %v2624
    %v2626 = vand.u32 %v2625, 4294901760
    %2627 = vmatprep.mubr.f32.mxu0 %v2626
    %v2628 = vand.u32 %v1429, 4294901760
    %v2629 = vsub.f32 %v1429, %v2628
    %v2630 = vand.u32 %v2629, 4294901760
    %2631 = vmatmul.mubr.f32.gmra.mrb[0].mxu0 %v2630
    %v2632 = vpop.f32.mrb[0].mxu0
    %v2633 = vadd.f32 %v2372, %v2632
    %v2634 = vpop.f32.mrb[0].mxu0
    %v2635 = vand.u32 %v1432, 4294901760
    %v2636 = vsub.f32 %v1432, %v2635
    %v2637 = vand.u32 %v2636, 4294901760
    %2638 = vmatprep.mubr.f32.mxu0 %v2637
    %v2639 = vand.u32 %v1431, 4294901760
    %v2640 = vsub.f32 %v1431, %v2639
    %v2641 = vand.u32 %v2640, 4294901760
    %2642 = vmatmul.mubr.f32.gmra.mrb[0].mxu0 %v2641
    %v2643 = vpop.f32.mrb[0].mxu0
    %v2644 = vadd.f32 %v2381, %v2643
    %v2645 = vpop.f32.mrb[0].mxu0
    %v2646 = vand.u32 %v1434, 4294901760
    %v2647 = vsub.f32 %v1434, %v2646
    %v2648 = vand.u32 %v2647, 4294901760
    %2649 = vmatprep.mubr.f32.mxu0 %v2648
    %v2650 = vand.u32 %v1433, 4294901760
    %v2651 = vsub.f32 %v1433, %v2650
    %v2652 = vand.u32 %v2651, 4294901760
    %2653 = vmatmul.mubr.f32.gmra.mrb[0].mxu0 %v2652
    %v2654 = vpop.f32.mrb[0].mxu0
    %v2655 = vadd.f32 %v2390, %v2654
    %v2656 = vpop.f32.mrb[0].mxu0
    %v2657 = vand.u32 %v1436, 4294901760
    %v2658 = vsub.f32 %v1436, %v2657
    %v2659 = vand.u32 %v2658, 4294901760
    %2660 = vmatprep.mubr.f32.mxu0 %v2659
    %v2661 = vand.u32 %v1435, 4294901760
    %v2662 = vsub.f32 %v1435, %v2661
    %v2663 = vand.u32 %v2662, 4294901760
    %2664 = vmatmul.mubr.f32.gmra.mrb[0].mxu0 %v2663
    %v2665 = vpop.f32.mrb[0].mxu0
    %v2666 = vadd.f32 %v2399, %v2665
    %v2667 = vpop.f32.mrb[0].mxu0
    %v2668 = vand.u32 %v1438, 4294901760
    %v2669 = vsub.f32 %v1438, %v2668
    %v2670 = vand.u32 %v2669, 4294901760
    %2671 = vmatprep.mubr.f32.mxu0 %v2670
    %v2672 = vand.u32 %v1437, 4294901760
    %v2673 = vsub.f32 %v1437, %v2672
    %v2674 = vand.u32 %v2673, 4294901760
    %2675 = vmatmul.mubr.f32.gmra.mrb[0].mxu0 %v2674
    %v2676 = vpop.f32.mrb[0].mxu0
    %v2677 = vadd.f32 %v2408, %v2676
    %v2678 = vpop.f32.mrb[0].mxu0
    %v2679 = vand.u32 %v1440, 4294901760
    %v2680 = vsub.f32 %v1440, %v2679
    %v2681 = vand.u32 %v2680, 4294901760
    %2682 = vmatprep.mubr.f32.mxu0 %v2681
    %v2683 = vand.u32 %v1439, 4294901760
    %v2684 = vsub.f32 %v1439, %v2683
    %v2685 = vand.u32 %v2684, 4294901760
    %2686 = vmatmul.mubr.f32.gmra.mrb[0].mxu0 %v2685
    %v2687 = vpop.f32.mrb[0].mxu0
    %v2688 = vadd.f32 %v2417, %v2687
    %v2689 = vpop.f32.mrb[0].mxu0
    %v2690 = vand.u32 %v1442, 4294901760
    %v2691 = vsub.f32 %v1442, %v2690
    %v2692 = vand.u32 %v2691, 4294901760
    %2693 = vmatprep.mubr.f32.mxu0 %v2692
    %v2694 = vand.u32 %v1441, 4294901760
    %v2695 = vsub.f32 %v1441, %v2694
    %v2696 = vand.u32 %v2695, 4294901760
    %2697 = vmatmul.mubr.f32.gmra.mrb[0].mxu0 %v2696
    %v2698 = vpop.f32.mrb[0].mxu0
    %v2699 = vadd.f32 %v2426, %v2698
    %v2700 = vpop.f32.mrb[0].mxu0
    %2701 = vdwg.mxu0
    %2702 = vmatprep.subr.mxu0 0.0
    %v2703 = vand.u32 %v1443, 4294901760
    %v2704 = vsub.f32 %v1443, %v2703
    %v2705 = vand.u32 %v2704, 4294901760
    %2706 = vmatpush1.msra.mxu0 %v2705
    %2707 = vmatprep.subr.mxu0 0.0
    %v2708 = vand.u32 %v1444, 4294901760
    %v2709 = vsub.f32 %v1444, %v2708
    %v2710 = vand.u32 %v2709, 4294901760
    %2711 = vmatpush1.msra.mxu0 %v2710
    %2712 = vmatprep.subr.mxu0 0.0
    %v2713 = vand.u32 %v1445, 4294901760
    %v2714 = vsub.f32 %v1445, %v2713
    %v2715 = vand.u32 %v2714, 4294901760
    %2716 = vmatpush1.msra.mxu0 %v2715
    %2717 = vmatprep.subr.mxu0 0.0
    %v2718 = vand.u32 %v1446, 4294901760
    %v2719 = vsub.f32 %v1446, %v2718
    %v2720 = vand.u32 %v2719, 4294901760
    %2721 = vmatpush1.msra.mxu0 %v2720
    %2722 = vmatprep.subr.mxu0 0.0
    %v2723 = vand.u32 %v1447, 4294901760
    %v2724 = vsub.f32 %v1447, %v2723
    %v2725 = vand.u32 %v2724, 4294901760
    %2726 = vmatpush1.msra.mxu0 %v2725
    %2727 = vmatprep.subr.mxu0 0.0
    %v2728 = vand.u32 %v1448, 4294901760
    %v2729 = vsub.f32 %v1448, %v2728
    %v2730 = vand.u32 %v2729, 4294901760
    %2731 = vmatpush1.msra.mxu0 %v2730
    %2732 = vmatprep.subr.mxu0 0.0
    %v2733 = vand.u32 %v1449, 4294901760
    %v2734 = vsub.f32 %v1449, %v2733
    %v2735 = vand.u32 %v2734, 4294901760
    %2736 = vmatpush1.msra.mxu0 %v2735
    %2737 = vmatprep.subr.mxu0 0.0
    %v2738 = vand.u32 %v1450, 4294901760
    %v2739 = vsub.f32 %v1450, %v2738
    %v2740 = vand.u32 %v2739, 4294901760
    %2741 = vmatpush1.msra.mxu0 %v2740
    %2742 = vmatprep.subr.mxu0 0.0
    %v2743 = vand.u32 %v1451, 4294901760
    %v2744 = vsub.f32 %v1451, %v2743
    %v2745 = vand.u32 %v2744, 4294901760
    %2746 = vmatpush1.msra.mxu0 %v2745
    %2747 = vmatprep.subr.mxu0 0.0
    %v2748 = vand.u32 %v1452, 4294901760
    %v2749 = vsub.f32 %v1452, %v2748
    %v2750 = vand.u32 %v2749, 4294901760
    %2751 = vmatpush1.msra.mxu0 %v2750
    %2752 = vmatprep.subr.mxu0 0.0
    %v2753 = vand.u32 %v1453, 4294901760
    %v2754 = vsub.f32 %v1453, %v2753
    %v2755 = vand.u32 %v2754, 4294901760
    %2756 = vmatpush1.msra.mxu0 %v2755
    %2757 = vmatprep.subr.mxu0 0.0
    %v2758 = vand.u32 %v1454, 4294901760
    %v2759 = vsub.f32 %v1454, %v2758
    %v2760 = vand.u32 %v2759, 4294901760
    %2761 = vmatpush1.msra.mxu0 %v2760
    %2762 = vmatprep.subr.mxu0 0.0
    %v2763 = vand.u32 %v1455, 4294901760
    %v2764 = vsub.f32 %v1455, %v2763
    %v2765 = vand.u32 %v2764, 4294901760
    %2766 = vmatpush1.msra.mxu0 %v2765
    %2767 = vmatprep.subr.mxu0 0.0
    %v2768 = vand.u32 %v1456, 4294901760
    %v2769 = vsub.f32 %v1456, %v2768
    %v2770 = vand.u32 %v2769, 4294901760
    %2771 = vmatpush1.msra.mxu0 %v2770
    %2772 = vmatprep.subr.mxu0 0.0
    %v2773 = vand.u32 %v1457, 4294901760
    %v2774 = vsub.f32 %v1457, %v2773
    %v2775 = vand.u32 %v2774, 4294901760
    %2776 = vmatpush1.msra.mxu0 %v2775
    %2777 = vmatprep.subr.mxu0 0.0
    %v2778 = vand.u32 %v1458, 4294901760
    %v2779 = vsub.f32 %v1458, %v2778
    %v2780 = vand.u32 %v2779, 4294901760
    %2781 = vmatpush1.msra.mxu0 %v2780
    %2782 = vmatprep.subr.mxu0 0.0
    %v2783 = vand.u32 %v1459, 4294901760
    %v2784 = vsub.f32 %v1459, %v2783
    %v2785 = vand.u32 %v2784, 4294901760
    %2786 = vmatpush1.msra.mxu0 %v2785
    %2787 = vmatprep.subr.mxu0 0.0
    %v2788 = vand.u32 %v1460, 4294901760
    %v2789 = vsub.f32 %v1460, %v2788
    %v2790 = vand.u32 %v2789, 4294901760
    %2791 = vmatpush1.msra.mxu0 %v2790
    %2792 = vmatprep.subr.mxu0 0.0
    %v2793 = vand.u32 %v1461, 4294901760
    %v2794 = vsub.f32 %v1461, %v2793
    %v2795 = vand.u32 %v2794, 4294901760
    %2796 = vmatpush1.msra.mxu0 %v2795
    %2797 = vmatprep.subr.mxu0 0.0
    %v2798 = vand.u32 %v1462, 4294901760
    %v2799 = vsub.f32 %v1462, %v2798
    %v2800 = vand.u32 %v2799, 4294901760
    %2801 = vmatpush1.msra.mxu0 %v2800
    %2802 = vmatprep.subr.mxu0 0.0
    %v2803 = vand.u32 %v1463, 4294901760
    %v2804 = vsub.f32 %v1463, %v2803
    %v2805 = vand.u32 %v2804, 4294901760
    %2806 = vmatpush1.msra.mxu0 %v2805
    %2807 = vmatprep.subr.mxu0 0.0
    %v2808 = vand.u32 %v1464, 4294901760
    %v2809 = vsub.f32 %v1464, %v2808
    %v2810 = vand.u32 %v2809, 4294901760
    %2811 = vmatpush1.msra.mxu0 %v2810
    %2812 = vmatprep.subr.mxu0 0.0
    %v2813 = vand.u32 %v1465, 4294901760
    %v2814 = vsub.f32 %v1465, %v2813
    %v2815 = vand.u32 %v2814, 4294901760
    %2816 = vmatpush1.msra.mxu0 %v2815
    %2817 = vmatprep.subr.mxu0 0.0
    %v2818 = vand.u32 %v1466, 4294901760
    %v2819 = vsub.f32 %v1466, %v2818
    %v2820 = vand.u32 %v2819, 4294901760
    %2821 = vmatpush1.msra.mxu0 %v2820
    %2822 = vmatprep.subr.mxu0 0.0
    %v2823 = vand.u32 %v1467, 4294901760
    %v2824 = vsub.f32 %v1467, %v2823
    %v2825 = vand.u32 %v2824, 4294901760
    %2826 = vmatpush1.msra.mxu0 %v2825
    %2827 = vmatprep.subr.mxu0 0.0
    %v2828 = vand.u32 %v1468, 4294901760
    %v2829 = vsub.f32 %v1468, %v2828
    %v2830 = vand.u32 %v2829, 4294901760
    %2831 = vmatpush1.msra.mxu0 %v2830
    %2832 = vmatprep.subr.mxu0 0.0
    %v2833 = vand.u32 %v1469, 4294901760
    %v2834 = vsub.f32 %v1469, %v2833
    %v2835 = vand.u32 %v2834, 4294901760
    %2836 = vmatpush1.msra.mxu0 %v2835
    %2837 = vmatprep.subr.mxu0 0.0
    %v2838 = vand.u32 %v1470, 4294901760
    %v2839 = vsub.f32 %v1470, %v2838
    %v2840 = vand.u32 %v2839, 4294901760
    %2841 = vmatpush1.msra.mxu0 %v2840
    %2842 = vmatprep.subr.mxu0 0.0
    %v2843 = vand.u32 %v1471, 4294901760
    %v2844 = vsub.f32 %v1471, %v2843
    %v2845 = vand.u32 %v2844, 4294901760
    %2846 = vmatpush1.msra.mxu0 %v2845
    %2847 = vmatprep.subr.mxu0 0.0
    %v2848 = vand.u32 %v1472, 4294901760
    %v2849 = vsub.f32 %v1472, %v2848
    %v2850 = vand.u32 %v2849, 4294901760
    %2851 = vmatpush1.msra.mxu0 %v2850
    %2852 = vmatprep.subr.mxu0 0.0
    %v2853 = vand.u32 %v1473, 4294901760
    %v2854 = vsub.f32 %v1473, %v2853
    %v2855 = vand.u32 %v2854, 4294901760
    %2856 = vmatpush1.msra.mxu0 %v2855
    %2857 = vmatprep.subr.mxu0 0.0
    %v2858 = vand.u32 %v1474, 4294901760
    %v2859 = vsub.f32 %v1474, %v2858
    %v2860 = vand.u32 %v2859, 4294901760
    %2861 = vmatpush1.msra.mxu0 %v2860
    %v2862 = vand.u32 %v1412, 4294901760
    %2863 = vmatprep.mubr.f32.mxu0 %v2862
    %v2864 = vand.u32 %v1411, 4294901760
    %2865 = vmatmul.mubr.f32.gmra.mrb[0].mxu0 %v2864
    %v2866 = vpop.f32.mrb[0].mxu0
    %v2867 = vadd.f32 %v2534, %v2866
    %v2868 = vpop.f32.mrb[0].mxu0
    %v2869 = vand.u32 %v1414, 4294901760
    %2870 = vmatprep.mubr.f32.mxu0 %v2869
    %v2871 = vand.u32 %v1413, 4294901760
    %2872 = vmatmul.mubr.f32.gmra.mrb[0].mxu0 %v2871
    %v2873 = vpop.f32.mrb[0].mxu0
    %v2874 = vadd.f32 %v2545, %v2873
    %v2875 = vpop.f32.mrb[0].mxu0
    %v2876 = vand.u32 %v1416, 4294901760
    %2877 = vmatprep.mubr.f32.mxu0 %v2876
    %v2878 = vand.u32 %v1415, 4294901760
    %2879 = vmatmul.mubr.f32.gmra.mrb[0].mxu0 %v2878
    %v2880 = vpop.f32.mrb[0].mxu0
    %v2881 = vadd.f32 %v2556, %v2880
    %v2882 = vpop.f32.mrb[0].mxu0
    %v2883 = vand.u32 %v1418, 4294901760
    %2884 = vmatprep.mubr.f32.mxu0 %v2883
    %v2885 = vand.u32 %v1417, 4294901760
    %2886 = vmatmul.mubr.f32.gmra.mrb[0].mxu0 %v2885
    %v2887 = vpop.f32.mrb[0].mxu0
    %v2888 = vadd.f32 %v2567, %v2887
    %v2889 = vpop.f32.mrb[0].mxu0
    %v2890 = vand.u32 %v1420, 4294901760
    %2891 = vmatprep.mubr.f32.mxu0 %v2890
    %v2892 = vand.u32 %v1419, 4294901760
    %2893 = vmatmul.mubr.f32.gmra.mrb[0].mxu0 %v2892
    %v2894 = vpop.f32.mrb[0].mxu0
    %v2895 = vadd.f32 %v2578, %v2894
    %v2896 = vpop.f32.mrb[0].mxu0
    %v2897 = vand.u32 %v1422, 4294901760
    %2898 = vmatprep.mubr.f32.mxu0 %v2897
    %v2899 = vand.u32 %v1421, 4294901760
    %2900 = vmatmul.mubr.f32.gmra.mrb[0].mxu0 %v2899
    %v2901 = vpop.f32.mrb[0].mxu0
    %v2902 = vadd.f32 %v2589, %v2901
    %v2903 = vpop.f32.mrb[0].mxu0
    %v2904 = vand.u32 %v1424, 4294901760
    %2905 = vmatprep.mubr.f32.mxu0 %v2904
    %v2906 = vand.u32 %v1423, 4294901760
    %2907 = vmatmul.mubr.f32.gmra.mrb[0].mxu0 %v2906
    %v2908 = vpop.f32.mrb[0].mxu0
    %v2909 = vadd.f32 %v2600, %v2908
    %v2910 = vpop.f32.mrb[0].mxu0
    %v2911 = vand.u32 %v1426, 4294901760
    %2912 = vmatprep.mubr.f32.mxu0 %v2911
    %v2913 = vand.u32 %v1425, 4294901760
    %2914 = vmatmul.mubr.f32.gmra.mrb[0].mxu0 %v2913
    %v2915 = vpop.f32.mrb[0].mxu0
    %v2916 = vadd.f32 %v2611, %v2915
    %v2917 = vpop.f32.mrb[0].mxu0
    %v2918 = vand.u32 %v1428, 4294901760
    %2919 = vmatprep.mubr.f32.mxu0 %v2918
    %v2920 = vand.u32 %v1427, 4294901760
    %2921 = vmatmul.mubr.f32.gmra.mrb[0].mxu0 %v2920
    %v2922 = vpop.f32.mrb[0].mxu0
    %v2923 = vadd.f32 %v2622, %v2922
    %v2924 = vpop.f32.mrb[0].mxu0
    %v2925 = vand.u32 %v1430, 4294901760
    %2926 = vmatprep.mubr.f32.mxu0 %v2925
    %v2927 = vand.u32 %v1429, 4294901760
    %2928 = vmatmul.mubr.f32.gmra.mrb[0].mxu0 %v2927
    %v2929 = vpop.f32.mrb[0].mxu0
    %v2930 = vadd.f32 %v2633, %v2929
    %v2931 = vpop.f32.mrb[0].mxu0
    %v2932 = vand.u32 %v1432, 4294901760
    %2933 = vmatprep.mubr.f32.mxu0 %v2932
    %v2934 = vand.u32 %v1431, 4294901760
    %2935 = vmatmul.mubr.f32.gmra.mrb[0].mxu0 %v2934
    %v2936 = vpop.f32.mrb[0].mxu0
    %v2937 = vadd.f32 %v2644, %v2936
    %v2938 = vpop.f32.mrb[0].mxu0
    %v2939 = vand.u32 %v1434, 4294901760
    %2940 = vmatprep.mubr.f32.mxu0 %v2939
    %v2941 = vand.u32 %v1433, 4294901760
    %2942 = vmatmul.mubr.f32.gmra.mrb[0].mxu0 %v2941
    %v2943 = vpop.f32.mrb[0].mxu0
    %v2944 = vadd.f32 %v2655, %v2943
    %v2945 = vpop.f32.mrb[0].mxu0
    %v2946 = vand.u32 %v1436, 4294901760
    %2947 = vmatprep.mubr.f32.mxu0 %v2946
    %v2948 = vand.u32 %v1435, 4294901760
    %2949 = vmatmul.mubr.f32.gmra.mrb[0].mxu0 %v2948
    %v2950 = vpop.f32.mrb[0].mxu0
    %v2951 = vadd.f32 %v2666, %v2950
    %v2952 = vpop.f32.mrb[0].mxu0
    %v2953 = vand.u32 %v1438, 4294901760
    %2954 = vmatprep.mubr.f32.mxu0 %v2953
    %v2955 = vand.u32 %v1437, 4294901760
    %2956 = vmatmul.mubr.f32.gmra.mrb[0].mxu0 %v2955
    %v2957 = vpop.f32.mrb[0].mxu0
    %v2958 = vadd.f32 %v2677, %v2957
    %v2959 = vpop.f32.mrb[0].mxu0
    %v2960 = vand.u32 %v1440, 4294901760
    %2961 = vmatprep.mubr.f32.mxu0 %v2960
    %v2962 = vand.u32 %v1439, 4294901760
    %2963 = vmatmul.mubr.f32.gmra.mrb[0].mxu0 %v2962
    %v2964 = vpop.f32.mrb[0].mxu0
    %v2965 = vadd.f32 %v2688, %v2964
    %v2966 = vpop.f32.mrb[0].mxu0
    %v2967 = vand.u32 %v1442, 4294901760
    %2968 = vmatprep.mubr.f32.mxu0 %v2967
    %v2969 = vand.u32 %v1441, 4294901760
    %2970 = vmatmul.mubr.f32.gmra.mrb[0].mxu0 %v2969
    %v2971 = vpop.f32.mrb[0].mxu0
    %v2972 = vadd.f32 %v2699, %v2971
    %v2973 = vpop.f32.mrb[0].mxu0
    %2974 = vdwg.mxu0
    %2975 = vmatprep.subr.mxu0 0.0
    %v2976 = vand.u32 %v1443, 4294901760
    %2977 = vmatpush1.msra.mxu0 %v2976
    %2978 = vmatprep.subr.mxu0 0.0
    %v2979 = vand.u32 %v1444, 4294901760
    %2980 = vmatpush1.msra.mxu0 %v2979
    %2981 = vmatprep.subr.mxu0 0.0
    %v2982 = vand.u32 %v1445, 4294901760
    %2983 = vmatpush1.msra.mxu0 %v2982
    %2984 = vmatprep.subr.mxu0 0.0
    %v2985 = vand.u32 %v1446, 4294901760
    %2986 = vmatpush1.msra.mxu0 %v2985
    %2987 = vmatprep.subr.mxu0 0.0
    %v2988 = vand.u32 %v1447, 4294901760
    %2989 = vmatpush1.msra.mxu0 %v2988
    %2990 = vmatprep.subr.mxu0 0.0
    %v2991 = vand.u32 %v1448, 4294901760
    %2992 = vmatpush1.msra.mxu0 %v2991
    %2993 = vmatprep.subr.mxu0 0.0
    %v2994 = vand.u32 %v1449, 4294901760
    %2995 = vmatpush1.msra.mxu0 %v2994
    %2996 = vmatprep.subr.mxu0 0.0
    %v2997 = vand.u32 %v1450, 4294901760
    %2998 = vmatpush1.msra.mxu0 %v2997
    %2999 = vmatprep.subr.mxu0 0.0
    %v3000 = vand.u32 %v1451, 4294901760
    %3001 = vmatpush1.msra.mxu0 %v3000
    %3002 = vmatprep.subr.mxu0 0.0
    %v3003 = vand.u32 %v1452, 4294901760
    %3004 = vmatpush1.msra.mxu0 %v3003
    %3005 = vmatprep.subr.mxu0 0.0
    %v3006 = vand.u32 %v1453, 4294901760
    %3007 = vmatpush1.msra.mxu0 %v3006
    %3008 = vmatprep.subr.mxu0 0.0
    %v3009 = vand.u32 %v1454, 4294901760
    %3010 = vmatpush1.msra.mxu0 %v3009
    %3011 = vmatprep.subr.mxu0 0.0
    %v3012 = vand.u32 %v1455, 4294901760
    %3013 = vmatpush1.msra.mxu0 %v3012
    %3014 = vmatprep.subr.mxu0 0.0
    %v3015 = vand.u32 %v1456, 4294901760
    %3016 = vmatpush1.msra.mxu0 %v3015
    %3017 = vmatprep.subr.mxu0 0.0
    %v3018 = vand.u32 %v1457, 4294901760
    %3019 = vmatpush1.msra.mxu0 %v3018
    %3020 = vmatprep.subr.mxu0 0.0
    %v3021 = vand.u32 %v1458, 4294901760
    %3022 = vmatpush1.msra.mxu0 %v3021
    %3023 = vmatprep.subr.mxu0 0.0
    %v3024 = vand.u32 %v1459, 4294901760
    %3025 = vmatpush1.msra.mxu0 %v3024
    %3026 = vmatprep.subr.mxu0 0.0
    %v3027 = vand.u32 %v1460, 4294901760
    %3028 = vmatpush1.msra.mxu0 %v3027
    %3029 = vmatprep.subr.mxu0 0.0
    %v3030 = vand.u32 %v1461, 4294901760
    %3031 = vmatpush1.msra.mxu0 %v3030
    %3032 = vmatprep.subr.mxu0 0.0
    %v3033 = vand.u32 %v1462, 4294901760
    %3034 = vmatpush1.msra.mxu0 %v3033
    %3035 = vmatprep.subr.mxu0 0.0
    %v3036 = vand.u32 %v1463, 4294901760
    %3037 = vmatpush1.msra.mxu0 %v3036
    %3038 = vmatprep.subr.mxu0 0.0
    %v3039 = vand.u32 %v1464, 4294901760
    %3040 = vmatpush1.msra.mxu0 %v3039
    %3041 = vmatprep.subr.mxu0 0.0
    %v3042 = vand.u32 %v1465, 4294901760
    %3043 = vmatpush1.msra.mxu0 %v3042
    %3044 = vmatprep.subr.mxu0 0.0
    %v3045 = vand.u32 %v1466, 4294901760
    %3046 = vmatpush1.msra.mxu0 %v3045
    %3047 = vmatprep.subr.mxu0 0.0
    %v3048 = vand.u32 %v1467, 4294901760
    %3049 = vmatpush1.msra.mxu0 %v3048
    %3050 = vmatprep.subr.mxu0 0.0
    %v3051 = vand.u32 %v1468, 4294901760
    %3052 = vmatpush1.msra.mxu0 %v3051
    %3053 = vmatprep.subr.mxu0 0.0
    %v3054 = vand.u32 %v1469, 4294901760
    %3055 = vmatpush1.msra.mxu0 %v3054
    %3056 = vmatprep.subr.mxu0 0.0
    %v3057 = vand.u32 %v1470, 4294901760
    %3058 = vmatpush1.msra.mxu0 %v3057
    %3059 = vmatprep.subr.mxu0 0.0
    %v3060 = vand.u32 %v1471, 4294901760
    %3061 = vmatpush1.msra.mxu0 %v3060
    %3062 = vmatprep.subr.mxu0 0.0
    %v3063 = vand.u32 %v1472, 4294901760
    %3064 = vmatpush1.msra.mxu0 %v3063
    %3065 = vmatprep.subr.mxu0 0.0
    %v3066 = vand.u32 %v1473, 4294901760
    %3067 = vmatpush1.msra.mxu0 %v3066
    %3068 = vmatprep.subr.mxu0 0.0
    %v3069 = vand.u32 %v1474, 4294901760
    %3070 = vmatpush1.msra.mxu0 %v3069
    %v3071 = vand.u32 %v1412, 4294901760
    %3072 = vmatprep.mubr.f32.mxu0 %v3071
    %v3073 = vand.u32 %v1411, 4294901760
    %3074 = vmatmul.mubr.f32.gmra.mrb[0].mxu0 %v3073
    %v3075 = vpop.f32.mrb[0].mxu0
    %v3076 = vadd.f32 %v2867, %v3075
    %v3077 = vpop.f32.mrb[0].mxu0
    %v3078 = vand.u32 %v1414, 4294901760
    %3079 = vmatprep.mubr.f32.mxu0 %v3078
    %v3080 = vand.u32 %v1413, 4294901760
    %3081 = vmatmul.mubr.f32.gmra.mrb[0].mxu0 %v3080
    %v3082 = vpop.f32.mrb[0].mxu0
    %v3083 = vadd.f32 %v2874, %v3082
    %v3084 = vpop.f32.mrb[0].mxu0
    %v3085 = vand.u32 %v1416, 4294901760
    %3086 = vmatprep.mubr.f32.mxu0 %v3085
    %v3087 = vand.u32 %v1415, 4294901760
    %3088 = vmatmul.mubr.f32.gmra.mrb[0].mxu0 %v3087
    %v3089 = vpop.f32.mrb[0].mxu0
    %v3090 = vadd.f32 %v2881, %v3089
    %v3091 = vpop.f32.mrb[0].mxu0
    %v3092 = vand.u32 %v1418, 4294901760
    %3093 = vmatprep.mubr.f32.mxu0 %v3092
    %v3094 = vand.u32 %v1417, 4294901760
    %3095 = vmatmul.mubr.f32.gmra.mrb[0].mxu0 %v3094
    %v3096 = vpop.f32.mrb[0].mxu0
    %v3097 = vadd.f32 %v2888, %v3096
    %v3098 = vpop.f32.mrb[0].mxu0
    %v3099 = vand.u32 %v1420, 4294901760
    %3100 = vmatprep.mubr.f32.mxu0 %v3099
    %v3101 = vand.u32 %v1419, 4294901760
    %3102 = vmatmul.mubr.f32.gmra.mrb[0].mxu0 %v3101
    %v3103 = vpop.f32.mrb[0].mxu0
    %v3104 = vadd.f32 %v2895, %v3103
    %v3105 = vpop.f32.mrb[0].mxu0
    %v3106 = vand.u32 %v1422, 4294901760
    %3107 = vmatprep.mubr.f32.mxu0 %v3106
    %v3108 = vand.u32 %v1421, 4294901760
    %3109 = vmatmul.mubr.f32.gmra.mrb[0].mxu0 %v3108
    %v3110 = vpop.f32.mrb[0].mxu0
    %v3111 = vadd.f32 %v2902, %v3110
    %v3112 = vpop.f32.mrb[0].mxu0
    %v3113 = vand.u32 %v1424, 4294901760
    %3114 = vmatprep.mubr.f32.mxu0 %v3113
    %v3115 = vand.u32 %v1423, 4294901760
    %3116 = vmatmul.mubr.f32.gmra.mrb[0].mxu0 %v3115
    %v3117 = vpop.f32.mrb[0].mxu0
    %v3118 = vadd.f32 %v2909, %v3117
    %v3119 = vpop.f32.mrb[0].mxu0
    %v3120 = vand.u32 %v1426, 4294901760
    %3121 = vmatprep.mubr.f32.mxu0 %v3120
    %v3122 = vand.u32 %v1425, 4294901760
    %3123 = vmatmul.mubr.f32.gmra.mrb[0].mxu0 %v3122
    %v3124 = vpop.f32.mrb[0].mxu0
    %v3125 = vadd.f32 %v2916, %v3124
    %v3126 = vpop.f32.mrb[0].mxu0
    %v3127 = vand.u32 %v1428, 4294901760
    %3128 = vmatprep.mubr.f32.mxu0 %v3127
    %v3129 = vand.u32 %v1427, 4294901760
    %3130 = vmatmul.mubr.f32.gmra.mrb[0].mxu0 %v3129
    %v3131 = vpop.f32.mrb[0].mxu0
    %v3132 = vadd.f32 %v2923, %v3131
    %v3133 = vpop.f32.mrb[0].mxu0
    %v3134 = vand.u32 %v1430, 4294901760
    %3135 = vmatprep.mubr.f32.mxu0 %v3134
    %v3136 = vand.u32 %v1429, 4294901760
    %3137 = vmatmul.mubr.f32.gmra.mrb[0].mxu0 %v3136
    %v3138 = vpop.f32.mrb[0].mxu0
    %v3139 = vadd.f32 %v2930, %v3138
    %v3140 = vpop.f32.mrb[0].mxu0
    %v3141 = vand.u32 %v1432, 4294901760
    %3142 = vmatprep.mubr.f32.mxu0 %v3141
    %v3143 = vand.u32 %v1431, 4294901760
    %3144 = vmatmul.mubr.f32.gmra.mrb[0].mxu0 %v3143
    %v3145 = vpop.f32.mrb[0].mxu0
    %v3146 = vadd.f32 %v2937, %v3145
    %v3147 = vpop.f32.mrb[0].mxu0
    %v3148 = vand.u32 %v1434, 4294901760
    %3149 = vmatprep.mubr.f32.mxu0 %v3148
    %v3150 = vand.u32 %v1433, 4294901760
    %3151 = vmatmul.mubr.f32.gmra.mrb[0].mxu0 %v3150
    %v3152 = vpop.f32.mrb[0].mxu0
    %v3153 = vadd.f32 %v2944, %v3152
    %v3154 = vpop.f32.mrb[0].mxu0
    %v3155 = vand.u32 %v1436, 4294901760
    %3156 = vmatprep.mubr.f32.mxu0 %v3155
    %v3157 = vand.u32 %v1435, 4294901760
    %3158 = vmatmul.mubr.f32.gmra.mrb[0].mxu0 %v3157
    %v3159 = vpop.f32.mrb[0].mxu0
    %v3160 = vadd.f32 %v2951, %v3159
    %v3161 = vpop.f32.mrb[0].mxu0
    %v3162 = vand.u32 %v1438, 4294901760
    %3163 = vmatprep.mubr.f32.mxu0 %v3162
    %v3164 = vand.u32 %v1437, 4294901760
    %3165 = vmatmul.mubr.f32.gmra.mrb[0].mxu0 %v3164
    %v3166 = vpop.f32.mrb[0].mxu0
    %v3167 = vadd.f32 %v2958, %v3166
    %v3168 = vpop.f32.mrb[0].mxu0
    %v3169 = vand.u32 %v1440, 4294901760
    %3170 = vmatprep.mubr.f32.mxu0 %v3169
    %v3171 = vand.u32 %v1439, 4294901760
    %3172 = vmatmul.mubr.f32.gmra.mrb[0].mxu0 %v3171
    %v3173 = vpop.f32.mrb[0].mxu0
    %v3174 = vadd.f32 %v2965, %v3173
    %v3175 = vpop.f32.mrb[0].mxu0
    %v3176 = vand.u32 %v1442, 4294901760
    %3177 = vmatprep.mubr.f32.mxu0 %v3176
    %v3178 = vand.u32 %v1441, 4294901760
    %3179 = vmatmul.mubr.f32.gmra.mrb[0].mxu0 %v3178
    %v3180 = vpop.f32.mrb[0].mxu0
    %v3181 = vadd.f32 %v2972, %v3180
    %v3182 = vpop.f32.mrb[0].mxu0
    %3183 = vdwg.mxu0
    %v3184 = vmax.f32 %v3076, 0.0
    %v3185 = vmax.f32 %v3083, 0.0
    %v3186 = vmax.f32 %v3090, 0.0
    %v3187 = vmax.f32 %v3097, 0.0
    %v3188 = vmax.f32 %v3104, 0.0
    %v3189 = vmax.f32 %v3111, 0.0
    %v3190 = vmax.f32 %v3118, 0.0
    %v3191 = vmax.f32 %v3125, 0.0
    %v3192 = vmax.f32 %v3132, 0.0
    %v3193 = vmax.f32 %v3139, 0.0
    %v3194 = vmax.f32 %v3146, 0.0
    %v3195 = vmax.f32 %v3153, 0.0
    %v3196 = vmax.f32 %v3160, 0.0
    %v3197 = vmax.f32 %v3167, 0.0
    %v3198 = vmax.f32 %v3174, 0.0
    %v3199 = vmax.f32 %v3181, 0.0
    %v3200 = vld [vmem:[%s5] sm:$0xff]
    %v3201 = vld [vmem:[%s5 + $0x8] sm:$0xff]
    %v3202 = vld [vmem:[%s5 + $0x10] sm:$0xff]
    %v3203 = vld [vmem:[%s5 + $0x18] sm:$0xff]
    %v3204 = vld [vmem:[%s5 + $0x20] sm:$0xff]
    %v3205 = vld [vmem:[%s5 + $0x28] sm:$0xff]
    %v3206 = vld [vmem:[%s5 + $0x30] sm:$0xff]
    %v3207 = vld [vmem:[%s5 + $0x38] sm:$0xff]
    %v3208 = vld [vmem:[%s5 + $0x40] sm:$0xff]
    %v3209 = vld [vmem:[%s5 + $0x48] sm:$0xff]
    %v3210 = vld [vmem:[%s5 + $0x50] sm:$0xff]
    %v3211 = vld [vmem:[%s5 + $0x58] sm:$0xff]
    %v3212 = vld [vmem:[%s5 + $0x60] sm:$0xff]
    %v3213 = vld [vmem:[%s5 + $0x68] sm:$0xff]
    %v3214 = vld [vmem:[%s5 + $0x70] sm:$0xff]
    %v3215 = vld [vmem:[%s5 + $0x78] sm:$0xff]
    %v3216 = vld [vmem:[%s6] sm:$0x1]
    %v3218 = vlaneseq
    %v3219 = vshrl.u32 %v3218, 7
    %v3220 = vsub.s32 0, %v3219
    %v3221 = vrot.slane %v3216, %v3220
    %3223 = vmatprep.subr.mxu0 0.0
    %v3224 = vand.u32 %v3200, 4294901760
    %3225 = vmatpush1.msra.mxu0 %v3224
    %3226 = vmatprep.subr.mxu0 0.0
    %v3227 = vand.u32 %v3201, 4294901760
    %3228 = vmatpush1.msra.mxu0 %v3227
    %3229 = vmatprep.subr.mxu0 0.0
    %v3230 = vand.u32 %v3202, 4294901760
    %3231 = vmatpush1.msra.mxu0 %v3230
    %3232 = vmatprep.subr.mxu0 0.0
    %v3233 = vand.u32 %v3203, 4294901760
    %3234 = vmatpush1.msra.mxu0 %v3233
    %3235 = vmatprep.subr.mxu0 0.0
    %v3236 = vand.u32 %v3204, 4294901760
    %3237 = vmatpush1.msra.mxu0 %v3236
    %3238 = vmatprep.subr.mxu0 0.0
    %v3239 = vand.u32 %v3205, 4294901760
    %3240 = vmatpush1.msra.mxu0 %v3239
    %3241 = vmatprep.subr.mxu0 0.0
    %v3242 = vand.u32 %v3206, 4294901760
    %3243 = vmatpush1.msra.mxu0 %v3242
    %3244 = vmatprep.subr.mxu0 0.0
    %v3245 = vand.u32 %v3207, 4294901760
    %3246 = vmatpush1.msra.mxu0 %v3245
    %3247 = vmatprep.subr.mxu0 0.0
    %v3248 = vand.u32 %v3208, 4294901760
    %3249 = vmatpush1.msra.mxu0 %v3248
    %3250 = vmatprep.subr.mxu0 0.0
    %v3251 = vand.u32 %v3209, 4294901760
    %3252 = vmatpush1.msra.mxu0 %v3251
    %3253 = vmatprep.subr.mxu0 0.0
    %v3254 = vand.u32 %v3210, 4294901760
    %3255 = vmatpush1.msra.mxu0 %v3254
    %3256 = vmatprep.subr.mxu0 0.0
    %v3257 = vand.u32 %v3211, 4294901760
    %3258 = vmatpush1.msra.mxu0 %v3257
    %3259 = vmatprep.subr.mxu0 0.0
    %v3260 = vand.u32 %v3212, 4294901760
    %3261 = vmatpush1.msra.mxu0 %v3260
    %3262 = vmatprep.subr.mxu0 0.0
    %v3263 = vand.u32 %v3213, 4294901760
    %3264 = vmatpush1.msra.mxu0 %v3263
    %3265 = vmatprep.subr.mxu0 0.0
    %v3266 = vand.u32 %v3214, 4294901760
    %3267 = vmatpush1.msra.mxu0 %v3266
    %3268 = vmatprep.subr.mxu0 0.0
    %v3269 = vand.u32 %v3215, 4294901760
    %3270 = vmatpush1.msra.mxu0 %v3269
    %3271 = vmatprep.subr.mxu0 0.0
    %3272 = vmatpush1.msra.mxu0 0.0
    %3273 = vmatprep.subr.mxu0 0.0
    %3274 = vmatpush1.msra.mxu0 0.0
    %3275 = vmatprep.subr.mxu0 0.0
    %3276 = vmatpush1.msra.mxu0 0.0
    %3277 = vmatprep.subr.mxu0 0.0
    %3278 = vmatpush1.msra.mxu0 0.0
    %3279 = vmatprep.subr.mxu0 0.0
    %3280 = vmatpush1.msra.mxu0 0.0
    %3281 = vmatprep.subr.mxu0 0.0
    %3282 = vmatpush1.msra.mxu0 0.0
    %3283 = vmatprep.subr.mxu0 0.0
    %3284 = vmatpush1.msra.mxu0 0.0
    %3285 = vmatprep.subr.mxu0 0.0
    %3286 = vmatpush1.msra.mxu0 0.0
    %3287 = vmatprep.subr.mxu0 0.0
    %3288 = vmatpush1.msra.mxu0 0.0
    %3289 = vmatprep.subr.mxu0 0.0
    %3290 = vmatpush1.msra.mxu0 0.0
    %3291 = vmatprep.subr.mxu0 0.0
    %3292 = vmatpush1.msra.mxu0 0.0
    %3293 = vmatprep.subr.mxu0 0.0
    %3294 = vmatpush1.msra.mxu0 0.0
    %3295 = vmatprep.subr.mxu0 0.0
    %3296 = vmatpush1.msra.mxu0 0.0
    %3297 = vmatprep.subr.mxu0 0.0
    %3298 = vmatpush1.msra.mxu0 0.0
    %3299 = vmatprep.subr.mxu0 0.0
    %3300 = vmatpush1.msra.mxu0 0.0
    %3301 = vmatprep.subr.mxu0 0.0
    %3302 = vmatpush1.msra.mxu0 0.0
    %3303 = vmatprep.mubr.f32.mxu0 0.0
    %v3304 = vand.u32 %v3184, 4294901760
    %v3305 = vsub.f32 %v3184, %v3304
    %v3306 = vand.u32 %v3305, 4294901760
    %v3307 = vsub.f32 %v3305, %v3306
    %v3308 = vand.u32 %v3307, 4294901760
    %3309 = vmatmul.mubr.f32.gmra.mrb[0].mxu0 %v3308
    %v3310 = vpop.f32.mrb[0].mxu0
    %v3311 = vadd.f32 %v3221, %v3310
    %v3312 = vpop.f32.mrb[0].mxu0
    %3313 = vmatprep.mubr.f32.mxu0 0.0
    %v3314 = vand.u32 %v3185, 4294901760
    %v3315 = vsub.f32 %v3185, %v3314
    %v3316 = vand.u32 %v3315, 4294901760
    %v3317 = vsub.f32 %v3315, %v3316
    %v3318 = vand.u32 %v3317, 4294901760
    %3319 = vmatmul.mubr.f32.gmra.mrb[0].mxu0 %v3318
    %v3320 = vpop.f32.mrb[0].mxu0
    %v3321 = vadd.f32 %v3221, %v3320
    %v3322 = vpop.f32.mrb[0].mxu0
    %3323 = vmatprep.mubr.f32.mxu0 0.0
    %v3324 = vand.u32 %v3186, 4294901760
    %v3325 = vsub.f32 %v3186, %v3324
    %v3326 = vand.u32 %v3325, 4294901760
    %v3327 = vsub.f32 %v3325, %v3326
    %v3328 = vand.u32 %v3327, 4294901760
    %3329 = vmatmul.mubr.f32.gmra.mrb[0].mxu0 %v3328
    %v3330 = vpop.f32.mrb[0].mxu0
    %v3331 = vadd.f32 %v3221, %v3330
    %v3332 = vpop.f32.mrb[0].mxu0
    %3333 = vmatprep.mubr.f32.mxu0 0.0
    %v3334 = vand.u32 %v3187, 4294901760
    %v3335 = vsub.f32 %v3187, %v3334
    %v3336 = vand.u32 %v3335, 4294901760
    %v3337 = vsub.f32 %v3335, %v3336
    %v3338 = vand.u32 %v3337, 4294901760
    %3339 = vmatmul.mubr.f32.gmra.mrb[0].mxu0 %v3338
    %v3340 = vpop.f32.mrb[0].mxu0
    %v3341 = vadd.f32 %v3221, %v3340
    %v3342 = vpop.f32.mrb[0].mxu0
    %3343 = vmatprep.mubr.f32.mxu0 0.0
    %v3344 = vand.u32 %v3188, 4294901760
    %v3345 = vsub.f32 %v3188, %v3344
    %v3346 = vand.u32 %v3345, 4294901760
    %v3347 = vsub.f32 %v3345, %v3346
    %v3348 = vand.u32 %v3347, 4294901760
    %3349 = vmatmul.mubr.f32.gmra.mrb[0].mxu0 %v3348
    %v3350 = vpop.f32.mrb[0].mxu0
    %v3351 = vadd.f32 %v3221, %v3350
    %v3352 = vpop.f32.mrb[0].mxu0
    %3353 = vmatprep.mubr.f32.mxu0 0.0
    %v3354 = vand.u32 %v3189, 4294901760
    %v3355 = vsub.f32 %v3189, %v3354
    %v3356 = vand.u32 %v3355, 4294901760
    %v3357 = vsub.f32 %v3355, %v3356
    %v3358 = vand.u32 %v3357, 4294901760
    %3359 = vmatmul.mubr.f32.gmra.mrb[0].mxu0 %v3358
    %v3360 = vpop.f32.mrb[0].mxu0
    %v3361 = vadd.f32 %v3221, %v3360
    %v3362 = vpop.f32.mrb[0].mxu0
    %3363 = vmatprep.mubr.f32.mxu0 0.0
    %v3364 = vand.u32 %v3190, 4294901760
    %v3365 = vsub.f32 %v3190, %v3364
    %v3366 = vand.u32 %v3365, 4294901760
    %v3367 = vsub.f32 %v3365, %v3366
    %v3368 = vand.u32 %v3367, 4294901760
    %3369 = vmatmul.mubr.f32.gmra.mrb[0].mxu0 %v3368
    %v3370 = vpop.f32.mrb[0].mxu0
    %v3371 = vadd.f32 %v3221, %v3370
    %v3372 = vpop.f32.mrb[0].mxu0
    %3373 = vmatprep.mubr.f32.mxu0 0.0
    %v3374 = vand.u32 %v3191, 4294901760
    %v3375 = vsub.f32 %v3191, %v3374
    %v3376 = vand.u32 %v3375, 4294901760
    %v3377 = vsub.f32 %v3375, %v3376
    %v3378 = vand.u32 %v3377, 4294901760
    %3379 = vmatmul.mubr.f32.gmra.mrb[0].mxu0 %v3378
    %v3380 = vpop.f32.mrb[0].mxu0
    %v3381 = vadd.f32 %v3221, %v3380
    %v3382 = vpop.f32.mrb[0].mxu0
    %3383 = vmatprep.mubr.f32.mxu0 0.0
    %v3384 = vand.u32 %v3192, 4294901760
    %v3385 = vsub.f32 %v3192, %v3384
    %v3386 = vand.u32 %v3385, 4294901760
    %v3387 = vsub.f32 %v3385, %v3386
    %v3388 = vand.u32 %v3387, 4294901760
    %3389 = vmatmul.mubr.f32.gmra.mrb[0].mxu0 %v3388
    %v3390 = vpop.f32.mrb[0].mxu0
    %v3391 = vadd.f32 %v3221, %v3390
    %v3392 = vpop.f32.mrb[0].mxu0
    %3393 = vmatprep.mubr.f32.mxu0 0.0
    %v3394 = vand.u32 %v3193, 4294901760
    %v3395 = vsub.f32 %v3193, %v3394
    %v3396 = vand.u32 %v3395, 4294901760
    %v3397 = vsub.f32 %v3395, %v3396
    %v3398 = vand.u32 %v3397, 4294901760
    %3399 = vmatmul.mubr.f32.gmra.mrb[0].mxu0 %v3398
    %v3400 = vpop.f32.mrb[0].mxu0
    %v3401 = vadd.f32 %v3221, %v3400
    %v3402 = vpop.f32.mrb[0].mxu0
    %3403 = vmatprep.mubr.f32.mxu0 0.0
    %v3404 = vand.u32 %v3194, 4294901760
    %v3405 = vsub.f32 %v3194, %v3404
    %v3406 = vand.u32 %v3405, 4294901760
    %v3407 = vsub.f32 %v3405, %v3406
    %v3408 = vand.u32 %v3407, 4294901760
    %3409 = vmatmul.mubr.f32.gmra.mrb[0].mxu0 %v3408
    %v3410 = vpop.f32.mrb[0].mxu0
    %v3411 = vadd.f32 %v3221, %v3410
    %v3412 = vpop.f32.mrb[0].mxu0
    %3413 = vmatprep.mubr.f32.mxu0 0.0
    %v3414 = vand.u32 %v3195, 4294901760
    %v3415 = vsub.f32 %v3195, %v3414
    %v3416 = vand.u32 %v3415, 4294901760
    %v3417 = vsub.f32 %v3415, %v3416
    %v3418 = vand.u32 %v3417, 4294901760
    %3419 = vmatmul.mubr.f32.gmra.mrb[0].mxu0 %v3418
    %v3420 = vpop.f32.mrb[0].mxu0
    %v3421 = vadd.f32 %v3221, %v3420
    %v3422 = vpop.f32.mrb[0].mxu0
    %3423 = vmatprep.mubr.f32.mxu0 0.0
    %v3424 = vand.u32 %v3196, 4294901760
    %v3425 = vsub.f32 %v3196, %v3424
    %v3426 = vand.u32 %v3425, 4294901760
    %v3427 = vsub.f32 %v3425, %v3426
    %v3428 = vand.u32 %v3427, 4294901760
    %3429 = vmatmul.mubr.f32.gmra.mrb[0].mxu0 %v3428
    %v3430 = vpop.f32.mrb[0].mxu0
    %v3431 = vadd.f32 %v3221, %v3430
    %v3432 = vpop.f32.mrb[0].mxu0
    %3433 = vmatprep.mubr.f32.mxu0 0.0
    %v3434 = vand.u32 %v3197, 4294901760
    %v3435 = vsub.f32 %v3197, %v3434
    %v3436 = vand.u32 %v3435, 4294901760
    %v3437 = vsub.f32 %v3435, %v3436
    %v3438 = vand.u32 %v3437, 4294901760
    %3439 = vmatmul.mubr.f32.gmra.mrb[0].mxu0 %v3438
    %v3440 = vpop.f32.mrb[0].mxu0
    %v3441 = vadd.f32 %v3221, %v3440
    %v3442 = vpop.f32.mrb[0].mxu0
    %3443 = vmatprep.mubr.f32.mxu0 0.0
    %v3444 = vand.u32 %v3198, 4294901760
    %v3445 = vsub.f32 %v3198, %v3444
    %v3446 = vand.u32 %v3445, 4294901760
    %v3447 = vsub.f32 %v3445, %v3446
    %v3448 = vand.u32 %v3447, 4294901760
    %3449 = vmatmul.mubr.f32.gmra.mrb[0].mxu0 %v3448
    %v3450 = vpop.f32.mrb[0].mxu0
    %v3451 = vadd.f32 %v3221, %v3450
    %v3452 = vpop.f32.mrb[0].mxu0
    %3453 = vmatprep.mubr.f32.mxu0 0.0
    %v3454 = vand.u32 %v3199, 4294901760
    %v3455 = vsub.f32 %v3199, %v3454
    %v3456 = vand.u32 %v3455, 4294901760
    %v3457 = vsub.f32 %v3455, %v3456
    %v3458 = vand.u32 %v3457, 4294901760
    %3459 = vmatmul.mubr.f32.gmra.mrb[0].mxu0 %v3458
    %v3460 = vpop.f32.mrb[0].mxu0
    %v3461 = vadd.f32 %v3221, %v3460
    %v3462 = vpop.f32.mrb[0].mxu0
    %3463 = vdwg.mxu0
    %3464 = vmatprep.subr.mxu0 0.0
    %v3465 = vand.u32 %v3200, 4294901760
    %v3466 = vsub.f32 %v3200, %v3465
    %v3467 = vand.u32 %v3466, 4294901760
    %v3468 = vsub.f32 %v3466, %v3467
    %v3469 = vand.u32 %v3468, 4294901760
    %3470 = vmatpush1.msra.mxu0 %v3469
    %3471 = vmatprep.subr.mxu0 0.0
    %v3472 = vand.u32 %v3201, 4294901760
    %v3473 = vsub.f32 %v3201, %v3472
    %v3474 = vand.u32 %v3473, 4294901760
    %v3475 = vsub.f32 %v3473, %v3474
    %v3476 = vand.u32 %v3475, 4294901760
    %3477 = vmatpush1.msra.mxu0 %v3476
    %3478 = vmatprep.subr.mxu0 0.0
    %v3479 = vand.u32 %v3202, 4294901760
    %v3480 = vsub.f32 %v3202, %v3479
    %v3481 = vand.u32 %v3480, 4294901760
    %v3482 = vsub.f32 %v3480, %v3481
    %v3483 = vand.u32 %v3482, 4294901760
    %3484 = vmatpush1.msra.mxu0 %v3483
    %3485 = vmatprep.subr.mxu0 0.0
    %v3486 = vand.u32 %v3203, 4294901760
    %v3487 = vsub.f32 %v3203, %v3486
    %v3488 = vand.u32 %v3487, 4294901760
    %v3489 = vsub.f32 %v3487, %v3488
    %v3490 = vand.u32 %v3489, 4294901760
    %3491 = vmatpush1.msra.mxu0 %v3490
    %3492 = vmatprep.subr.mxu0 0.0
    %v3493 = vand.u32 %v3204, 4294901760
    %v3494 = vsub.f32 %v3204, %v3493
    %v3495 = vand.u32 %v3494, 4294901760
    %v3496 = vsub.f32 %v3494, %v3495
    %v3497 = vand.u32 %v3496, 4294901760
    %3498 = vmatpush1.msra.mxu0 %v3497
    %3499 = vmatprep.subr.mxu0 0.0
    %v3500 = vand.u32 %v3205, 4294901760
    %v3501 = vsub.f32 %v3205, %v3500
    %v3502 = vand.u32 %v3501, 4294901760
    %v3503 = vsub.f32 %v3501, %v3502
    %v3504 = vand.u32 %v3503, 4294901760
    %3505 = vmatpush1.msra.mxu0 %v3504
    %3506 = vmatprep.subr.mxu0 0.0
    %v3507 = vand.u32 %v3206, 4294901760
    %v3508 = vsub.f32 %v3206, %v3507
    %v3509 = vand.u32 %v3508, 4294901760
    %v3510 = vsub.f32 %v3508, %v3509
    %v3511 = vand.u32 %v3510, 4294901760
    %3512 = vmatpush1.msra.mxu0 %v3511
    %3513 = vmatprep.subr.mxu0 0.0
    %v3514 = vand.u32 %v3207, 4294901760
    %v3515 = vsub.f32 %v3207, %v3514
    %v3516 = vand.u32 %v3515, 4294901760
    %v3517 = vsub.f32 %v3515, %v3516
    %v3518 = vand.u32 %v3517, 4294901760
    %3519 = vmatpush1.msra.mxu0 %v3518
    %3520 = vmatprep.subr.mxu0 0.0
    %v3521 = vand.u32 %v3208, 4294901760
    %v3522 = vsub.f32 %v3208, %v3521
    %v3523 = vand.u32 %v3522, 4294901760
    %v3524 = vsub.f32 %v3522, %v3523
    %v3525 = vand.u32 %v3524, 4294901760
    %3526 = vmatpush1.msra.mxu0 %v3525
    %3527 = vmatprep.subr.mxu0 0.0
    %v3528 = vand.u32 %v3209, 4294901760
    %v3529 = vsub.f32 %v3209, %v3528
    %v3530 = vand.u32 %v3529, 4294901760
    %v3531 = vsub.f32 %v3529, %v3530
    %v3532 = vand.u32 %v3531, 4294901760
    %3533 = vmatpush1.msra.mxu0 %v3532
    %3534 = vmatprep.subr.mxu0 0.0
    %v3535 = vand.u32 %v3210, 4294901760
    %v3536 = vsub.f32 %v3210, %v3535
    %v3537 = vand.u32 %v3536, 4294901760
    %v3538 = vsub.f32 %v3536, %v3537
    %v3539 = vand.u32 %v3538, 4294901760
    %3540 = vmatpush1.msra.mxu0 %v3539
    %3541 = vmatprep.subr.mxu0 0.0
    %v3542 = vand.u32 %v3211, 4294901760
    %v3543 = vsub.f32 %v3211, %v3542
    %v3544 = vand.u32 %v3543, 4294901760
    %v3545 = vsub.f32 %v3543, %v3544
    %v3546 = vand.u32 %v3545, 4294901760
    %3547 = vmatpush1.msra.mxu0 %v3546
    %3548 = vmatprep.subr.mxu0 0.0
    %v3549 = vand.u32 %v3212, 4294901760
    %v3550 = vsub.f32 %v3212, %v3549
    %v3551 = vand.u32 %v3550, 4294901760
    %v3552 = vsub.f32 %v3550, %v3551
    %v3553 = vand.u32 %v3552, 4294901760
    %3554 = vmatpush1.msra.mxu0 %v3553
    %3555 = vmatprep.subr.mxu0 0.0
    %v3556 = vand.u32 %v3213, 4294901760
    %v3557 = vsub.f32 %v3213, %v3556
    %v3558 = vand.u32 %v3557, 4294901760
    %v3559 = vsub.f32 %v3557, %v3558
    %v3560 = vand.u32 %v3559, 4294901760
    %3561 = vmatpush1.msra.mxu0 %v3560
    %3562 = vmatprep.subr.mxu0 0.0
    %v3563 = vand.u32 %v3214, 4294901760
    %v3564 = vsub.f32 %v3214, %v3563
    %v3565 = vand.u32 %v3564, 4294901760
    %v3566 = vsub.f32 %v3564, %v3565
    %v3567 = vand.u32 %v3566, 4294901760
    %3568 = vmatpush1.msra.mxu0 %v3567
    %3569 = vmatprep.subr.mxu0 0.0
    %v3570 = vand.u32 %v3215, 4294901760
    %v3571 = vsub.f32 %v3215, %v3570
    %v3572 = vand.u32 %v3571, 4294901760
    %v3573 = vsub.f32 %v3571, %v3572
    %v3574 = vand.u32 %v3573, 4294901760
    %3575 = vmatpush1.msra.mxu0 %v3574
    %3576 = vmatprep.subr.mxu0 0.0
    %3577 = vmatpush1.msra.mxu0 0.0
    %3578 = vmatprep.subr.mxu0 0.0
    %3579 = vmatpush1.msra.mxu0 0.0
    %3580 = vmatprep.subr.mxu0 0.0
    %3581 = vmatpush1.msra.mxu0 0.0
    %3582 = vmatprep.subr.mxu0 0.0
    %3583 = vmatpush1.msra.mxu0 0.0
    %3584 = vmatprep.subr.mxu0 0.0
    %3585 = vmatpush1.msra.mxu0 0.0
    %3586 = vmatprep.subr.mxu0 0.0
    %3587 = vmatpush1.msra.mxu0 0.0
    %3588 = vmatprep.subr.mxu0 0.0
    %3589 = vmatpush1.msra.mxu0 0.0
    %3590 = vmatprep.subr.mxu0 0.0
    %3591 = vmatpush1.msra.mxu0 0.0
    %3592 = vmatprep.subr.mxu0 0.0
    %3593 = vmatpush1.msra.mxu0 0.0
    %3594 = vmatprep.subr.mxu0 0.0
    %3595 = vmatpush1.msra.mxu0 0.0
    %3596 = vmatprep.subr.mxu0 0.0
    %3597 = vmatpush1.msra.mxu0 0.0
    %3598 = vmatprep.subr.mxu0 0.0
    %3599 = vmatpush1.msra.mxu0 0.0
    %3600 = vmatprep.subr.mxu0 0.0
    %3601 = vmatpush1.msra.mxu0 0.0
    %3602 = vmatprep.subr.mxu0 0.0
    %3603 = vmatpush1.msra.mxu0 0.0
    %3604 = vmatprep.subr.mxu0 0.0
    %3605 = vmatpush1.msra.mxu0 0.0
    %3606 = vmatprep.subr.mxu0 0.0
    %3607 = vmatpush1.msra.mxu0 0.0
    %3608 = vmatprep.mubr.f32.mxu0 0.0
    %v3609 = vand.u32 %v3184, 4294901760
    %3610 = vmatmul.mubr.f32.gmra.mrb[0].mxu0 %v3609
    %v3611 = vpop.f32.mrb[0].mxu0
    %v3612 = vadd.f32 %v3311, %v3611
    %v3613 = vpop.f32.mrb[0].mxu0
    %3614 = vmatprep.mubr.f32.mxu0 0.0
    %v3615 = vand.u32 %v3185, 4294901760
    %3616 = vmatmul.mubr.f32.gmra.mrb[0].mxu0 %v3615
    %v3617 = vpop.f32.mrb[0].mxu0
    %v3618 = vadd.f32 %v3321, %v3617
    %v3619 = vpop.f32.mrb[0].mxu0
    %3620 = vmatprep.mubr.f32.mxu0 0.0
    %v3621 = vand.u32 %v3186, 4294901760
    %3622 = vmatmul.mubr.f32.gmra.mrb[0].mxu0 %v3621
    %v3623 = vpop.f32.mrb[0].mxu0
    %v3624 = vadd.f32 %v3331, %v3623
    %v3625 = vpop.f32.mrb[0].mxu0
    %3626 = vmatprep.mubr.f32.mxu0 0.0
    %v3627 = vand.u32 %v3187, 4294901760
    %3628 = vmatmul.mubr.f32.gmra.mrb[0].mxu0 %v3627
    %v3629 = vpop.f32.mrb[0].mxu0
    %v3630 = vadd.f32 %v3341, %v3629
    %v3631 = vpop.f32.mrb[0].mxu0
    %3632 = vmatprep.mubr.f32.mxu0 0.0
    %v3633 = vand.u32 %v3188, 4294901760
    %3634 = vmatmul.mubr.f32.gmra.mrb[0].mxu0 %v3633
    %v3635 = vpop.f32.mrb[0].mxu0
    %v3636 = vadd.f32 %v3351, %v3635
    %v3637 = vpop.f32.mrb[0].mxu0
    %3638 = vmatprep.mubr.f32.mxu0 0.0
    %v3639 = vand.u32 %v3189, 4294901760
    %3640 = vmatmul.mubr.f32.gmra.mrb[0].mxu0 %v3639
    %v3641 = vpop.f32.mrb[0].mxu0
    %v3642 = vadd.f32 %v3361, %v3641
    %v3643 = vpop.f32.mrb[0].mxu0
    %3644 = vmatprep.mubr.f32.mxu0 0.0
    %v3645 = vand.u32 %v3190, 4294901760
    %3646 = vmatmul.mubr.f32.gmra.mrb[0].mxu0 %v3645
    %v3647 = vpop.f32.mrb[0].mxu0
    %v3648 = vadd.f32 %v3371, %v3647
    %v3649 = vpop.f32.mrb[0].mxu0
    %3650 = vmatprep.mubr.f32.mxu0 0.0
    %v3651 = vand.u32 %v3191, 4294901760
    %3652 = vmatmul.mubr.f32.gmra.mrb[0].mxu0 %v3651
    %v3653 = vpop.f32.mrb[0].mxu0
    %v3654 = vadd.f32 %v3381, %v3653
    %v3655 = vpop.f32.mrb[0].mxu0
    %3656 = vmatprep.mubr.f32.mxu0 0.0
    %v3657 = vand.u32 %v3192, 4294901760
    %3658 = vmatmul.mubr.f32.gmra.mrb[0].mxu0 %v3657
    %v3659 = vpop.f32.mrb[0].mxu0
    %v3660 = vadd.f32 %v3391, %v3659
    %v3661 = vpop.f32.mrb[0].mxu0
    %3662 = vmatprep.mubr.f32.mxu0 0.0
    %v3663 = vand.u32 %v3193, 4294901760
    %3664 = vmatmul.mubr.f32.gmra.mrb[0].mxu0 %v3663
    %v3665 = vpop.f32.mrb[0].mxu0
    %v3666 = vadd.f32 %v3401, %v3665
    %v3667 = vpop.f32.mrb[0].mxu0
    %3668 = vmatprep.mubr.f32.mxu0 0.0
    %v3669 = vand.u32 %v3194, 4294901760
    %3670 = vmatmul.mubr.f32.gmra.mrb[0].mxu0 %v3669
    %v3671 = vpop.f32.mrb[0].mxu0
    %v3672 = vadd.f32 %v3411, %v3671
    %v3673 = vpop.f32.mrb[0].mxu0
    %3674 = vmatprep.mubr.f32.mxu0 0.0
    %v3675 = vand.u32 %v3195, 4294901760
    %3676 = vmatmul.mubr.f32.gmra.mrb[0].mxu0 %v3675
    %v3677 = vpop.f32.mrb[0].mxu0
    %v3678 = vadd.f32 %v3421, %v3677
    %v3679 = vpop.f32.mrb[0].mxu0
    %3680 = vmatprep.mubr.f32.mxu0 0.0
    %v3681 = vand.u32 %v3196, 4294901760
    %3682 = vmatmul.mubr.f32.gmra.mrb[0].mxu0 %v3681
    %v3683 = vpop.f32.mrb[0].mxu0
    %v3684 = vadd.f32 %v3431, %v3683
    %v3685 = vpop.f32.mrb[0].mxu0
    %3686 = vmatprep.mubr.f32.mxu0 0.0
    %v3687 = vand.u32 %v3197, 4294901760
    %3688 = vmatmul.mubr.f32.gmra.mrb[0].mxu0 %v3687
    %v3689 = vpop.f32.mrb[0].mxu0
    %v3690 = vadd.f32 %v3441, %v3689
    %v3691 = vpop.f32.mrb[0].mxu0
    %3692 = vmatprep.mubr.f32.mxu0 0.0
    %v3693 = vand.u32 %v3198, 4294901760
    %3694 = vmatmul.mubr.f32.gmra.mrb[0].mxu0 %v3693
    %v3695 = vpop.f32.mrb[0].mxu0
    %v3696 = vadd.f32 %v3451, %v3695
    %v3697 = vpop.f32.mrb[0].mxu0
    %3698 = vmatprep.mubr.f32.mxu0 0.0
    %v3699 = vand.u32 %v3199, 4294901760
    %3700 = vmatmul.mubr.f32.gmra.mrb[0].mxu0 %v3699
    %v3701 = vpop.f32.mrb[0].mxu0
    %v3702 = vadd.f32 %v3461, %v3701
    %v3703 = vpop.f32.mrb[0].mxu0
    %3704 = vdwg.mxu0
    %3705 = vmatprep.subr.mxu0 0.0
    %v3706 = vand.u32 %v3200, 4294901760
    %v3707 = vsub.f32 %v3200, %v3706
    %3708 = vmatpush1.msra.mxu0 %v3707
    %3709 = vmatprep.subr.mxu0 0.0
    %v3710 = vand.u32 %v3201, 4294901760
    %v3711 = vsub.f32 %v3201, %v3710
    %3712 = vmatpush1.msra.mxu0 %v3711
    %3713 = vmatprep.subr.mxu0 0.0
    %v3714 = vand.u32 %v3202, 4294901760
    %v3715 = vsub.f32 %v3202, %v3714
    %3716 = vmatpush1.msra.mxu0 %v3715
    %3717 = vmatprep.subr.mxu0 0.0
    %v3718 = vand.u32 %v3203, 4294901760
    %v3719 = vsub.f32 %v3203, %v3718
    %3720 = vmatpush1.msra.mxu0 %v3719
    %3721 = vmatprep.subr.mxu0 0.0
    %v3722 = vand.u32 %v3204, 4294901760
    %v3723 = vsub.f32 %v3204, %v3722
    %3724 = vmatpush1.msra.mxu0 %v3723
    %3725 = vmatprep.subr.mxu0 0.0
    %v3726 = vand.u32 %v3205, 4294901760
    %v3727 = vsub.f32 %v3205, %v3726
    %3728 = vmatpush1.msra.mxu0 %v3727
    %3729 = vmatprep.subr.mxu0 0.0
    %v3730 = vand.u32 %v3206, 4294901760
    %v3731 = vsub.f32 %v3206, %v3730
    %3732 = vmatpush1.msra.mxu0 %v3731
    %3733 = vmatprep.subr.mxu0 0.0
    %v3734 = vand.u32 %v3207, 4294901760
    %v3735 = vsub.f32 %v3207, %v3734
    %3736 = vmatpush1.msra.mxu0 %v3735
    %3737 = vmatprep.subr.mxu0 0.0
    %v3738 = vand.u32 %v3208, 4294901760
    %v3739 = vsub.f32 %v3208, %v3738
    %3740 = vmatpush1.msra.mxu0 %v3739
    %3741 = vmatprep.subr.mxu0 0.0
    %v3742 = vand.u32 %v3209, 4294901760
    %v3743 = vsub.f32 %v3209, %v3742
    %3744 = vmatpush1.msra.mxu0 %v3743
    %3745 = vmatprep.subr.mxu0 0.0
    %v3746 = vand.u32 %v3210, 4294901760
    %v3747 = vsub.f32 %v3210, %v3746
    %3748 = vmatpush1.msra.mxu0 %v3747
    %3749 = vmatprep.subr.mxu0 0.0
    %v3750 = vand.u32 %v3211, 4294901760
    %v3751 = vsub.f32 %v3211, %v3750
    %3752 = vmatpush1.msra.mxu0 %v3751
    %3753 = vmatprep.subr.mxu0 0.0
    %v3754 = vand.u32 %v3212, 4294901760
    %v3755 = vsub.f32 %v3212, %v3754
    %3756 = vmatpush1.msra.mxu0 %v3755
    %3757 = vmatprep.subr.mxu0 0.0
    %v3758 = vand.u32 %v3213, 4294901760
    %v3759 = vsub.f32 %v3213, %v3758
    %3760 = vmatpush1.msra.mxu0 %v3759
    %3761 = vmatprep.subr.mxu0 0.0
    %v3762 = vand.u32 %v3214, 4294901760
    %v3763 = vsub.f32 %v3214, %v3762
    %3764 = vmatpush1.msra.mxu0 %v3763
    %3765 = vmatprep.subr.mxu0 0.0
    %v3766 = vand.u32 %v3215, 4294901760
    %v3767 = vsub.f32 %v3215, %v3766
    %3768 = vmatpush1.msra.mxu0 %v3767
    %3769 = vmatprep.subr.mxu0 0.0
    %3770 = vmatpush1.msra.mxu0 0.0
    %3771 = vmatprep.subr.mxu0 0.0
    %3772 = vmatpush1.msra.mxu0 0.0
    %3773 = vmatprep.subr.mxu0 0.0
    %3774 = vmatpush1.msra.mxu0 0.0
    %3775 = vmatprep.subr.mxu0 0.0
    %3776 = vmatpush1.msra.mxu0 0.0
    %3777 = vmatprep.subr.mxu0 0.0
    %3778 = vmatpush1.msra.mxu0 0.0
    %3779 = vmatprep.subr.mxu0 0.0
    %3780 = vmatpush1.msra.mxu0 0.0
    %3781 = vmatprep.subr.mxu0 0.0
    %3782 = vmatpush1.msra.mxu0 0.0
    %3783 = vmatprep.subr.mxu0 0.0
    %3784 = vmatpush1.msra.mxu0 0.0
    %3785 = vmatprep.subr.mxu0 0.0
    %3786 = vmatpush1.msra.mxu0 0.0
    %3787 = vmatprep.subr.mxu0 0.0
    %3788 = vmatpush1.msra.mxu0 0.0
    %3789 = vmatprep.subr.mxu0 0.0
    %3790 = vmatpush1.msra.mxu0 0.0
    %3791 = vmatprep.subr.mxu0 0.0
    %3792 = vmatpush1.msra.mxu0 0.0
    %3793 = vmatprep.subr.mxu0 0.0
    %3794 = vmatpush1.msra.mxu0 0.0
    %3795 = vmatprep.subr.mxu0 0.0
    %3796 = vmatpush1.msra.mxu0 0.0
    %3797 = vmatprep.subr.mxu0 0.0
    %3798 = vmatpush1.msra.mxu0 0.0
    %3799 = vmatprep.subr.mxu0 0.0
    %3800 = vmatpush1.msra.mxu0 0.0
    %3801 = vmatprep.mubr.f32.mxu0 0.0
    %v3802 = vand.u32 %v3184, 4294901760
    %v3803 = vsub.f32 %v3184, %v3802
    %3804 = vmatmul.mubr.f32.gmra.mrb[0].mxu0 %v3803
    %v3805 = vpop.f32.mrb[0].mxu0
    %v3806 = vadd.f32 %v3612, %v3805
    %v3807 = vpop.f32.mrb[0].mxu0
    %3808 = vmatprep.mubr.f32.mxu0 0.0
    %v3809 = vand.u32 %v3185, 4294901760
    %v3810 = vsub.f32 %v3185, %v3809
    %3811 = vmatmul.mubr.f32.gmra.mrb[0].mxu0 %v3810
    %v3812 = vpop.f32.mrb[0].mxu0
    %v3813 = vadd.f32 %v3618, %v3812
    %v3814 = vpop.f32.mrb[0].mxu0
    %3815 = vmatprep.mubr.f32.mxu0 0.0
    %v3816 = vand.u32 %v3186, 4294901760
    %v3817 = vsub.f32 %v3186, %v3816
    %3818 = vmatmul.mubr.f32.gmra.mrb[0].mxu0 %v3817
    %v3819 = vpop.f32.mrb[0].mxu0
    %v3820 = vadd.f32 %v3624, %v3819
    %v3821 = vpop.f32.mrb[0].mxu0
    %3822 = vmatprep.mubr.f32.mxu0 0.0
    %v3823 = vand.u32 %v3187, 4294901760
    %v3824 = vsub.f32 %v3187, %v3823
    %3825 = vmatmul.mubr.f32.gmra.mrb[0].mxu0 %v3824
    %v3826 = vpop.f32.mrb[0].mxu0
    %v3827 = vadd.f32 %v3630, %v3826
    %v3828 = vpop.f32.mrb[0].mxu0
    %3829 = vmatprep.mubr.f32.mxu0 0.0
    %v3830 = vand.u32 %v3188, 4294901760
    %v3831 = vsub.f32 %v3188, %v3830
    %3832 = vmatmul.mubr.f32.gmra.mrb[0].mxu0 %v3831
    %v3833 = vpop.f32.mrb[0].mxu0
    %v3834 = vadd.f32 %v3636, %v3833
    %v3835 = vpop.f32.mrb[0].mxu0
    %3836 = vmatprep.mubr.f32.mxu0 0.0
    %v3837 = vand.u32 %v3189, 4294901760
    %v3838 = vsub.f32 %v3189, %v3837
    %3839 = vmatmul.mubr.f32.gmra.mrb[0].mxu0 %v3838
    %v3840 = vpop.f32.mrb[0].mxu0
    %v3841 = vadd.f32 %v3642, %v3840
    %v3842 = vpop.f32.mrb[0].mxu0
    %3843 = vmatprep.mubr.f32.mxu0 0.0
    %v3844 = vand.u32 %v3190, 4294901760
    %v3845 = vsub.f32 %v3190, %v3844
    %3846 = vmatmul.mubr.f32.gmra.mrb[0].mxu0 %v3845
    %v3847 = vpop.f32.mrb[0].mxu0
    %v3848 = vadd.f32 %v3648, %v3847
    %v3849 = vpop.f32.mrb[0].mxu0
    %3850 = vmatprep.mubr.f32.mxu0 0.0
    %v3851 = vand.u32 %v3191, 4294901760
    %v3852 = vsub.f32 %v3191, %v3851
    %3853 = vmatmul.mubr.f32.gmra.mrb[0].mxu0 %v3852
    %v3854 = vpop.f32.mrb[0].mxu0
    %v3855 = vadd.f32 %v3654, %v3854
    %v3856 = vpop.f32.mrb[0].mxu0
    %3857 = vmatprep.mubr.f32.mxu0 0.0
    %v3858 = vand.u32 %v3192, 4294901760
    %v3859 = vsub.f32 %v3192, %v3858
    %3860 = vmatmul.mubr.f32.gmra.mrb[0].mxu0 %v3859
    %v3861 = vpop.f32.mrb[0].mxu0
    %v3862 = vadd.f32 %v3660, %v3861
    %v3863 = vpop.f32.mrb[0].mxu0
    %3864 = vmatprep.mubr.f32.mxu0 0.0
    %v3865 = vand.u32 %v3193, 4294901760
    %v3866 = vsub.f32 %v3193, %v3865
    %3867 = vmatmul.mubr.f32.gmra.mrb[0].mxu0 %v3866
    %v3868 = vpop.f32.mrb[0].mxu0
    %v3869 = vadd.f32 %v3666, %v3868
    %v3870 = vpop.f32.mrb[0].mxu0
    %3871 = vmatprep.mubr.f32.mxu0 0.0
    %v3872 = vand.u32 %v3194, 4294901760
    %v3873 = vsub.f32 %v3194, %v3872
    %3874 = vmatmul.mubr.f32.gmra.mrb[0].mxu0 %v3873
    %v3875 = vpop.f32.mrb[0].mxu0
    %v3876 = vadd.f32 %v3672, %v3875
    %v3877 = vpop.f32.mrb[0].mxu0
    %3878 = vmatprep.mubr.f32.mxu0 0.0
    %v3879 = vand.u32 %v3195, 4294901760
    %v3880 = vsub.f32 %v3195, %v3879
    %3881 = vmatmul.mubr.f32.gmra.mrb[0].mxu0 %v3880
    %v3882 = vpop.f32.mrb[0].mxu0
    %v3883 = vadd.f32 %v3678, %v3882
    %v3884 = vpop.f32.mrb[0].mxu0
    %3885 = vmatprep.mubr.f32.mxu0 0.0
    %v3886 = vand.u32 %v3196, 4294901760
    %v3887 = vsub.f32 %v3196, %v3886
    %3888 = vmatmul.mubr.f32.gmra.mrb[0].mxu0 %v3887
    %v3889 = vpop.f32.mrb[0].mxu0
    %v3890 = vadd.f32 %v3684, %v3889
    %v3891 = vpop.f32.mrb[0].mxu0
    %3892 = vmatprep.mubr.f32.mxu0 0.0
    %v3893 = vand.u32 %v3197, 4294901760
    %v3894 = vsub.f32 %v3197, %v3893
    %3895 = vmatmul.mubr.f32.gmra.mrb[0].mxu0 %v3894
    %v3896 = vpop.f32.mrb[0].mxu0
    %v3897 = vadd.f32 %v3690, %v3896
    %v3898 = vpop.f32.mrb[0].mxu0
    %3899 = vmatprep.mubr.f32.mxu0 0.0
    %v3900 = vand.u32 %v3198, 4294901760
    %v3901 = vsub.f32 %v3198, %v3900
    %3902 = vmatmul.mubr.f32.gmra.mrb[0].mxu0 %v3901
    %v3903 = vpop.f32.mrb[0].mxu0
    %v3904 = vadd.f32 %v3696, %v3903
    %v3905 = vpop.f32.mrb[0].mxu0
    %3906 = vmatprep.mubr.f32.mxu0 0.0
    %v3907 = vand.u32 %v3199, 4294901760
    %v3908 = vsub.f32 %v3199, %v3907
    %3909 = vmatmul.mubr.f32.gmra.mrb[0].mxu0 %v3908
    %v3910 = vpop.f32.mrb[0].mxu0
    %v3911 = vadd.f32 %v3702, %v3910
    %v3912 = vpop.f32.mrb[0].mxu0
    %3913 = vdwg.mxu0
    %3914 = vmatprep.subr.mxu0 0.0
    %v3915 = vand.u32 %v3200, 4294901760
    %3916 = vmatpush1.msra.mxu0 %v3915
    %3917 = vmatprep.subr.mxu0 0.0
    %v3918 = vand.u32 %v3201, 4294901760
    %3919 = vmatpush1.msra.mxu0 %v3918
    %3920 = vmatprep.subr.mxu0 0.0
    %v3921 = vand.u32 %v3202, 4294901760
    %3922 = vmatpush1.msra.mxu0 %v3921
    %3923 = vmatprep.subr.mxu0 0.0
    %v3924 = vand.u32 %v3203, 4294901760
    %3925 = vmatpush1.msra.mxu0 %v3924
    %3926 = vmatprep.subr.mxu0 0.0
    %v3927 = vand.u32 %v3204, 4294901760
    %3928 = vmatpush1.msra.mxu0 %v3927
    %3929 = vmatprep.subr.mxu0 0.0
    %v3930 = vand.u32 %v3205, 4294901760
    %3931 = vmatpush1.msra.mxu0 %v3930
    %3932 = vmatprep.subr.mxu0 0.0
    %v3933 = vand.u32 %v3206, 4294901760
    %3934 = vmatpush1.msra.mxu0 %v3933
    %3935 = vmatprep.subr.mxu0 0.0
    %v3936 = vand.u32 %v3207, 4294901760
    %3937 = vmatpush1.msra.mxu0 %v3936
    %3938 = vmatprep.subr.mxu0 0.0
    %v3939 = vand.u32 %v3208, 4294901760
    %3940 = vmatpush1.msra.mxu0 %v3939
    %3941 = vmatprep.subr.mxu0 0.0
    %v3942 = vand.u32 %v3209, 4294901760
    %3943 = vmatpush1.msra.mxu0 %v3942
    %3944 = vmatprep.subr.mxu0 0.0
    %v3945 = vand.u32 %v3210, 4294901760
    %3946 = vmatpush1.msra.mxu0 %v3945
    %3947 = vmatprep.subr.mxu0 0.0
    %v3948 = vand.u32 %v3211, 4294901760
    %3949 = vmatpush1.msra.mxu0 %v3948
    %3950 = vmatprep.subr.mxu0 0.0
    %v3951 = vand.u32 %v3212, 4294901760
    %3952 = vmatpush1.msra.mxu0 %v3951
    %3953 = vmatprep.subr.mxu0 0.0
    %v3954 = vand.u32 %v3213, 4294901760
    %3955 = vmatpush1.msra.mxu0 %v3954
    %3956 = vmatprep.subr.mxu0 0.0
    %v3957 = vand.u32 %v3214, 4294901760
    %3958 = vmatpush1.msra.mxu0 %v3957
    %3959 = vmatprep.subr.mxu0 0.0
    %v3960 = vand.u32 %v3215, 4294901760
    %3961 = vmatpush1.msra.mxu0 %v3960
    %3962 = vmatprep.subr.mxu0 0.0
    %3963 = vmatpush1.msra.mxu0 0.0
    %3964 = vmatprep.subr.mxu0 0.0
    %3965 = vmatpush1.msra.mxu0 0.0
    %3966 = vmatprep.subr.mxu0 0.0
    %3967 = vmatpush1.msra.mxu0 0.0
    %3968 = vmatprep.subr.mxu0 0.0
    %3969 = vmatpush1.msra.mxu0 0.0
    %3970 = vmatprep.subr.mxu0 0.0
    %3971 = vmatpush1.msra.mxu0 0.0
    %3972 = vmatprep.subr.mxu0 0.0
    %3973 = vmatpush1.msra.mxu0 0.0
    %3974 = vmatprep.subr.mxu0 0.0
    %3975 = vmatpush1.msra.mxu0 0.0
    %3976 = vmatprep.subr.mxu0 0.0
    %3977 = vmatpush1.msra.mxu0 0.0
    %3978 = vmatprep.subr.mxu0 0.0
    %3979 = vmatpush1.msra.mxu0 0.0
    %3980 = vmatprep.subr.mxu0 0.0
    %3981 = vmatpush1.msra.mxu0 0.0
    %3982 = vmatprep.subr.mxu0 0.0
    %3983 = vmatpush1.msra.mxu0 0.0
    %3984 = vmatprep.subr.mxu0 0.0
    %3985 = vmatpush1.msra.mxu0 0.0
    %3986 = vmatprep.subr.mxu0 0.0
    %3987 = vmatpush1.msra.mxu0 0.0
    %3988 = vmatprep.subr.mxu0 0.0
    %3989 = vmatpush1.msra.mxu0 0.0
    %3990 = vmatprep.subr.mxu0 0.0
    %3991 = vmatpush1.msra.mxu0 0.0
    %3992 = vmatprep.subr.mxu0 0.0
    %3993 = vmatpush1.msra.mxu0 0.0
    %3994 = vmatprep.mubr.f32.mxu0 0.0
    %v3995 = vand.u32 %v3184, 4294901760
    %v3996 = vsub.f32 %v3184, %v3995
    %v3997 = vand.u32 %v3996, 4294901760
    %3998 = vmatmul.mubr.f32.gmra.mrb[0].mxu0 %v3997
    %v3999 = vpop.f32.mrb[0].mxu0
    %v4000 = vadd.f32 %v3806, %v3999
    %v4001 = vpop.f32.mrb[0].mxu0
    %4002 = vmatprep.mubr.f32.mxu0 0.0
    %v4003 = vand.u32 %v3185, 4294901760
    %v4004 = vsub.f32 %v3185, %v4003
    %v4005 = vand.u32 %v4004, 4294901760
    %4006 = vmatmul.mubr.f32.gmra.mrb[0].mxu0 %v4005
    %v4007 = vpop.f32.mrb[0].mxu0
    %v4008 = vadd.f32 %v3813, %v4007
    %v4009 = vpop.f32.mrb[0].mxu0
    %4010 = vmatprep.mubr.f32.mxu0 0.0
    %v4011 = vand.u32 %v3186, 4294901760
    %v4012 = vsub.f32 %v3186, %v4011
    %v4013 = vand.u32 %v4012, 4294901760
    %4014 = vmatmul.mubr.f32.gmra.mrb[0].mxu0 %v4013
    %v4015 = vpop.f32.mrb[0].mxu0
    %v4016 = vadd.f32 %v3820, %v4015
    %v4017 = vpop.f32.mrb[0].mxu0
    %4018 = vmatprep.mubr.f32.mxu0 0.0
    %v4019 = vand.u32 %v3187, 4294901760
    %v4020 = vsub.f32 %v3187, %v4019
    %v4021 = vand.u32 %v4020, 4294901760
    %4022 = vmatmul.mubr.f32.gmra.mrb[0].mxu0 %v4021
    %v4023 = vpop.f32.mrb[0].mxu0
    %v4024 = vadd.f32 %v3827, %v4023
    %v4025 = vpop.f32.mrb[0].mxu0
    %4026 = vmatprep.mubr.f32.mxu0 0.0
    %v4027 = vand.u32 %v3188, 4294901760
    %v4028 = vsub.f32 %v3188, %v4027
    %v4029 = vand.u32 %v4028, 4294901760
    %4030 = vmatmul.mubr.f32.gmra.mrb[0].mxu0 %v4029
    %v4031 = vpop.f32.mrb[0].mxu0
    %v4032 = vadd.f32 %v3834, %v4031
    %v4033 = vpop.f32.mrb[0].mxu0
    %4034 = vmatprep.mubr.f32.mxu0 0.0
    %v4035 = vand.u32 %v3189, 4294901760
    %v4036 = vsub.f32 %v3189, %v4035
    %v4037 = vand.u32 %v4036, 4294901760
    %4038 = vmatmul.mubr.f32.gmra.mrb[0].mxu0 %v4037
    %v4039 = vpop.f32.mrb[0].mxu0
    %v4040 = vadd.f32 %v3841, %v4039
    %v4041 = vpop.f32.mrb[0].mxu0
    %4042 = vmatprep.mubr.f32.mxu0 0.0
    %v4043 = vand.u32 %v3190, 4294901760
    %v4044 = vsub.f32 %v3190, %v4043
    %v4045 = vand.u32 %v4044, 4294901760
    %4046 = vmatmul.mubr.f32.gmra.mrb[0].mxu0 %v4045
    %v4047 = vpop.f32.mrb[0].mxu0
    %v4048 = vadd.f32 %v3848, %v4047
    %v4049 = vpop.f32.mrb[0].mxu0
    %4050 = vmatprep.mubr.f32.mxu0 0.0
    %v4051 = vand.u32 %v3191, 4294901760
    %v4052 = vsub.f32 %v3191, %v4051
    %v4053 = vand.u32 %v4052, 4294901760
    %4054 = vmatmul.mubr.f32.gmra.mrb[0].mxu0 %v4053
    %v4055 = vpop.f32.mrb[0].mxu0
    %v4056 = vadd.f32 %v3855, %v4055
    %v4057 = vpop.f32.mrb[0].mxu0
    %4058 = vmatprep.mubr.f32.mxu0 0.0
    %v4059 = vand.u32 %v3192, 4294901760
    %v4060 = vsub.f32 %v3192, %v4059
    %v4061 = vand.u32 %v4060, 4294901760
    %4062 = vmatmul.mubr.f32.gmra.mrb[0].mxu0 %v4061
    %v4063 = vpop.f32.mrb[0].mxu0
    %v4064 = vadd.f32 %v3862, %v4063
    %v4065 = vpop.f32.mrb[0].mxu0
    %4066 = vmatprep.mubr.f32.mxu0 0.0
    %v4067 = vand.u32 %v3193, 4294901760
    %v4068 = vsub.f32 %v3193, %v4067
    %v4069 = vand.u32 %v4068, 4294901760
    %4070 = vmatmul.mubr.f32.gmra.mrb[0].mxu0 %v4069
    %v4071 = vpop.f32.mrb[0].mxu0
    %v4072 = vadd.f32 %v3869, %v4071
    %v4073 = vpop.f32.mrb[0].mxu0
    %4074 = vmatprep.mubr.f32.mxu0 0.0
    %v4075 = vand.u32 %v3194, 4294901760
    %v4076 = vsub.f32 %v3194, %v4075
    %v4077 = vand.u32 %v4076, 4294901760
    %4078 = vmatmul.mubr.f32.gmra.mrb[0].mxu0 %v4077
    %v4079 = vpop.f32.mrb[0].mxu0
    %v4080 = vadd.f32 %v3876, %v4079
    %v4081 = vpop.f32.mrb[0].mxu0
    %4082 = vmatprep.mubr.f32.mxu0 0.0
    %v4083 = vand.u32 %v3195, 4294901760
    %v4084 = vsub.f32 %v3195, %v4083
    %v4085 = vand.u32 %v4084, 4294901760
    %4086 = vmatmul.mubr.f32.gmra.mrb[0].mxu0 %v4085
    %v4087 = vpop.f32.mrb[0].mxu0
    %v4088 = vadd.f32 %v3883, %v4087
    %v4089 = vpop.f32.mrb[0].mxu0
    %4090 = vmatprep.mubr.f32.mxu0 0.0
    %v4091 = vand.u32 %v3196, 4294901760
    %v4092 = vsub.f32 %v3196, %v4091
    %v4093 = vand.u32 %v4092, 4294901760
    %4094 = vmatmul.mubr.f32.gmra.mrb[0].mxu0 %v4093
    %v4095 = vpop.f32.mrb[0].mxu0
    %v4096 = vadd.f32 %v3890, %v4095
    %v4097 = vpop.f32.mrb[0].mxu0
    %4098 = vmatprep.mubr.f32.mxu0 0.0
    %v4099 = vand.u32 %v3197, 4294901760
    %v4100 = vsub.f32 %v3197, %v4099
    %v4101 = vand.u32 %v4100, 4294901760
    %4102 = vmatmul.mubr.f32.gmra.mrb[0].mxu0 %v4101
    %v4103 = vpop.f32.mrb[0].mxu0
    %v4104 = vadd.f32 %v3897, %v4103
    %v4105 = vpop.f32.mrb[0].mxu0
    %4106 = vmatprep.mubr.f32.mxu0 0.0
    %v4107 = vand.u32 %v3198, 4294901760
    %v4108 = vsub.f32 %v3198, %v4107
    %v4109 = vand.u32 %v4108, 4294901760
    %4110 = vmatmul.mubr.f32.gmra.mrb[0].mxu0 %v4109
    %v4111 = vpop.f32.mrb[0].mxu0
    %v4112 = vadd.f32 %v3904, %v4111
    %v4113 = vpop.f32.mrb[0].mxu0
    %4114 = vmatprep.mubr.f32.mxu0 0.0
    %v4115 = vand.u32 %v3199, 4294901760
    %v4116 = vsub.f32 %v3199, %v4115
    %v4117 = vand.u32 %v4116, 4294901760
    %4118 = vmatmul.mubr.f32.gmra.mrb[0].mxu0 %v4117
    %v4119 = vpop.f32.mrb[0].mxu0
    %v4120 = vadd.f32 %v3911, %v4119
    %v4121 = vpop.f32.mrb[0].mxu0
    %4122 = vdwg.mxu0
    %4123 = vmatprep.subr.mxu0 0.0
    %v4124 = vand.u32 %v3200, 4294901760
    %v4125 = vsub.f32 %v3200, %v4124
    %v4126 = vand.u32 %v4125, 4294901760
    %4127 = vmatpush1.msra.mxu0 %v4126
    %4128 = vmatprep.subr.mxu0 0.0
    %v4129 = vand.u32 %v3201, 4294901760
    %v4130 = vsub.f32 %v3201, %v4129
    %v4131 = vand.u32 %v4130, 4294901760
    %4132 = vmatpush1.msra.mxu0 %v4131
    %4133 = vmatprep.subr.mxu0 0.0
    %v4134 = vand.u32 %v3202, 4294901760
    %v4135 = vsub.f32 %v3202, %v4134
    %v4136 = vand.u32 %v4135, 4294901760
    %4137 = vmatpush1.msra.mxu0 %v4136
    %4138 = vmatprep.subr.mxu0 0.0
    %v4139 = vand.u32 %v3203, 4294901760
    %v4140 = vsub.f32 %v3203, %v4139
    %v4141 = vand.u32 %v4140, 4294901760
    %4142 = vmatpush1.msra.mxu0 %v4141
    %4143 = vmatprep.subr.mxu0 0.0
    %v4144 = vand.u32 %v3204, 4294901760
    %v4145 = vsub.f32 %v3204, %v4144
    %v4146 = vand.u32 %v4145, 4294901760
    %4147 = vmatpush1.msra.mxu0 %v4146
    %4148 = vmatprep.subr.mxu0 0.0
    %v4149 = vand.u32 %v3205, 4294901760
    %v4150 = vsub.f32 %v3205, %v4149
    %v4151 = vand.u32 %v4150, 4294901760
    %4152 = vmatpush1.msra.mxu0 %v4151
    %4153 = vmatprep.subr.mxu0 0.0
    %v4154 = vand.u32 %v3206, 4294901760
    %v4155 = vsub.f32 %v3206, %v4154
    %v4156 = vand.u32 %v4155, 4294901760
    %4157 = vmatpush1.msra.mxu0 %v4156
    %4158 = vmatprep.subr.mxu0 0.0
    %v4159 = vand.u32 %v3207, 4294901760
    %v4160 = vsub.f32 %v3207, %v4159
    %v4161 = vand.u32 %v4160, 4294901760
    %4162 = vmatpush1.msra.mxu0 %v4161
    %4163 = vmatprep.subr.mxu0 0.0
    %v4164 = vand.u32 %v3208, 4294901760
    %v4165 = vsub.f32 %v3208, %v4164
    %v4166 = vand.u32 %v4165, 4294901760
    %4167 = vmatpush1.msra.mxu0 %v4166
    %4168 = vmatprep.subr.mxu0 0.0
    %v4169 = vand.u32 %v3209, 4294901760
    %v4170 = vsub.f32 %v3209, %v4169
    %v4171 = vand.u32 %v4170, 4294901760
    %4172 = vmatpush1.msra.mxu0 %v4171
    %4173 = vmatprep.subr.mxu0 0.0
    %v4174 = vand.u32 %v3210, 4294901760
    %v4175 = vsub.f32 %v3210, %v4174
    %v4176 = vand.u32 %v4175, 4294901760
    %4177 = vmatpush1.msra.mxu0 %v4176
    %4178 = vmatprep.subr.mxu0 0.0
    %v4179 = vand.u32 %v3211, 4294901760
    %v4180 = vsub.f32 %v3211, %v4179
    %v4181 = vand.u32 %v4180, 4294901760
    %4182 = vmatpush1.msra.mxu0 %v4181
    %4183 = vmatprep.subr.mxu0 0.0
    %v4184 = vand.u32 %v3212, 4294901760
    %v4185 = vsub.f32 %v3212, %v4184
    %v4186 = vand.u32 %v4185, 4294901760
    %4187 = vmatpush1.msra.mxu0 %v4186
    %4188 = vmatprep.subr.mxu0 0.0
    %v4189 = vand.u32 %v3213, 4294901760
    %v4190 = vsub.f32 %v3213, %v4189
    %v4191 = vand.u32 %v4190, 4294901760
    %4192 = vmatpush1.msra.mxu0 %v4191
    %4193 = vmatprep.subr.mxu0 0.0
    %v4194 = vand.u32 %v3214, 4294901760
    %v4195 = vsub.f32 %v3214, %v4194
    %v4196 = vand.u32 %v4195, 4294901760
    %4197 = vmatpush1.msra.mxu0 %v4196
    %4198 = vmatprep.subr.mxu0 0.0
    %v4199 = vand.u32 %v3215, 4294901760
    %v4200 = vsub.f32 %v3215, %v4199
    %v4201 = vand.u32 %v4200, 4294901760
    %4202 = vmatpush1.msra.mxu0 %v4201
    %4203 = vmatprep.subr.mxu0 0.0
    %4204 = vmatpush1.msra.mxu0 0.0
    %4205 = vmatprep.subr.mxu0 0.0
    %4206 = vmatpush1.msra.mxu0 0.0
    %4207 = vmatprep.subr.mxu0 0.0
    %4208 = vmatpush1.msra.mxu0 0.0
    %4209 = vmatprep.subr.mxu0 0.0
    %4210 = vmatpush1.msra.mxu0 0.0
    %4211 = vmatprep.subr.mxu0 0.0
    %4212 = vmatpush1.msra.mxu0 0.0
    %4213 = vmatprep.subr.mxu0 0.0
    %4214 = vmatpush1.msra.mxu0 0.0
    %4215 = vmatprep.subr.mxu0 0.0
    %4216 = vmatpush1.msra.mxu0 0.0
    %4217 = vmatprep.subr.mxu0 0.0
    %4218 = vmatpush1.msra.mxu0 0.0
    %4219 = vmatprep.subr.mxu0 0.0
    %4220 = vmatpush1.msra.mxu0 0.0
    %4221 = vmatprep.subr.mxu0 0.0
    %4222 = vmatpush1.msra.mxu0 0.0
    %4223 = vmatprep.subr.mxu0 0.0
    %4224 = vmatpush1.msra.mxu0 0.0
    %4225 = vmatprep.subr.mxu0 0.0
    %4226 = vmatpush1.msra.mxu0 0.0
    %4227 = vmatprep.subr.mxu0 0.0
    %4228 = vmatpush1.msra.mxu0 0.0
    %4229 = vmatprep.subr.mxu0 0.0
    %4230 = vmatpush1.msra.mxu0 0.0
    %4231 = vmatprep.subr.mxu0 0.0
    %4232 = vmatpush1.msra.mxu0 0.0
    %4233 = vmatprep.subr.mxu0 0.0
    %4234 = vmatpush1.msra.mxu0 0.0
    %4235 = vmatprep.mubr.f32.mxu0 0.0
    %v4236 = vand.u32 %v3184, 4294901760
    %4237 = vmatmul.mubr.f32.gmra.mrb[0].mxu0 %v4236
    %v4238 = vpop.f32.mrb[0].mxu0
    %v4239 = vadd.f32 %v4000, %v4238
    %v4240 = vpop.f32.mrb[0].mxu0
    %4241 = vmatprep.mubr.f32.mxu0 0.0
    %v4242 = vand.u32 %v3185, 4294901760
    %4243 = vmatmul.mubr.f32.gmra.mrb[0].mxu0 %v4242
    %v4244 = vpop.f32.mrb[0].mxu0
    %v4245 = vadd.f32 %v4008, %v4244
    %v4246 = vpop.f32.mrb[0].mxu0
    %4247 = vmatprep.mubr.f32.mxu0 0.0
    %v4248 = vand.u32 %v3186, 4294901760
    %4249 = vmatmul.mubr.f32.gmra.mrb[0].mxu0 %v4248
    %v4250 = vpop.f32.mrb[0].mxu0
    %v4251 = vadd.f32 %v4016, %v4250
    %v4252 = vpop.f32.mrb[0].mxu0
    %4253 = vmatprep.mubr.f32.mxu0 0.0
    %v4254 = vand.u32 %v3187, 4294901760
    %4255 = vmatmul.mubr.f32.gmra.mrb[0].mxu0 %v4254
    %v4256 = vpop.f32.mrb[0].mxu0
    %v4257 = vadd.f32 %v4024, %v4256
    %v4258 = vpop.f32.mrb[0].mxu0
    %4259 = vmatprep.mubr.f32.mxu0 0.0
    %v4260 = vand.u32 %v3188, 4294901760
    %4261 = vmatmul.mubr.f32.gmra.mrb[0].mxu0 %v4260
    %v4262 = vpop.f32.mrb[0].mxu0
    %v4263 = vadd.f32 %v4032, %v4262
    %v4264 = vpop.f32.mrb[0].mxu0
    %4265 = vmatprep.mubr.f32.mxu0 0.0
    %v4266 = vand.u32 %v3189, 4294901760
    %4267 = vmatmul.mubr.f32.gmra.mrb[0].mxu0 %v4266
    %v4268 = vpop.f32.mrb[0].mxu0
    %v4269 = vadd.f32 %v4040, %v4268
    %v4270 = vpop.f32.mrb[0].mxu0
    %4271 = vmatprep.mubr.f32.mxu0 0.0
    %v4272 = vand.u32 %v3190, 4294901760
    %4273 = vmatmul.mubr.f32.gmra.mrb[0].mxu0 %v4272
    %v4274 = vpop.f32.mrb[0].mxu0
    %v4275 = vadd.f32 %v4048, %v4274
    %v4276 = vpop.f32.mrb[0].mxu0
    %4277 = vmatprep.mubr.f32.mxu0 0.0
    %v4278 = vand.u32 %v3191, 4294901760
    %4279 = vmatmul.mubr.f32.gmra.mrb[0].mxu0 %v4278
    %v4280 = vpop.f32.mrb[0].mxu0
    %v4281 = vadd.f32 %v4056, %v4280
    %v4282 = vpop.f32.mrb[0].mxu0
    %4283 = vmatprep.mubr.f32.mxu0 0.0
    %v4284 = vand.u32 %v3192, 4294901760
    %4285 = vmatmul.mubr.f32.gmra.mrb[0].mxu0 %v4284
    %v4286 = vpop.f32.mrb[0].mxu0
    %v4287 = vadd.f32 %v4064, %v4286
    %v4288 = vpop.f32.mrb[0].mxu0
    %4289 = vmatprep.mubr.f32.mxu0 0.0
    %v4290 = vand.u32 %v3193, 4294901760
    %4291 = vmatmul.mubr.f32.gmra.mrb[0].mxu0 %v4290
    %v4292 = vpop.f32.mrb[0].mxu0
    %v4293 = vadd.f32 %v4072, %v4292
    %v4294 = vpop.f32.mrb[0].mxu0
    %4295 = vmatprep.mubr.f32.mxu0 0.0
    %v4296 = vand.u32 %v3194, 4294901760
    %4297 = vmatmul.mubr.f32.gmra.mrb[0].mxu0 %v4296
    %v4298 = vpop.f32.mrb[0].mxu0
    %v4299 = vadd.f32 %v4080, %v4298
    %v4300 = vpop.f32.mrb[0].mxu0
    %4301 = vmatprep.mubr.f32.mxu0 0.0
    %v4302 = vand.u32 %v3195, 4294901760
    %4303 = vmatmul.mubr.f32.gmra.mrb[0].mxu0 %v4302
    %v4304 = vpop.f32.mrb[0].mxu0
    %v4305 = vadd.f32 %v4088, %v4304
    %v4306 = vpop.f32.mrb[0].mxu0
    %4307 = vmatprep.mubr.f32.mxu0 0.0
    %v4308 = vand.u32 %v3196, 4294901760
    %4309 = vmatmul.mubr.f32.gmra.mrb[0].mxu0 %v4308
    %v4310 = vpop.f32.mrb[0].mxu0
    %v4311 = vadd.f32 %v4096, %v4310
    %v4312 = vpop.f32.mrb[0].mxu0
    %4313 = vmatprep.mubr.f32.mxu0 0.0
    %v4314 = vand.u32 %v3197, 4294901760
    %4315 = vmatmul.mubr.f32.gmra.mrb[0].mxu0 %v4314
    %v4316 = vpop.f32.mrb[0].mxu0
    %v4317 = vadd.f32 %v4104, %v4316
    %v4318 = vpop.f32.mrb[0].mxu0
    %4319 = vmatprep.mubr.f32.mxu0 0.0
    %v4320 = vand.u32 %v3198, 4294901760
    %4321 = vmatmul.mubr.f32.gmra.mrb[0].mxu0 %v4320
    %v4322 = vpop.f32.mrb[0].mxu0
    %v4323 = vadd.f32 %v4112, %v4322
    %v4324 = vpop.f32.mrb[0].mxu0
    %4325 = vmatprep.mubr.f32.mxu0 0.0
    %v4326 = vand.u32 %v3199, 4294901760
    %4327 = vmatmul.mubr.f32.gmra.mrb[0].mxu0 %v4326
    %v4328 = vpop.f32.mrb[0].mxu0
    %v4329 = vadd.f32 %v4120, %v4328
    %v4330 = vpop.f32.mrb[0].mxu0
    %4331 = vdwg.mxu0
    %4332 = vmatprep.subr.mxu0 0.0
    %v4333 = vand.u32 %v3200, 4294901760
    %4334 = vmatpush1.msra.mxu0 %v4333
    %4335 = vmatprep.subr.mxu0 0.0
    %v4336 = vand.u32 %v3201, 4294901760
    %4337 = vmatpush1.msra.mxu0 %v4336
    %4338 = vmatprep.subr.mxu0 0.0
    %v4339 = vand.u32 %v3202, 4294901760
    %4340 = vmatpush1.msra.mxu0 %v4339
    %4341 = vmatprep.subr.mxu0 0.0
    %v4342 = vand.u32 %v3203, 4294901760
    %4343 = vmatpush1.msra.mxu0 %v4342
    %4344 = vmatprep.subr.mxu0 0.0
    %v4345 = vand.u32 %v3204, 4294901760
    %4346 = vmatpush1.msra.mxu0 %v4345
    %4347 = vmatprep.subr.mxu0 0.0
    %v4348 = vand.u32 %v3205, 4294901760
    %4349 = vmatpush1.msra.mxu0 %v4348
    %4350 = vmatprep.subr.mxu0 0.0
    %v4351 = vand.u32 %v3206, 4294901760
    %4352 = vmatpush1.msra.mxu0 %v4351
    %4353 = vmatprep.subr.mxu0 0.0
    %v4354 = vand.u32 %v3207, 4294901760
    %4355 = vmatpush1.msra.mxu0 %v4354
    %4356 = vmatprep.subr.mxu0 0.0
    %v4357 = vand.u32 %v3208, 4294901760
    %4358 = vmatpush1.msra.mxu0 %v4357
    %4359 = vmatprep.subr.mxu0 0.0
    %v4360 = vand.u32 %v3209, 4294901760
    %4361 = vmatpush1.msra.mxu0 %v4360
    %4362 = vmatprep.subr.mxu0 0.0
    %v4363 = vand.u32 %v3210, 4294901760
    %4364 = vmatpush1.msra.mxu0 %v4363
    %4365 = vmatprep.subr.mxu0 0.0
    %v4366 = vand.u32 %v3211, 4294901760
    %4367 = vmatpush1.msra.mxu0 %v4366
    %4368 = vmatprep.subr.mxu0 0.0
    %v4369 = vand.u32 %v3212, 4294901760
    %4370 = vmatpush1.msra.mxu0 %v4369
    %4371 = vmatprep.subr.mxu0 0.0
    %v4372 = vand.u32 %v3213, 4294901760
    %4373 = vmatpush1.msra.mxu0 %v4372
    %4374 = vmatprep.subr.mxu0 0.0
    %v4375 = vand.u32 %v3214, 4294901760
    %4376 = vmatpush1.msra.mxu0 %v4375
    %4377 = vmatprep.subr.mxu0 0.0
    %v4378 = vand.u32 %v3215, 4294901760
    %4379 = vmatpush1.msra.mxu0 %v4378
    %4380 = vmatprep.subr.mxu0 0.0
    %4381 = vmatpush1.msra.mxu0 0.0
    %4382 = vmatprep.subr.mxu0 0.0
    %4383 = vmatpush1.msra.mxu0 0.0
    %4384 = vmatprep.subr.mxu0 0.0
    %4385 = vmatpush1.msra.mxu0 0.0
    %4386 = vmatprep.subr.mxu0 0.0
    %4387 = vmatpush1.msra.mxu0 0.0
    %4388 = vmatprep.subr.mxu0 0.0
    %4389 = vmatpush1.msra.mxu0 0.0
    %4390 = vmatprep.subr.mxu0 0.0
    %4391 = vmatpush1.msra.mxu0 0.0
    %4392 = vmatprep.subr.mxu0 0.0
    %4393 = vmatpush1.msra.mxu0 0.0
    %4394 = vmatprep.subr.mxu0 0.0
    %4395 = vmatpush1.msra.mxu0 0.0
    %4396 = vmatprep.subr.mxu0 0.0
    %4397 = vmatpush1.msra.mxu0 0.0
    %4398 = vmatprep.subr.mxu0 0.0
    %4399 = vmatpush1.msra.mxu0 0.0
    %4400 = vmatprep.subr.mxu0 0.0
    %4401 = vmatpush1.msra.mxu0 0.0
    %4402 = vmatprep.subr.mxu0 0.0
    %4403 = vmatpush1.msra.mxu0 0.0
    %4404 = vmatprep.subr.mxu0 0.0
    %4405 = vmatpush1.msra.mxu0 0.0
    %4406 = vmatprep.subr.mxu0 0.0
    %4407 = vmatpush1.msra.mxu0 0.0
    %4408 = vmatprep.subr.mxu0 0.0
    %4409 = vmatpush1.msra.mxu0 0.0
    %4410 = vmatprep.subr.mxu0 0.0
    %4411 = vmatpush1.msra.mxu0 0.0
    %4412 = vmatprep.mubr.f32.mxu0 0.0
    %v4413 = vand.u32 %v3184, 4294901760
    %4414 = vmatmul.mubr.f32.gmra.mrb[0].mxu0 %v4413
    %v4415 = vpop.f32.mrb[0].mxu0
    %v4416 = vadd.f32 %v4239, %v4415
    %v4417 = vpop.f32.mrb[0].mxu0
    %4418 = vmatprep.mubr.f32.mxu0 0.0
    %v4419 = vand.u32 %v3185, 4294901760
    %4420 = vmatmul.mubr.f32.gmra.mrb[0].mxu0 %v4419
    %v4421 = vpop.f32.mrb[0].mxu0
    %v4422 = vadd.f32 %v4245, %v4421
    %v4423 = vpop.f32.mrb[0].mxu0
    %4424 = vmatprep.mubr.f32.mxu0 0.0
    %v4425 = vand.u32 %v3186, 4294901760
    %4426 = vmatmul.mubr.f32.gmra.mrb[0].mxu0 %v4425
    %v4427 = vpop.f32.mrb[0].mxu0
    %v4428 = vadd.f32 %v4251, %v4427
    %v4429 = vpop.f32.mrb[0].mxu0
    %4430 = vmatprep.mubr.f32.mxu0 0.0
    %v4431 = vand.u32 %v3187, 4294901760
    %4432 = vmatmul.mubr.f32.gmra.mrb[0].mxu0 %v4431
    %v4433 = vpop.f32.mrb[0].mxu0
    %v4434 = vadd.f32 %v4257, %v4433
    %v4435 = vpop.f32.mrb[0].mxu0
    %4436 = vmatprep.mubr.f32.mxu0 0.0
    %v4437 = vand.u32 %v3188, 4294901760
    %4438 = vmatmul.mubr.f32.gmra.mrb[0].mxu0 %v4437
    %v4439 = vpop.f32.mrb[0].mxu0
    %v4440 = vadd.f32 %v4263, %v4439
    %v4441 = vpop.f32.mrb[0].mxu0
    %4442 = vmatprep.mubr.f32.mxu0 0.0
    %v4443 = vand.u32 %v3189, 4294901760
    %4444 = vmatmul.mubr.f32.gmra.mrb[0].mxu0 %v4443
    %v4445 = vpop.f32.mrb[0].mxu0
    %v4446 = vadd.f32 %v4269, %v4445
    %v4447 = vpop.f32.mrb[0].mxu0
    %4448 = vmatprep.mubr.f32.mxu0 0.0
    %v4449 = vand.u32 %v3190, 4294901760
    %4450 = vmatmul.mubr.f32.gmra.mrb[0].mxu0 %v4449
    %v4451 = vpop.f32.mrb[0].mxu0
    %v4452 = vadd.f32 %v4275, %v4451
    %v4453 = vpop.f32.mrb[0].mxu0
    %4454 = vmatprep.mubr.f32.mxu0 0.0
    %v4455 = vand.u32 %v3191, 4294901760
    %4456 = vmatmul.mubr.f32.gmra.mrb[0].mxu0 %v4455
    %v4457 = vpop.f32.mrb[0].mxu0
    %v4458 = vadd.f32 %v4281, %v4457
    %v4459 = vpop.f32.mrb[0].mxu0
    %4460 = vmatprep.mubr.f32.mxu0 0.0
    %v4461 = vand.u32 %v3192, 4294901760
    %4462 = vmatmul.mubr.f32.gmra.mrb[0].mxu0 %v4461
    %v4463 = vpop.f32.mrb[0].mxu0
    %v4464 = vadd.f32 %v4287, %v4463
    %v4465 = vpop.f32.mrb[0].mxu0
    %4466 = vmatprep.mubr.f32.mxu0 0.0
    %v4467 = vand.u32 %v3193, 4294901760
    %4468 = vmatmul.mubr.f32.gmra.mrb[0].mxu0 %v4467
    %v4469 = vpop.f32.mrb[0].mxu0
    %v4470 = vadd.f32 %v4293, %v4469
    %v4471 = vpop.f32.mrb[0].mxu0
    %4472 = vmatprep.mubr.f32.mxu0 0.0
    %v4473 = vand.u32 %v3194, 4294901760
    %4474 = vmatmul.mubr.f32.gmra.mrb[0].mxu0 %v4473
    %v4475 = vpop.f32.mrb[0].mxu0
    %v4476 = vadd.f32 %v4299, %v4475
    %v4477 = vpop.f32.mrb[0].mxu0
    %4478 = vmatprep.mubr.f32.mxu0 0.0
    %v4479 = vand.u32 %v3195, 4294901760
    %4480 = vmatmul.mubr.f32.gmra.mrb[0].mxu0 %v4479
    %v4481 = vpop.f32.mrb[0].mxu0
    %v4482 = vadd.f32 %v4305, %v4481
    %v4483 = vpop.f32.mrb[0].mxu0
    %4484 = vmatprep.mubr.f32.mxu0 0.0
    %v4485 = vand.u32 %v3196, 4294901760
    %4486 = vmatmul.mubr.f32.gmra.mrb[0].mxu0 %v4485
    %v4487 = vpop.f32.mrb[0].mxu0
    %v4488 = vadd.f32 %v4311, %v4487
    %v4489 = vpop.f32.mrb[0].mxu0
    %4490 = vmatprep.mubr.f32.mxu0 0.0
    %v4491 = vand.u32 %v3197, 4294901760
    %4492 = vmatmul.mubr.f32.gmra.mrb[0].mxu0 %v4491
    %v4493 = vpop.f32.mrb[0].mxu0
    %v4494 = vadd.f32 %v4317, %v4493
    %v4495 = vpop.f32.mrb[0].mxu0
    %4496 = vmatprep.mubr.f32.mxu0 0.0
    %v4497 = vand.u32 %v3198, 4294901760
    %4498 = vmatmul.mubr.f32.gmra.mrb[0].mxu0 %v4497
    %v4499 = vpop.f32.mrb[0].mxu0
    %v4500 = vadd.f32 %v4323, %v4499
    %v4501 = vpop.f32.mrb[0].mxu0
    %4502 = vmatprep.mubr.f32.mxu0 0.0
    %v4503 = vand.u32 %v3199, 4294901760
    %4504 = vmatmul.mubr.f32.gmra.mrb[0].mxu0 %v4503
    %v4505 = vpop.f32.mrb[0].mxu0
    %v4506 = vadd.f32 %v4329, %v4505
    %v4507 = vpop.f32.mrb[0].mxu0
    %4508 = vdwg.mxu0
    %v4509 = vmax.f32 %v4416, 0.0
    %v4510 = vmax.f32 %v4422, 0.0
    %v4511 = vmax.f32 %v4428, 0.0
    %v4512 = vmax.f32 %v4434, 0.0
    %v4513 = vmax.f32 %v4440, 0.0
    %v4514 = vmax.f32 %v4446, 0.0
    %v4515 = vmax.f32 %v4452, 0.0
    %v4516 = vmax.f32 %v4458, 0.0
    %v4517 = vmax.f32 %v4464, 0.0
    %v4518 = vmax.f32 %v4470, 0.0
    %v4519 = vmax.f32 %v4476, 0.0
    %v4520 = vmax.f32 %v4482, 0.0
    %v4521 = vmax.f32 %v4488, 0.0
    %v4522 = vmax.f32 %v4494, 0.0
    %v4523 = vmax.f32 %v4500, 0.0
    %v4524 = vmax.f32 %v4506, 0.0
    %v4525 = vld [vmem:[%s7] sm:$0x1]
    %v4527 = vlaneseq
    %v4528 = vshrl.u32 %v4527, 7
    %v4529 = vsub.s32 0, %v4528
    %v4530 = vrot.slane %v4525, %v4529
    %v4532 = vmul.f32 %v4509, %v4530
    %v4533 = vmul.f32 %v4510, %v4530
    %v4534 = vmul.f32 %v4511, %v4530
    %v4535 = vmul.f32 %v4512, %v4530
    %v4536 = vmul.f32 %v4513, %v4530
    %v4537 = vmul.f32 %v4514, %v4530
    %v4538 = vmul.f32 %v4515, %v4530
    %v4539 = vmul.f32 %v4516, %v4530
    %v4540 = vmul.f32 %v4517, %v4530
    %v4541 = vmul.f32 %v4518, %v4530
    %v4542 = vmul.f32 %v4519, %v4530
    %v4543 = vmul.f32 %v4520, %v4530
    %v4544 = vmul.f32 %v4521, %v4530
    %v4545 = vmul.f32 %v4522, %v4530
    %v4546 = vmul.f32 %v4523, %v4530
    %v4547 = vmul.f32 %v4524, %v4530
    %vm4548 = vcmask 523264
    %v4549 = vsel %vm4548, %v4532, 0.0
    %4550 = vadd.xlane.f32.xlu0 %v4549
    %v4551 = vpop.xlane.xlu0 %4550
    %v4552 = vsel %vm4548, %v4533, 0.0
    %4553 = vadd.xlane.f32.xlu0 %v4552
    %v4554 = vpop.xlane.xlu0 %4553
    %v4555 = vsel %vm4548, %v4534, 0.0
    %4556 = vadd.xlane.f32.xlu0 %v4555
    %v4557 = vpop.xlane.xlu0 %4556
    %v4558 = vsel %vm4548, %v4535, 0.0
    %4559 = vadd.xlane.f32.xlu0 %v4558
    %v4560 = vpop.xlane.xlu0 %4559
    %v4561 = vsel %vm4548, %v4536, 0.0
    %4562 = vadd.xlane.f32.xlu0 %v4561
    %v4563 = vpop.xlane.xlu0 %4562
    %v4564 = vsel %vm4548, %v4537, 0.0
    %4565 = vadd.xlane.f32.xlu0 %v4564
    %v4566 = vpop.xlane.xlu0 %4565
    %v4567 = vsel %vm4548, %v4538, 0.0
    %4568 = vadd.xlane.f32.xlu0 %v4567
    %v4569 = vpop.xlane.xlu0 %4568
    %v4570 = vsel %vm4548, %v4539, 0.0
    %4571 = vadd.xlane.f32.xlu0 %v4570
    %v4572 = vpop.xlane.xlu0 %4571
    %v4573 = vsel %vm4548, %v4540, 0.0
    %4574 = vadd.xlane.f32.xlu0 %v4573
    %v4575 = vpop.xlane.xlu0 %4574
    %v4576 = vsel %vm4548, %v4541, 0.0
    %4577 = vadd.xlane.f32.xlu0 %v4576
    %v4578 = vpop.xlane.xlu0 %4577
    %v4579 = vsel %vm4548, %v4542, 0.0
    %4580 = vadd.xlane.f32.xlu0 %v4579
    %v4581 = vpop.xlane.xlu0 %4580
    %v4582 = vsel %vm4548, %v4543, 0.0
    %4583 = vadd.xlane.f32.xlu0 %v4582
    %v4584 = vpop.xlane.xlu0 %4583
    %v4585 = vsel %vm4548, %v4544, 0.0
    %4586 = vadd.xlane.f32.xlu0 %v4585
    %v4587 = vpop.xlane.xlu0 %4586
    %v4588 = vsel %vm4548, %v4545, 0.0
    %4589 = vadd.xlane.f32.xlu0 %v4588
    %v4590 = vpop.xlane.xlu0 %4589
    %v4591 = vsel %vm4548, %v4546, 0.0
    %4592 = vadd.xlane.f32.xlu0 %v4591
    %v4593 = vpop.xlane.xlu0 %4592
    %v4594 = vsel %vm4548, %v4547, 0.0
    %4595 = vadd.xlane.f32.xlu0 %v4594
    %v4596 = vpop.xlane.xlu0 %4595
    %v4597 = vld [vmem:[#allocation2] sm:$0x1]
    %v4599 = vlaneseq
    %v4600 = vshrl.u32 %v4599, 7
    %v4601 = vsub.s32 0, %v4600
    %v4602 = vrot.slane %v4597, %v4601
    %v4604 = vadd.f32 %v4551, %v4602
    %v4605 = vadd.f32 %v4554, %v4602
    %v4606 = vadd.f32 %v4557, %v4602
    %v4607 = vadd.f32 %v4560, %v4602
    %v4608 = vadd.f32 %v4563, %v4602
    %v4609 = vadd.f32 %v4566, %v4602
    %v4610 = vadd.f32 %v4569, %v4602
    %v4611 = vadd.f32 %v4572, %v4602
    %v4612 = vadd.f32 %v4575, %v4602
    %v4613 = vadd.f32 %v4578, %v4602
    %v4614 = vadd.f32 %v4581, %v4602
    %v4615 = vadd.f32 %v4584, %v4602
    %v4616 = vadd.f32 %v4587, %v4602
    %v4617 = vadd.f32 %v4590, %v4602
    %v4618 = vadd.f32 %v4593, %v4602
    %v4619 = vadd.f32 %v4596, %v4602
    %vm4620 = vcmask 7168
    %4621 = vst.msk [vmem:[%s9] sm:$0xff] %vm4620, %v4604
    %4622 = vst.msk [vmem:[%s9 + $0x8] sm:$0xff] %vm4620, %v4605
    %4623 = vst.msk [vmem:[%s9 + $0x10] sm:$0xff] %vm4620, %v4606
    %4624 = vst.msk [vmem:[%s9 + $0x18] sm:$0xff] %vm4620, %v4607
    %4625 = vst.msk [vmem:[%s9 + $0x20] sm:$0xff] %vm4620, %v4608
    %4626 = vst.msk [vmem:[%s9 + $0x28] sm:$0xff] %vm4620, %v4609
    %4627 = vst.msk [vmem:[%s9 + $0x30] sm:$0xff] %vm4620, %v4610
    %4628 = vst.msk [vmem:[%s9 + $0x38] sm:$0xff] %vm4620, %v4611
    %4629 = vst.msk [vmem:[%s9 + $0x40] sm:$0xff] %vm4620, %v4612
    %4630 = vst.msk [vmem:[%s9 + $0x48] sm:$0xff] %vm4620, %v4613
    %4631 = vst.msk [vmem:[%s9 + $0x50] sm:$0xff] %vm4620, %v4614
    %4632 = vst.msk [vmem:[%s9 + $0x58] sm:$0xff] %vm4620, %v4615
    %4633 = vst.msk [vmem:[%s9 + $0x60] sm:$0xff] %vm4620, %v4616
    %4634 = vst.msk [vmem:[%s9 + $0x68] sm:$0xff] %vm4620, %v4617
    %4635 = vst.msk [vmem:[%s9 + $0x70] sm:$0xff] %vm4620, %v4618
    %4636 = vst.msk [vmem:[%s9 + $0x78] sm:$0xff] %vm4620, %v4619
    // Predicated region
    $region42: #{tpu_custom_call.1} parent=1 // pred_check
      _
    $region43: #{tpu_custom_call.1} parent=1 // pred_check_branch
      %4638 = sbr.rel (0) target = $region45
    $region44: #{tpu_custom_call.1} parent=1 // pred_region
      _
    $region45: #{tpu_custom_call.1} parent=1 // pred_fallthru
      _
    // Predicated region
    $region46: #{tpu_custom_call.1} parent=1 // pred_check
      _
    $region47: #{tpu_custom_call.1} parent=1 // pred_check_branch
      %4640 = sbr.rel (0) target = $region49
    $region48: #{tpu_custom_call.1} parent=1 // pred_region
      _
    $region49: #{tpu_custom_call.1} parent=1 // pred_fallthru
      _
    %4641 = vsyncpa [#allocation4], 1

</llo_original>
